<compile_context>
chip_gen: v7x
topology: tpu7x:2x2x1
jax: 0.10.0
libtpu: 0.0.40
codegen_flags: <defaults>
</compile_context>

<pallas_src>
import functools

import jax
import jax.numpy as jnp
from jax import lax
from jax.experimental import pallas as pl
from jax.experimental.pallas import tpu as pltpu

EPS = 1e-5  # PyTorch BatchNorm default


# ----------------------------- Pallas kernel --------------------------------

def _bottleneck_kernel(x_ref, w1_ref, b1_ref, w2_ref, b2_ref, w3_ref, b3_ref,
                       o_ref, halo_ref, *, D, H, W):
    """Fused bottleneck for one sample (all depth slices in one grid step).

    x_ref   : (1, D, H*W, Cin)     one sample, NDHWC with HW flattened
    w1_ref  : (Cin, KP)            bn1-scaled conv1 weight tiled [w1|w1|w1|0]
    b1_ref  : (1, KP)              bn1 bias tiled the same way
    w2_ref  : (9, KP, P)           per-(kh,kw) tap; rows = (kd, cin), K-padded
    b2_ref  : (1, P)
    w3_ref  : (P, Cout)            bn3 scale folded
    b3_ref  : (1, Cout)
    o_ref   : (1, D, H*W, Cout)
    halo_ref: (D, H+2, W+2, KP)    lane-dense VMEM halo scratch (KP = 128)
    """
    HW = H * W
    M = D * HW
    Cin = x_ref.shape[-1]
    P = w3_ref.shape[0]          # planes
    KP = halo_ref.shape[-1]      # lane-dense conv2 contraction width (128)
    f32 = jnp.float32

    # ---- conv1 (1x1x1) + folded bn1 + relu: one big MXU dot ----------------
    xs = x_ref[...].reshape(M, Cin)
    o1 = jnp.dot(xs, w1_ref[...], preferred_element_type=f32) + b1_ref[...]
    o1 = jnp.maximum(o1, 0.0).reshape(D, H, W, KP)   # slots 0..2 replicated, 3 zero

    # Depth-shift the kd=0 / kd=2 channel slots (input depths d-1 / d+1,
    # zero at the depth boundary): major-axis concats + a lane-slot select.
    zslab = jnp.zeros((1, H, W, KP), f32)
    prev = jnp.concatenate([zslab, o1[:D - 1]], axis=0)     # conv1 out @ d-1
    nxt = jnp.concatenate([o1[1:], zslab], axis=0)          # conv1 out @ d+1
    lane = lax.broadcasted_iota(jnp.int32, (1, 1, 1, KP), 3)
    wide = jnp.where(lane < P, prev,
                     jnp.where(jnp.logical_and(lane >= 2 * P, lane < 3 * P),
                               nxt, o1))                     # (D, H, W, KP)

    # Spatially zero-padded, lane-dense halo buffer for conv2.  The 1-wide
    # spatial border stays zero; the interior is overwritten with `wide`.
    halo_ref[...] = jnp.zeros_like(halo_ref)
    halo_ref[:, 1:H + 1, 1:W + 1, :] = wide

    # ---- conv2 (3x3x3, pad=1) + folded bn2 + relu ---------------------------
    # 9 MXU dots, each contracting K = 3*planes (padded to KP): kd is folded
    # into the halo channel slots, so only (kh, kw) windows are gathered.
    acc = jnp.zeros((M, P), f32)
    for kh in range(3):
        for kw in range(3):
            patch = halo_ref[:, kh:kh + H, kw:kw + W, :].reshape(M, KP)
            acc = acc + jnp.dot(patch, w2_ref[kh * 3 + kw],
                                preferred_element_type=f32)
    o2 = jnp.maximum(acc + b2_ref[...], 0.0)

    # ---- conv3 (1x1x1) + folded bn3 + identity residual + relu -------------
    res = x_ref[...].reshape(M, Cin)
    y = jnp.dot(o2, w3_ref[...], preferred_element_type=f32)
    y = jnp.maximum(y + b3_ref[...] + res, 0.0)
    o_ref[...] = y.reshape(o_ref.shape).astype(o_ref.dtype)


# ------------------------------- JAX glue ------------------------------------

def fold_bn(gamma, beta, mean, var, eps=EPS):
    scale = gamma / jnp.sqrt(var + eps)
    bias = beta - mean * scale
    return scale.astype(jnp.float32), bias.astype(jnp.float32)


def bottleneck_forward(x_ncdhw, params, stride=1):
    """Forward pass of the Bottleneck block.  x_ncdhw: (N, C, D, H, W)."""
    if stride != 1:
        raise NotImplementedError("TODO(synk): stride>1 / downsample path")

    x = jnp.transpose(x_ncdhw, (0, 2, 3, 4, 1))          # NCDHW -> NDHWC
    N, D, H, W, Cin = x.shape
    planes = params["w1"].shape[1]
    Cout = 4 * planes
    if Cin != Cout:
        raise NotImplementedError(
            "identity residual requires inplanes == 4*planes (downsample=None)")

    KP = 128                       # lane-dense conv2 contraction width
    assert 3 * planes <= KP and Cout % 128 == 0

    # Fold the BN scale into the conv weights; only per-channel biases remain.
    s1, b1 = fold_bn(*params["bn1"])
    s2, b2 = fold_bn(*params["bn2"])
    s3, b3 = fold_bn(*params["bn3"])

    # conv1 weight/bias tiled into the 3 kd channel slots (+ zero pad slot) so
    # the kernel's conv1 dot emits the halo channel layout directly.
    w1s = (params["w1"] * s1[None, :]).astype(jnp.float32)            # (Cin, P)
    w1t = jnp.concatenate(
        [w1s, w1s, w1s, jnp.zeros((Cin, KP - 3 * planes), jnp.float32)], axis=1)
    b1t = jnp.concatenate(
        [b1, b1, b1, jnp.zeros((KP - 3 * planes,), jnp.float32)]).reshape(1, KP)

    # conv2 weight regrouped per (kh, kw) tap with kd folded into the
    # contraction dim, K zero-padded to KP rows.
    w2s = (params["w2"] * s2).astype(jnp.float32)                     # (3,3,3,P,P)
    w2k = jnp.transpose(w2s, (1, 2, 0, 3, 4)).reshape(9, 3 * planes, planes)
    w2k = jnp.pad(w2k, ((0, 0), (0, KP - 3 * planes), (0, 0)))

    w3s = (params["w3"] * s3[None, :]).astype(jnp.float32)            # (P, 4P)
    b2 = b2.reshape(1, planes)
    b3 = b3.reshape(1, Cout)

    HW = H * W
    x2 = x.reshape(N, D, HW, Cin)

    kernel = functools.partial(_bottleneck_kernel, D=D, H=H, W=W)
    out = pl.pallas_call(
        kernel,
        out_shape=jax.ShapeDtypeStruct((N, D, HW, Cout), x.dtype),
        grid_spec=pltpu.PrefetchScalarGridSpec(
            num_scalar_prefetch=0,
            grid=(N,),
            in_specs=[
                pl.BlockSpec((1, D, HW, Cin), lambda n: (n, 0, 0, 0)),
                pl.BlockSpec((Cin, KP), lambda n: (0, 0)),
                pl.BlockSpec((1, KP), lambda n: (0, 0)),
                pl.BlockSpec((9, KP, planes), lambda n: (0, 0, 0)),
                pl.BlockSpec((1, planes), lambda n: (0, 0)),
                pl.BlockSpec((planes, Cout), lambda n: (0, 0)),
                pl.BlockSpec((1, Cout), lambda n: (0, 0)),
            ],
            # Lane-dense output block: last dim = 4*planes = 128.
            out_specs=pl.BlockSpec((1, D, HW, Cout), lambda n: (n, 0, 0, 0)),
            scratch_shapes=[pltpu.VMEM((D, H + 2, W + 2, KP), jnp.float32)],
        ),
        compiler_params=pltpu.CompilerParams(
            dimension_semantics=("parallel",)),
    )(x2, w1t, b1t, w2k, b2, w3s, b3)

    out = out.reshape(N, D, H, W, Cout)
    return jnp.transpose(out, (0, 4, 1, 2, 3))           # back to NCDHW


# --------------------------- pure-JAX reference ------------------------------

def ref_forward(x_ncdhw, p, stride=1, eps=EPS):
    x = jnp.transpose(x_ncdhw, (0, 2, 3, 4, 1))
    dn = ("NDHWC", "DHWIO", "NDHWC")
    hp = lax.Precision.HIGHEST

    def bn(y, g, b, m, v):
        return (y - m) / jnp.sqrt(v + eps) * g + b

    o = lax.conv_general_dilated(x, p["w1"].reshape(1, 1, 1, *p["w1"].shape),
                                 (1, 1, 1), "VALID", dimension_numbers=dn,
                                 precision=hp)
    o = jax.nn.relu(bn(o, *p["bn1"]))
    o = lax.conv_general_dilated(o, p["w2"], (stride,) * 3, ((1, 1),) * 3,
                                 dimension_numbers=dn, precision=hp)
    o = jax.nn.relu(bn(o, *p["bn2"]))
    o = lax.conv_general_dilated(o, p["w3"].reshape(1, 1, 1, *p["w3"].shape),
                                 (1, 1, 1), "VALID", dimension_numbers=dn,
                                 precision=hp)
    o = jax.nn.relu(bn(o, *p["bn3"]) + x)
    return jnp.transpose(o, (0, 4, 1, 2, 3))


# ---------------------------------- main -------------------------------------

def make_params(key, inplanes, planes):
    ks = jax.random.split(key, 6)
    f32 = jnp.float32

    def bn_params(k, c):
        k1, k2, k3, k4 = jax.random.split(k, 4)
        gamma = jax.random.uniform(k1, (c,), f32, 0.5, 1.5)
        beta = jax.random.normal(k2, (c,), f32) * 0.1
        mean = jax.random.normal(k3, (c,), f32) * 0.1
        var = jax.random.uniform(k4, (c,), f32, 0.5, 1.5)
        return (gamma, beta, mean, var)

    return {
        "w1": jax.random.normal(ks[0], (inplanes, planes), f32) * 0.1,
        "bn1": bn_params(ks[1], planes),
        "w2": jax.random.normal(ks[2], (3, 3, 3, planes, planes), f32) * 0.1,
        "bn2": bn_params(ks[3], planes),
        "w3": jax.random.normal(ks[4], (planes, planes * 4), f32) * 0.1,
        "bn3": bn_params(ks[5], planes * 4),
    }


if __name__ == "__main__":
    key = jax.random.PRNGKey(0)
    k_x, k_p = jax.random.split(key)

    # Channels chosen so the output channel dim (4*planes = 128) is lane-dense.
    inplanes, planes = 128, 32        # inplanes == planes * expansion (4)
    N, D, H, W = 2, 8, 8, 8
    stride = 1

    x = jax.random.normal(k_x, (N, inplanes, D, H, W), jnp.float32)
    params = make_params(k_p, inplanes, planes)

    fwd = jax.jit(functools.partial(bottleneck_forward, stride=stride))
    out = jax.block_until_ready(fwd(x, params))

    ref = jax.block_until_ready(ref_forward(x, params, stride=stride))
    assert out.shape == (N, planes * 4, D, H, W)
    max_err = float(jnp.max(jnp.abs(out - ref)))
    assert jnp.allclose(out, ref, atol=2e-3, rtol=2e-3), (
        f"mismatch vs JAX reference (max abs err {max_err})")

    print("KERNEL_OK")
</pallas_src>

<mosaic_0001>
module attributes {stable_mosaic.version = 11 : i64} {
  func.func @_bottleneck_kernel(%arg0: i32, %arg1: memref<1x8x64x128xf32, #tpu.memory_space<vmem>>, %arg2: memref<128x128xf32, #tpu.memory_space<vmem>>, %arg3: memref<1x128xf32, #tpu.memory_space<vmem>>, %arg4: memref<9x128x32xf32, #tpu.memory_space<vmem>>, %arg5: memref<1x32xf32, #tpu.memory_space<vmem>>, %arg6: memref<32x128xf32, #tpu.memory_space<vmem>>, %arg7: memref<1x128xf32, #tpu.memory_space<vmem>>, %arg8: memref<1x8x64x128xf32, #tpu.memory_space<vmem>>, %arg9: memref<8x10x10x128xf32, #tpu.memory_space<vmem>>) attributes {dimension_semantics = [#tpu.dimension_semantics<parallel>], iteration_bounds = array<i64: 2>, scalar_prefetch = 0 : i64, scratch_operands = 1 : i64, tpu.core_type = #tpu.core_type<tc>, window_params = [{transform_indices = @transform_0, window_bounds = array<i64: 1, 8, 64, 128>}, {pipeline_mode = #tpu.pipeline_mode<synchronous>, transform_indices = @transform_1, window_bounds = array<i64: 128, 128>}, {pipeline_mode = #tpu.pipeline_mode<synchronous>, transform_indices = @transform_2, window_bounds = array<i64: 1, 128>}, {pipeline_mode = #tpu.pipeline_mode<synchronous>, transform_indices = @transform_3, window_bounds = array<i64: 9, 128, 32>}, {pipeline_mode = #tpu.pipeline_mode<synchronous>, transform_indices = @transform_4, window_bounds = array<i64: 1, 32>}, {pipeline_mode = #tpu.pipeline_mode<synchronous>, transform_indices = @transform_5, window_bounds = array<i64: 32, 128>}, {pipeline_mode = #tpu.pipeline_mode<synchronous>, transform_indices = @transform_6, window_bounds = array<i64: 1, 128>}, {transform_indices = @transform_7, window_bounds = array<i64: 1, 8, 64, 128>}]} {
    %c0 = arith.constant 0 : index
    %c0_0 = arith.constant 0 : index
    %c0_1 = arith.constant 0 : index
    %c0_2 = arith.constant 0 : index
    %0 = vector.load %arg1[%c0, %c0_0, %c0_1, %c0_2] : memref<1x8x64x128xf32, #tpu.memory_space<vmem>>, vector<1x8x64x128xf32>
    %1 = vector.shape_cast %0 : vector<1x8x64x128xf32> to vector<512x128xf32>
    %c0_3 = arith.constant 0 : index
    %c0_4 = arith.constant 0 : index
    %2 = vector.load %arg2[%c0_3, %c0_4] : memref<128x128xf32, #tpu.memory_space<vmem>>, vector<128x128xf32>
    %cst = arith.constant dense<0.000000e+00> : vector<512x128xf32>
    %3 = tpu.matmul %1, %2, %cst {dimension_numbers = #tpu.dot_dimension_numbers<[1], [0], [0], [1], [0, 0, 1, 1], [], []>} : vector<512x128xf32>, vector<128x128xf32>, vector<512x128xf32> -> vector<512x128xf32>
    %c0_5 = arith.constant 0 : index
    %c0_6 = arith.constant 0 : index
    %4 = vector.load %arg3[%c0_5, %c0_6] : memref<1x128xf32, #tpu.memory_space<vmem>>, vector<1x128xf32>
    %5 = vector.broadcast %4 : vector<1x128xf32> to vector<512x128xf32>
    %6 = arith.addf %3, %5 : vector<512x128xf32>
    %cst_7 = arith.constant 0.000000e+00 : f32
    %7 = vector.broadcast %cst_7 : f32 to vector<512x128xf32>
    %8 = arith.maximumf %6, %7 : vector<512x128xf32>
    %9 = vector.shape_cast %8 : vector<512x128xf32> to vector<8x8x8x128xf32>
    %cst_8 = arith.constant 0.000000e+00 : f32
    %10 = vector.broadcast %cst_8 : f32 to vector<1x8x8x128xf32>
    %11 = vector.extract_strided_slice %9 {offsets = [0, 0, 0, 0], sizes = [7, 8, 8, 128], strides = [1, 1, 1, 1]} : vector<8x8x8x128xf32> to vector<7x8x8x128xf32>
    %12 = tpu.concatenate %10, %11 in 0 : vector<1x8x8x128xf32>, vector<7x8x8x128xf32> -> vector<8x8x8x128xf32>
    %13 = vector.extract_strided_slice %9 {offsets = [1, 0, 0, 0], sizes = [7, 8, 8, 128], strides = [1, 1, 1, 1]} : vector<8x8x8x128xf32> to vector<7x8x8x128xf32>
    %14 = tpu.concatenate %13, %10 in 0 : vector<7x8x8x128xf32>, vector<1x8x8x128xf32> -> vector<8x8x8x128xf32>
    %15 = tpu.iota {dimensions = array<i32: 3>} : vector<1x1x1x128xi32>
    %c32_i32 = arith.constant 32 : i32
    %16 = vector.broadcast %c32_i32 : i32 to vector<1x1x1x128xi32>
    %17 = arith.cmpi slt, %15, %16 : vector<1x1x1x128xi32>
    %c64_i32 = arith.constant 64 : i32
    %18 = vector.broadcast %c64_i32 : i32 to vector<1x1x1x128xi32>
    %19 = arith.cmpi sge, %15, %18 : vector<1x1x1x128xi32>
    %c96_i32 = arith.constant 96 : i32
    %20 = vector.broadcast %c96_i32 : i32 to vector<1x1x1x128xi32>
    %21 = arith.cmpi slt, %15, %20 : vector<1x1x1x128xi32>
    %22 = arith.andi %19, %21 : vector<1x1x1x128xi1>
    %23 = vector.shape_cast %22 : vector<1x1x1x128xi1> to vector<1x1x1x128xi1>
    %24 = vector.broadcast %23 : vector<1x1x1x128xi1> to vector<8x8x8x128xi1>
    %25 = arith.select %24, %14, %9 : vector<8x8x8x128xi1>, vector<8x8x8x128xf32>
    %26 = vector.shape_cast %17 : vector<1x1x1x128xi1> to vector<1x1x1x128xi1>
    %27 = vector.broadcast %26 : vector<1x1x1x128xi1> to vector<8x8x8x128xi1>
    %28 = arith.select %27, %12, %25 : vector<8x8x8x128xi1>, vector<8x8x8x128xf32>
    %cst_9 = arith.constant 0.000000e+00 : f32
    %29 = vector.broadcast %cst_9 : f32 to vector<8x10x10x128xf32>
    %c0_10 = arith.constant 0 : index
    %c0_11 = arith.constant 0 : index
    %c0_12 = arith.constant 0 : index
    %c0_13 = arith.constant 0 : index
    %30 = vector.load %arg9[%c0_10, %c0_11, %c0_12, %c0_13] : memref<8x10x10x128xf32, #tpu.memory_space<vmem>>, vector<8x10x10x128xf32>
    tpu.vector_store %arg9[%c0_10, %c0_11, %c0_12, %c0_13], %29 {strides = array<i32>} : memref<8x10x10x128xf32, #tpu.memory_space<vmem>>, vector<8x10x10x128xf32>,
    %c0_14 = arith.constant 0 : index
    %c1 = arith.constant 1 : index
    %c1_15 = arith.constant 1 : index
    %c0_16 = arith.constant 0 : index
    %31 = vector.load %arg9[%c0_14, %c1, %c1_15, %c0_16] : memref<8x10x10x128xf32, #tpu.memory_space<vmem>>, vector<8x8x8x128xf32>
    tpu.vector_store %arg9[%c0_14, %c1, %c1_15, %c0_16], %28 {strides = array<i32>} : memref<8x10x10x128xf32, #tpu.memory_space<vmem>>, vector<8x8x8x128xf32>,
    %cst_17 = arith.constant 0.000000e+00 : f32
    %32 = vector.broadcast %cst_17 : f32 to vector<512x32xf32>
    %c0_18 = arith.constant 0 : index
    %c0_19 = arith.constant 0 : index
    %c0_20 = arith.constant 0 : index
    %c0_21 = arith.constant 0 : index
    %33 = vector.load %arg9[%c0_18, %c0_19, %c0_20, %c0_21] : memref<8x10x10x128xf32, #tpu.memory_space<vmem>>, vector<8x8x8x128xf32>
    %34 = vector.shape_cast %33 : vector<8x8x8x128xf32> to vector<512x128xf32>
    %c0_22 = arith.constant 0 : index
    %c0_23 = arith.constant 0 : index
    %c0_24 = arith.constant 0 : index
    %35 = vector.load %arg4[%c0_22, %c0_23, %c0_24] : memref<9x128x32xf32, #tpu.memory_space<vmem>>, vector<1x128x32xf32>
    %36 = vector.shape_cast %35 : vector<1x128x32xf32> to vector<128x32xf32>
    %cst_25 = arith.constant dense<0.000000e+00> : vector<512x32xf32>
    %37 = tpu.matmul %34, %36, %cst_25 {dimension_numbers = #tpu.dot_dimension_numbers<[1], [0], [0], [1], [0, 0, 1, 1], [], []>} : vector<512x128xf32>, vector<128x32xf32>, vector<512x32xf32> -> vector<512x32xf32>
    %38 = arith.addf %32, %37 : vector<512x32xf32>
    %c0_26 = arith.constant 0 : index
    %c0_27 = arith.constant 0 : index
    %c1_28 = arith.constant 1 : index
    %c0_29 = arith.constant 0 : index
    %39 = vector.load %arg9[%c0_26, %c0_27, %c1_28, %c0_29] : memref<8x10x10x128xf32, #tpu.memory_space<vmem>>, vector<8x8x8x128xf32>
    %40 = vector.shape_cast %39 : vector<8x8x8x128xf32> to vector<512x128xf32>
    %c1_30 = arith.constant 1 : index
    %c0_31 = arith.constant 0 : index
    %c0_32 = arith.constant 0 : index
    %41 = vector.load %arg4[%c1_30, %c0_31, %c0_32] : memref<9x128x32xf32, #tpu.memory_space<vmem>>, vector<1x128x32xf32>
    %42 = vector.shape_cast %41 : vector<1x128x32xf32> to vector<128x32xf32>
    %cst_33 = arith.constant dense<0.000000e+00> : vector<512x32xf32>
    %43 = tpu.matmul %40, %42, %cst_33 {dimension_numbers = #tpu.dot_dimension_numbers<[1], [0], [0], [1], [0, 0, 1, 1], [], []>} : vector<512x128xf32>, vector<128x32xf32>, vector<512x32xf32> -> vector<512x32xf32>
    %44 = arith.addf %38, %43 : vector<512x32xf32>
    %c0_34 = arith.constant 0 : index
    %c0_35 = arith.constant 0 : index
    %c2 = arith.constant 2 : index
    %c0_36 = arith.constant 0 : index
    %45 = vector.load %arg9[%c0_34, %c0_35, %c2, %c0_36] : memref<8x10x10x128xf32, #tpu.memory_space<vmem>>, vector<8x8x8x128xf32>
    %46 = vector.shape_cast %45 : vector<8x8x8x128xf32> to vector<512x128xf32>
    %c2_37 = arith.constant 2 : index
    %c0_38 = arith.constant 0 : index
    %c0_39 = arith.constant 0 : index
    %47 = vector.load %arg4[%c2_37, %c0_38, %c0_39] : memref<9x128x32xf32, #tpu.memory_space<vmem>>, vector<1x128x32xf32>
    %48 = vector.shape_cast %47 : vector<1x128x32xf32> to vector<128x32xf32>
    %cst_40 = arith.constant dense<0.000000e+00> : vector<512x32xf32>
    %49 = tpu.matmul %46, %48, %cst_40 {dimension_numbers = #tpu.dot_dimension_numbers<[1], [0], [0], [1], [0, 0, 1, 1], [], []>} : vector<512x128xf32>, vector<128x32xf32>, vector<512x32xf32> -> vector<512x32xf32>
    %50 = arith.addf %44, %49 : vector<512x32xf32>
    %c0_41 = arith.constant 0 : index
    %c1_42 = arith.constant 1 : index
    %c0_43 = arith.constant 0 : index
    %c0_44 = arith.constant 0 : index
    %51 = vector.load %arg9[%c0_41, %c1_42, %c0_43, %c0_44] : memref<8x10x10x128xf32, #tpu.memory_space<vmem>>, vector<8x8x8x128xf32>
    %52 = vector.shape_cast %51 : vector<8x8x8x128xf32> to vector<512x128xf32>
    %c3 = arith.constant 3 : index
    %c0_45 = arith.constant 0 : index
    %c0_46 = arith.constant 0 : index
    %53 = vector.load %arg4[%c3, %c0_45, %c0_46] : memref<9x128x32xf32, #tpu.memory_space<vmem>>, vector<1x128x32xf32>
    %54 = vector.shape_cast %53 : vector<1x128x32xf32> to vector<128x32xf32>
    %cst_47 = arith.constant dense<0.000000e+00> : vector<512x32xf32>
    %55 = tpu.matmul %52, %54, %cst_47 {dimension_numbers = #tpu.dot_dimension_numbers<[1], [0], [0], [1], [0, 0, 1, 1], [], []>} : vector<512x128xf32>, vector<128x32xf32>, vector<512x32xf32> -> vector<512x32xf32>
    %56 = arith.addf %50, %55 : vector<512x32xf32>
    %c0_48 = arith.constant 0 : index
    %c1_49 = arith.constant 1 : index
    %c1_50 = arith.constant 1 : index
    %c0_51 = arith.constant 0 : index
    %57 = vector.load %arg9[%c0_48, %c1_49, %c1_50, %c0_51] : memref<8x10x10x128xf32, #tpu.memory_space<vmem>>, vector<8x8x8x128xf32>
    %58 = vector.shape_cast %57 : vector<8x8x8x128xf32> to vector<512x128xf32>
    %c4 = arith.constant 4 : index
    %c0_52 = arith.constant 0 : index
    %c0_53 = arith.constant 0 : index
    %59 = vector.load %arg4[%c4, %c0_52, %c0_53] : memref<9x128x32xf32, #tpu.memory_space<vmem>>, vector<1x128x32xf32>
    %60 = vector.shape_cast %59 : vector<1x128x32xf32> to vector<128x32xf32>
    %cst_54 = arith.constant dense<0.000000e+00> : vector<512x32xf32>
    %61 = tpu.matmul %58, %60, %cst_54 {dimension_numbers = #tpu.dot_dimension_numbers<[1], [0], [0], [1], [0, 0, 1, 1], [], []>} : vector<512x128xf32>, vector<128x32xf32>, vector<512x32xf32> -> vector<512x32xf32>
    %62 = arith.addf %56, %61 : vector<512x32xf32>
    %c0_55 = arith.constant 0 : index
    %c1_56 = arith.constant 1 : index
    %c2_57 = arith.constant 2 : index
    %c0_58 = arith.constant 0 : index
    %63 = vector.load %arg9[%c0_55, %c1_56, %c2_57, %c0_58] : memref<8x10x10x128xf32, #tpu.memory_space<vmem>>, vector<8x8x8x128xf32>
    %64 = vector.shape_cast %63 : vector<8x8x8x128xf32> to vector<512x128xf32>
    %c5 = arith.constant 5 : index
    %c0_59 = arith.constant 0 : index
    %c0_60 = arith.constant 0 : index
    %65 = vector.load %arg4[%c5, %c0_59, %c0_60] : memref<9x128x32xf32, #tpu.memory_space<vmem>>, vector<1x128x32xf32>
    %66 = vector.shape_cast %65 : vector<1x128x32xf32> to vector<128x32xf32>
    %cst_61 = arith.constant dense<0.000000e+00> : vector<512x32xf32>
    %67 = tpu.matmul %64, %66, %cst_61 {dimension_numbers = #tpu.dot_dimension_numbers<[1], [0], [0], [1], [0, 0, 1, 1], [], []>} : vector<512x128xf32>, vector<128x32xf32>, vector<512x32xf32> -> vector<512x32xf32>
    %68 = arith.addf %62, %67 : vector<512x32xf32>
    %c0_62 = arith.constant 0 : index
    %c2_63 = arith.constant 2 : index
    %c0_64 = arith.constant 0 : index
    %c0_65 = arith.constant 0 : index
    %69 = vector.load %arg9[%c0_62, %c2_63, %c0_64, %c0_65] : memref<8x10x10x128xf32, #tpu.memory_space<vmem>>, vector<8x8x8x128xf32>
    %70 = vector.shape_cast %69 : vector<8x8x8x128xf32> to vector<512x128xf32>
    %c6 = arith.constant 6 : index
    %c0_66 = arith.constant 0 : index
    %c0_67 = arith.constant 0 : index
    %71 = vector.load %arg4[%c6, %c0_66, %c0_67] : memref<9x128x32xf32, #tpu.memory_space<vmem>>, vector<1x128x32xf32>
    %72 = vector.shape_cast %71 : vector<1x128x32xf32> to vector<128x32xf32>
    %cst_68 = arith.constant dense<0.000000e+00> : vector<512x32xf32>
    %73 = tpu.matmul %70, %72, %cst_68 {dimension_numbers = #tpu.dot_dimension_numbers<[1], [0], [0], [1], [0, 0, 1, 1], [], []>} : vector<512x128xf32>, vector<128x32xf32>, vector<512x32xf32> -> vector<512x32xf32>
    %74 = arith.addf %68, %73 : vector<512x32xf32>
    %c0_69 = arith.constant 0 : index
    %c2_70 = arith.constant 2 : index
    %c1_71 = arith.constant 1 : index
    %c0_72 = arith.constant 0 : index
    %75 = vector.load %arg9[%c0_69, %c2_70, %c1_71, %c0_72] : memref<8x10x10x128xf32, #tpu.memory_space<vmem>>, vector<8x8x8x128xf32>
    %76 = vector.shape_cast %75 : vector<8x8x8x128xf32> to vector<512x128xf32>
    %c7 = arith.constant 7 : index
    %c0_73 = arith.constant 0 : index
    %c0_74 = arith.constant 0 : index
    %77 = vector.load %arg4[%c7, %c0_73, %c0_74] : memref<9x128x32xf32, #tpu.memory_space<vmem>>, vector<1x128x32xf32>
    %78 = vector.shape_cast %77 : vector<1x128x32xf32> to vector<128x32xf32>
    %cst_75 = arith.constant dense<0.000000e+00> : vector<512x32xf32>
    %79 = tpu.matmul %76, %78, %cst_75 {dimension_numbers = #tpu.dot_dimension_numbers<[1], [0], [0], [1], [0, 0, 1, 1], [], []>} : vector<512x128xf32>, vector<128x32xf32>, vector<512x32xf32> -> vector<512x32xf32>
    %80 = arith.addf %74, %79 : vector<512x32xf32>
    %c0_76 = arith.constant 0 : index
    %c2_77 = arith.constant 2 : index
    %c2_78 = arith.constant 2 : index
    %c0_79 = arith.constant 0 : index
    %81 = vector.load %arg9[%c0_76, %c2_77, %c2_78, %c0_79] : memref<8x10x10x128xf32, #tpu.memory_space<vmem>>, vector<8x8x8x128xf32>
    %82 = vector.shape_cast %81 : vector<8x8x8x128xf32> to vector<512x128xf32>
    %c8 = arith.constant 8 : index
    %c0_80 = arith.constant 0 : index
    %c0_81 = arith.constant 0 : index
    %83 = vector.load %arg4[%c8, %c0_80, %c0_81] : memref<9x128x32xf32, #tpu.memory_space<vmem>>, vector<1x128x32xf32>
    %84 = vector.shape_cast %83 : vector<1x128x32xf32> to vector<128x32xf32>
    %cst_82 = arith.constant dense<0.000000e+00> : vector<512x32xf32>
    %85 = tpu.matmul %82, %84, %cst_82 {dimension_numbers = #tpu.dot_dimension_numbers<[1], [0], [0], [1], [0, 0, 1, 1], [], []>} : vector<512x128xf32>, vector<128x32xf32>, vector<512x32xf32> -> vector<512x32xf32>
    %86 = arith.addf %80, %85 : vector<512x32xf32>
    %c0_83 = arith.constant 0 : index
    %c0_84 = arith.constant 0 : index
    %87 = vector.load %arg5[%c0_83, %c0_84] : memref<1x32xf32, #tpu.memory_space<vmem>>, vector<1x32xf32>
    %88 = vector.broadcast %87 : vector<1x32xf32> to vector<512x32xf32>
    %89 = arith.addf %86, %88 : vector<512x32xf32>
    %cst_85 = arith.constant 0.000000e+00 : f32
    %90 = vector.broadcast %cst_85 : f32 to vector<512x32xf32>
    %91 = arith.maximumf %89, %90 : vector<512x32xf32>
    %c0_86 = arith.constant 0 : index
    %c0_87 = arith.constant 0 : index
    %c0_88 = arith.constant 0 : index
    %c0_89 = arith.constant 0 : index
    %92 = vector.load %arg1[%c0_86, %c0_87, %c0_88, %c0_89] : memref<1x8x64x128xf32, #tpu.memory_space<vmem>>, vector<1x8x64x128xf32>
    %93 = vector.shape_cast %92 : vector<1x8x64x128xf32> to vector<512x128xf32>
    %c0_90 = arith.constant 0 : index
    %c0_91 = arith.constant 0 : index
    %94 = vector.load %arg6[%c0_90, %c0_91] : memref<32x128xf32, #tpu.memory_space<vmem>>, vector<32x128xf32>
    %cst_92 = arith.constant dense<0.000000e+00> : vector<512x128xf32>
    %95 = tpu.matmul %91, %94, %cst_92 {dimension_numbers = #tpu.dot_dimension_numbers<[1], [0], [0], [1], [0, 0, 1, 1], [], []>} : vector<512x32xf32>, vector<32x128xf32>, vector<512x128xf32> -> vector<512x128xf32>
    %c0_93 = arith.constant 0 : index
    %c0_94 = arith.constant 0 : index
    %96 = vector.load %arg7[%c0_93, %c0_94] : memref<1x128xf32, #tpu.memory_space<vmem>>, vector<1x128xf32>
    %97 = vector.broadcast %96 : vector<1x128xf32> to vector<512x128xf32>
    %98 = arith.addf %95, %97 : vector<512x128xf32>
    %99 = arith.addf %98, %93 : vector<512x128xf32>
    %cst_95 = arith.constant 0.000000e+00 : f32
    %100 = vector.broadcast %cst_95 : f32 to vector<512x128xf32>
    %101 = arith.maximumf %99, %100 : vector<512x128xf32>
    %102 = vector.shape_cast %101 : vector<512x128xf32> to vector<1x8x64x128xf32>
    %c0_96 = arith.constant 0 : index
    %c0_97 = arith.constant 0 : index
    %c0_98 = arith.constant 0 : index
    %c0_99 = arith.constant 0 : index
    %103 = vector.load %arg8[%c0_96, %c0_97, %c0_98, %c0_99] : memref<1x8x64x128xf32, #tpu.memory_space<vmem>>, vector<1x8x64x128xf32>
    tpu.vector_store %arg8[%c0_96, %c0_97, %c0_98, %c0_99], %102 {strides = array<i32>} : memref<1x8x64x128xf32, #tpu.memory_space<vmem>>, vector<1x8x64x128xf32>,
    return
  }
  func.func @transform_0(%arg0: i32) -> (i32, i32, i32, i32) {
    %c0_i32 = arith.constant 0 : i32
    %c0_i32_0 = arith.constant 0 : i32
    %c0_i32_1 = arith.constant 0 : i32
    %c0_i32_2 = arith.constant 0 : i32
    return %arg0, %c0_i32, %c0_i32_0, %c0_i32_1 : i32, i32, i32, i32
  }
  func.func @transform_1(%arg0: i32) -> (i32, i32) {
    %c0_i32 = arith.constant 0 : i32
    %c0_i32_0 = arith.constant 0 : i32
    %c0_i32_1 = arith.constant 0 : i32
    return %c0_i32, %c0_i32_0 : i32, i32
  }
  func.func @transform_2(%arg0: i32) -> (i32, i32) {
    %c0_i32 = arith.constant 0 : i32
    %c0_i32_0 = arith.constant 0 : i32
    %c0_i32_1 = arith.constant 0 : i32
    return %c0_i32, %c0_i32_0 : i32, i32
  }
  func.func @transform_3(%arg0: i32) -> (i32, i32, i32) {
    %c0_i32 = arith.constant 0 : i32
    %c0_i32_0 = arith.constant 0 : i32
    %c0_i32_1 = arith.constant 0 : i32
    %c0_i32_2 = arith.constant 0 : i32
    return %c0_i32, %c0_i32_0, %c0_i32_1 : i32, i32, i32
  }
  func.func @transform_4(%arg0: i32) -> (i32, i32) {
    %c0_i32 = arith.constant 0 : i32
    %c0_i32_0 = arith.constant 0 : i32
    %c0_i32_1 = arith.constant 0 : i32
    return %c0_i32, %c0_i32_0 : i32, i32
  }
  func.func @transform_5(%arg0: i32) -> (i32, i32) {
    %c0_i32 = arith.constant 0 : i32
    %c0_i32_0 = arith.constant 0 : i32
    %c0_i32_1 = arith.constant 0 : i32
    return %c0_i32, %c0_i32_0 : i32, i32
  }
  func.func @transform_6(%arg0: i32) -> (i32, i32) {
    %c0_i32 = arith.constant 0 : i32
    %c0_i32_0 = arith.constant 0 : i32
    %c0_i32_1 = arith.constant 0 : i32
    return %c0_i32, %c0_i32_0 : i32, i32
  }
  func.func @transform_7(%arg0: i32) -> (i32, i32, i32, i32) {
    %c0_i32 = arith.constant 0 : i32
    %c0_i32_0 = arith.constant 0 : i32
    %c0_i32_1 = arith.constant 0 : i32
    %c0_i32_2 = arith.constant 0 : i32
    return %arg0, %c0_i32, %c0_i32_0, %c0_i32_1 : i32, i32, i32, i32
  }
}

</mosaic_0001>

<llo_original>
// kernel: bottleneck_forward.1
$region0: #{bottleneck_forward.1}
  #allocation0 [shape = 'u32[]', space=smem, size = 0x4, offset = 0x4, fixed_abs, tag = 'smem constant byte address 0x4 - core index']
  #allocation1 [shape = 'u32[144,128]{1,0:T(1,128)}', space=vmem, size = 0x12000, scoped, tag = 'internal scratch']
  #allocation2 [shape = 'f32[8,10,10,128]{3,2,1,0:T(8,128)}', space=vmem, size = 0xa0000, scoped, tag = 'scratch operand']
  %s0 = inlined_call_operand.vmem [shape: f32[2,8,64,128], index: 0, kind: input, shape index: {}]
  %s1 = inlined_call_operand.vmem [shape: f32[128,128], index: 1, kind: input, shape index: {}]
  %s2 = inlined_call_operand.vmem [shape: f32[1,128], index: 2, kind: input, shape index: {}]
  %s3 = inlined_call_operand.vmem [shape: f32[9,128,32], index: 3, kind: input, shape index: {}]
  %s4 = inlined_call_operand.vmem [shape: f32[1,32], index: 4, kind: input, shape index: {}]
  %s5 = inlined_call_operand.vmem [shape: f32[32,128], index: 5, kind: input, shape index: {}]
  %s6 = inlined_call_operand.vmem [shape: f32[1,128], index: 6, kind: input, shape index: {}]
  %s7 = inlined_call_operand.hbm [shape: f32[2,8,64,128], index: 7, kind: output, shape index: {}]
  %s8 = sld [smem:[#allocation0]]
  $region61: #{bottleneck_forward.1} parent=0
    _
  %s10 = ssub.s32 1, %s8
  %s11 = scalar_select 0, %s10, %s8
  $region1: #{bottleneck_forward.1} parent=0
    #allocation3 [shape = 'u8[524288]{0}', space=vmem, size = 0x80000, scoped, tag = 'output window, operand 0']
    #allocation4 [shape = 's32[2]{0}', space=sflag, size = 0x8, scoped, tag = 'scoped memory for bottleneck_forward.1']
    %12 = vsyncpa [#allocation4], 0
    %s13 = scalar_lea.sflag [#allocation4], 1
    %14 = vsyncpa %s13, 0
    loop: start=0, step=1, limit=4
    $region2: #{bottleneck_forward.1} parent=1 // loop_pre_header
      _
    $region3: #{bottleneck_forward.1} parent=1 // loop_header
      %s16 = sphi 0, %s20
      %p17 = scmp.ge.s32.totalorder %s16, 4
      %s26 = sphi 0, %s28
      %s29 = sphi 0, %s26
      %s30 = sphi 0, %s29
      %s46 = sphi 0, %s30
      %s50 = sphi 0, %s50
      %s52 = sphi 0, %s50
      %s53 = sphi 0, %s52
      %s67 = sphi 0, %s53
      %s71 = sphi 0, %s71
      %s73 = sphi 0, %s71
      %s74 = sphi 0, %s73
      %s88 = sphi 0, %s74
      %s92 = sphi 0, %s92
      %s94 = sphi 0, %s92
      %s95 = sphi 0, %s94
      %s109 = sphi 0, %s95
      %s113 = sphi 0, %s113
      %s115 = sphi 0, %s113
      %s116 = sphi 0, %s115
      %s130 = sphi 0, %s116
      %s134 = sphi 0, %s134
      %s136 = sphi 0, %s134
      %s137 = sphi 0, %s136
      %s151 = sphi 0, %s137
      %s155 = sphi 0, %s155
      %s157 = sphi 0, %s155
      %s158 = sphi 0, %s157
      %s172 = sphi 0, %s158
      %s178 = sphi 0, %s180
      %s181 = sphi 0, %s178
      %s182 = sphi 0, %s181
      %s198 = sphi 0, %s182
    $region4: #{bottleneck_forward.1} parent=1 // loop_header_branch
      %19 = sbr.rel (%p17) target = $region8
    $region5: #{bottleneck_forward.1} parent=1 // loop_body
      %s21 = ssub.s32 %s16, 1
      %s22 = ssub.s32 %s16, 2
      %s23 = sadd.s32 %s16, 1
      %s24 = ssub.s32 %s16, %s23
      %p25 = scmp.eq.s32.totalorder %s24, 0
      %s27 = sadd.s32 %s26, 1
      %s28 = scalar_select %p25, %s26, %s27
      %p31 = pneg %p25
      %p32 = scmp.eq.s32.totalorder %s16, 1
      %p33 = por %p31, %p32
      %p34 = scmp.ne.s32.totalorder %s26, %s29
      %p35 = scmp.eq.s32.totalorder %s16, 0
      %p36 = por %p34, %p35
      %p37 = scmp.ne.s32.totalorder %s26, %s29
      %p38 = scmp.eq.s32.totalorder %s21, 1
      %p39 = por %p37, %p38
      %p40 = scmp.ne.s32.totalorder %s29, %s30
      %p41 = scmp.eq.s32.totalorder %s21, 0
      %p42 = por %p40, %p41
      %p43 = scmp.ne.s32.totalorder %s29, %s30
      %p44 = scmp.eq.s32.totalorder %s22, 1
      %p45 = por %p43, %p44
      %p47 = scmp.ne.s32.totalorder %s30, %s46
      %p48 = scmp.eq.s32.totalorder %s22, 0
      %p49 = por %p47, %p48
      %s51 = sadd.s32 %s50, 1
      %p54 = scmp.eq.s32.totalorder %s16, 1
      %p55 = scmp.ne.s32.totalorder %s50, %s52
      %p56 = scmp.eq.s32.totalorder %s16, 0
      %p57 = por %p55, %p56
      %p58 = scmp.ne.s32.totalorder %s50, %s52
      %p59 = scmp.eq.s32.totalorder %s21, 1
      %p60 = por %p58, %p59
      %p61 = scmp.ne.s32.totalorder %s52, %s53
      %p62 = scmp.eq.s32.totalorder %s21, 0
      %p63 = por %p61, %p62
      %p64 = scmp.ne.s32.totalorder %s52, %s53
      %p65 = scmp.eq.s32.totalorder %s22, 1
      %p66 = por %p64, %p65
      %p68 = scmp.ne.s32.totalorder %s53, %s67
      %p69 = scmp.eq.s32.totalorder %s22, 0
      %p70 = por %p68, %p69
      %s72 = sadd.s32 %s71, 1
      %p75 = scmp.eq.s32.totalorder %s16, 1
      %p76 = scmp.ne.s32.totalorder %s71, %s73
      %p77 = scmp.eq.s32.totalorder %s16, 0
      %p78 = por %p76, %p77
      %p79 = scmp.ne.s32.totalorder %s71, %s73
      %p80 = scmp.eq.s32.totalorder %s21, 1
      %p81 = por %p79, %p80
      %p82 = scmp.ne.s32.totalorder %s73, %s74
      %p83 = scmp.eq.s32.totalorder %s21, 0
      %p84 = por %p82, %p83
      %p85 = scmp.ne.s32.totalorder %s73, %s74
      %p86 = scmp.eq.s32.totalorder %s22, 1
      %p87 = por %p85, %p86
      %p89 = scmp.ne.s32.totalorder %s74, %s88
      %p90 = scmp.eq.s32.totalorder %s22, 0
      %p91 = por %p89, %p90
      %s93 = sadd.s32 %s92, 1
      %p96 = scmp.eq.s32.totalorder %s16, 1
      %p97 = scmp.ne.s32.totalorder %s92, %s94
      %p98 = scmp.eq.s32.totalorder %s16, 0
      %p99 = por %p97, %p98
      %p100 = scmp.ne.s32.totalorder %s92, %s94
      %p101 = scmp.eq.s32.totalorder %s21, 1
      %p102 = por %p100, %p101
      %p103 = scmp.ne.s32.totalorder %s94, %s95
      %p104 = scmp.eq.s32.totalorder %s21, 0
      %p105 = por %p103, %p104
      %p106 = scmp.ne.s32.totalorder %s94, %s95
      %p107 = scmp.eq.s32.totalorder %s22, 1
      %p108 = por %p106, %p107
      %p110 = scmp.ne.s32.totalorder %s95, %s109
      %p111 = scmp.eq.s32.totalorder %s22, 0
      %p112 = por %p110, %p111
      %s114 = sadd.s32 %s113, 1
      %p117 = scmp.eq.s32.totalorder %s16, 1
      %p118 = scmp.ne.s32.totalorder %s113, %s115
      %p119 = scmp.eq.s32.totalorder %s16, 0
      %p120 = por %p118, %p119
      %p121 = scmp.ne.s32.totalorder %s113, %s115
      %p122 = scmp.eq.s32.totalorder %s21, 1
      %p123 = por %p121, %p122
      %p124 = scmp.ne.s32.totalorder %s115, %s116
      %p125 = scmp.eq.s32.totalorder %s21, 0
      %p126 = por %p124, %p125
      %p127 = scmp.ne.s32.totalorder %s115, %s116
      %p128 = scmp.eq.s32.totalorder %s22, 1
      %p129 = por %p127, %p128
      %p131 = scmp.ne.s32.totalorder %s116, %s130
      %p132 = scmp.eq.s32.totalorder %s22, 0
      %p133 = por %p131, %p132
      %s135 = sadd.s32 %s134, 1
      %p138 = scmp.eq.s32.totalorder %s16, 1
      %p139 = scmp.ne.s32.totalorder %s134, %s136
      %p140 = scmp.eq.s32.totalorder %s16, 0
      %p141 = por %p139, %p140
      %p142 = scmp.ne.s32.totalorder %s134, %s136
      %p143 = scmp.eq.s32.totalorder %s21, 1
      %p144 = por %p142, %p143
      %p145 = scmp.ne.s32.totalorder %s136, %s137
      %p146 = scmp.eq.s32.totalorder %s21, 0
      %p147 = por %p145, %p146
      %p148 = scmp.ne.s32.totalorder %s136, %s137
      %p149 = scmp.eq.s32.totalorder %s22, 1
      %p150 = por %p148, %p149
      %p152 = scmp.ne.s32.totalorder %s137, %s151
      %p153 = scmp.eq.s32.totalorder %s22, 0
      %p154 = por %p152, %p153
      %s156 = sadd.s32 %s155, 1
      %p159 = scmp.eq.s32.totalorder %s16, 1
      %p160 = scmp.ne.s32.totalorder %s155, %s157
      %p161 = scmp.eq.s32.totalorder %s16, 0
      %p162 = por %p160, %p161
      %p163 = scmp.ne.s32.totalorder %s155, %s157
      %p164 = scmp.eq.s32.totalorder %s21, 1
      %p165 = por %p163, %p164
      %p166 = scmp.ne.s32.totalorder %s157, %s158
      %p167 = scmp.eq.s32.totalorder %s21, 0
      %p168 = por %p166, %p167
      %p169 = scmp.ne.s32.totalorder %s157, %s158
      %p170 = scmp.eq.s32.totalorder %s22, 1
      %p171 = por %p169, %p170
      %p173 = scmp.ne.s32.totalorder %s158, %s172
      %p174 = scmp.eq.s32.totalorder %s22, 0
      %p175 = por %p173, %p174
      %s176 = ssub.s32 %s16, %s23
      %p177 = scmp.eq.s32.totalorder %s176, 0
      %s179 = sadd.s32 %s178, 1
      %s180 = scalar_select %p177, %s178, %s179
      %p183 = pneg %p177
      %p184 = scmp.eq.s32.totalorder %s16, 1
      %p185 = por %p183, %p184
      %p186 = scmp.ne.s32.totalorder %s178, %s181
      %p187 = scmp.eq.s32.totalorder %s16, 0
      %p188 = por %p186, %p187
      %p189 = scmp.ne.s32.totalorder %s178, %s181
      %p190 = scmp.eq.s32.totalorder %s21, 1
      %p191 = por %p189, %p190
      %p192 = scmp.ne.s32.totalorder %s181, %s182
      %p193 = scmp.eq.s32.totalorder %s21, 0
      %p194 = por %p192, %p193
      %p195 = scmp.ne.s32.totalorder %s181, %s182
      %p196 = scmp.eq.s32.totalorder %s22, 1
      %p197 = por %p195, %p196
      %p199 = scmp.ne.s32.totalorder %s182, %s198
      %p200 = scmp.eq.s32.totalorder %s22, 0
      %p201 = por %p199, %p200
      %p202 = scmp.le.s32.totalorder 1, %s16
      %p203 = scmp.lt.s32.totalorder %s16, 3
      %p204 = pnand %p202, %p203
      %p205 = pneg %p204
      // Predicated region
      $region9: #{bottleneck_forward.1} parent=5 // pred_check
        _
      $region10: #{bottleneck_forward.1} parent=5 // pred_check_branch
        %207 = sbr.rel (%p204) target = $region12
      $region11: #{bottleneck_forward.1} parent=5 // pred_region
        %s208 = ssub.s32 %s16, 1
        // Predicated region
        $region13: #{bottleneck_forward.1} parent=11 // pred_check
          %p209 = pneg %p63
        $region14: #{bottleneck_forward.1} parent=11 // pred_check_branch
          %211 = sbr.rel (%p209) target = $region16
        $region15: #{bottleneck_forward.1} parent=11 // pred_region
          _
        $region16: #{bottleneck_forward.1} parent=11 // pred_fallthru
          _
        // Predicated region
        $region17: #{bottleneck_forward.1} parent=11 // pred_check
          %p212 = pneg %p84
        $region18: #{bottleneck_forward.1} parent=11 // pred_check_branch
          %214 = sbr.rel (%p212) target = $region20
        $region19: #{bottleneck_forward.1} parent=11 // pred_region
          _
        $region20: #{bottleneck_forward.1} parent=11 // pred_fallthru
          _
        // Predicated region
        $region21: #{bottleneck_forward.1} parent=11 // pred_check
          %p215 = pneg %p105
        $region22: #{bottleneck_forward.1} parent=11 // pred_check_branch
          %217 = sbr.rel (%p215) target = $region24
        $region23: #{bottleneck_forward.1} parent=11 // pred_region
          _
        $region24: #{bottleneck_forward.1} parent=11 // pred_fallthru
          _
        // Predicated region
        $region25: #{bottleneck_forward.1} parent=11 // pred_check
          %p218 = pneg %p126
        $region26: #{bottleneck_forward.1} parent=11 // pred_check_branch
          %220 = sbr.rel (%p218) target = $region28
        $region27: #{bottleneck_forward.1} parent=11 // pred_region
          _
        $region28: #{bottleneck_forward.1} parent=11 // pred_fallthru
          _
        // Predicated region
        $region29: #{bottleneck_forward.1} parent=11 // pred_check
          %p221 = pneg %p147
        $region30: #{bottleneck_forward.1} parent=11 // pred_check_branch
          %223 = sbr.rel (%p221) target = $region32
        $region31: #{bottleneck_forward.1} parent=11 // pred_region
          _
        $region32: #{bottleneck_forward.1} parent=11 // pred_fallthru
          _
        // Predicated region
        $region33: #{bottleneck_forward.1} parent=11 // pred_check
          %p224 = pneg %p168
        $region34: #{bottleneck_forward.1} parent=11 // pred_check_branch
          %226 = sbr.rel (%p224) target = $region36
        $region35: #{bottleneck_forward.1} parent=11 // pred_region
          _
        $region36: #{bottleneck_forward.1} parent=11 // pred_fallthru
          _
      $region12: #{bottleneck_forward.1} parent=5 // pred_fallthru
        _
      %p227 = scmp.lt.s32.totalorder %s16, 2
      // Predicated region
      $region37: #{bottleneck_forward.1} parent=5 // pred_check
        %p228 = pneg %p227
      $region38: #{bottleneck_forward.1} parent=5 // pred_check_branch
        %230 = sbr.rel (%p228) target = $region40
      $region39: #{bottleneck_forward.1} parent=5 // pred_region
        // Predicated region
        $region41: #{bottleneck_forward.1} parent=39 // pred_check
          %p231 = pneg %p36
        $region42: #{bottleneck_forward.1} parent=39 // pred_check_branch
          %233 = sbr.rel (%p231) target = $region44
        $region43: #{bottleneck_forward.1} parent=39 // pred_region
          %p234 = scmp.lt.s32.totalorder %s16, 1
          %s235 = scalar_select %p234, %s16, 1
          %s236 = smul.addr %s235, 64
          %s237 = smul.addr %s236, 8
          %s238 = scalar_lea.vmem %s0, %s237
        $region44: #{bottleneck_forward.1} parent=39 // pred_fallthru
          _
      $region40: #{bottleneck_forward.1} parent=5 // pred_fallthru
        _
      %p239 = scmp.le.s32.totalorder 1, %s16
      %p240 = scmp.lt.s32.totalorder %s16, 3
      %p241 = pnand %p239, %p240
      %p242 = pneg %p241
      // Predicated region
      $region45: #{bottleneck_forward.1} parent=5 // pred_check
        _
      $region46: #{bottleneck_forward.1} parent=5 // pred_check_branch
        %244 = sbr.rel (%p241) target = $region48
      $region47: #{bottleneck_forward.1} parent=5 // pred_region
        %s245 = ssub.s32 %s16, 1
        %p246 = scmp.lt.s32.totalorder %s21, 1
        %s247 = scalar_select %p246, %s21, 1
        %s248 = smul.addr %s247, 64
        %s249 = smul.addr %s248, 8
        %s250 = scalar_lea.vmem %s0, %s249
        %p251 = pneg %p42
        %p252 = pneg %p39
        %p253 = pneg %p63
        %p254 = pneg %p60
        %p255 = pneg %p84
        %p256 = pneg %p81
        %p257 = pneg %p105
        %p258 = pneg %p102
        %p259 = pneg %p126
        %p260 = pneg %p123
        %p261 = pneg %p147
        %p262 = pneg %p144
        %p263 = pneg %p168
        %p264 = pneg %p165
        %p265 = pneg %p194
        %p266 = pneg %p191
        %s267 = sand.u32 %s181, 1
        %s268 = scalar_lea.sflag [#allocation4], %s267
        %s269 = sand.u32 %s181, 1
        %s270 = smul.addr %s269, 512
        %s271 = scalar_lea.vmem [#allocation3], %s270
        %p272 = scmp.lt.s32.totalorder %s21, 1
        %s273 = scalar_select %p272, %s21, 1
        %s274 = smul.addr %s273, 64
        %s275 = smul.addr %s274, 8
        %s276 = scalar_lea.vmem %s0, %s275
        %v277 = vld [vmem:[%s276] sm:$0xff]
        %v278 = vld [vmem:[%s276 + $0x8] sm:$0xff]
        %v279 = vld [vmem:[%s276 + $0x10] sm:$0xff]
        %v280 = vld [vmem:[%s276 + $0x18] sm:$0xff]
        %v281 = vld [vmem:[%s276 + $0x20] sm:$0xff]
        %v282 = vld [vmem:[%s276 + $0x28] sm:$0xff]
        %v283 = vld [vmem:[%s276 + $0x30] sm:$0xff]
        %v284 = vld [vmem:[%s276 + $0x38] sm:$0xff]
        %v285 = vld [vmem:[%s276 + $0x40] sm:$0xff]
        %v286 = vld [vmem:[%s276 + $0x48] sm:$0xff]
        %v287 = vld [vmem:[%s276 + $0x50] sm:$0xff]
        %v288 = vld [vmem:[%s276 + $0x58] sm:$0xff]
        %v289 = vld [vmem:[%s276 + $0x60] sm:$0xff]
        %v290 = vld [vmem:[%s276 + $0x68] sm:$0xff]
        %v291 = vld [vmem:[%s276 + $0x70] sm:$0xff]
        %v292 = vld [vmem:[%s276 + $0x78] sm:$0xff]
        %v293 = vld [vmem:[%s276 + $0x80] sm:$0xff]
        %v294 = vld [vmem:[%s276 + $0x88] sm:$0xff]
        %v295 = vld [vmem:[%s276 + $0x90] sm:$0xff]
        %v296 = vld [vmem:[%s276 + $0x98] sm:$0xff]
        %v297 = vld [vmem:[%s276 + $0xa0] sm:$0xff]
        %v298 = vld [vmem:[%s276 + $0xa8] sm:$0xff]
        %v299 = vld [vmem:[%s276 + $0xb0] sm:$0xff]
        %v300 = vld [vmem:[%s276 + $0xb8] sm:$0xff]
        %v301 = vld [vmem:[%s276 + $0xc0] sm:$0xff]
        %v302 = vld [vmem:[%s276 + $0xc8] sm:$0xff]
        %v303 = vld [vmem:[%s276 + $0xd0] sm:$0xff]
        %v304 = vld [vmem:[%s276 + $0xd8] sm:$0xff]
        %v305 = vld [vmem:[%s276 + $0xe0] sm:$0xff]
        %v306 = vld [vmem:[%s276 + $0xe8] sm:$0xff]
        %v307 = vld [vmem:[%s276 + $0xf0] sm:$0xff]
        %v308 = vld [vmem:[%s276 + $0xf8] sm:$0xff]
        %v309 = vld [vmem:[%s276 + $0x100] sm:$0xff]
        %v310 = vld [vmem:[%s276 + $0x108] sm:$0xff]
        %v311 = vld [vmem:[%s276 + $0x110] sm:$0xff]
        %v312 = vld [vmem:[%s276 + $0x118] sm:$0xff]
        %v313 = vld [vmem:[%s276 + $0x120] sm:$0xff]
        %v314 = vld [vmem:[%s276 + $0x128] sm:$0xff]
        %v315 = vld [vmem:[%s276 + $0x130] sm:$0xff]
        %v316 = vld [vmem:[%s276 + $0x138] sm:$0xff]
        %v317 = vld [vmem:[%s276 + $0x140] sm:$0xff]
        %v318 = vld [vmem:[%s276 + $0x148] sm:$0xff]
        %v319 = vld [vmem:[%s276 + $0x150] sm:$0xff]
        %v320 = vld [vmem:[%s276 + $0x158] sm:$0xff]
        %v321 = vld [vmem:[%s276 + $0x160] sm:$0xff]
        %v322 = vld [vmem:[%s276 + $0x168] sm:$0xff]
        %v323 = vld [vmem:[%s276 + $0x170] sm:$0xff]
        %v324 = vld [vmem:[%s276 + $0x178] sm:$0xff]
        %v325 = vld [vmem:[%s276 + $0x180] sm:$0xff]
        %v326 = vld [vmem:[%s276 + $0x188] sm:$0xff]
        %v327 = vld [vmem:[%s276 + $0x190] sm:$0xff]
        %v328 = vld [vmem:[%s276 + $0x198] sm:$0xff]
        %v329 = vld [vmem:[%s276 + $0x1a0] sm:$0xff]
        %v330 = vld [vmem:[%s276 + $0x1a8] sm:$0xff]
        %v331 = vld [vmem:[%s276 + $0x1b0] sm:$0xff]
        %v332 = vld [vmem:[%s276 + $0x1b8] sm:$0xff]
        %v333 = vld [vmem:[%s276 + $0x1c0] sm:$0xff]
        %v334 = vld [vmem:[%s276 + $0x1c8] sm:$0xff]
        %v335 = vld [vmem:[%s276 + $0x1d0] sm:$0xff]
        %v336 = vld [vmem:[%s276 + $0x1d8] sm:$0xff]
        %v337 = vld [vmem:[%s276 + $0x1e0] sm:$0xff]
        %v338 = vld [vmem:[%s276 + $0x1e8] sm:$0xff]
        %v339 = vld [vmem:[%s276 + $0x1f0] sm:$0xff]
        %v340 = vld [vmem:[%s276 + $0x1f8] sm:$0xff]
        %v341 = vld [vmem:[%s1] sm:$0xff]
        %v342 = vld [vmem:[%s1 + $0x8] sm:$0xff]
        %v343 = vld [vmem:[%s1 + $0x10] sm:$0xff]
        %v344 = vld [vmem:[%s1 + $0x18] sm:$0xff]
        %v345 = vld [vmem:[%s1 + $0x20] sm:$0xff]
        %v346 = vld [vmem:[%s1 + $0x28] sm:$0xff]
        %v347 = vld [vmem:[%s1 + $0x30] sm:$0xff]
        %v348 = vld [vmem:[%s1 + $0x38] sm:$0xff]
        %v349 = vld [vmem:[%s1 + $0x40] sm:$0xff]
        %v350 = vld [vmem:[%s1 + $0x48] sm:$0xff]
        %v351 = vld [vmem:[%s1 + $0x50] sm:$0xff]
        %v352 = vld [vmem:[%s1 + $0x58] sm:$0xff]
        %v353 = vld [vmem:[%s1 + $0x60] sm:$0xff]
        %v354 = vld [vmem:[%s1 + $0x68] sm:$0xff]
        %v355 = vld [vmem:[%s1 + $0x70] sm:$0xff]
        %v356 = vld [vmem:[%s1 + $0x78] sm:$0xff]
        %v357 = vld [vmem:[%s2] sm:$0x1]
        %v359 = vlaneseq
        %v360 = vshrl.u32 %v359, 7
        %v361 = vsub.s32 0, %v360
        %v362 = vrot.slane %v357, %v361
        %364 = vmatprep.subr.mxu0 0.0
        %365 = vmatpush1.msra.mxu0 %v341
        %366 = vmatprep.subr.mxu0 0.0
        %367 = vmatpush1.msra.mxu0 %v342
        %368 = vmatprep.subr.mxu0 0.0
        %369 = vmatpush1.msra.mxu0 %v343
        %370 = vmatprep.subr.mxu0 0.0
        %371 = vmatpush1.msra.mxu0 %v344
        %372 = vmatprep.subr.mxu0 0.0
        %373 = vmatpush1.msra.mxu0 %v345
        %374 = vmatprep.subr.mxu0 0.0
        %375 = vmatpush1.msra.mxu0 %v346
        %376 = vmatprep.subr.mxu0 0.0
        %377 = vmatpush1.msra.mxu0 %v347
        %378 = vmatprep.subr.mxu0 0.0
        %379 = vmatpush1.msra.mxu0 %v348
        %380 = vmatprep.subr.mxu0 0.0
        %381 = vmatpush1.msra.mxu0 %v349
        %382 = vmatprep.subr.mxu0 0.0
        %383 = vmatpush1.msra.mxu0 %v350
        %384 = vmatprep.subr.mxu0 0.0
        %385 = vmatpush1.msra.mxu0 %v351
        %386 = vmatprep.subr.mxu0 0.0
        %387 = vmatpush1.msra.mxu0 %v352
        %388 = vmatprep.subr.mxu0 0.0
        %389 = vmatpush1.msra.mxu0 %v353
        %390 = vmatprep.subr.mxu0 0.0
        %391 = vmatpush1.msra.mxu0 %v354
        %392 = vmatprep.subr.mxu0 0.0
        %393 = vmatpush1.msra.mxu0 %v355
        %394 = vmatprep.subr.mxu0 0.0
        %395 = vmatpush1.msra.mxu0 %v356
        %396 = vmatprep.subr.mxu0 0.0
        %397 = vmatpush1.msra.mxu0 0.0
        %398 = vmatprep.subr.mxu0 0.0
        %399 = vmatpush1.msra.mxu0 0.0
        %400 = vmatprep.subr.mxu0 0.0
        %401 = vmatpush1.msra.mxu0 0.0
        %402 = vmatprep.subr.mxu0 0.0
        %403 = vmatpush1.msra.mxu0 0.0
        %404 = vmatprep.subr.mxu0 0.0
        %405 = vmatpush1.msra.mxu0 0.0
        %406 = vmatprep.subr.mxu0 0.0
        %407 = vmatpush1.msra.mxu0 0.0
        %408 = vmatprep.subr.mxu0 0.0
        %409 = vmatpush1.msra.mxu0 0.0
        %410 = vmatprep.subr.mxu0 0.0
        %411 = vmatpush1.msra.mxu0 0.0
        %412 = vmatprep.subr.mxu0 0.0
        %413 = vmatpush1.msra.mxu0 0.0
        %414 = vmatprep.subr.mxu0 0.0
        %415 = vmatpush1.msra.mxu0 0.0
        %416 = vmatprep.subr.mxu0 0.0
        %417 = vmatpush1.msra.mxu0 0.0
        %418 = vmatprep.subr.mxu0 0.0
        %419 = vmatpush1.msra.mxu0 0.0
        %420 = vmatprep.subr.mxu0 0.0
        %421 = vmatpush1.msra.mxu0 0.0
        %422 = vmatprep.subr.mxu0 0.0
        %423 = vmatpush1.msra.mxu0 0.0
        %424 = vmatprep.subr.mxu0 0.0
        %425 = vmatpush1.msra.mxu0 0.0
        %426 = vmatprep.subr.mxu0 0.0
        %427 = vmatpush1.msra.mxu0 0.0
        %428 = vmatprep.mubr.f32.mxu0 0.0
        %429 = vmatmul.mubr.f32.gmra.mrb[0].mxu0 %v277
        %v430 = vpop.f32.mrb[0].mxu0
        %v431 = vadd.f32 %v362, %v430
        %v432 = vpop.f32.mrb[0].mxu0
        %433 = vmatprep.mubr.f32.mxu0 0.0
        %434 = vmatmul.mubr.f32.gmra.mrb[0].mxu0 %v278
        %v435 = vpop.f32.mrb[0].mxu0
        %v436 = vadd.f32 %v362, %v435
        %v437 = vpop.f32.mrb[0].mxu0
        %438 = vmatprep.mubr.f32.mxu0 0.0
        %439 = vmatmul.mubr.f32.gmra.mrb[0].mxu0 %v279
        %v440 = vpop.f32.mrb[0].mxu0
        %v441 = vadd.f32 %v362, %v440
        %v442 = vpop.f32.mrb[0].mxu0
        %443 = vmatprep.mubr.f32.mxu0 0.0
        %444 = vmatmul.mubr.f32.gmra.mrb[0].mxu0 %v280
        %v445 = vpop.f32.mrb[0].mxu0
        %v446 = vadd.f32 %v362, %v445
        %v447 = vpop.f32.mrb[0].mxu0
        %448 = vmatprep.mubr.f32.mxu0 0.0
        %449 = vmatmul.mubr.f32.gmra.mrb[0].mxu0 %v281
        %v450 = vpop.f32.mrb[0].mxu0
        %v451 = vadd.f32 %v362, %v450
        %v452 = vpop.f32.mrb[0].mxu0
        %453 = vmatprep.mubr.f32.mxu0 0.0
        %454 = vmatmul.mubr.f32.gmra.mrb[0].mxu0 %v282
        %v455 = vpop.f32.mrb[0].mxu0
        %v456 = vadd.f32 %v362, %v455
        %v457 = vpop.f32.mrb[0].mxu0
        %458 = vmatprep.mubr.f32.mxu0 0.0
        %459 = vmatmul.mubr.f32.gmra.mrb[0].mxu0 %v283
        %v460 = vpop.f32.mrb[0].mxu0
        %v461 = vadd.f32 %v362, %v460
        %v462 = vpop.f32.mrb[0].mxu0
        %463 = vmatprep.mubr.f32.mxu0 0.0
        %464 = vmatmul.mubr.f32.gmra.mrb[0].mxu0 %v284
        %v465 = vpop.f32.mrb[0].mxu0
        %v466 = vadd.f32 %v362, %v465
        %v467 = vpop.f32.mrb[0].mxu0
        %468 = vmatprep.mubr.f32.mxu0 0.0
        %469 = vmatmul.mubr.f32.gmra.mrb[0].mxu0 %v285
        %v470 = vpop.f32.mrb[0].mxu0
        %v471 = vadd.f32 %v362, %v470
        %v472 = vpop.f32.mrb[0].mxu0
        %473 = vmatprep.mubr.f32.mxu0 0.0
        %474 = vmatmul.mubr.f32.gmra.mrb[0].mxu0 %v286
        %v475 = vpop.f32.mrb[0].mxu0
        %v476 = vadd.f32 %v362, %v475
        %v477 = vpop.f32.mrb[0].mxu0
        %478 = vmatprep.mubr.f32.mxu0 0.0
        %479 = vmatmul.mubr.f32.gmra.mrb[0].mxu0 %v287
        %v480 = vpop.f32.mrb[0].mxu0
        %v481 = vadd.f32 %v362, %v480
        %v482 = vpop.f32.mrb[0].mxu0
        %483 = vmatprep.mubr.f32.mxu0 0.0
        %484 = vmatmul.mubr.f32.gmra.mrb[0].mxu0 %v288
        %v485 = vpop.f32.mrb[0].mxu0
        %v486 = vadd.f32 %v362, %v485
        %v487 = vpop.f32.mrb[0].mxu0
        %488 = vmatprep.mubr.f32.mxu0 0.0
        %489 = vmatmul.mubr.f32.gmra.mrb[0].mxu0 %v289
        %v490 = vpop.f32.mrb[0].mxu0
        %v491 = vadd.f32 %v362, %v490
        %v492 = vpop.f32.mrb[0].mxu0
        %493 = vmatprep.mubr.f32.mxu0 0.0
        %494 = vmatmul.mubr.f32.gmra.mrb[0].mxu0 %v290
        %v495 = vpop.f32.mrb[0].mxu0
        %v496 = vadd.f32 %v362, %v495
        %v497 = vpop.f32.mrb[0].mxu0
        %498 = vmatprep.mubr.f32.mxu0 0.0
        %499 = vmatmul.mubr.f32.gmra.mrb[0].mxu0 %v291
        %v500 = vpop.f32.mrb[0].mxu0
        %v501 = vadd.f32 %v362, %v500
        %v502 = vpop.f32.mrb[0].mxu0
        %503 = vmatprep.mubr.f32.mxu0 0.0
        %504 = vmatmul.mubr.f32.gmra.mrb[0].mxu0 %v292
        %v505 = vpop.f32.mrb[0].mxu0
        %v506 = vadd.f32 %v362, %v505
        %v507 = vpop.f32.mrb[0].mxu0
        %508 = vmatprep.mubr.f32.mxu0 0.0
        %509 = vmatmul.mubr.f32.gmra.mrb[0].mxu0 %v293
        %v510 = vpop.f32.mrb[0].mxu0
        %v511 = vadd.f32 %v362, %v510
        %v512 = vpop.f32.mrb[0].mxu0
        %513 = vmatprep.mubr.f32.mxu0 0.0
        %514 = vmatmul.mubr.f32.gmra.mrb[0].mxu0 %v294
        %v515 = vpop.f32.mrb[0].mxu0
        %v516 = vadd.f32 %v362, %v515
        %v517 = vpop.f32.mrb[0].mxu0
        %518 = vmatprep.mubr.f32.mxu0 0.0
        %519 = vmatmul.mubr.f32.gmra.mrb[0].mxu0 %v295
        %v520 = vpop.f32.mrb[0].mxu0
        %v521 = vadd.f32 %v362, %v520
        %v522 = vpop.f32.mrb[0].mxu0
        %523 = vmatprep.mubr.f32.mxu0 0.0
        %524 = vmatmul.mubr.f32.gmra.mrb[0].mxu0 %v296
        %v525 = vpop.f32.mrb[0].mxu0
        %v526 = vadd.f32 %v362, %v525
        %v527 = vpop.f32.mrb[0].mxu0
        %528 = vmatprep.mubr.f32.mxu0 0.0
        %529 = vmatmul.mubr.f32.gmra.mrb[0].mxu0 %v297
        %v530 = vpop.f32.mrb[0].mxu0
        %v531 = vadd.f32 %v362, %v530
        %v532 = vpop.f32.mrb[0].mxu0
        %533 = vmatprep.mubr.f32.mxu0 0.0
        %534 = vmatmul.mubr.f32.gmra.mrb[0].mxu0 %v298
        %v535 = vpop.f32.mrb[0].mxu0
        %v536 = vadd.f32 %v362, %v535
        %v537 = vpop.f32.mrb[0].mxu0
        %538 = vmatprep.mubr.f32.mxu0 0.0
        %539 = vmatmul.mubr.f32.gmra.mrb[0].mxu0 %v299
        %v540 = vpop.f32.mrb[0].mxu0
        %v541 = vadd.f32 %v362, %v540
        %v542 = vpop.f32.mrb[0].mxu0
        %543 = vmatprep.mubr.f32.mxu0 0.0
        %544 = vmatmul.mubr.f32.gmra.mrb[0].mxu0 %v300
        %v545 = vpop.f32.mrb[0].mxu0
        %v546 = vadd.f32 %v362, %v545
        %v547 = vpop.f32.mrb[0].mxu0
        %548 = vmatprep.mubr.f32.mxu0 0.0
        %549 = vmatmul.mubr.f32.gmra.mrb[0].mxu0 %v301
        %v550 = vpop.f32.mrb[0].mxu0
        %v551 = vadd.f32 %v362, %v550
        %v552 = vpop.f32.mrb[0].mxu0
        %553 = vmatprep.mubr.f32.mxu0 0.0
        %554 = vmatmul.mubr.f32.gmra.mrb[0].mxu0 %v302
        %v555 = vpop.f32.mrb[0].mxu0
        %v556 = vadd.f32 %v362, %v555
        %v557 = vpop.f32.mrb[0].mxu0
        %558 = vmatprep.mubr.f32.mxu0 0.0
        %559 = vmatmul.mubr.f32.gmra.mrb[0].mxu0 %v303
        %v560 = vpop.f32.mrb[0].mxu0
        %v561 = vadd.f32 %v362, %v560
        %v562 = vpop.f32.mrb[0].mxu0
        %563 = vmatprep.mubr.f32.mxu0 0.0
        %564 = vmatmul.mubr.f32.gmra.mrb[0].mxu0 %v304
        %v565 = vpop.f32.mrb[0].mxu0
        %v566 = vadd.f32 %v362, %v565
        %v567 = vpop.f32.mrb[0].mxu0
        %568 = vmatprep.mubr.f32.mxu0 0.0
        %569 = vmatmul.mubr.f32.gmra.mrb[0].mxu0 %v305
        %v570 = vpop.f32.mrb[0].mxu0
        %v571 = vadd.f32 %v362, %v570
        %v572 = vpop.f32.mrb[0].mxu0
        %573 = vmatprep.mubr.f32.mxu0 0.0
        %574 = vmatmul.mubr.f32.gmra.mrb[0].mxu0 %v306
        %v575 = vpop.f32.mrb[0].mxu0
        %v576 = vadd.f32 %v362, %v575
        %v577 = vpop.f32.mrb[0].mxu0
        %578 = vmatprep.mubr.f32.mxu0 0.0
        %579 = vmatmul.mubr.f32.gmra.mrb[0].mxu0 %v307
        %v580 = vpop.f32.mrb[0].mxu0
        %v581 = vadd.f32 %v362, %v580
        %v582 = vpop.f32.mrb[0].mxu0
        %583 = vmatprep.mubr.f32.mxu0 0.0
        %584 = vmatmul.mubr.f32.gmra.mrb[0].mxu0 %v308
        %v585 = vpop.f32.mrb[0].mxu0
        %v586 = vadd.f32 %v362, %v585
        %v587 = vpop.f32.mrb[0].mxu0
        %588 = vmatprep.mubr.f32.mxu0 0.0
        %589 = vmatmul.mubr.f32.gmra.mrb[0].mxu0 %v309
        %v590 = vpop.f32.mrb[0].mxu0
        %v591 = vadd.f32 %v362, %v590
        %v592 = vpop.f32.mrb[0].mxu0
        %593 = vmatprep.mubr.f32.mxu0 0.0
        %594 = vmatmul.mubr.f32.gmra.mrb[0].mxu0 %v310
        %v595 = vpop.f32.mrb[0].mxu0
        %v596 = vadd.f32 %v362, %v595
        %v597 = vpop.f32.mrb[0].mxu0
        %598 = vmatprep.mubr.f32.mxu0 0.0
        %599 = vmatmul.mubr.f32.gmra.mrb[0].mxu0 %v311
        %v600 = vpop.f32.mrb[0].mxu0
        %v601 = vadd.f32 %v362, %v600
        %v602 = vpop.f32.mrb[0].mxu0
        %603 = vmatprep.mubr.f32.mxu0 0.0
        %604 = vmatmul.mubr.f32.gmra.mrb[0].mxu0 %v312
        %v605 = vpop.f32.mrb[0].mxu0
        %v606 = vadd.f32 %v362, %v605
        %v607 = vpop.f32.mrb[0].mxu0
        %608 = vmatprep.mubr.f32.mxu0 0.0
        %609 = vmatmul.mubr.f32.gmra.mrb[0].mxu0 %v313
        %v610 = vpop.f32.mrb[0].mxu0
        %v611 = vadd.f32 %v362, %v610
        %v612 = vpop.f32.mrb[0].mxu0
        %613 = vmatprep.mubr.f32.mxu0 0.0
        %614 = vmatmul.mubr.f32.gmra.mrb[0].mxu0 %v314
        %v615 = vpop.f32.mrb[0].mxu0
        %v616 = vadd.f32 %v362, %v615
        %v617 = vpop.f32.mrb[0].mxu0
        %618 = vmatprep.mubr.f32.mxu0 0.0
        %619 = vmatmul.mubr.f32.gmra.mrb[0].mxu0 %v315
        %v620 = vpop.f32.mrb[0].mxu0
        %v621 = vadd.f32 %v362, %v620
        %v622 = vpop.f32.mrb[0].mxu0
        %623 = vmatprep.mubr.f32.mxu0 0.0
        %624 = vmatmul.mubr.f32.gmra.mrb[0].mxu0 %v316
        %v625 = vpop.f32.mrb[0].mxu0
        %v626 = vadd.f32 %v362, %v625
        %v627 = vpop.f32.mrb[0].mxu0
        %628 = vmatprep.mubr.f32.mxu0 0.0
        %629 = vmatmul.mubr.f32.gmra.mrb[0].mxu0 %v317
        %v630 = vpop.f32.mrb[0].mxu0
        %v631 = vadd.f32 %v362, %v630
        %v632 = vpop.f32.mrb[0].mxu0
        %633 = vmatprep.mubr.f32.mxu0 0.0
        %634 = vmatmul.mubr.f32.gmra.mrb[0].mxu0 %v318
        %v635 = vpop.f32.mrb[0].mxu0
        %v636 = vadd.f32 %v362, %v635
        %v637 = vpop.f32.mrb[0].mxu0
        %638 = vmatprep.mubr.f32.mxu0 0.0
        %639 = vmatmul.mubr.f32.gmra.mrb[0].mxu0 %v319
        %v640 = vpop.f32.mrb[0].mxu0
        %v641 = vadd.f32 %v362, %v640
        %v642 = vpop.f32.mrb[0].mxu0
        %643 = vmatprep.mubr.f32.mxu0 0.0
        %644 = vmatmul.mubr.f32.gmra.mrb[0].mxu0 %v320
        %v645 = vpop.f32.mrb[0].mxu0
        %v646 = vadd.f32 %v362, %v645
        %v647 = vpop.f32.mrb[0].mxu0
        %648 = vmatprep.mubr.f32.mxu0 0.0
        %649 = vmatmul.mubr.f32.gmra.mrb[0].mxu0 %v321
        %v650 = vpop.f32.mrb[0].mxu0
        %v651 = vadd.f32 %v362, %v650
        %v652 = vpop.f32.mrb[0].mxu0
        %653 = vmatprep.mubr.f32.mxu0 0.0
        %654 = vmatmul.mubr.f32.gmra.mrb[0].mxu0 %v322
        %v655 = vpop.f32.mrb[0].mxu0
        %v656 = vadd.f32 %v362, %v655
        %v657 = vpop.f32.mrb[0].mxu0
        %658 = vmatprep.mubr.f32.mxu0 0.0
        %659 = vmatmul.mubr.f32.gmra.mrb[0].mxu0 %v323
        %v660 = vpop.f32.mrb[0].mxu0
        %v661 = vadd.f32 %v362, %v660
        %v662 = vpop.f32.mrb[0].mxu0
        %663 = vmatprep.mubr.f32.mxu0 0.0
        %664 = vmatmul.mubr.f32.gmra.mrb[0].mxu0 %v324
        %v665 = vpop.f32.mrb[0].mxu0
        %v666 = vadd.f32 %v362, %v665
        %v667 = vpop.f32.mrb[0].mxu0
        %668 = vmatprep.mubr.f32.mxu0 0.0
        %669 = vmatmul.mubr.f32.gmra.mrb[0].mxu0 %v325
        %v670 = vpop.f32.mrb[0].mxu0
        %v671 = vadd.f32 %v362, %v670
        %v672 = vpop.f32.mrb[0].mxu0
        %673 = vmatprep.mubr.f32.mxu0 0.0
        %674 = vmatmul.mubr.f32.gmra.mrb[0].mxu0 %v326
        %v675 = vpop.f32.mrb[0].mxu0
        %v676 = vadd.f32 %v362, %v675
        %v677 = vpop.f32.mrb[0].mxu0
        %678 = vmatprep.mubr.f32.mxu0 0.0
        %679 = vmatmul.mubr.f32.gmra.mrb[0].mxu0 %v327
        %v680 = vpop.f32.mrb[0].mxu0
        %v681 = vadd.f32 %v362, %v680
        %v682 = vpop.f32.mrb[0].mxu0
        %683 = vmatprep.mubr.f32.mxu0 0.0
        %684 = vmatmul.mubr.f32.gmra.mrb[0].mxu0 %v328
        %v685 = vpop.f32.mrb[0].mxu0
        %v686 = vadd.f32 %v362, %v685
        %v687 = vpop.f32.mrb[0].mxu0
        %688 = vmatprep.mubr.f32.mxu0 0.0
        %689 = vmatmul.mubr.f32.gmra.mrb[0].mxu0 %v329
        %v690 = vpop.f32.mrb[0].mxu0
        %v691 = vadd.f32 %v362, %v690
        %v692 = vpop.f32.mrb[0].mxu0
        %693 = vmatprep.mubr.f32.mxu0 0.0
        %694 = vmatmul.mubr.f32.gmra.mrb[0].mxu0 %v330
        %v695 = vpop.f32.mrb[0].mxu0
        %v696 = vadd.f32 %v362, %v695
        %v697 = vpop.f32.mrb[0].mxu0
        %698 = vmatprep.mubr.f32.mxu0 0.0
        %699 = vmatmul.mubr.f32.gmra.mrb[0].mxu0 %v331
        %v700 = vpop.f32.mrb[0].mxu0
        %v701 = vadd.f32 %v362, %v700
        %v702 = vpop.f32.mrb[0].mxu0
        %703 = vmatprep.mubr.f32.mxu0 0.0
        %704 = vmatmul.mubr.f32.gmra.mrb[0].mxu0 %v332
        %v705 = vpop.f32.mrb[0].mxu0
        %v706 = vadd.f32 %v362, %v705
        %v707 = vpop.f32.mrb[0].mxu0
        %708 = vmatprep.mubr.f32.mxu0 0.0
        %709 = vmatmul.mubr.f32.gmra.mrb[0].mxu0 %v333
        %v710 = vpop.f32.mrb[0].mxu0
        %v711 = vadd.f32 %v362, %v710
        %v712 = vpop.f32.mrb[0].mxu0
        %713 = vmatprep.mubr.f32.mxu0 0.0
        %714 = vmatmul.mubr.f32.gmra.mrb[0].mxu0 %v334
        %v715 = vpop.f32.mrb[0].mxu0
        %v716 = vadd.f32 %v362, %v715
        %v717 = vpop.f32.mrb[0].mxu0
        %718 = vmatprep.mubr.f32.mxu0 0.0
        %719 = vmatmul.mubr.f32.gmra.mrb[0].mxu0 %v335
        %v720 = vpop.f32.mrb[0].mxu0
        %v721 = vadd.f32 %v362, %v720
        %v722 = vpop.f32.mrb[0].mxu0
        %723 = vmatprep.mubr.f32.mxu0 0.0
        %724 = vmatmul.mubr.f32.gmra.mrb[0].mxu0 %v336
        %v725 = vpop.f32.mrb[0].mxu0
        %v726 = vadd.f32 %v362, %v725
        %v727 = vpop.f32.mrb[0].mxu0
        %728 = vmatprep.mubr.f32.mxu0 0.0
        %729 = vmatmul.mubr.f32.gmra.mrb[0].mxu0 %v337
        %v730 = vpop.f32.mrb[0].mxu0
        %v731 = vadd.f32 %v362, %v730
        %v732 = vpop.f32.mrb[0].mxu0
        %733 = vmatprep.mubr.f32.mxu0 0.0
        %734 = vmatmul.mubr.f32.gmra.mrb[0].mxu0 %v338
        %v735 = vpop.f32.mrb[0].mxu0
        %v736 = vadd.f32 %v362, %v735
        %v737 = vpop.f32.mrb[0].mxu0
        %738 = vmatprep.mubr.f32.mxu0 0.0
        %739 = vmatmul.mubr.f32.gmra.mrb[0].mxu0 %v339
        %v740 = vpop.f32.mrb[0].mxu0
        %v741 = vadd.f32 %v362, %v740
        %v742 = vpop.f32.mrb[0].mxu0
        %743 = vmatprep.mubr.f32.mxu0 0.0
        %744 = vmatmul.mubr.f32.gmra.mrb[0].mxu0 %v340
        %v745 = vpop.f32.mrb[0].mxu0
        %v746 = vadd.f32 %v362, %v745
        %v747 = vpop.f32.mrb[0].mxu0
        %748 = vdwg.mxu0
        %v749 = vmax.f32 %v431, 0.0
        %v750 = vmax.f32 %v436, 0.0
        %v751 = vmax.f32 %v441, 0.0
        %v752 = vmax.f32 %v446, 0.0
        %v753 = vmax.f32 %v451, 0.0
        %v754 = vmax.f32 %v456, 0.0
        %v755 = vmax.f32 %v461, 0.0
        %v756 = vmax.f32 %v466, 0.0
        %v757 = vmax.f32 %v471, 0.0
        %v758 = vmax.f32 %v476, 0.0
        %v759 = vmax.f32 %v481, 0.0
        %v760 = vmax.f32 %v486, 0.0
        %v761 = vmax.f32 %v491, 0.0
        %v762 = vmax.f32 %v496, 0.0
        %v763 = vmax.f32 %v501, 0.0
        %v764 = vmax.f32 %v506, 0.0
        %v765 = vmax.f32 %v511, 0.0
        %v766 = vmax.f32 %v516, 0.0
        %v767 = vmax.f32 %v521, 0.0
        %v768 = vmax.f32 %v526, 0.0
        %v769 = vmax.f32 %v531, 0.0
        %v770 = vmax.f32 %v536, 0.0
        %v771 = vmax.f32 %v541, 0.0
        %v772 = vmax.f32 %v546, 0.0
        %v773 = vmax.f32 %v551, 0.0
        %v774 = vmax.f32 %v556, 0.0
        %v775 = vmax.f32 %v561, 0.0
        %v776 = vmax.f32 %v566, 0.0
        %v777 = vmax.f32 %v571, 0.0
        %v778 = vmax.f32 %v576, 0.0
        %v779 = vmax.f32 %v581, 0.0
        %v780 = vmax.f32 %v586, 0.0
        %v781 = vmax.f32 %v591, 0.0
        %v782 = vmax.f32 %v596, 0.0
        %v783 = vmax.f32 %v601, 0.0
        %v784 = vmax.f32 %v606, 0.0
        %v785 = vmax.f32 %v611, 0.0
        %v786 = vmax.f32 %v616, 0.0
        %v787 = vmax.f32 %v621, 0.0
        %v788 = vmax.f32 %v626, 0.0
        %v789 = vmax.f32 %v631, 0.0
        %v790 = vmax.f32 %v636, 0.0
        %v791 = vmax.f32 %v641, 0.0
        %v792 = vmax.f32 %v646, 0.0
        %v793 = vmax.f32 %v651, 0.0
        %v794 = vmax.f32 %v656, 0.0
        %v795 = vmax.f32 %v661, 0.0
        %v796 = vmax.f32 %v666, 0.0
        %v797 = vmax.f32 %v671, 0.0
        %v798 = vmax.f32 %v676, 0.0
        %v799 = vmax.f32 %v681, 0.0
        %v800 = vmax.f32 %v686, 0.0
        %v801 = vmax.f32 %v691, 0.0
        %v802 = vmax.f32 %v696, 0.0
        %v803 = vmax.f32 %v701, 0.0
        %v804 = vmax.f32 %v706, 0.0
        %v805 = vmax.f32 %v711, 0.0
        %v806 = vmax.f32 %v716, 0.0
        %v807 = vmax.f32 %v721, 0.0
        %v808 = vmax.f32 %v726, 0.0
        %v809 = vmax.f32 %v731, 0.0
        %v810 = vmax.f32 %v736, 0.0
        %v811 = vmax.f32 %v741, 0.0
        %v812 = vmax.f32 %v746, 0.0
        %v813 = vlaneseq
        %v814 = vand.u32 %v813, 127
        %vm815 = vcmp.lt.s32.totalorder %v814, 32
        %vm816 = vcmp.ge.s32.totalorder %v814, 64
        %vm817 = vcmp.lt.s32.totalorder %v814, 96
        %vm818 = vmand %vm816, %vm817
        %v819 = vsel %vm818, 1, 0
        %vm820 = vcmp.eq.s32.totalorder %v819, 1
        %v821 = vsel %vm820, %v757, %v749
        %v822 = vsel %vm820, %v758, %v750
        %v823 = vsel %vm820, %v759, %v751
        %v824 = vsel %vm820, %v760, %v752
        %v825 = vsel %vm820, %v761, %v753
        %v826 = vsel %vm820, %v762, %v754
        %v827 = vsel %vm820, %v763, %v755
        %v828 = vsel %vm820, %v764, %v756
        %v829 = vsel %vm820, %v765, %v757
        %v830 = vsel %vm820, %v766, %v758
        %v831 = vsel %vm820, %v767, %v759
        %v832 = vsel %vm820, %v768, %v760
        %v833 = vsel %vm820, %v769, %v761
        %v834 = vsel %vm820, %v770, %v762
        %v835 = vsel %vm820, %v771, %v763
        %v836 = vsel %vm820, %v772, %v764
        %v837 = vsel %vm820, %v773, %v765
        %v838 = vsel %vm820, %v774, %v766
        %v839 = vsel %vm820, %v775, %v767
        %v840 = vsel %vm820, %v776, %v768
        %v841 = vsel %vm820, %v777, %v769
        %v842 = vsel %vm820, %v778, %v770
        %v843 = vsel %vm820, %v779, %v771
        %v844 = vsel %vm820, %v780, %v772
        %v845 = vsel %vm820, %v781, %v773
        %v846 = vsel %vm820, %v782, %v774
        %v847 = vsel %vm820, %v783, %v775
        %v848 = vsel %vm820, %v784, %v776
        %v849 = vsel %vm820, %v785, %v777
        %v850 = vsel %vm820, %v786, %v778
        %v851 = vsel %vm820, %v787, %v779
        %v852 = vsel %vm820, %v788, %v780
        %v853 = vsel %vm820, %v789, %v781
        %v854 = vsel %vm820, %v790, %v782
        %v855 = vsel %vm820, %v791, %v783
        %v856 = vsel %vm820, %v792, %v784
        %v857 = vsel %vm820, %v793, %v785
        %v858 = vsel %vm820, %v794, %v786
        %v859 = vsel %vm820, %v795, %v787
        %v860 = vsel %vm820, %v796, %v788
        %v861 = vsel %vm820, %v797, %v789
        %v862 = vsel %vm820, %v798, %v790
        %v863 = vsel %vm820, %v799, %v791
        %v864 = vsel %vm820, %v800, %v792
        %v865 = vsel %vm820, %v801, %v793
        %v866 = vsel %vm820, %v802, %v794
        %v867 = vsel %vm820, %v803, %v795
        %v868 = vsel %vm820, %v804, %v796
        %v869 = vsel %vm820, %v805, %v797
        %v870 = vsel %vm820, %v806, %v798
        %v871 = vsel %vm820, %v807, %v799
        %v872 = vsel %vm820, %v808, %v800
        %v873 = vsel %vm820, %v809, %v801
        %v874 = vsel %vm820, %v810, %v802
        %v875 = vsel %vm820, %v811, %v803
        %v876 = vsel %vm820, %v812, %v804
        %v877 = vsel %vm820, 0.0, %v805
        %v878 = vsel %vm820, 0.0, %v806
        %v879 = vsel %vm820, 0.0, %v807
        %v880 = vsel %vm820, 0.0, %v808
        %v881 = vsel %vm820, 0.0, %v809
        %v882 = vsel %vm820, 0.0, %v810
        %v883 = vsel %vm820, 0.0, %v811
        %v884 = vsel %vm820, 0.0, %v812
        %v885 = vsel %vm815, 1, 0
        %vm886 = vcmp.eq.s32.totalorder %v885, 1
        %v887 = vsel %vm886, 0.0, %v821
        %v888 = vsel %vm886, 0.0, %v822
        %v889 = vsel %vm886, 0.0, %v823
        %v890 = vsel %vm886, 0.0, %v824
        %v891 = vsel %vm886, 0.0, %v825
        %v892 = vsel %vm886, 0.0, %v826
        %v893 = vsel %vm886, 0.0, %v827
        %v894 = vsel %vm886, 0.0, %v828
        %v895 = vsel %vm886, %v749, %v829
        %v896 = vsel %vm886, %v750, %v830
        %v897 = vsel %vm886, %v751, %v831
        %v898 = vsel %vm886, %v752, %v832
        %v899 = vsel %vm886, %v753, %v833
        %v900 = vsel %vm886, %v754, %v834
        %v901 = vsel %vm886, %v755, %v835
        %v902 = vsel %vm886, %v756, %v836
        %v903 = vsel %vm886, %v757, %v837
        %v904 = vsel %vm886, %v758, %v838
        %v905 = vsel %vm886, %v759, %v839
        %v906 = vsel %vm886, %v760, %v840
        %v907 = vsel %vm886, %v761, %v841
        %v908 = vsel %vm886, %v762, %v842
        %v909 = vsel %vm886, %v763, %v843
        %v910 = vsel %vm886, %v764, %v844
        %v911 = vsel %vm886, %v765, %v845
        %v912 = vsel %vm886, %v766, %v846
        %v913 = vsel %vm886, %v767, %v847
        %v914 = vsel %vm886, %v768, %v848
        %v915 = vsel %vm886, %v769, %v849
        %v916 = vsel %vm886, %v770, %v850
        %v917 = vsel %vm886, %v771, %v851
        %v918 = vsel %vm886, %v772, %v852
        %v919 = vsel %vm886, %v773, %v853
        %v920 = vsel %vm886, %v774, %v854
        %v921 = vsel %vm886, %v775, %v855
        %v922 = vsel %vm886, %v776, %v856
        %v923 = vsel %vm886, %v777, %v857
        %v924 = vsel %vm886, %v778, %v858
        %v925 = vsel %vm886, %v779, %v859
        %v926 = vsel %vm886, %v780, %v860
        %v927 = vsel %vm886, %v781, %v861
        %v928 = vsel %vm886, %v782, %v862
        %v929 = vsel %vm886, %v783, %v863
        %v930 = vsel %vm886, %v784, %v864
        %v931 = vsel %vm886, %v785, %v865
        %v932 = vsel %vm886, %v786, %v866
        %v933 = vsel %vm886, %v787, %v867
        %v934 = vsel %vm886, %v788, %v868
        %v935 = vsel %vm886, %v789, %v869
        %v936 = vsel %vm886, %v790, %v870
        %v937 = vsel %vm886, %v791, %v871
        %v938 = vsel %vm886, %v792, %v872
        %v939 = vsel %vm886, %v793, %v873
        %v940 = vsel %vm886, %v794, %v874
        %v941 = vsel %vm886, %v795, %v875
        %v942 = vsel %vm886, %v796, %v876
        %v943 = vsel %vm886, %v797, %v877
        %v944 = vsel %vm886, %v798, %v878
        %v945 = vsel %vm886, %v799, %v879
        %v946 = vsel %vm886, %v800, %v880
        %v947 = vsel %vm886, %v801, %v881
        %v948 = vsel %vm886, %v802, %v882
        %v949 = vsel %vm886, %v803, %v883
        %v950 = vsel %vm886, %v804, %v884
        %951 = vst [vmem:[#allocation2] sm:$0xff] 0.0
        %952 = vst [vmem:[#allocation2 + $0x8] sm:$0x3] 0.0
        %953 = vst [vmem:[#allocation2 + $0x10] sm:$0xff] 0.0
        %954 = vst [vmem:[#allocation2 + $0x18] sm:$0x3] 0.0
        %955 = vst [vmem:[#allocation2 + $0x20] sm:$0xff] 0.0
        %956 = vst [vmem:[#allocation2 + $0x28] sm:$0x3] 0.0
        %957 = vst [vmem:[#allocation2 + $0x30] sm:$0xff] 0.0
        %958 = vst [vmem:[#allocation2 + $0x38] sm:$0x3] 0.0
        %959 = vst [vmem:[#allocation2 + $0x40] sm:$0xff] 0.0
        %960 = vst [vmem:[#allocation2 + $0x48] sm:$0x3] 0.0
        %961 = vst [vmem:[#allocation2 + $0x50] sm:$0xff] 0.0
        %962 = vst [vmem:[#allocation2 + $0x58] sm:$0x3] 0.0
        %963 = vst [vmem:[#allocation2 + $0x60] sm:$0xff] 0.0
        %964 = vst [vmem:[#allocation2 + $0x68] sm:$0x3] 0.0
        %965 = vst [vmem:[#allocation2 + $0x70] sm:$0xff] 0.0
        %966 = vst [vmem:[#allocation2 + $0x78] sm:$0x3] 0.0
        %967 = vst [vmem:[#allocation2 + $0x80] sm:$0xff] 0.0
        %968 = vst [vmem:[#allocation2 + $0x88] sm:$0x3] 0.0
        %969 = vst [vmem:[#allocation2 + $0x90] sm:$0xff] 0.0
        %970 = vst [vmem:[#allocation2 + $0x98] sm:$0x3] 0.0
        %971 = vst [vmem:[#allocation2 + $0xa0] sm:$0xff] 0.0
        %972 = vst [vmem:[#allocation2 + $0xa8] sm:$0x3] 0.0
        %973 = vst [vmem:[#allocation2 + $0xb0] sm:$0xff] 0.0
        %974 = vst [vmem:[#allocation2 + $0xb8] sm:$0x3] 0.0
        %975 = vst [vmem:[#allocation2 + $0xc0] sm:$0xff] 0.0
        %976 = vst [vmem:[#allocation2 + $0xc8] sm:$0x3] 0.0
        %977 = vst [vmem:[#allocation2 + $0xd0] sm:$0xff] 0.0
        %978 = vst [vmem:[#allocation2 + $0xd8] sm:$0x3] 0.0
        %979 = vst [vmem:[#allocation2 + $0xe0] sm:$0xff] 0.0
        %980 = vst [vmem:[#allocation2 + $0xe8] sm:$0x3] 0.0
        %981 = vst [vmem:[#allocation2 + $0xf0] sm:$0xff] 0.0
        %982 = vst [vmem:[#allocation2 + $0xf8] sm:$0x3] 0.0
        %983 = vst [vmem:[#allocation2 + $0x100] sm:$0xff] 0.0
        %984 = vst [vmem:[#allocation2 + $0x108] sm:$0x3] 0.0
        %985 = vst [vmem:[#allocation2 + $0x110] sm:$0xff] 0.0
        %986 = vst [vmem:[#allocation2 + $0x118] sm:$0x3] 0.0
        %987 = vst [vmem:[#allocation2 + $0x120] sm:$0xff] 0.0
        %988 = vst [vmem:[#allocation2 + $0x128] sm:$0x3] 0.0
        %989 = vst [vmem:[#allocation2 + $0x130] sm:$0xff] 0.0
        %990 = vst [vmem:[#allocation2 + $0x138] sm:$0x3] 0.0
        %991 = vst [vmem:[#allocation2 + $0x140] sm:$0xff] 0.0
        %992 = vst [vmem:[#allocation2 + $0x148] sm:$0x3] 0.0
        %993 = vst [vmem:[#allocation2 + $0x150] sm:$0xff] 0.0
        %994 = vst [vmem:[#allocation2 + $0x158] sm:$0x3] 0.0
        %995 = vst [vmem:[#allocation2 + $0x160] sm:$0xff] 0.0
        %996 = vst [vmem:[#allocation2 + $0x168] sm:$0x3] 0.0
        %997 = vst [vmem:[#allocation2 + $0x170] sm:$0xff] 0.0
        %998 = vst [vmem:[#allocation2 + $0x178] sm:$0x3] 0.0
        %999 = vst [vmem:[#allocation2 + $0x180] sm:$0xff] 0.0
        %1000 = vst [vmem:[#allocation2 + $0x188] sm:$0x3] 0.0
        %1001 = vst [vmem:[#allocation2 + $0x190] sm:$0xff] 0.0
        %1002 = vst [vmem:[#allocation2 + $0x198] sm:$0x3] 0.0
        %1003 = vst [vmem:[#allocation2 + $0x1a0] sm:$0xff] 0.0
        %1004 = vst [vmem:[#allocation2 + $0x1a8] sm:$0x3] 0.0
        %1005 = vst [vmem:[#allocation2 + $0x1b0] sm:$0xff] 0.0
        %1006 = vst [vmem:[#allocation2 + $0x1b8] sm:$0x3] 0.0
        %1007 = vst [vmem:[#allocation2 + $0x1c0] sm:$0xff] 0.0
        %1008 = vst [vmem:[#allocation2 + $0x1c8] sm:$0x3] 0.0
        %1009 = vst [vmem:[#allocation2 + $0x1d0] sm:$0xff] 0.0
        %1010 = vst [vmem:[#allocation2 + $0x1d8] sm:$0x3] 0.0
        %1011 = vst [vmem:[#allocation2 + $0x1e0] sm:$0xff] 0.0
        %1012 = vst [vmem:[#allocation2 + $0x1e8] sm:$0x3] 0.0
        %1013 = vst [vmem:[#allocation2 + $0x1f0] sm:$0xff] 0.0
        %1014 = vst [vmem:[#allocation2 + $0x1f8] sm:$0x3] 0.0
        %1015 = vst [vmem:[#allocation2 + $0x200] sm:$0xff] 0.0
        %1016 = vst [vmem:[#allocation2 + $0x208] sm:$0x3] 0.0
        %1017 = vst [vmem:[#allocation2 + $0x210] sm:$0xff] 0.0
        %1018 = vst [vmem:[#allocation2 + $0x218] sm:$0x3] 0.0
        %1019 = vst [vmem:[#allocation2 + $0x220] sm:$0xff] 0.0
        %1020 = vst [vmem:[#allocation2 + $0x228] sm:$0x3] 0.0
        %1021 = vst [vmem:[#allocation2 + $0x230] sm:$0xff] 0.0
        %1022 = vst [vmem:[#allocation2 + $0x238] sm:$0x3] 0.0
        %1023 = vst [vmem:[#allocation2 + $0x240] sm:$0xff] 0.0
        %1024 = vst [vmem:[#allocation2 + $0x248] sm:$0x3] 0.0
        %1025 = vst [vmem:[#allocation2 + $0x250] sm:$0xff] 0.0
        %1026 = vst [vmem:[#allocation2 + $0x258] sm:$0x3] 0.0
        %1027 = vst [vmem:[#allocation2 + $0x260] sm:$0xff] 0.0
        %1028 = vst [vmem:[#allocation2 + $0x268] sm:$0x3] 0.0
        %1029 = vst [vmem:[#allocation2 + $0x270] sm:$0xff] 0.0
        %1030 = vst [vmem:[#allocation2 + $0x278] sm:$0x3] 0.0
        %1031 = vst [vmem:[#allocation2 + $0x280] sm:$0xff] 0.0
        %1032 = vst [vmem:[#allocation2 + $0x288] sm:$0x3] 0.0
        %1033 = vst [vmem:[#allocation2 + $0x290] sm:$0xff] 0.0
        %1034 = vst [vmem:[#allocation2 + $0x298] sm:$0x3] 0.0
        %1035 = vst [vmem:[#allocation2 + $0x2a0] sm:$0xff] 0.0
        %1036 = vst [vmem:[#allocation2 + $0x2a8] sm:$0x3] 0.0
        %1037 = vst [vmem:[#allocation2 + $0x2b0] sm:$0xff] 0.0
        %1038 = vst [vmem:[#allocation2 + $0x2b8] sm:$0x3] 0.0
        %1039 = vst [vmem:[#allocation2 + $0x2c0] sm:$0xff] 0.0
        %1040 = vst [vmem:[#allocation2 + $0x2c8] sm:$0x3] 0.0
        %1041 = vst [vmem:[#allocation2 + $0x2d0] sm:$0xff] 0.0
        %1042 = vst [vmem:[#allocation2 + $0x2d8] sm:$0x3] 0.0
        %1043 = vst [vmem:[#allocation2 + $0x2e0] sm:$0xff] 0.0
        %1044 = vst [vmem:[#allocation2 + $0x2e8] sm:$0x3] 0.0
        %1045 = vst [vmem:[#allocation2 + $0x2f0] sm:$0xff] 0.0
        %1046 = vst [vmem:[#allocation2 + $0x2f8] sm:$0x3] 0.0
        %1047 = vst [vmem:[#allocation2 + $0x300] sm:$0xff] 0.0
        %1048 = vst [vmem:[#allocation2 + $0x308] sm:$0x3] 0.0
        %1049 = vst [vmem:[#allocation2 + $0x310] sm:$0xff] 0.0
        %1050 = vst [vmem:[#allocation2 + $0x318] sm:$0x3] 0.0
        %1051 = vst [vmem:[#allocation2 + $0x320] sm:$0xff] 0.0
        %1052 = vst [vmem:[#allocation2 + $0x328] sm:$0x3] 0.0
        %1053 = vst [vmem:[#allocation2 + $0x330] sm:$0xff] 0.0
        %1054 = vst [vmem:[#allocation2 + $0x338] sm:$0x3] 0.0
        %1055 = vst [vmem:[#allocation2 + $0x340] sm:$0xff] 0.0
        %1056 = vst [vmem:[#allocation2 + $0x348] sm:$0x3] 0.0
        %1057 = vst [vmem:[#allocation2 + $0x350] sm:$0xff] 0.0
        %1058 = vst [vmem:[#allocation2 + $0x358] sm:$0x3] 0.0
        %1059 = vst [vmem:[#allocation2 + $0x360] sm:$0xff] 0.0
        %1060 = vst [vmem:[#allocation2 + $0x368] sm:$0x3] 0.0
        %1061 = vst [vmem:[#allocation2 + $0x370] sm:$0xff] 0.0
        %1062 = vst [vmem:[#allocation2 + $0x378] sm:$0x3] 0.0
        %1063 = vst [vmem:[#allocation2 + $0x380] sm:$0xff] 0.0
        %1064 = vst [vmem:[#allocation2 + $0x388] sm:$0x3] 0.0
        %1065 = vst [vmem:[#allocation2 + $0x390] sm:$0xff] 0.0
        %1066 = vst [vmem:[#allocation2 + $0x398] sm:$0x3] 0.0
        %1067 = vst [vmem:[#allocation2 + $0x3a0] sm:$0xff] 0.0
        %1068 = vst [vmem:[#allocation2 + $0x3a8] sm:$0x3] 0.0
        %1069 = vst [vmem:[#allocation2 + $0x3b0] sm:$0xff] 0.0
        %1070 = vst [vmem:[#allocation2 + $0x3b8] sm:$0x3] 0.0
        %1071 = vst [vmem:[#allocation2 + $0x3c0] sm:$0xff] 0.0
        %1072 = vst [vmem:[#allocation2 + $0x3c8] sm:$0x3] 0.0
        %1073 = vst [vmem:[#allocation2 + $0x3d0] sm:$0xff] 0.0
        %1074 = vst [vmem:[#allocation2 + $0x3d8] sm:$0x3] 0.0
        %1075 = vst [vmem:[#allocation2 + $0x3e0] sm:$0xff] 0.0
        %1076 = vst [vmem:[#allocation2 + $0x3e8] sm:$0x3] 0.0
        %1077 = vst [vmem:[#allocation2 + $0x3f0] sm:$0xff] 0.0
        %1078 = vst [vmem:[#allocation2 + $0x3f8] sm:$0x3] 0.0
        %1079 = vst [vmem:[#allocation2 + $0x400] sm:$0xff] 0.0
        %1080 = vst [vmem:[#allocation2 + $0x408] sm:$0x3] 0.0
        %1081 = vst [vmem:[#allocation2 + $0x410] sm:$0xff] 0.0
        %1082 = vst [vmem:[#allocation2 + $0x418] sm:$0x3] 0.0
        %1083 = vst [vmem:[#allocation2 + $0x420] sm:$0xff] 0.0
        %1084 = vst [vmem:[#allocation2 + $0x428] sm:$0x3] 0.0
        %1085 = vst [vmem:[#allocation2 + $0x430] sm:$0xff] 0.0
        %1086 = vst [vmem:[#allocation2 + $0x438] sm:$0x3] 0.0
        %1087 = vst [vmem:[#allocation2 + $0x440] sm:$0xff] 0.0
        %1088 = vst [vmem:[#allocation2 + $0x448] sm:$0x3] 0.0
        %1089 = vst [vmem:[#allocation2 + $0x450] sm:$0xff] 0.0
        %1090 = vst [vmem:[#allocation2 + $0x458] sm:$0x3] 0.0
        %1091 = vst [vmem:[#allocation2 + $0x460] sm:$0xff] 0.0
        %1092 = vst [vmem:[#allocation2 + $0x468] sm:$0x3] 0.0
        %1093 = vst [vmem:[#allocation2 + $0x470] sm:$0xff] 0.0
        %1094 = vst [vmem:[#allocation2 + $0x478] sm:$0x3] 0.0
        %1095 = vst [vmem:[#allocation2 + $0x480] sm:$0xff] 0.0
        %1096 = vst [vmem:[#allocation2 + $0x488] sm:$0x3] 0.0
        %1097 = vst [vmem:[#allocation2 + $0x490] sm:$0xff] 0.0
        %1098 = vst [vmem:[#allocation2 + $0x498] sm:$0x3] 0.0
        %1099 = vst [vmem:[#allocation2 + $0x4a0] sm:$0xff] 0.0
        %1100 = vst [vmem:[#allocation2 + $0x4a8] sm:$0x3] 0.0
        %1101 = vst [vmem:[#allocation2 + $0x4b0] sm:$0xff] 0.0
        %1102 = vst [vmem:[#allocation2 + $0x4b8] sm:$0x3] 0.0
        %1103 = vst [vmem:[#allocation2 + $0x4c0] sm:$0xff] 0.0
        %1104 = vst [vmem:[#allocation2 + $0x4c8] sm:$0x3] 0.0
        %1105 = vst [vmem:[#allocation2 + $0x4d0] sm:$0xff] 0.0
        %1106 = vst [vmem:[#allocation2 + $0x4d8] sm:$0x3] 0.0
        %1107 = vst [vmem:[#allocation2 + $0x4e0] sm:$0xff] 0.0
        %1108 = vst [vmem:[#allocation2 + $0x4e8] sm:$0x3] 0.0
        %1109 = vst [vmem:[#allocation2 + $0x4f0] sm:$0xff] 0.0
        %1110 = vst [vmem:[#allocation2 + $0x4f8] sm:$0x3] 0.0
        %s1111 = scalar_lea.vmem [#allocation2], 16
        %1112 = vst [vmem:[%s1111 + $0x1] sm:$0xff] %v887
        %1113 = vst [vmem:[%s1111 + $0x11] sm:$0xff] %v888
        %1114 = vst [vmem:[%s1111 + $0x21] sm:$0xff] %v889
        %1115 = vst [vmem:[%s1111 + $0x31] sm:$0xff] %v890
        %1116 = vst [vmem:[%s1111 + $0x41] sm:$0xff] %v891
        %1117 = vst [vmem:[%s1111 + $0x51] sm:$0xff] %v892
        %1118 = vst [vmem:[%s1111 + $0x61] sm:$0xff] %v893
        %1119 = vst [vmem:[%s1111 + $0x71] sm:$0xff] %v894
        %1120 = vst [vmem:[%s1111 + $0xa1] sm:$0xff] %v895
        %1121 = vst [vmem:[%s1111 + $0xb1] sm:$0xff] %v896
        %1122 = vst [vmem:[%s1111 + $0xc1] sm:$0xff] %v897
        %1123 = vst [vmem:[%s1111 + $0xd1] sm:$0xff] %v898
        %1124 = vst [vmem:[%s1111 + $0xe1] sm:$0xff] %v899
        %1125 = vst [vmem:[%s1111 + $0xf1] sm:$0xff] %v900
        %1126 = vst [vmem:[%s1111 + $0x101] sm:$0xff] %v901
        %1127 = vst [vmem:[%s1111 + $0x111] sm:$0xff] %v902
        %1128 = vst [vmem:[%s1111 + $0x141] sm:$0xff] %v903
        %1129 = vst [vmem:[%s1111 + $0x151] sm:$0xff] %v904
        %1130 = vst [vmem:[%s1111 + $0x161] sm:$0xff] %v905
        %1131 = vst [vmem:[%s1111 + $0x171] sm:$0xff] %v906
        %1132 = vst [vmem:[%s1111 + $0x181] sm:$0xff] %v907
        %1133 = vst [vmem:[%s1111 + $0x191] sm:$0xff] %v908
        %1134 = vst [vmem:[%s1111 + $0x1a1] sm:$0xff] %v909
        %1135 = vst [vmem:[%s1111 + $0x1b1] sm:$0xff] %v910
        %1136 = vst [vmem:[%s1111 + $0x1e1] sm:$0xff] %v911
        %1137 = vst [vmem:[%s1111 + $0x1f1] sm:$0xff] %v912
        %1138 = vst [vmem:[%s1111 + $0x201] sm:$0xff] %v913
        %1139 = vst [vmem:[%s1111 + $0x211] sm:$0xff] %v914
        %1140 = vst [vmem:[%s1111 + $0x221] sm:$0xff] %v915
        %1141 = vst [vmem:[%s1111 + $0x231] sm:$0xff] %v916
        %1142 = vst [vmem:[%s1111 + $0x241] sm:$0xff] %v917
        %1143 = vst [vmem:[%s1111 + $0x251] sm:$0xff] %v918
        %1144 = vst [vmem:[%s1111 + $0x281] sm:$0xff] %v919
        %1145 = vst [vmem:[%s1111 + $0x291] sm:$0xff] %v920
        %1146 = vst [vmem:[%s1111 + $0x2a1] sm:$0xff] %v921
        %1147 = vst [vmem:[%s1111 + $0x2b1] sm:$0xff] %v922
        %1148 = vst [vmem:[%s1111 + $0x2c1] sm:$0xff] %v923
        %1149 = vst [vmem:[%s1111 + $0x2d1] sm:$0xff] %v924
        %1150 = vst [vmem:[%s1111 + $0x2e1] sm:$0xff] %v925
        %1151 = vst [vmem:[%s1111 + $0x2f1] sm:$0xff] %v926
        %1152 = vst [vmem:[%s1111 + $0x321] sm:$0xff] %v927
        %1153 = vst [vmem:[%s1111 + $0x331] sm:$0xff] %v928
        %1154 = vst [vmem:[%s1111 + $0x341] sm:$0xff] %v929
        %1155 = vst [vmem:[%s1111 + $0x351] sm:$0xff] %v930
        %1156 = vst [vmem:[%s1111 + $0x361] sm:$0xff] %v931
        %1157 = vst [vmem:[%s1111 + $0x371] sm:$0xff] %v932
        %1158 = vst [vmem:[%s1111 + $0x381] sm:$0xff] %v933
        %1159 = vst [vmem:[%s1111 + $0x391] sm:$0xff] %v934
        %1160 = vst [vmem:[%s1111 + $0x3c1] sm:$0xff] %v935
        %1161 = vst [vmem:[%s1111 + $0x3d1] sm:$0xff] %v936
        %1162 = vst [vmem:[%s1111 + $0x3e1] sm:$0xff] %v937
        %1163 = vst [vmem:[%s1111 + $0x3f1] sm:$0xff] %v938
        %1164 = vst [vmem:[%s1111 + $0x401] sm:$0xff] %v939
        %1165 = vst [vmem:[%s1111 + $0x411] sm:$0xff] %v940
        %1166 = vst [vmem:[%s1111 + $0x421] sm:$0xff] %v941
        %1167 = vst [vmem:[%s1111 + $0x431] sm:$0xff] %v942
        %1168 = vst [vmem:[%s1111 + $0x461] sm:$0xff] %v943
        %1169 = vst [vmem:[%s1111 + $0x471] sm:$0xff] %v944
        %1170 = vst [vmem:[%s1111 + $0x481] sm:$0xff] %v945
        %1171 = vst [vmem:[%s1111 + $0x491] sm:$0xff] %v946
        %1172 = vst [vmem:[%s1111 + $0x4a1] sm:$0xff] %v947
        %1173 = vst [vmem:[%s1111 + $0x4b1] sm:$0xff] %v948
        %1174 = vst [vmem:[%s1111 + $0x4c1] sm:$0xff] %v949
        %1175 = vst [vmem:[%s1111 + $0x4d1] sm:$0xff] %v950
        %v1176 = vld [vmem:[#allocation2] sm:$0xff]
        %v1177 = vld [vmem:[#allocation2 + $0x10] sm:$0xff]
        %v1178 = vld [vmem:[#allocation2 + $0x20] sm:$0xff]
        %v1179 = vld [vmem:[#allocation2 + $0x30] sm:$0xff]
        %v1180 = vld [vmem:[#allocation2 + $0x40] sm:$0xff]
        %v1181 = vld [vmem:[#allocation2 + $0x50] sm:$0xff]
        %v1182 = vld [vmem:[#allocation2 + $0x60] sm:$0xff]
        %v1183 = vld [vmem:[#allocation2 + $0x70] sm:$0xff]
        %v1184 = vld [vmem:[#allocation2 + $0xa0] sm:$0xff]
        %v1185 = vld [vmem:[#allocation2 + $0xb0] sm:$0xff]
        %v1186 = vld [vmem:[#allocation2 + $0xc0] sm:$0xff]
        %v1187 = vld [vmem:[#allocation2 + $0xd0] sm:$0xff]
        %v1188 = vld [vmem:[#allocation2 + $0xe0] sm:$0xff]
        %v1189 = vld [vmem:[#allocation2 + $0xf0] sm:$0xff]
        %v1190 = vld [vmem:[#allocation2 + $0x100] sm:$0xff]
        %v1191 = vld [vmem:[#allocation2 + $0x110] sm:$0xff]
        %v1192 = vld [vmem:[#allocation2 + $0x140] sm:$0xff]
        %v1193 = vld [vmem:[#allocation2 + $0x150] sm:$0xff]
        %v1194 = vld [vmem:[#allocation2 + $0x160] sm:$0xff]
        %v1195 = vld [vmem:[#allocation2 + $0x170] sm:$0xff]
        %v1196 = vld [vmem:[#allocation2 + $0x180] sm:$0xff]
        %v1197 = vld [vmem:[#allocation2 + $0x190] sm:$0xff]
        %v1198 = vld [vmem:[#allocation2 + $0x1a0] sm:$0xff]
        %v1199 = vld [vmem:[#allocation2 + $0x1b0] sm:$0xff]
        %v1200 = vld [vmem:[#allocation2 + $0x1e0] sm:$0xff]
        %v1201 = vld [vmem:[#allocation2 + $0x1f0] sm:$0xff]
        %v1202 = vld [vmem:[#allocation2 + $0x200] sm:$0xff]
        %v1203 = vld [vmem:[#allocation2 + $0x210] sm:$0xff]
        %v1204 = vld [vmem:[#allocation2 + $0x220] sm:$0xff]
        %v1205 = vld [vmem:[#allocation2 + $0x230] sm:$0xff]
        %v1206 = vld [vmem:[#allocation2 + $0x240] sm:$0xff]
        %v1207 = vld [vmem:[#allocation2 + $0x250] sm:$0xff]
        %v1208 = vld [vmem:[#allocation2 + $0x280] sm:$0xff]
        %v1209 = vld [vmem:[#allocation2 + $0x290] sm:$0xff]
        %v1210 = vld [vmem:[#allocation2 + $0x2a0] sm:$0xff]
        %v1211 = vld [vmem:[#allocation2 + $0x2b0] sm:$0xff]
        %v1212 = vld [vmem:[#allocation2 + $0x2c0] sm:$0xff]
        %v1213 = vld [vmem:[#allocation2 + $0x2d0] sm:$0xff]
        %v1214 = vld [vmem:[#allocation2 + $0x2e0] sm:$0xff]
        %v1215 = vld [vmem:[#allocation2 + $0x2f0] sm:$0xff]
        %v1216 = vld [vmem:[#allocation2 + $0x320] sm:$0xff]
        %v1217 = vld [vmem:[#allocation2 + $0x330] sm:$0xff]
        %v1218 = vld [vmem:[#allocation2 + $0x340] sm:$0xff]
        %v1219 = vld [vmem:[#allocation2 + $0x350] sm:$0xff]
        %v1220 = vld [vmem:[#allocation2 + $0x360] sm:$0xff]
        %v1221 = vld [vmem:[#allocation2 + $0x370] sm:$0xff]
        %v1222 = vld [vmem:[#allocation2 + $0x380] sm:$0xff]
        %v1223 = vld [vmem:[#allocation2 + $0x390] sm:$0xff]
        %v1224 = vld [vmem:[#allocation2 + $0x3c0] sm:$0xff]
        %v1225 = vld [vmem:[#allocation2 + $0x3d0] sm:$0xff]
        %v1226 = vld [vmem:[#allocation2 + $0x3e0] sm:$0xff]
        %v1227 = vld [vmem:[#allocation2 + $0x3f0] sm:$0xff]
        %v1228 = vld [vmem:[#allocation2 + $0x400] sm:$0xff]
        %v1229 = vld [vmem:[#allocation2 + $0x410] sm:$0xff]
        %v1230 = vld [vmem:[#allocation2 + $0x420] sm:$0xff]
        %v1231 = vld [vmem:[#allocation2 + $0x430] sm:$0xff]
        %v1232 = vld [vmem:[#allocation2 + $0x460] sm:$0xff]
        %v1233 = vld [vmem:[#allocation2 + $0x470] sm:$0xff]
        %v1234 = vld [vmem:[#allocation2 + $0x480] sm:$0xff]
        %v1235 = vld [vmem:[#allocation2 + $0x490] sm:$0xff]
        %v1236 = vld [vmem:[#allocation2 + $0x4a0] sm:$0xff]
        %v1237 = vld [vmem:[#allocation2 + $0x4b0] sm:$0xff]
        %v1238 = vld [vmem:[#allocation2 + $0x4c0] sm:$0xff]
        %v1239 = vld [vmem:[#allocation2 + $0x4d0] sm:$0xff]
        %v1240 = vld [vmem:[%s3] sm:$0xff]
        %v1241 = vld [vmem:[%s3 + $0x8] sm:$0xff]
        %v1242 = vld [vmem:[%s3 + $0x10] sm:$0xff]
        %v1243 = vld [vmem:[%s3 + $0x18] sm:$0xff]
        %v1244 = vld [vmem:[%s3 + $0x20] sm:$0xff]
        %v1245 = vld [vmem:[%s3 + $0x28] sm:$0xff]
        %v1246 = vld [vmem:[%s3 + $0x30] sm:$0xff]
        %v1247 = vld [vmem:[%s3 + $0x38] sm:$0xff]
        %v1248 = vld [vmem:[%s3 + $0x40] sm:$0xff]
        %v1249 = vld [vmem:[%s3 + $0x48] sm:$0xff]
        %v1250 = vld [vmem:[%s3 + $0x50] sm:$0xff]
        %v1251 = vld [vmem:[%s3 + $0x58] sm:$0xff]
        %v1252 = vld [vmem:[%s3 + $0x60] sm:$0xff]
        %v1253 = vld [vmem:[%s3 + $0x68] sm:$0xff]
        %v1254 = vld [vmem:[%s3 + $0x70] sm:$0xff]
        %v1255 = vld [vmem:[%s3 + $0x78] sm:$0xff]
        %v1256 = vld [vmem:[#allocation2 + $0x1] sm:$0xff]
        %v1257 = vld [vmem:[#allocation2 + $0x11] sm:$0xff]
        %v1258 = vld [vmem:[#allocation2 + $0x21] sm:$0xff]
        %v1259 = vld [vmem:[#allocation2 + $0x31] sm:$0xff]
        %v1260 = vld [vmem:[#allocation2 + $0x41] sm:$0xff]
        %v1261 = vld [vmem:[#allocation2 + $0x51] sm:$0xff]
        %v1262 = vld [vmem:[#allocation2 + $0x61] sm:$0xff]
        %v1263 = vld [vmem:[#allocation2 + $0x71] sm:$0xff]
        %v1264 = vld [vmem:[#allocation2 + $0xa1] sm:$0xff]
        %v1265 = vld [vmem:[#allocation2 + $0xb1] sm:$0xff]
        %v1266 = vld [vmem:[#allocation2 + $0xc1] sm:$0xff]
        %v1267 = vld [vmem:[#allocation2 + $0xd1] sm:$0xff]
        %v1268 = vld [vmem:[#allocation2 + $0xe1] sm:$0xff]
        %v1269 = vld [vmem:[#allocation2 + $0xf1] sm:$0xff]
        %v1270 = vld [vmem:[#allocation2 + $0x101] sm:$0xff]
        %v1271 = vld [vmem:[#allocation2 + $0x111] sm:$0xff]
        %v1272 = vld [vmem:[#allocation2 + $0x141] sm:$0xff]
        %v1273 = vld [vmem:[#allocation2 + $0x151] sm:$0xff]
        %v1274 = vld [vmem:[#allocation2 + $0x161] sm:$0xff]
        %v1275 = vld [vmem:[#allocation2 + $0x171] sm:$0xff]
        %v1276 = vld [vmem:[#allocation2 + $0x181] sm:$0xff]
        %v1277 = vld [vmem:[#allocation2 + $0x191] sm:$0xff]
        %v1278 = vld [vmem:[#allocation2 + $0x1a1] sm:$0xff]
        %v1279 = vld [vmem:[#allocation2 + $0x1b1] sm:$0xff]
        %v1280 = vld [vmem:[#allocation2 + $0x1e1] sm:$0xff]
        %v1281 = vld [vmem:[#allocation2 + $0x1f1] sm:$0xff]
        %v1282 = vld [vmem:[#allocation2 + $0x201] sm:$0xff]
        %v1283 = vld [vmem:[#allocation2 + $0x211] sm:$0xff]
        %v1284 = vld [vmem:[#allocation2 + $0x221] sm:$0xff]
        %v1285 = vld [vmem:[#allocation2 + $0x231] sm:$0xff]
        %v1286 = vld [vmem:[#allocation2 + $0x241] sm:$0xff]
        %v1287 = vld [vmem:[#allocation2 + $0x251] sm:$0xff]
        %v1288 = vld [vmem:[#allocation2 + $0x281] sm:$0xff]
        %v1289 = vld [vmem:[#allocation2 + $0x291] sm:$0xff]
        %v1290 = vld [vmem:[#allocation2 + $0x2a1] sm:$0xff]
        %v1291 = vld [vmem:[#allocation2 + $0x2b1] sm:$0xff]
        %v1292 = vld [vmem:[#allocation2 + $0x2c1] sm:$0xff]
        %v1293 = vld [vmem:[#allocation2 + $0x2d1] sm:$0xff]
        %v1294 = vld [vmem:[#allocation2 + $0x2e1] sm:$0xff]
        %v1295 = vld [vmem:[#allocation2 + $0x2f1] sm:$0xff]
        %v1296 = vld [vmem:[#allocation2 + $0x321] sm:$0xff]
        %v1297 = vld [vmem:[#allocation2 + $0x331] sm:$0xff]
        %v1298 = vld [vmem:[#allocation2 + $0x341] sm:$0xff]
        %v1299 = vld [vmem:[#allocation2 + $0x351] sm:$0xff]
        %v1300 = vld [vmem:[#allocation2 + $0x361] sm:$0xff]
        %v1301 = vld [vmem:[#allocation2 + $0x371] sm:$0xff]
        %v1302 = vld [vmem:[#allocation2 + $0x381] sm:$0xff]
        %v1303 = vld [vmem:[#allocation2 + $0x391] sm:$0xff]
        %v1304 = vld [vmem:[#allocation2 + $0x3c1] sm:$0xff]
        %v1305 = vld [vmem:[#allocation2 + $0x3d1] sm:$0xff]
        %v1306 = vld [vmem:[#allocation2 + $0x3e1] sm:$0xff]
        %v1307 = vld [vmem:[#allocation2 + $0x3f1] sm:$0xff]
        %v1308 = vld [vmem:[#allocation2 + $0x401] sm:$0xff]
        %v1309 = vld [vmem:[#allocation2 + $0x411] sm:$0xff]
        %v1310 = vld [vmem:[#allocation2 + $0x421] sm:$0xff]
        %v1311 = vld [vmem:[#allocation2 + $0x431] sm:$0xff]
        %v1312 = vld [vmem:[#allocation2 + $0x461] sm:$0xff]
        %v1313 = vld [vmem:[#allocation2 + $0x471] sm:$0xff]
        %v1314 = vld [vmem:[#allocation2 + $0x481] sm:$0xff]
        %v1315 = vld [vmem:[#allocation2 + $0x491] sm:$0xff]
        %v1316 = vld [vmem:[#allocation2 + $0x4a1] sm:$0xff]
        %v1317 = vld [vmem:[#allocation2 + $0x4b1] sm:$0xff]
        %v1318 = vld [vmem:[#allocation2 + $0x4c1] sm:$0xff]
        %v1319 = vld [vmem:[#allocation2 + $0x4d1] sm:$0xff]
        %s1320 = scalar_lea.vmem %s3, 128
        %v1321 = vld [vmem:[%s1320] sm:$0xff]
        %v1322 = vld [vmem:[%s1320 + $0x8] sm:$0xff]
        %v1323 = vld [vmem:[%s1320 + $0x10] sm:$0xff]
        %v1324 = vld [vmem:[%s1320 + $0x18] sm:$0xff]
        %v1325 = vld [vmem:[%s1320 + $0x20] sm:$0xff]
        %v1326 = vld [vmem:[%s1320 + $0x28] sm:$0xff]
        %v1327 = vld [vmem:[%s1320 + $0x30] sm:$0xff]
        %v1328 = vld [vmem:[%s1320 + $0x38] sm:$0xff]
        %v1329 = vld [vmem:[%s1320 + $0x40] sm:$0xff]
        %v1330 = vld [vmem:[%s1320 + $0x48] sm:$0xff]
        %v1331 = vld [vmem:[%s1320 + $0x50] sm:$0xff]
        %v1332 = vld [vmem:[%s1320 + $0x58] sm:$0xff]
        %v1333 = vld [vmem:[%s1320 + $0x60] sm:$0xff]
        %v1334 = vld [vmem:[%s1320 + $0x68] sm:$0xff]
        %v1335 = vld [vmem:[%s1320 + $0x70] sm:$0xff]
        %v1336 = vld [vmem:[%s1320 + $0x78] sm:$0xff]
        %1337 = vmatprep.subr.mxu0 0.0
        %1338 = vmatpush1.msra.mxu0 %v1321
        %1339 = vmatprep.subr.mxu0 0.0
        %1340 = vmatpush1.msra.mxu0 %v1322
        %1341 = vmatprep.subr.mxu0 0.0
        %1342 = vmatpush1.msra.mxu0 %v1323
        %1343 = vmatprep.subr.mxu0 0.0
        %1344 = vmatpush1.msra.mxu0 %v1324
        %1345 = vmatprep.subr.mxu0 0.0
        %1346 = vmatpush1.msra.mxu0 %v1325
        %1347 = vmatprep.subr.mxu0 0.0
        %1348 = vmatpush1.msra.mxu0 %v1326
        %1349 = vmatprep.subr.mxu0 0.0
        %1350 = vmatpush1.msra.mxu0 %v1327
        %1351 = vmatprep.subr.mxu0 0.0
        %1352 = vmatpush1.msra.mxu0 %v1328
        %1353 = vmatprep.subr.mxu0 0.0
        %1354 = vmatpush1.msra.mxu0 %v1329
        %1355 = vmatprep.subr.mxu0 0.0
        %1356 = vmatpush1.msra.mxu0 %v1330
        %1357 = vmatprep.subr.mxu0 0.0
        %1358 = vmatpush1.msra.mxu0 %v1331
        %1359 = vmatprep.subr.mxu0 0.0
        %1360 = vmatpush1.msra.mxu0 %v1332
        %1361 = vmatprep.subr.mxu0 0.0
        %1362 = vmatpush1.msra.mxu0 %v1333
        %1363 = vmatprep.subr.mxu0 0.0
        %1364 = vmatpush1.msra.mxu0 %v1334
        %1365 = vmatprep.subr.mxu0 0.0
        %1366 = vmatpush1.msra.mxu0 %v1335
        %1367 = vmatprep.subr.mxu0 0.0
        %1368 = vmatpush1.msra.mxu0 %v1336
        %1369 = vmatprep.subr.mxu0 0.0
        %1370 = vmatpush1.msra.mxu0 0.0
        %1371 = vmatprep.subr.mxu0 0.0
        %1372 = vmatpush1.msra.mxu0 0.0
        %1373 = vmatprep.subr.mxu0 0.0
        %1374 = vmatpush1.msra.mxu0 0.0
        %1375 = vmatprep.subr.mxu0 0.0
        %1376 = vmatpush1.msra.mxu0 0.0
        %1377 = vmatprep.subr.mxu0 0.0
        %1378 = vmatpush1.msra.mxu0 0.0
        %1379 = vmatprep.subr.mxu0 0.0
        %1380 = vmatpush1.msra.mxu0 0.0
        %1381 = vmatprep.subr.mxu0 0.0
        %1382 = vmatpush1.msra.mxu0 0.0
        %1383 = vmatprep.subr.mxu0 0.0
        %1384 = vmatpush1.msra.mxu0 0.0
        %1385 = vmatprep.subr.mxu0 0.0
        %1386 = vmatpush1.msra.mxu0 0.0
        %1387 = vmatprep.subr.mxu0 0.0
        %1388 = vmatpush1.msra.mxu0 0.0
        %1389 = vmatprep.subr.mxu0 0.0
        %1390 = vmatpush1.msra.mxu0 0.0
        %1391 = vmatprep.subr.mxu0 0.0
        %1392 = vmatpush1.msra.mxu0 0.0
        %1393 = vmatprep.subr.mxu0 0.0
        %1394 = vmatpush1.msra.mxu0 0.0
        %1395 = vmatprep.subr.mxu0 0.0
        %1396 = vmatpush1.msra.mxu0 0.0
        %1397 = vmatprep.subr.mxu0 0.0
        %1398 = vmatpush1.msra.mxu0 0.0
        %1399 = vmatprep.subr.mxu0 0.0
        %1400 = vmatpush1.msra.mxu0 0.0
        %1401 = vmatprep.mubr.f32.mxu0 0.0
        %1402 = vmatmul.mubr.f32.gmra.mrb[0].mxu0 %v1256
        %v1403 = vpop.f32.mrb[0].mxu0
        %v1404 = vadd.f32 0.0, %v1403
        %v1405 = vpop.f32.mrb[0].mxu0
        %1406 = vmatprep.mubr.f32.mxu0 0.0
        %1407 = vmatmul.mubr.f32.gmra.mrb[0].mxu0 %v1257
        %v1408 = vpop.f32.mrb[0].mxu0
        %v1409 = vadd.f32 0.0, %v1408
        %v1410 = vpop.f32.mrb[0].mxu0
        %1411 = vmatprep.mubr.f32.mxu0 0.0
        %1412 = vmatmul.mubr.f32.gmra.mrb[0].mxu0 %v1258
        %v1413 = vpop.f32.mrb[0].mxu0
        %v1414 = vadd.f32 0.0, %v1413
        %v1415 = vpop.f32.mrb[0].mxu0
        %1416 = vmatprep.mubr.f32.mxu0 0.0
        %1417 = vmatmul.mubr.f32.gmra.mrb[0].mxu0 %v1259
        %v1418 = vpop.f32.mrb[0].mxu0
        %v1419 = vadd.f32 0.0, %v1418
        %v1420 = vpop.f32.mrb[0].mxu0
        %1421 = vmatprep.mubr.f32.mxu0 0.0
        %1422 = vmatmul.mubr.f32.gmra.mrb[0].mxu0 %v1260
        %v1423 = vpop.f32.mrb[0].mxu0
        %v1424 = vadd.f32 0.0, %v1423
        %v1425 = vpop.f32.mrb[0].mxu0
        %1426 = vmatprep.mubr.f32.mxu0 0.0
        %1427 = vmatmul.mubr.f32.gmra.mrb[0].mxu0 %v1261
        %v1428 = vpop.f32.mrb[0].mxu0
        %v1429 = vadd.f32 0.0, %v1428
        %v1430 = vpop.f32.mrb[0].mxu0
        %1431 = vmatprep.mubr.f32.mxu0 0.0
        %1432 = vmatmul.mubr.f32.gmra.mrb[0].mxu0 %v1262
        %v1433 = vpop.f32.mrb[0].mxu0
        %v1434 = vadd.f32 0.0, %v1433
        %v1435 = vpop.f32.mrb[0].mxu0
        %1436 = vmatprep.mubr.f32.mxu0 0.0
        %1437 = vmatmul.mubr.f32.gmra.mrb[0].mxu0 %v1263
        %v1438 = vpop.f32.mrb[0].mxu0
        %v1439 = vadd.f32 0.0, %v1438
        %v1440 = vpop.f32.mrb[0].mxu0
        %1441 = vmatprep.mubr.f32.mxu0 0.0
        %1442 = vmatmul.mubr.f32.gmra.mrb[0].mxu0 %v1264
        %v1443 = vpop.f32.mrb[0].mxu0
        %v1444 = vadd.f32 0.0, %v1443
        %v1445 = vpop.f32.mrb[0].mxu0
        %1446 = vmatprep.mubr.f32.mxu0 0.0
        %1447 = vmatmul.mubr.f32.gmra.mrb[0].mxu0 %v1265
        %v1448 = vpop.f32.mrb[0].mxu0
        %v1449 = vadd.f32 0.0, %v1448
        %v1450 = vpop.f32.mrb[0].mxu0
        %1451 = vmatprep.mubr.f32.mxu0 0.0
        %1452 = vmatmul.mubr.f32.gmra.mrb[0].mxu0 %v1266
        %v1453 = vpop.f32.mrb[0].mxu0
        %v1454 = vadd.f32 0.0, %v1453
        %v1455 = vpop.f32.mrb[0].mxu0
        %1456 = vmatprep.mubr.f32.mxu0 0.0
        %1457 = vmatmul.mubr.f32.gmra.mrb[0].mxu0 %v1267
        %v1458 = vpop.f32.mrb[0].mxu0
        %v1459 = vadd.f32 0.0, %v1458
        %v1460 = vpop.f32.mrb[0].mxu0
        %1461 = vmatprep.mubr.f32.mxu0 0.0
        %1462 = vmatmul.mubr.f32.gmra.mrb[0].mxu0 %v1268
        %v1463 = vpop.f32.mrb[0].mxu0
        %v1464 = vadd.f32 0.0, %v1463
        %v1465 = vpop.f32.mrb[0].mxu0
        %1466 = vmatprep.mubr.f32.mxu0 0.0
        %1467 = vmatmul.mubr.f32.gmra.mrb[0].mxu0 %v1269
        %v1468 = vpop.f32.mrb[0].mxu0
        %v1469 = vadd.f32 0.0, %v1468
        %v1470 = vpop.f32.mrb[0].mxu0
        %1471 = vmatprep.mubr.f32.mxu0 0.0
        %1472 = vmatmul.mubr.f32.gmra.mrb[0].mxu0 %v1270
        %v1473 = vpop.f32.mrb[0].mxu0
        %v1474 = vadd.f32 0.0, %v1473
        %v1475 = vpop.f32.mrb[0].mxu0
        %1476 = vmatprep.mubr.f32.mxu0 0.0
        %1477 = vmatmul.mubr.f32.gmra.mrb[0].mxu0 %v1271
        %v1478 = vpop.f32.mrb[0].mxu0
        %v1479 = vadd.f32 0.0, %v1478
        %v1480 = vpop.f32.mrb[0].mxu0
        %1481 = vmatprep.mubr.f32.mxu0 0.0
        %1482 = vmatmul.mubr.f32.gmra.mrb[0].mxu0 %v1272
        %v1483 = vpop.f32.mrb[0].mxu0
        %v1484 = vadd.f32 0.0, %v1483
        %v1485 = vpop.f32.mrb[0].mxu0
        %1486 = vmatprep.mubr.f32.mxu0 0.0
        %1487 = vmatmul.mubr.f32.gmra.mrb[0].mxu0 %v1273
        %v1488 = vpop.f32.mrb[0].mxu0
        %v1489 = vadd.f32 0.0, %v1488
        %v1490 = vpop.f32.mrb[0].mxu0
        %1491 = vmatprep.mubr.f32.mxu0 0.0
        %1492 = vmatmul.mubr.f32.gmra.mrb[0].mxu0 %v1274
        %v1493 = vpop.f32.mrb[0].mxu0
        %v1494 = vadd.f32 0.0, %v1493
        %v1495 = vpop.f32.mrb[0].mxu0
        %1496 = vmatprep.mubr.f32.mxu0 0.0
        %1497 = vmatmul.mubr.f32.gmra.mrb[0].mxu0 %v1275
        %v1498 = vpop.f32.mrb[0].mxu0
        %v1499 = vadd.f32 0.0, %v1498
        %v1500 = vpop.f32.mrb[0].mxu0
        %1501 = vmatprep.mubr.f32.mxu0 0.0
        %1502 = vmatmul.mubr.f32.gmra.mrb[0].mxu0 %v1276
        %v1503 = vpop.f32.mrb[0].mxu0
        %v1504 = vadd.f32 0.0, %v1503
        %v1505 = vpop.f32.mrb[0].mxu0
        %1506 = vmatprep.mubr.f32.mxu0 0.0
        %1507 = vmatmul.mubr.f32.gmra.mrb[0].mxu0 %v1277
        %v1508 = vpop.f32.mrb[0].mxu0
        %v1509 = vadd.f32 0.0, %v1508
        %v1510 = vpop.f32.mrb[0].mxu0
        %1511 = vmatprep.mubr.f32.mxu0 0.0
        %1512 = vmatmul.mubr.f32.gmra.mrb[0].mxu0 %v1278
        %v1513 = vpop.f32.mrb[0].mxu0
        %v1514 = vadd.f32 0.0, %v1513
        %v1515 = vpop.f32.mrb[0].mxu0
        %1516 = vmatprep.mubr.f32.mxu0 0.0
        %1517 = vmatmul.mubr.f32.gmra.mrb[0].mxu0 %v1279
        %v1518 = vpop.f32.mrb[0].mxu0
        %v1519 = vadd.f32 0.0, %v1518
        %v1520 = vpop.f32.mrb[0].mxu0
        %1521 = vmatprep.mubr.f32.mxu0 0.0
        %1522 = vmatmul.mubr.f32.gmra.mrb[0].mxu0 %v1280
        %v1523 = vpop.f32.mrb[0].mxu0
        %v1524 = vadd.f32 0.0, %v1523
        %v1525 = vpop.f32.mrb[0].mxu0
        %1526 = vmatprep.mubr.f32.mxu0 0.0
        %1527 = vmatmul.mubr.f32.gmra.mrb[0].mxu0 %v1281
        %v1528 = vpop.f32.mrb[0].mxu0
        %v1529 = vadd.f32 0.0, %v1528
        %v1530 = vpop.f32.mrb[0].mxu0
        %1531 = vmatprep.mubr.f32.mxu0 0.0
        %1532 = vmatmul.mubr.f32.gmra.mrb[0].mxu0 %v1282
        %v1533 = vpop.f32.mrb[0].mxu0
        %v1534 = vadd.f32 0.0, %v1533
        %v1535 = vpop.f32.mrb[0].mxu0
        %1536 = vmatprep.mubr.f32.mxu0 0.0
        %1537 = vmatmul.mubr.f32.gmra.mrb[0].mxu0 %v1283
        %v1538 = vpop.f32.mrb[0].mxu0
        %v1539 = vadd.f32 0.0, %v1538
        %v1540 = vpop.f32.mrb[0].mxu0
        %1541 = vmatprep.mubr.f32.mxu0 0.0
        %1542 = vmatmul.mubr.f32.gmra.mrb[0].mxu0 %v1284
        %v1543 = vpop.f32.mrb[0].mxu0
        %v1544 = vadd.f32 0.0, %v1543
        %v1545 = vpop.f32.mrb[0].mxu0
        %1546 = vmatprep.mubr.f32.mxu0 0.0
        %1547 = vmatmul.mubr.f32.gmra.mrb[0].mxu0 %v1285
        %v1548 = vpop.f32.mrb[0].mxu0
        %v1549 = vadd.f32 0.0, %v1548
        %v1550 = vpop.f32.mrb[0].mxu0
        %1551 = vmatprep.mubr.f32.mxu0 0.0
        %1552 = vmatmul.mubr.f32.gmra.mrb[0].mxu0 %v1286
        %v1553 = vpop.f32.mrb[0].mxu0
        %v1554 = vadd.f32 0.0, %v1553
        %v1555 = vpop.f32.mrb[0].mxu0
        %1556 = vmatprep.mubr.f32.mxu0 0.0
        %1557 = vmatmul.mubr.f32.gmra.mrb[0].mxu0 %v1287
        %v1558 = vpop.f32.mrb[0].mxu0
        %v1559 = vadd.f32 0.0, %v1558
        %v1560 = vpop.f32.mrb[0].mxu0
        %1561 = vmatprep.mubr.f32.mxu0 0.0
        %1562 = vmatmul.mubr.f32.gmra.mrb[0].mxu0 %v1288
        %v1563 = vpop.f32.mrb[0].mxu0
        %v1564 = vadd.f32 0.0, %v1563
        %v1565 = vpop.f32.mrb[0].mxu0
        %1566 = vmatprep.mubr.f32.mxu0 0.0
        %1567 = vmatmul.mubr.f32.gmra.mrb[0].mxu0 %v1289
        %v1568 = vpop.f32.mrb[0].mxu0
        %v1569 = vadd.f32 0.0, %v1568
        %v1570 = vpop.f32.mrb[0].mxu0
        %1571 = vmatprep.mubr.f32.mxu0 0.0
        %1572 = vmatmul.mubr.f32.gmra.mrb[0].mxu0 %v1290
        %v1573 = vpop.f32.mrb[0].mxu0
        %v1574 = vadd.f32 0.0, %v1573
        %v1575 = vpop.f32.mrb[0].mxu0
        %1576 = vmatprep.mubr.f32.mxu0 0.0
        %1577 = vmatmul.mubr.f32.gmra.mrb[0].mxu0 %v1291
        %v1578 = vpop.f32.mrb[0].mxu0
        %v1579 = vadd.f32 0.0, %v1578
        %v1580 = vpop.f32.mrb[0].mxu0
        %1581 = vmatprep.mubr.f32.mxu0 0.0
        %1582 = vmatmul.mubr.f32.gmra.mrb[0].mxu0 %v1292
        %v1583 = vpop.f32.mrb[0].mxu0
        %v1584 = vadd.f32 0.0, %v1583
        %v1585 = vpop.f32.mrb[0].mxu0
        %1586 = vmatprep.mubr.f32.mxu0 0.0
        %1587 = vmatmul.mubr.f32.gmra.mrb[0].mxu0 %v1293
        %v1588 = vpop.f32.mrb[0].mxu0
        %v1589 = vadd.f32 0.0, %v1588
        %v1590 = vpop.f32.mrb[0].mxu0
        %1591 = vmatprep.mubr.f32.mxu0 0.0
        %1592 = vmatmul.mubr.f32.gmra.mrb[0].mxu0 %v1294
        %v1593 = vpop.f32.mrb[0].mxu0
        %v1594 = vadd.f32 0.0, %v1593
        %v1595 = vpop.f32.mrb[0].mxu0
        %1596 = vmatprep.mubr.f32.mxu0 0.0
        %1597 = vmatmul.mubr.f32.gmra.mrb[0].mxu0 %v1295
        %v1598 = vpop.f32.mrb[0].mxu0
        %v1599 = vadd.f32 0.0, %v1598
        %v1600 = vpop.f32.mrb[0].mxu0
        %1601 = vmatprep.mubr.f32.mxu0 0.0
        %1602 = vmatmul.mubr.f32.gmra.mrb[0].mxu0 %v1296
        %v1603 = vpop.f32.mrb[0].mxu0
        %v1604 = vadd.f32 0.0, %v1603
        %v1605 = vpop.f32.mrb[0].mxu0
        %1606 = vmatprep.mubr.f32.mxu0 0.0
        %1607 = vmatmul.mubr.f32.gmra.mrb[0].mxu0 %v1297
        %v1608 = vpop.f32.mrb[0].mxu0
        %v1609 = vadd.f32 0.0, %v1608
        %v1610 = vpop.f32.mrb[0].mxu0
        %1611 = vmatprep.mubr.f32.mxu0 0.0
        %1612 = vmatmul.mubr.f32.gmra.mrb[0].mxu0 %v1298
        %v1613 = vpop.f32.mrb[0].mxu0
        %v1614 = vadd.f32 0.0, %v1613
        %v1615 = vpop.f32.mrb[0].mxu0
        %1616 = vmatprep.mubr.f32.mxu0 0.0
        %1617 = vmatmul.mubr.f32.gmra.mrb[0].mxu0 %v1299
        %v1618 = vpop.f32.mrb[0].mxu0
        %v1619 = vadd.f32 0.0, %v1618
        %v1620 = vpop.f32.mrb[0].mxu0
        %1621 = vmatprep.mubr.f32.mxu0 0.0
        %1622 = vmatmul.mubr.f32.gmra.mrb[0].mxu0 %v1300
        %v1623 = vpop.f32.mrb[0].mxu0
        %v1624 = vadd.f32 0.0, %v1623
        %v1625 = vpop.f32.mrb[0].mxu0
        %1626 = vmatprep.mubr.f32.mxu0 0.0
        %1627 = vmatmul.mubr.f32.gmra.mrb[0].mxu0 %v1301
        %v1628 = vpop.f32.mrb[0].mxu0
        %v1629 = vadd.f32 0.0, %v1628
        %v1630 = vpop.f32.mrb[0].mxu0
        %1631 = vmatprep.mubr.f32.mxu0 0.0
        %1632 = vmatmul.mubr.f32.gmra.mrb[0].mxu0 %v1302
        %v1633 = vpop.f32.mrb[0].mxu0
        %v1634 = vadd.f32 0.0, %v1633
        %v1635 = vpop.f32.mrb[0].mxu0
        %1636 = vmatprep.mubr.f32.mxu0 0.0
        %1637 = vmatmul.mubr.f32.gmra.mrb[0].mxu0 %v1303
        %v1638 = vpop.f32.mrb[0].mxu0
        %v1639 = vadd.f32 0.0, %v1638
        %v1640 = vpop.f32.mrb[0].mxu0
        %1641 = vmatprep.mubr.f32.mxu0 0.0
        %1642 = vmatmul.mubr.f32.gmra.mrb[0].mxu0 %v1304
        %v1643 = vpop.f32.mrb[0].mxu0
        %v1644 = vadd.f32 0.0, %v1643
        %v1645 = vpop.f32.mrb[0].mxu0
        %1646 = vmatprep.mubr.f32.mxu0 0.0
        %1647 = vmatmul.mubr.f32.gmra.mrb[0].mxu0 %v1305
        %v1648 = vpop.f32.mrb[0].mxu0
        %v1649 = vadd.f32 0.0, %v1648
        %v1650 = vpop.f32.mrb[0].mxu0
        %1651 = vmatprep.mubr.f32.mxu0 0.0
        %1652 = vmatmul.mubr.f32.gmra.mrb[0].mxu0 %v1306
        %v1653 = vpop.f32.mrb[0].mxu0
        %v1654 = vadd.f32 0.0, %v1653
        %v1655 = vpop.f32.mrb[0].mxu0
        %1656 = vmatprep.mubr.f32.mxu0 0.0
        %1657 = vmatmul.mubr.f32.gmra.mrb[0].mxu0 %v1307
        %v1658 = vpop.f32.mrb[0].mxu0
        %v1659 = vadd.f32 0.0, %v1658
        %v1660 = vpop.f32.mrb[0].mxu0
        %1661 = vmatprep.mubr.f32.mxu0 0.0
        %1662 = vmatmul.mubr.f32.gmra.mrb[0].mxu0 %v1308
        %v1663 = vpop.f32.mrb[0].mxu0
        %v1664 = vadd.f32 0.0, %v1663
        %v1665 = vpop.f32.mrb[0].mxu0
        %1666 = vmatprep.mubr.f32.mxu0 0.0
        %1667 = vmatmul.mubr.f32.gmra.mrb[0].mxu0 %v1309
        %v1668 = vpop.f32.mrb[0].mxu0
        %v1669 = vadd.f32 0.0, %v1668
        %v1670 = vpop.f32.mrb[0].mxu0
        %1671 = vmatprep.mubr.f32.mxu0 0.0
        %1672 = vmatmul.mubr.f32.gmra.mrb[0].mxu0 %v1310
        %v1673 = vpop.f32.mrb[0].mxu0
        %v1674 = vadd.f32 0.0, %v1673
        %v1675 = vpop.f32.mrb[0].mxu0
        %1676 = vmatprep.mubr.f32.mxu0 0.0
        %1677 = vmatmul.mubr.f32.gmra.mrb[0].mxu0 %v1311
        %v1678 = vpop.f32.mrb[0].mxu0
        %v1679 = vadd.f32 0.0, %v1678
        %v1680 = vpop.f32.mrb[0].mxu0
        %1681 = vmatprep.mubr.f32.mxu0 0.0
        %1682 = vmatmul.mubr.f32.gmra.mrb[0].mxu0 %v1312
        %v1683 = vpop.f32.mrb[0].mxu0
        %v1684 = vadd.f32 0.0, %v1683
        %v1685 = vpop.f32.mrb[0].mxu0
        %1686 = vmatprep.mubr.f32.mxu0 0.0
        %1687 = vmatmul.mubr.f32.gmra.mrb[0].mxu0 %v1313
        %v1688 = vpop.f32.mrb[0].mxu0
        %v1689 = vadd.f32 0.0, %v1688
        %v1690 = vpop.f32.mrb[0].mxu0
        %1691 = vmatprep.mubr.f32.mxu0 0.0
        %1692 = vmatmul.mubr.f32.gmra.mrb[0].mxu0 %v1314
        %v1693 = vpop.f32.mrb[0].mxu0
        %v1694 = vadd.f32 0.0, %v1693
        %v1695 = vpop.f32.mrb[0].mxu0
        %1696 = vmatprep.mubr.f32.mxu0 0.0
        %1697 = vmatmul.mubr.f32.gmra.mrb[0].mxu0 %v1315
        %v1698 = vpop.f32.mrb[0].mxu0
        %v1699 = vadd.f32 0.0, %v1698
        %v1700 = vpop.f32.mrb[0].mxu0
        %1701 = vmatprep.mubr.f32.mxu0 0.0
        %1702 = vmatmul.mubr.f32.gmra.mrb[0].mxu0 %v1316
        %v1703 = vpop.f32.mrb[0].mxu0
        %v1704 = vadd.f32 0.0, %v1703
        %v1705 = vpop.f32.mrb[0].mxu0
        %1706 = vmatprep.mubr.f32.mxu0 0.0
        %1707 = vmatmul.mubr.f32.gmra.mrb[0].mxu0 %v1317
        %v1708 = vpop.f32.mrb[0].mxu0
        %v1709 = vadd.f32 0.0, %v1708
        %v1710 = vpop.f32.mrb[0].mxu0
        %1711 = vmatprep.mubr.f32.mxu0 0.0
        %1712 = vmatmul.mubr.f32.gmra.mrb[0].mxu0 %v1318
        %v1713 = vpop.f32.mrb[0].mxu0
        %v1714 = vadd.f32 0.0, %v1713
        %v1715 = vpop.f32.mrb[0].mxu0
        %1716 = vmatprep.mubr.f32.mxu0 0.0
        %1717 = vmatmul.mubr.f32.gmra.mrb[0].mxu0 %v1319
        %v1718 = vpop.f32.mrb[0].mxu0
        %v1719 = vadd.f32 0.0, %v1718
        %v1720 = vpop.f32.mrb[0].mxu0
        %1721 = vdwg.mxu0
        %1722 = vmatprep.subr.mxu0 0.0
        %1723 = vmatpush1.msra.mxu0 %v1240
        %1724 = vmatprep.subr.mxu0 0.0
        %1725 = vmatpush1.msra.mxu0 %v1241
        %1726 = vmatprep.subr.mxu0 0.0
        %1727 = vmatpush1.msra.mxu0 %v1242
        %1728 = vmatprep.subr.mxu0 0.0
        %1729 = vmatpush1.msra.mxu0 %v1243
        %1730 = vmatprep.subr.mxu0 0.0
        %1731 = vmatpush1.msra.mxu0 %v1244
        %1732 = vmatprep.subr.mxu0 0.0
        %1733 = vmatpush1.msra.mxu0 %v1245
        %1734 = vmatprep.subr.mxu0 0.0
        %1735 = vmatpush1.msra.mxu0 %v1246
        %1736 = vmatprep.subr.mxu0 0.0
        %1737 = vmatpush1.msra.mxu0 %v1247
        %1738 = vmatprep.subr.mxu0 0.0
        %1739 = vmatpush1.msra.mxu0 %v1248
        %1740 = vmatprep.subr.mxu0 0.0
        %1741 = vmatpush1.msra.mxu0 %v1249
        %1742 = vmatprep.subr.mxu0 0.0
        %1743 = vmatpush1.msra.mxu0 %v1250
        %1744 = vmatprep.subr.mxu0 0.0
        %1745 = vmatpush1.msra.mxu0 %v1251
        %1746 = vmatprep.subr.mxu0 0.0
        %1747 = vmatpush1.msra.mxu0 %v1252
        %1748 = vmatprep.subr.mxu0 0.0
        %1749 = vmatpush1.msra.mxu0 %v1253
        %1750 = vmatprep.subr.mxu0 0.0
        %1751 = vmatpush1.msra.mxu0 %v1254
        %1752 = vmatprep.subr.mxu0 0.0
        %1753 = vmatpush1.msra.mxu0 %v1255
        %1754 = vmatprep.subr.mxu0 0.0
        %1755 = vmatpush1.msra.mxu0 0.0
        %1756 = vmatprep.subr.mxu0 0.0
        %1757 = vmatpush1.msra.mxu0 0.0
        %1758 = vmatprep.subr.mxu0 0.0
        %1759 = vmatpush1.msra.mxu0 0.0
        %1760 = vmatprep.subr.mxu0 0.0
        %1761 = vmatpush1.msra.mxu0 0.0
        %1762 = vmatprep.subr.mxu0 0.0
        %1763 = vmatpush1.msra.mxu0 0.0
        %1764 = vmatprep.subr.mxu0 0.0
        %1765 = vmatpush1.msra.mxu0 0.0
        %1766 = vmatprep.subr.mxu0 0.0
        %1767 = vmatpush1.msra.mxu0 0.0
        %1768 = vmatprep.subr.mxu0 0.0
        %1769 = vmatpush1.msra.mxu0 0.0
        %1770 = vmatprep.subr.mxu0 0.0
        %1771 = vmatpush1.msra.mxu0 0.0
        %1772 = vmatprep.subr.mxu0 0.0
        %1773 = vmatpush1.msra.mxu0 0.0
        %1774 = vmatprep.subr.mxu0 0.0
        %1775 = vmatpush1.msra.mxu0 0.0
        %1776 = vmatprep.subr.mxu0 0.0
        %1777 = vmatpush1.msra.mxu0 0.0
        %1778 = vmatprep.subr.mxu0 0.0
        %1779 = vmatpush1.msra.mxu0 0.0
        %1780 = vmatprep.subr.mxu0 0.0
        %1781 = vmatpush1.msra.mxu0 0.0
        %1782 = vmatprep.subr.mxu0 0.0
        %1783 = vmatpush1.msra.mxu0 0.0
        %1784 = vmatprep.subr.mxu0 0.0
        %1785 = vmatpush1.msra.mxu0 0.0
        %1786 = vmatprep.mubr.f32.mxu0 0.0
        %1787 = vmatmul.mubr.f32.gmra.mrb[0].mxu0 %v1176
        %v1788 = vpop.f32.mrb[0].mxu0
        %v1789 = vadd.f32 %v1404, %v1788
        %v1790 = vpop.f32.mrb[0].mxu0
        %1791 = vmatprep.mubr.f32.mxu0 0.0
        %1792 = vmatmul.mubr.f32.gmra.mrb[0].mxu0 %v1177
        %v1793 = vpop.f32.mrb[0].mxu0
        %v1794 = vadd.f32 %v1409, %v1793
        %v1795 = vpop.f32.mrb[0].mxu0
        %1796 = vmatprep.mubr.f32.mxu0 0.0
        %1797 = vmatmul.mubr.f32.gmra.mrb[0].mxu0 %v1178
        %v1798 = vpop.f32.mrb[0].mxu0
        %v1799 = vadd.f32 %v1414, %v1798
        %v1800 = vpop.f32.mrb[0].mxu0
        %1801 = vmatprep.mubr.f32.mxu0 0.0
        %1802 = vmatmul.mubr.f32.gmra.mrb[0].mxu0 %v1179
        %v1803 = vpop.f32.mrb[0].mxu0
        %v1804 = vadd.f32 %v1419, %v1803
        %v1805 = vpop.f32.mrb[0].mxu0
        %1806 = vmatprep.mubr.f32.mxu0 0.0
        %1807 = vmatmul.mubr.f32.gmra.mrb[0].mxu0 %v1180
        %v1808 = vpop.f32.mrb[0].mxu0
        %v1809 = vadd.f32 %v1424, %v1808
        %v1810 = vpop.f32.mrb[0].mxu0
        %1811 = vmatprep.mubr.f32.mxu0 0.0
        %1812 = vmatmul.mubr.f32.gmra.mrb[0].mxu0 %v1181
        %v1813 = vpop.f32.mrb[0].mxu0
        %v1814 = vadd.f32 %v1429, %v1813
        %v1815 = vpop.f32.mrb[0].mxu0
        %1816 = vmatprep.mubr.f32.mxu0 0.0
        %1817 = vmatmul.mubr.f32.gmra.mrb[0].mxu0 %v1182
        %v1818 = vpop.f32.mrb[0].mxu0
        %v1819 = vadd.f32 %v1434, %v1818
        %v1820 = vpop.f32.mrb[0].mxu0
        %1821 = vmatprep.mubr.f32.mxu0 0.0
        %1822 = vmatmul.mubr.f32.gmra.mrb[0].mxu0 %v1183
        %v1823 = vpop.f32.mrb[0].mxu0
        %v1824 = vadd.f32 %v1439, %v1823
        %v1825 = vpop.f32.mrb[0].mxu0
        %1826 = vmatprep.mubr.f32.mxu0 0.0
        %1827 = vmatmul.mubr.f32.gmra.mrb[0].mxu0 %v1184
        %v1828 = vpop.f32.mrb[0].mxu0
        %v1829 = vadd.f32 %v1444, %v1828
        %v1830 = vpop.f32.mrb[0].mxu0
        %1831 = vmatprep.mubr.f32.mxu0 0.0
        %1832 = vmatmul.mubr.f32.gmra.mrb[0].mxu0 %v1185
        %v1833 = vpop.f32.mrb[0].mxu0
        %v1834 = vadd.f32 %v1449, %v1833
        %v1835 = vpop.f32.mrb[0].mxu0
        %1836 = vmatprep.mubr.f32.mxu0 0.0
        %1837 = vmatmul.mubr.f32.gmra.mrb[0].mxu0 %v1186
        %v1838 = vpop.f32.mrb[0].mxu0
        %v1839 = vadd.f32 %v1454, %v1838
        %v1840 = vpop.f32.mrb[0].mxu0
        %1841 = vmatprep.mubr.f32.mxu0 0.0
        %1842 = vmatmul.mubr.f32.gmra.mrb[0].mxu0 %v1187
        %v1843 = vpop.f32.mrb[0].mxu0
        %v1844 = vadd.f32 %v1459, %v1843
        %v1845 = vpop.f32.mrb[0].mxu0
        %1846 = vmatprep.mubr.f32.mxu0 0.0
        %1847 = vmatmul.mubr.f32.gmra.mrb[0].mxu0 %v1188
        %v1848 = vpop.f32.mrb[0].mxu0
        %v1849 = vadd.f32 %v1464, %v1848
        %v1850 = vpop.f32.mrb[0].mxu0
        %1851 = vmatprep.mubr.f32.mxu0 0.0
        %1852 = vmatmul.mubr.f32.gmra.mrb[0].mxu0 %v1189
        %v1853 = vpop.f32.mrb[0].mxu0
        %v1854 = vadd.f32 %v1469, %v1853
        %v1855 = vpop.f32.mrb[0].mxu0
        %1856 = vmatprep.mubr.f32.mxu0 0.0
        %1857 = vmatmul.mubr.f32.gmra.mrb[0].mxu0 %v1190
        %v1858 = vpop.f32.mrb[0].mxu0
        %v1859 = vadd.f32 %v1474, %v1858
        %v1860 = vpop.f32.mrb[0].mxu0
        %1861 = vmatprep.mubr.f32.mxu0 0.0
        %1862 = vmatmul.mubr.f32.gmra.mrb[0].mxu0 %v1191
        %v1863 = vpop.f32.mrb[0].mxu0
        %v1864 = vadd.f32 %v1479, %v1863
        %v1865 = vpop.f32.mrb[0].mxu0
        %1866 = vmatprep.mubr.f32.mxu0 0.0
        %1867 = vmatmul.mubr.f32.gmra.mrb[0].mxu0 %v1192
        %v1868 = vpop.f32.mrb[0].mxu0
        %v1869 = vadd.f32 %v1484, %v1868
        %v1870 = vpop.f32.mrb[0].mxu0
        %1871 = vmatprep.mubr.f32.mxu0 0.0
        %1872 = vmatmul.mubr.f32.gmra.mrb[0].mxu0 %v1193
        %v1873 = vpop.f32.mrb[0].mxu0
        %v1874 = vadd.f32 %v1489, %v1873
        %v1875 = vpop.f32.mrb[0].mxu0
        %1876 = vmatprep.mubr.f32.mxu0 0.0
        %1877 = vmatmul.mubr.f32.gmra.mrb[0].mxu0 %v1194
        %v1878 = vpop.f32.mrb[0].mxu0
        %v1879 = vadd.f32 %v1494, %v1878
        %v1880 = vpop.f32.mrb[0].mxu0
        %1881 = vmatprep.mubr.f32.mxu0 0.0
        %1882 = vmatmul.mubr.f32.gmra.mrb[0].mxu0 %v1195
        %v1883 = vpop.f32.mrb[0].mxu0
        %v1884 = vadd.f32 %v1499, %v1883
        %v1885 = vpop.f32.mrb[0].mxu0
        %1886 = vmatprep.mubr.f32.mxu0 0.0
        %1887 = vmatmul.mubr.f32.gmra.mrb[0].mxu0 %v1196
        %v1888 = vpop.f32.mrb[0].mxu0
        %v1889 = vadd.f32 %v1504, %v1888
        %v1890 = vpop.f32.mrb[0].mxu0
        %1891 = vmatprep.mubr.f32.mxu0 0.0
        %1892 = vmatmul.mubr.f32.gmra.mrb[0].mxu0 %v1197
        %v1893 = vpop.f32.mrb[0].mxu0
        %v1894 = vadd.f32 %v1509, %v1893
        %v1895 = vpop.f32.mrb[0].mxu0
        %1896 = vmatprep.mubr.f32.mxu0 0.0
        %1897 = vmatmul.mubr.f32.gmra.mrb[0].mxu0 %v1198
        %v1898 = vpop.f32.mrb[0].mxu0
        %v1899 = vadd.f32 %v1514, %v1898
        %v1900 = vpop.f32.mrb[0].mxu0
        %1901 = vmatprep.mubr.f32.mxu0 0.0
        %1902 = vmatmul.mubr.f32.gmra.mrb[0].mxu0 %v1199
        %v1903 = vpop.f32.mrb[0].mxu0
        %v1904 = vadd.f32 %v1519, %v1903
        %v1905 = vpop.f32.mrb[0].mxu0
        %1906 = vmatprep.mubr.f32.mxu0 0.0
        %1907 = vmatmul.mubr.f32.gmra.mrb[0].mxu0 %v1200
        %v1908 = vpop.f32.mrb[0].mxu0
        %v1909 = vadd.f32 %v1524, %v1908
        %v1910 = vpop.f32.mrb[0].mxu0
        %1911 = vmatprep.mubr.f32.mxu0 0.0
        %1912 = vmatmul.mubr.f32.gmra.mrb[0].mxu0 %v1201
        %v1913 = vpop.f32.mrb[0].mxu0
        %v1914 = vadd.f32 %v1529, %v1913
        %v1915 = vpop.f32.mrb[0].mxu0
        %1916 = vmatprep.mubr.f32.mxu0 0.0
        %1917 = vmatmul.mubr.f32.gmra.mrb[0].mxu0 %v1202
        %v1918 = vpop.f32.mrb[0].mxu0
        %v1919 = vadd.f32 %v1534, %v1918
        %v1920 = vpop.f32.mrb[0].mxu0
        %1921 = vmatprep.mubr.f32.mxu0 0.0
        %1922 = vmatmul.mubr.f32.gmra.mrb[0].mxu0 %v1203
        %v1923 = vpop.f32.mrb[0].mxu0
        %v1924 = vadd.f32 %v1539, %v1923
        %v1925 = vpop.f32.mrb[0].mxu0
        %1926 = vmatprep.mubr.f32.mxu0 0.0
        %1927 = vmatmul.mubr.f32.gmra.mrb[0].mxu0 %v1204
        %v1928 = vpop.f32.mrb[0].mxu0
        %v1929 = vadd.f32 %v1544, %v1928
        %v1930 = vpop.f32.mrb[0].mxu0
        %1931 = vmatprep.mubr.f32.mxu0 0.0
        %1932 = vmatmul.mubr.f32.gmra.mrb[0].mxu0 %v1205
        %v1933 = vpop.f32.mrb[0].mxu0
        %v1934 = vadd.f32 %v1549, %v1933
        %v1935 = vpop.f32.mrb[0].mxu0
        %1936 = vmatprep.mubr.f32.mxu0 0.0
        %1937 = vmatmul.mubr.f32.gmra.mrb[0].mxu0 %v1206
        %v1938 = vpop.f32.mrb[0].mxu0
        %v1939 = vadd.f32 %v1554, %v1938
        %v1940 = vpop.f32.mrb[0].mxu0
        %1941 = vmatprep.mubr.f32.mxu0 0.0
        %1942 = vmatmul.mubr.f32.gmra.mrb[0].mxu0 %v1207
        %v1943 = vpop.f32.mrb[0].mxu0
        %v1944 = vadd.f32 %v1559, %v1943
        %v1945 = vpop.f32.mrb[0].mxu0
        %1946 = vmatprep.mubr.f32.mxu0 0.0
        %1947 = vmatmul.mubr.f32.gmra.mrb[0].mxu0 %v1208
        %v1948 = vpop.f32.mrb[0].mxu0
        %v1949 = vadd.f32 %v1564, %v1948
        %v1950 = vpop.f32.mrb[0].mxu0
        %1951 = vmatprep.mubr.f32.mxu0 0.0
        %1952 = vmatmul.mubr.f32.gmra.mrb[0].mxu0 %v1209
        %v1953 = vpop.f32.mrb[0].mxu0
        %v1954 = vadd.f32 %v1569, %v1953
        %v1955 = vpop.f32.mrb[0].mxu0
        %1956 = vmatprep.mubr.f32.mxu0 0.0
        %1957 = vmatmul.mubr.f32.gmra.mrb[0].mxu0 %v1210
        %v1958 = vpop.f32.mrb[0].mxu0
        %v1959 = vadd.f32 %v1574, %v1958
        %v1960 = vpop.f32.mrb[0].mxu0
        %1961 = vmatprep.mubr.f32.mxu0 0.0
        %1962 = vmatmul.mubr.f32.gmra.mrb[0].mxu0 %v1211
        %v1963 = vpop.f32.mrb[0].mxu0
        %v1964 = vadd.f32 %v1579, %v1963
        %v1965 = vpop.f32.mrb[0].mxu0
        %1966 = vmatprep.mubr.f32.mxu0 0.0
        %1967 = vmatmul.mubr.f32.gmra.mrb[0].mxu0 %v1212
        %v1968 = vpop.f32.mrb[0].mxu0
        %v1969 = vadd.f32 %v1584, %v1968
        %v1970 = vpop.f32.mrb[0].mxu0
        %1971 = vmatprep.mubr.f32.mxu0 0.0
        %1972 = vmatmul.mubr.f32.gmra.mrb[0].mxu0 %v1213
        %v1973 = vpop.f32.mrb[0].mxu0
        %v1974 = vadd.f32 %v1589, %v1973
        %v1975 = vpop.f32.mrb[0].mxu0
        %1976 = vmatprep.mubr.f32.mxu0 0.0
        %1977 = vmatmul.mubr.f32.gmra.mrb[0].mxu0 %v1214
        %v1978 = vpop.f32.mrb[0].mxu0
        %v1979 = vadd.f32 %v1594, %v1978
        %v1980 = vpop.f32.mrb[0].mxu0
        %1981 = vmatprep.mubr.f32.mxu0 0.0
        %1982 = vmatmul.mubr.f32.gmra.mrb[0].mxu0 %v1215
        %v1983 = vpop.f32.mrb[0].mxu0
        %v1984 = vadd.f32 %v1599, %v1983
        %v1985 = vpop.f32.mrb[0].mxu0
        %1986 = vmatprep.mubr.f32.mxu0 0.0
        %1987 = vmatmul.mubr.f32.gmra.mrb[0].mxu0 %v1216
        %v1988 = vpop.f32.mrb[0].mxu0
        %v1989 = vadd.f32 %v1604, %v1988
        %v1990 = vpop.f32.mrb[0].mxu0
        %1991 = vmatprep.mubr.f32.mxu0 0.0
        %1992 = vmatmul.mubr.f32.gmra.mrb[0].mxu0 %v1217
        %v1993 = vpop.f32.mrb[0].mxu0
        %v1994 = vadd.f32 %v1609, %v1993
        %v1995 = vpop.f32.mrb[0].mxu0
        %1996 = vmatprep.mubr.f32.mxu0 0.0
        %1997 = vmatmul.mubr.f32.gmra.mrb[0].mxu0 %v1218
        %v1998 = vpop.f32.mrb[0].mxu0
        %v1999 = vadd.f32 %v1614, %v1998
        %v2000 = vpop.f32.mrb[0].mxu0
        %2001 = vmatprep.mubr.f32.mxu0 0.0
        %2002 = vmatmul.mubr.f32.gmra.mrb[0].mxu0 %v1219
        %v2003 = vpop.f32.mrb[0].mxu0
        %v2004 = vadd.f32 %v1619, %v2003
        %v2005 = vpop.f32.mrb[0].mxu0
        %2006 = vmatprep.mubr.f32.mxu0 0.0
        %2007 = vmatmul.mubr.f32.gmra.mrb[0].mxu0 %v1220
        %v2008 = vpop.f32.mrb[0].mxu0
        %v2009 = vadd.f32 %v1624, %v2008
        %v2010 = vpop.f32.mrb[0].mxu0
        %2011 = vmatprep.mubr.f32.mxu0 0.0
        %2012 = vmatmul.mubr.f32.gmra.mrb[0].mxu0 %v1221
        %v2013 = vpop.f32.mrb[0].mxu0
        %v2014 = vadd.f32 %v1629, %v2013
        %v2015 = vpop.f32.mrb[0].mxu0
        %2016 = vmatprep.mubr.f32.mxu0 0.0
        %2017 = vmatmul.mubr.f32.gmra.mrb[0].mxu0 %v1222
        %v2018 = vpop.f32.mrb[0].mxu0
        %v2019 = vadd.f32 %v1634, %v2018
        %v2020 = vpop.f32.mrb[0].mxu0
        %2021 = vmatprep.mubr.f32.mxu0 0.0
        %2022 = vmatmul.mubr.f32.gmra.mrb[0].mxu0 %v1223
        %v2023 = vpop.f32.mrb[0].mxu0
        %v2024 = vadd.f32 %v1639, %v2023
        %v2025 = vpop.f32.mrb[0].mxu0
        %2026 = vmatprep.mubr.f32.mxu0 0.0
        %2027 = vmatmul.mubr.f32.gmra.mrb[0].mxu0 %v1224
        %v2028 = vpop.f32.mrb[0].mxu0
        %v2029 = vadd.f32 %v1644, %v2028
        %v2030 = vpop.f32.mrb[0].mxu0
        %2031 = vmatprep.mubr.f32.mxu0 0.0
        %2032 = vmatmul.mubr.f32.gmra.mrb[0].mxu0 %v1225
        %v2033 = vpop.f32.mrb[0].mxu0
        %v2034 = vadd.f32 %v1649, %v2033
        %v2035 = vpop.f32.mrb[0].mxu0
        %2036 = vmatprep.mubr.f32.mxu0 0.0
        %2037 = vmatmul.mubr.f32.gmra.mrb[0].mxu0 %v1226
        %v2038 = vpop.f32.mrb[0].mxu0
        %v2039 = vadd.f32 %v1654, %v2038
        %v2040 = vpop.f32.mrb[0].mxu0
        %2041 = vmatprep.mubr.f32.mxu0 0.0
        %2042 = vmatmul.mubr.f32.gmra.mrb[0].mxu0 %v1227
        %v2043 = vpop.f32.mrb[0].mxu0
        %v2044 = vadd.f32 %v1659, %v2043
        %v2045 = vpop.f32.mrb[0].mxu0
        %2046 = vmatprep.mubr.f32.mxu0 0.0
        %2047 = vmatmul.mubr.f32.gmra.mrb[0].mxu0 %v1228
        %v2048 = vpop.f32.mrb[0].mxu0
        %v2049 = vadd.f32 %v1664, %v2048
        %v2050 = vpop.f32.mrb[0].mxu0
        %2051 = vmatprep.mubr.f32.mxu0 0.0
        %2052 = vmatmul.mubr.f32.gmra.mrb[0].mxu0 %v1229
        %v2053 = vpop.f32.mrb[0].mxu0
        %v2054 = vadd.f32 %v1669, %v2053
        %v2055 = vpop.f32.mrb[0].mxu0
        %2056 = vmatprep.mubr.f32.mxu0 0.0
        %2057 = vmatmul.mubr.f32.gmra.mrb[0].mxu0 %v1230
        %v2058 = vpop.f32.mrb[0].mxu0
        %v2059 = vadd.f32 %v1674, %v2058
        %v2060 = vpop.f32.mrb[0].mxu0
        %2061 = vmatprep.mubr.f32.mxu0 0.0
        %2062 = vmatmul.mubr.f32.gmra.mrb[0].mxu0 %v1231
        %v2063 = vpop.f32.mrb[0].mxu0
        %v2064 = vadd.f32 %v1679, %v2063
        %v2065 = vpop.f32.mrb[0].mxu0
        %2066 = vmatprep.mubr.f32.mxu0 0.0
        %2067 = vmatmul.mubr.f32.gmra.mrb[0].mxu0 %v1232
        %v2068 = vpop.f32.mrb[0].mxu0
        %v2069 = vadd.f32 %v1684, %v2068
        %v2070 = vpop.f32.mrb[0].mxu0
        %2071 = vmatprep.mubr.f32.mxu0 0.0
        %2072 = vmatmul.mubr.f32.gmra.mrb[0].mxu0 %v1233
        %v2073 = vpop.f32.mrb[0].mxu0
        %v2074 = vadd.f32 %v1689, %v2073
        %v2075 = vpop.f32.mrb[0].mxu0
        %2076 = vmatprep.mubr.f32.mxu0 0.0
        %2077 = vmatmul.mubr.f32.gmra.mrb[0].mxu0 %v1234
        %v2078 = vpop.f32.mrb[0].mxu0
        %v2079 = vadd.f32 %v1694, %v2078
        %v2080 = vpop.f32.mrb[0].mxu0
        %2081 = vmatprep.mubr.f32.mxu0 0.0
        %2082 = vmatmul.mubr.f32.gmra.mrb[0].mxu0 %v1235
        %v2083 = vpop.f32.mrb[0].mxu0
        %v2084 = vadd.f32 %v1699, %v2083
        %v2085 = vpop.f32.mrb[0].mxu0
        %2086 = vmatprep.mubr.f32.mxu0 0.0
        %2087 = vmatmul.mubr.f32.gmra.mrb[0].mxu0 %v1236
        %v2088 = vpop.f32.mrb[0].mxu0
        %v2089 = vadd.f32 %v1704, %v2088
        %v2090 = vpop.f32.mrb[0].mxu0
        %2091 = vmatprep.mubr.f32.mxu0 0.0
        %2092 = vmatmul.mubr.f32.gmra.mrb[0].mxu0 %v1237
        %v2093 = vpop.f32.mrb[0].mxu0
        %v2094 = vadd.f32 %v1709, %v2093
        %v2095 = vpop.f32.mrb[0].mxu0
        %2096 = vmatprep.mubr.f32.mxu0 0.0
        %2097 = vmatmul.mubr.f32.gmra.mrb[0].mxu0 %v1238
        %v2098 = vpop.f32.mrb[0].mxu0
        %v2099 = vadd.f32 %v1714, %v2098
        %v2100 = vpop.f32.mrb[0].mxu0
        %2101 = vmatprep.mubr.f32.mxu0 0.0
        %2102 = vmatmul.mubr.f32.gmra.mrb[0].mxu0 %v1239
        %v2103 = vpop.f32.mrb[0].mxu0
        %v2104 = vadd.f32 %v1719, %v2103
        %v2105 = vpop.f32.mrb[0].mxu0
        %2106 = vdwg.mxu0
        %v2107 = vld [vmem:[#allocation2 + $0x2] sm:$0xff]
        %v2108 = vld [vmem:[#allocation2 + $0x12] sm:$0xff]
        %v2109 = vld [vmem:[#allocation2 + $0x22] sm:$0xff]
        %v2110 = vld [vmem:[#allocation2 + $0x32] sm:$0xff]
        %v2111 = vld [vmem:[#allocation2 + $0x42] sm:$0xff]
        %v2112 = vld [vmem:[#allocation2 + $0x52] sm:$0xff]
        %v2113 = vld [vmem:[#allocation2 + $0x62] sm:$0xff]
        %v2114 = vld [vmem:[#allocation2 + $0x72] sm:$0xff]
        %v2115 = vld [vmem:[#allocation2 + $0xa2] sm:$0xff]
        %v2116 = vld [vmem:[#allocation2 + $0xb2] sm:$0xff]
        %v2117 = vld [vmem:[#allocation2 + $0xc2] sm:$0xff]
        %v2118 = vld [vmem:[#allocation2 + $0xd2] sm:$0xff]
        %v2119 = vld [vmem:[#allocation2 + $0xe2] sm:$0xff]
        %v2120 = vld [vmem:[#allocation2 + $0xf2] sm:$0xff]
        %v2121 = vld [vmem:[#allocation2 + $0x102] sm:$0xff]
        %v2122 = vld [vmem:[#allocation2 + $0x112] sm:$0xff]
        %v2123 = vld [vmem:[#allocation2 + $0x142] sm:$0xff]
        %v2124 = vld [vmem:[#allocation2 + $0x152] sm:$0xff]
        %v2125 = vld [vmem:[#allocation2 + $0x162] sm:$0xff]
        %v2126 = vld [vmem:[#allocation2 + $0x172] sm:$0xff]
        %v2127 = vld [vmem:[#allocation2 + $0x182] sm:$0xff]
        %v2128 = vld [vmem:[#allocation2 + $0x192] sm:$0xff]
        %v2129 = vld [vmem:[#allocation2 + $0x1a2] sm:$0xff]
        %v2130 = vld [vmem:[#allocation2 + $0x1b2] sm:$0xff]
        %v2131 = vld [vmem:[#allocation2 + $0x1e2] sm:$0xff]
        %v2132 = vld [vmem:[#allocation2 + $0x1f2] sm:$0xff]
        %v2133 = vld [vmem:[#allocation2 + $0x202] sm:$0xff]
        %v2134 = vld [vmem:[#allocation2 + $0x212] sm:$0xff]
        %v2135 = vld [vmem:[#allocation2 + $0x222] sm:$0xff]
        %v2136 = vld [vmem:[#allocation2 + $0x232] sm:$0xff]
        %v2137 = vld [vmem:[#allocation2 + $0x242] sm:$0xff]
        %v2138 = vld [vmem:[#allocation2 + $0x252] sm:$0xff]
        %v2139 = vld [vmem:[#allocation2 + $0x282] sm:$0xff]
        %v2140 = vld [vmem:[#allocation2 + $0x292] sm:$0xff]
        %v2141 = vld [vmem:[#allocation2 + $0x2a2] sm:$0xff]
        %v2142 = vld [vmem:[#allocation2 + $0x2b2] sm:$0xff]
        %v2143 = vld [vmem:[#allocation2 + $0x2c2] sm:$0xff]
        %v2144 = vld [vmem:[#allocation2 + $0x2d2] sm:$0xff]
        %v2145 = vld [vmem:[#allocation2 + $0x2e2] sm:$0xff]
        %v2146 = vld [vmem:[#allocation2 + $0x2f2] sm:$0xff]
        %v2147 = vld [vmem:[#allocation2 + $0x322] sm:$0xff]
        %v2148 = vld [vmem:[#allocation2 + $0x332] sm:$0xff]
        %v2149 = vld [vmem:[#allocation2 + $0x342] sm:$0xff]
        %v2150 = vld [vmem:[#allocation2 + $0x352] sm:$0xff]
        %v2151 = vld [vmem:[#allocation2 + $0x362] sm:$0xff]
        %v2152 = vld [vmem:[#allocation2 + $0x372] sm:$0xff]
        %v2153 = vld [vmem:[#allocation2 + $0x382] sm:$0xff]
        %v2154 = vld [vmem:[#allocation2 + $0x392] sm:$0xff]
        %v2155 = vld [vmem:[#allocation2 + $0x3c2] sm:$0xff]
        %v2156 = vld [vmem:[#allocation2 + $0x3d2] sm:$0xff]
        %v2157 = vld [vmem:[#allocation2 + $0x3e2] sm:$0xff]
        %v2158 = vld [vmem:[#allocation2 + $0x3f2] sm:$0xff]
        %v2159 = vld [vmem:[#allocation2 + $0x402] sm:$0xff]
        %v2160 = vld [vmem:[#allocation2 + $0x412] sm:$0xff]
        %v2161 = vld [vmem:[#allocation2 + $0x422] sm:$0xff]
        %v2162 = vld [vmem:[#allocation2 + $0x432] sm:$0xff]
        %v2163 = vld [vmem:[#allocation2 + $0x462] sm:$0xff]
        %v2164 = vld [vmem:[#allocation2 + $0x472] sm:$0xff]
        %v2165 = vld [vmem:[#allocation2 + $0x482] sm:$0xff]
        %v2166 = vld [vmem:[#allocation2 + $0x492] sm:$0xff]
        %v2167 = vld [vmem:[#allocation2 + $0x4a2] sm:$0xff]
        %v2168 = vld [vmem:[#allocation2 + $0x4b2] sm:$0xff]
        %v2169 = vld [vmem:[#allocation2 + $0x4c2] sm:$0xff]
        %v2170 = vld [vmem:[#allocation2 + $0x4d2] sm:$0xff]
        %s2171 = scalar_lea.vmem %s3, 256
        %v2172 = vld [vmem:[%s2171] sm:$0xff]
        %v2173 = vld [vmem:[%s2171 + $0x8] sm:$0xff]
        %v2174 = vld [vmem:[%s2171 + $0x10] sm:$0xff]
        %v2175 = vld [vmem:[%s2171 + $0x18] sm:$0xff]
        %v2176 = vld [vmem:[%s2171 + $0x20] sm:$0xff]
        %v2177 = vld [vmem:[%s2171 + $0x28] sm:$0xff]
        %v2178 = vld [vmem:[%s2171 + $0x30] sm:$0xff]
        %v2179 = vld [vmem:[%s2171 + $0x38] sm:$0xff]
        %v2180 = vld [vmem:[%s2171 + $0x40] sm:$0xff]
        %v2181 = vld [vmem:[%s2171 + $0x48] sm:$0xff]
        %v2182 = vld [vmem:[%s2171 + $0x50] sm:$0xff]
        %v2183 = vld [vmem:[%s2171 + $0x58] sm:$0xff]
        %v2184 = vld [vmem:[%s2171 + $0x60] sm:$0xff]
        %v2185 = vld [vmem:[%s2171 + $0x68] sm:$0xff]
        %v2186 = vld [vmem:[%s2171 + $0x70] sm:$0xff]
        %v2187 = vld [vmem:[%s2171 + $0x78] sm:$0xff]
        %2188 = vmatprep.subr.mxu0 0.0
        %2189 = vmatpush1.msra.mxu0 %v2172
        %2190 = vmatprep.subr.mxu0 0.0
        %2191 = vmatpush1.msra.mxu0 %v2173
        %2192 = vmatprep.subr.mxu0 0.0
        %2193 = vmatpush1.msra.mxu0 %v2174
        %2194 = vmatprep.subr.mxu0 0.0
        %2195 = vmatpush1.msra.mxu0 %v2175
        %2196 = vmatprep.subr.mxu0 0.0
        %2197 = vmatpush1.msra.mxu0 %v2176
        %2198 = vmatprep.subr.mxu0 0.0
        %2199 = vmatpush1.msra.mxu0 %v2177
        %2200 = vmatprep.subr.mxu0 0.0
        %2201 = vmatpush1.msra.mxu0 %v2178
        %2202 = vmatprep.subr.mxu0 0.0
        %2203 = vmatpush1.msra.mxu0 %v2179
        %2204 = vmatprep.subr.mxu0 0.0
        %2205 = vmatpush1.msra.mxu0 %v2180
        %2206 = vmatprep.subr.mxu0 0.0
        %2207 = vmatpush1.msra.mxu0 %v2181
        %2208 = vmatprep.subr.mxu0 0.0
        %2209 = vmatpush1.msra.mxu0 %v2182
        %2210 = vmatprep.subr.mxu0 0.0
        %2211 = vmatpush1.msra.mxu0 %v2183
        %2212 = vmatprep.subr.mxu0 0.0
        %2213 = vmatpush1.msra.mxu0 %v2184
        %2214 = vmatprep.subr.mxu0 0.0
        %2215 = vmatpush1.msra.mxu0 %v2185
        %2216 = vmatprep.subr.mxu0 0.0
        %2217 = vmatpush1.msra.mxu0 %v2186
        %2218 = vmatprep.subr.mxu0 0.0
        %2219 = vmatpush1.msra.mxu0 %v2187
        %2220 = vmatprep.subr.mxu0 0.0
        %2221 = vmatpush1.msra.mxu0 0.0
        %2222 = vmatprep.subr.mxu0 0.0
        %2223 = vmatpush1.msra.mxu0 0.0
        %2224 = vmatprep.subr.mxu0 0.0
        %2225 = vmatpush1.msra.mxu0 0.0
        %2226 = vmatprep.subr.mxu0 0.0
        %2227 = vmatpush1.msra.mxu0 0.0
        %2228 = vmatprep.subr.mxu0 0.0
        %2229 = vmatpush1.msra.mxu0 0.0
        %2230 = vmatprep.subr.mxu0 0.0
        %2231 = vmatpush1.msra.mxu0 0.0
        %2232 = vmatprep.subr.mxu0 0.0
        %2233 = vmatpush1.msra.mxu0 0.0
        %2234 = vmatprep.subr.mxu0 0.0
        %2235 = vmatpush1.msra.mxu0 0.0
        %2236 = vmatprep.subr.mxu0 0.0
        %2237 = vmatpush1.msra.mxu0 0.0
        %2238 = vmatprep.subr.mxu0 0.0
        %2239 = vmatpush1.msra.mxu0 0.0
        %2240 = vmatprep.subr.mxu0 0.0
        %2241 = vmatpush1.msra.mxu0 0.0
        %2242 = vmatprep.subr.mxu0 0.0
        %2243 = vmatpush1.msra.mxu0 0.0
        %2244 = vmatprep.subr.mxu0 0.0
        %2245 = vmatpush1.msra.mxu0 0.0
        %2246 = vmatprep.subr.mxu0 0.0
        %2247 = vmatpush1.msra.mxu0 0.0
        %2248 = vmatprep.subr.mxu0 0.0
        %2249 = vmatpush1.msra.mxu0 0.0
        %2250 = vmatprep.subr.mxu0 0.0
        %2251 = vmatpush1.msra.mxu0 0.0
        %2252 = vmatprep.mubr.f32.mxu0 0.0
        %2253 = vmatmul.mubr.f32.gmra.mrb[0].mxu0 %v2107
        %v2254 = vpop.f32.mrb[0].mxu0
        %v2255 = vadd.f32 0.0, %v2254
        %v2256 = vpop.f32.mrb[0].mxu0
        %2257 = vmatprep.mubr.f32.mxu0 0.0
        %2258 = vmatmul.mubr.f32.gmra.mrb[0].mxu0 %v2108
        %v2259 = vpop.f32.mrb[0].mxu0
        %v2260 = vadd.f32 0.0, %v2259
        %v2261 = vpop.f32.mrb[0].mxu0
        %2262 = vmatprep.mubr.f32.mxu0 0.0
        %2263 = vmatmul.mubr.f32.gmra.mrb[0].mxu0 %v2109
        %v2264 = vpop.f32.mrb[0].mxu0
        %v2265 = vadd.f32 0.0, %v2264
        %v2266 = vpop.f32.mrb[0].mxu0
        %2267 = vmatprep.mubr.f32.mxu0 0.0
        %2268 = vmatmul.mubr.f32.gmra.mrb[0].mxu0 %v2110
        %v2269 = vpop.f32.mrb[0].mxu0
        %v2270 = vadd.f32 0.0, %v2269
        %v2271 = vpop.f32.mrb[0].mxu0
        %2272 = vmatprep.mubr.f32.mxu0 0.0
        %2273 = vmatmul.mubr.f32.gmra.mrb[0].mxu0 %v2111
        %v2274 = vpop.f32.mrb[0].mxu0
        %v2275 = vadd.f32 0.0, %v2274
        %v2276 = vpop.f32.mrb[0].mxu0
        %2277 = vmatprep.mubr.f32.mxu0 0.0
        %2278 = vmatmul.mubr.f32.gmra.mrb[0].mxu0 %v2112
        %v2279 = vpop.f32.mrb[0].mxu0
        %v2280 = vadd.f32 0.0, %v2279
        %v2281 = vpop.f32.mrb[0].mxu0
        %2282 = vmatprep.mubr.f32.mxu0 0.0
        %2283 = vmatmul.mubr.f32.gmra.mrb[0].mxu0 %v2113
        %v2284 = vpop.f32.mrb[0].mxu0
        %v2285 = vadd.f32 0.0, %v2284
        %v2286 = vpop.f32.mrb[0].mxu0
        %2287 = vmatprep.mubr.f32.mxu0 0.0
        %2288 = vmatmul.mubr.f32.gmra.mrb[0].mxu0 %v2114
        %v2289 = vpop.f32.mrb[0].mxu0
        %v2290 = vadd.f32 0.0, %v2289
        %v2291 = vpop.f32.mrb[0].mxu0
        %2292 = vmatprep.mubr.f32.mxu0 0.0
        %2293 = vmatmul.mubr.f32.gmra.mrb[0].mxu0 %v2115
        %v2294 = vpop.f32.mrb[0].mxu0
        %v2295 = vadd.f32 0.0, %v2294
        %v2296 = vpop.f32.mrb[0].mxu0
        %2297 = vmatprep.mubr.f32.mxu0 0.0
        %2298 = vmatmul.mubr.f32.gmra.mrb[0].mxu0 %v2116
        %v2299 = vpop.f32.mrb[0].mxu0
        %v2300 = vadd.f32 0.0, %v2299
        %v2301 = vpop.f32.mrb[0].mxu0
        %2302 = vmatprep.mubr.f32.mxu0 0.0
        %2303 = vmatmul.mubr.f32.gmra.mrb[0].mxu0 %v2117
        %v2304 = vpop.f32.mrb[0].mxu0
        %v2305 = vadd.f32 0.0, %v2304
        %v2306 = vpop.f32.mrb[0].mxu0
        %2307 = vmatprep.mubr.f32.mxu0 0.0
        %2308 = vmatmul.mubr.f32.gmra.mrb[0].mxu0 %v2118
        %v2309 = vpop.f32.mrb[0].mxu0
        %v2310 = vadd.f32 0.0, %v2309
        %v2311 = vpop.f32.mrb[0].mxu0
        %2312 = vmatprep.mubr.f32.mxu0 0.0
        %2313 = vmatmul.mubr.f32.gmra.mrb[0].mxu0 %v2119
        %v2314 = vpop.f32.mrb[0].mxu0
        %v2315 = vadd.f32 0.0, %v2314
        %v2316 = vpop.f32.mrb[0].mxu0
        %2317 = vmatprep.mubr.f32.mxu0 0.0
        %2318 = vmatmul.mubr.f32.gmra.mrb[0].mxu0 %v2120
        %v2319 = vpop.f32.mrb[0].mxu0
        %v2320 = vadd.f32 0.0, %v2319
        %v2321 = vpop.f32.mrb[0].mxu0
        %2322 = vmatprep.mubr.f32.mxu0 0.0
        %2323 = vmatmul.mubr.f32.gmra.mrb[0].mxu0 %v2121
        %v2324 = vpop.f32.mrb[0].mxu0
        %v2325 = vadd.f32 0.0, %v2324
        %v2326 = vpop.f32.mrb[0].mxu0
        %2327 = vmatprep.mubr.f32.mxu0 0.0
        %2328 = vmatmul.mubr.f32.gmra.mrb[0].mxu0 %v2122
        %v2329 = vpop.f32.mrb[0].mxu0
        %v2330 = vadd.f32 0.0, %v2329
        %v2331 = vpop.f32.mrb[0].mxu0
        %2332 = vmatprep.mubr.f32.mxu0 0.0
        %2333 = vmatmul.mubr.f32.gmra.mrb[0].mxu0 %v2123
        %v2334 = vpop.f32.mrb[0].mxu0
        %v2335 = vadd.f32 0.0, %v2334
        %v2336 = vpop.f32.mrb[0].mxu0
        %2337 = vmatprep.mubr.f32.mxu0 0.0
        %2338 = vmatmul.mubr.f32.gmra.mrb[0].mxu0 %v2124
        %v2339 = vpop.f32.mrb[0].mxu0
        %v2340 = vadd.f32 0.0, %v2339
        %v2341 = vpop.f32.mrb[0].mxu0
        %2342 = vmatprep.mubr.f32.mxu0 0.0
        %2343 = vmatmul.mubr.f32.gmra.mrb[0].mxu0 %v2125
        %v2344 = vpop.f32.mrb[0].mxu0
        %v2345 = vadd.f32 0.0, %v2344
        %v2346 = vpop.f32.mrb[0].mxu0
        %2347 = vmatprep.mubr.f32.mxu0 0.0
        %2348 = vmatmul.mubr.f32.gmra.mrb[0].mxu0 %v2126
        %v2349 = vpop.f32.mrb[0].mxu0
        %v2350 = vadd.f32 0.0, %v2349
        %v2351 = vpop.f32.mrb[0].mxu0
        %2352 = vmatprep.mubr.f32.mxu0 0.0
        %2353 = vmatmul.mubr.f32.gmra.mrb[0].mxu0 %v2127
        %v2354 = vpop.f32.mrb[0].mxu0
        %v2355 = vadd.f32 0.0, %v2354
        %v2356 = vpop.f32.mrb[0].mxu0
        %2357 = vmatprep.mubr.f32.mxu0 0.0
        %2358 = vmatmul.mubr.f32.gmra.mrb[0].mxu0 %v2128
        %v2359 = vpop.f32.mrb[0].mxu0
        %v2360 = vadd.f32 0.0, %v2359
        %v2361 = vpop.f32.mrb[0].mxu0
        %2362 = vmatprep.mubr.f32.mxu0 0.0
        %2363 = vmatmul.mubr.f32.gmra.mrb[0].mxu0 %v2129
        %v2364 = vpop.f32.mrb[0].mxu0
        %v2365 = vadd.f32 0.0, %v2364
        %v2366 = vpop.f32.mrb[0].mxu0
        %2367 = vmatprep.mubr.f32.mxu0 0.0
        %2368 = vmatmul.mubr.f32.gmra.mrb[0].mxu0 %v2130
        %v2369 = vpop.f32.mrb[0].mxu0
        %v2370 = vadd.f32 0.0, %v2369
        %v2371 = vpop.f32.mrb[0].mxu0
        %2372 = vmatprep.mubr.f32.mxu0 0.0
        %2373 = vmatmul.mubr.f32.gmra.mrb[0].mxu0 %v2131
        %v2374 = vpop.f32.mrb[0].mxu0
        %v2375 = vadd.f32 0.0, %v2374
        %v2376 = vpop.f32.mrb[0].mxu0
        %2377 = vmatprep.mubr.f32.mxu0 0.0
        %2378 = vmatmul.mubr.f32.gmra.mrb[0].mxu0 %v2132
        %v2379 = vpop.f32.mrb[0].mxu0
        %v2380 = vadd.f32 0.0, %v2379
        %v2381 = vpop.f32.mrb[0].mxu0
        %2382 = vmatprep.mubr.f32.mxu0 0.0
        %2383 = vmatmul.mubr.f32.gmra.mrb[0].mxu0 %v2133
        %v2384 = vpop.f32.mrb[0].mxu0
        %v2385 = vadd.f32 0.0, %v2384
        %v2386 = vpop.f32.mrb[0].mxu0
        %2387 = vmatprep.mubr.f32.mxu0 0.0
        %2388 = vmatmul.mubr.f32.gmra.mrb[0].mxu0 %v2134
        %v2389 = vpop.f32.mrb[0].mxu0
        %v2390 = vadd.f32 0.0, %v2389
        %v2391 = vpop.f32.mrb[0].mxu0
        %2392 = vmatprep.mubr.f32.mxu0 0.0
        %2393 = vmatmul.mubr.f32.gmra.mrb[0].mxu0 %v2135
        %v2394 = vpop.f32.mrb[0].mxu0
        %v2395 = vadd.f32 0.0, %v2394
        %v2396 = vpop.f32.mrb[0].mxu0
        %2397 = vmatprep.mubr.f32.mxu0 0.0
        %2398 = vmatmul.mubr.f32.gmra.mrb[0].mxu0 %v2136
        %v2399 = vpop.f32.mrb[0].mxu0
        %v2400 = vadd.f32 0.0, %v2399
        %v2401 = vpop.f32.mrb[0].mxu0
        %2402 = vmatprep.mubr.f32.mxu0 0.0
        %2403 = vmatmul.mubr.f32.gmra.mrb[0].mxu0 %v2137
        %v2404 = vpop.f32.mrb[0].mxu0
        %v2405 = vadd.f32 0.0, %v2404
        %v2406 = vpop.f32.mrb[0].mxu0
        %2407 = vmatprep.mubr.f32.mxu0 0.0
        %2408 = vmatmul.mubr.f32.gmra.mrb[0].mxu0 %v2138
        %v2409 = vpop.f32.mrb[0].mxu0
        %v2410 = vadd.f32 0.0, %v2409
        %v2411 = vpop.f32.mrb[0].mxu0
        %2412 = vmatprep.mubr.f32.mxu0 0.0
        %2413 = vmatmul.mubr.f32.gmra.mrb[0].mxu0 %v2139
        %v2414 = vpop.f32.mrb[0].mxu0
        %v2415 = vadd.f32 0.0, %v2414
        %v2416 = vpop.f32.mrb[0].mxu0
        %2417 = vmatprep.mubr.f32.mxu0 0.0
        %2418 = vmatmul.mubr.f32.gmra.mrb[0].mxu0 %v2140
        %v2419 = vpop.f32.mrb[0].mxu0
        %v2420 = vadd.f32 0.0, %v2419
        %v2421 = vpop.f32.mrb[0].mxu0
        %2422 = vmatprep.mubr.f32.mxu0 0.0
        %2423 = vmatmul.mubr.f32.gmra.mrb[0].mxu0 %v2141
        %v2424 = vpop.f32.mrb[0].mxu0
        %v2425 = vadd.f32 0.0, %v2424
        %v2426 = vpop.f32.mrb[0].mxu0
        %2427 = vmatprep.mubr.f32.mxu0 0.0
        %2428 = vmatmul.mubr.f32.gmra.mrb[0].mxu0 %v2142
        %v2429 = vpop.f32.mrb[0].mxu0
        %v2430 = vadd.f32 0.0, %v2429
        %v2431 = vpop.f32.mrb[0].mxu0
        %2432 = vmatprep.mubr.f32.mxu0 0.0
        %2433 = vmatmul.mubr.f32.gmra.mrb[0].mxu0 %v2143
        %v2434 = vpop.f32.mrb[0].mxu0
        %v2435 = vadd.f32 0.0, %v2434
        %v2436 = vpop.f32.mrb[0].mxu0
        %2437 = vmatprep.mubr.f32.mxu0 0.0
        %2438 = vmatmul.mubr.f32.gmra.mrb[0].mxu0 %v2144
        %v2439 = vpop.f32.mrb[0].mxu0
        %v2440 = vadd.f32 0.0, %v2439
        %v2441 = vpop.f32.mrb[0].mxu0
        %2442 = vmatprep.mubr.f32.mxu0 0.0
        %2443 = vmatmul.mubr.f32.gmra.mrb[0].mxu0 %v2145
        %v2444 = vpop.f32.mrb[0].mxu0
        %v2445 = vadd.f32 0.0, %v2444
        %v2446 = vpop.f32.mrb[0].mxu0
        %2447 = vmatprep.mubr.f32.mxu0 0.0
        %2448 = vmatmul.mubr.f32.gmra.mrb[0].mxu0 %v2146
        %v2449 = vpop.f32.mrb[0].mxu0
        %v2450 = vadd.f32 0.0, %v2449
        %v2451 = vpop.f32.mrb[0].mxu0
        %2452 = vmatprep.mubr.f32.mxu0 0.0
        %2453 = vmatmul.mubr.f32.gmra.mrb[0].mxu0 %v2147
        %v2454 = vpop.f32.mrb[0].mxu0
        %v2455 = vadd.f32 0.0, %v2454
        %v2456 = vpop.f32.mrb[0].mxu0
        %2457 = vmatprep.mubr.f32.mxu0 0.0
        %2458 = vmatmul.mubr.f32.gmra.mrb[0].mxu0 %v2148
        %v2459 = vpop.f32.mrb[0].mxu0
        %v2460 = vadd.f32 0.0, %v2459
        %v2461 = vpop.f32.mrb[0].mxu0
        %2462 = vmatprep.mubr.f32.mxu0 0.0
        %2463 = vmatmul.mubr.f32.gmra.mrb[0].mxu0 %v2149
        %v2464 = vpop.f32.mrb[0].mxu0
        %v2465 = vadd.f32 0.0, %v2464
        %v2466 = vpop.f32.mrb[0].mxu0
        %2467 = vmatprep.mubr.f32.mxu0 0.0
        %2468 = vmatmul.mubr.f32.gmra.mrb[0].mxu0 %v2150
        %v2469 = vpop.f32.mrb[0].mxu0
        %v2470 = vadd.f32 0.0, %v2469
        %v2471 = vpop.f32.mrb[0].mxu0
        %2472 = vmatprep.mubr.f32.mxu0 0.0
        %2473 = vmatmul.mubr.f32.gmra.mrb[0].mxu0 %v2151
        %v2474 = vpop.f32.mrb[0].mxu0
        %v2475 = vadd.f32 0.0, %v2474
        %v2476 = vpop.f32.mrb[0].mxu0
        %2477 = vmatprep.mubr.f32.mxu0 0.0
        %2478 = vmatmul.mubr.f32.gmra.mrb[0].mxu0 %v2152
        %v2479 = vpop.f32.mrb[0].mxu0
        %v2480 = vadd.f32 0.0, %v2479
        %v2481 = vpop.f32.mrb[0].mxu0
        %2482 = vmatprep.mubr.f32.mxu0 0.0
        %2483 = vmatmul.mubr.f32.gmra.mrb[0].mxu0 %v2153
        %v2484 = vpop.f32.mrb[0].mxu0
        %v2485 = vadd.f32 0.0, %v2484
        %v2486 = vpop.f32.mrb[0].mxu0
        %2487 = vmatprep.mubr.f32.mxu0 0.0
        %2488 = vmatmul.mubr.f32.gmra.mrb[0].mxu0 %v2154
        %v2489 = vpop.f32.mrb[0].mxu0
        %v2490 = vadd.f32 0.0, %v2489
        %v2491 = vpop.f32.mrb[0].mxu0
        %2492 = vmatprep.mubr.f32.mxu0 0.0
        %2493 = vmatmul.mubr.f32.gmra.mrb[0].mxu0 %v2155
        %v2494 = vpop.f32.mrb[0].mxu0
        %v2495 = vadd.f32 0.0, %v2494
        %v2496 = vpop.f32.mrb[0].mxu0
        %2497 = vmatprep.mubr.f32.mxu0 0.0
        %2498 = vmatmul.mubr.f32.gmra.mrb[0].mxu0 %v2156
        %v2499 = vpop.f32.mrb[0].mxu0
        %v2500 = vadd.f32 0.0, %v2499
        %v2501 = vpop.f32.mrb[0].mxu0
        %2502 = vmatprep.mubr.f32.mxu0 0.0
        %2503 = vmatmul.mubr.f32.gmra.mrb[0].mxu0 %v2157
        %v2504 = vpop.f32.mrb[0].mxu0
        %v2505 = vadd.f32 0.0, %v2504
        %v2506 = vpop.f32.mrb[0].mxu0
        %2507 = vmatprep.mubr.f32.mxu0 0.0
        %2508 = vmatmul.mubr.f32.gmra.mrb[0].mxu0 %v2158
        %v2509 = vpop.f32.mrb[0].mxu0
        %v2510 = vadd.f32 0.0, %v2509
        %v2511 = vpop.f32.mrb[0].mxu0
        %2512 = vmatprep.mubr.f32.mxu0 0.0
        %2513 = vmatmul.mubr.f32.gmra.mrb[0].mxu0 %v2159
        %v2514 = vpop.f32.mrb[0].mxu0
        %v2515 = vadd.f32 0.0, %v2514
        %v2516 = vpop.f32.mrb[0].mxu0
        %2517 = vmatprep.mubr.f32.mxu0 0.0
        %2518 = vmatmul.mubr.f32.gmra.mrb[0].mxu0 %v2160
        %v2519 = vpop.f32.mrb[0].mxu0
        %v2520 = vadd.f32 0.0, %v2519
        %v2521 = vpop.f32.mrb[0].mxu0
        %2522 = vmatprep.mubr.f32.mxu0 0.0
        %2523 = vmatmul.mubr.f32.gmra.mrb[0].mxu0 %v2161
        %v2524 = vpop.f32.mrb[0].mxu0
        %v2525 = vadd.f32 0.0, %v2524
        %v2526 = vpop.f32.mrb[0].mxu0
        %2527 = vmatprep.mubr.f32.mxu0 0.0
        %2528 = vmatmul.mubr.f32.gmra.mrb[0].mxu0 %v2162
        %v2529 = vpop.f32.mrb[0].mxu0
        %v2530 = vadd.f32 0.0, %v2529
        %v2531 = vpop.f32.mrb[0].mxu0
        %2532 = vmatprep.mubr.f32.mxu0 0.0
        %2533 = vmatmul.mubr.f32.gmra.mrb[0].mxu0 %v2163
        %v2534 = vpop.f32.mrb[0].mxu0
        %v2535 = vadd.f32 0.0, %v2534
        %v2536 = vpop.f32.mrb[0].mxu0
        %2537 = vmatprep.mubr.f32.mxu0 0.0
        %2538 = vmatmul.mubr.f32.gmra.mrb[0].mxu0 %v2164
        %v2539 = vpop.f32.mrb[0].mxu0
        %v2540 = vadd.f32 0.0, %v2539
        %v2541 = vpop.f32.mrb[0].mxu0
        %2542 = vmatprep.mubr.f32.mxu0 0.0
        %2543 = vmatmul.mubr.f32.gmra.mrb[0].mxu0 %v2165
        %v2544 = vpop.f32.mrb[0].mxu0
        %v2545 = vadd.f32 0.0, %v2544
        %v2546 = vpop.f32.mrb[0].mxu0
        %2547 = vmatprep.mubr.f32.mxu0 0.0
        %2548 = vmatmul.mubr.f32.gmra.mrb[0].mxu0 %v2166
        %v2549 = vpop.f32.mrb[0].mxu0
        %v2550 = vadd.f32 0.0, %v2549
        %v2551 = vpop.f32.mrb[0].mxu0
        %2552 = vmatprep.mubr.f32.mxu0 0.0
        %2553 = vmatmul.mubr.f32.gmra.mrb[0].mxu0 %v2167
        %v2554 = vpop.f32.mrb[0].mxu0
        %v2555 = vadd.f32 0.0, %v2554
        %v2556 = vpop.f32.mrb[0].mxu0
        %2557 = vmatprep.mubr.f32.mxu0 0.0
        %2558 = vmatmul.mubr.f32.gmra.mrb[0].mxu0 %v2168
        %v2559 = vpop.f32.mrb[0].mxu0
        %v2560 = vadd.f32 0.0, %v2559
        %v2561 = vpop.f32.mrb[0].mxu0
        %2562 = vmatprep.mubr.f32.mxu0 0.0
        %2563 = vmatmul.mubr.f32.gmra.mrb[0].mxu0 %v2169
        %v2564 = vpop.f32.mrb[0].mxu0
        %v2565 = vadd.f32 0.0, %v2564
        %v2566 = vpop.f32.mrb[0].mxu0
        %2567 = vmatprep.mubr.f32.mxu0 0.0
        %2568 = vmatmul.mubr.f32.gmra.mrb[0].mxu0 %v2170
        %v2569 = vpop.f32.mrb[0].mxu0
        %v2570 = vadd.f32 0.0, %v2569
        %v2571 = vpop.f32.mrb[0].mxu0
        %2572 = vdwg.mxu0
        %v2573 = vadd.f32 %v1789, %v2255
        %v2574 = vadd.f32 %v1794, %v2260
        %v2575 = vadd.f32 %v1799, %v2265
        %v2576 = vadd.f32 %v1804, %v2270
        %v2577 = vadd.f32 %v1809, %v2275
        %v2578 = vadd.f32 %v1814, %v2280
        %v2579 = vadd.f32 %v1819, %v2285
        %v2580 = vadd.f32 %v1824, %v2290
        %v2581 = vadd.f32 %v1829, %v2295
        %v2582 = vadd.f32 %v1834, %v2300
        %v2583 = vadd.f32 %v1839, %v2305
        %v2584 = vadd.f32 %v1844, %v2310
        %v2585 = vadd.f32 %v1849, %v2315
        %v2586 = vadd.f32 %v1854, %v2320
        %v2587 = vadd.f32 %v1859, %v2325
        %v2588 = vadd.f32 %v1864, %v2330
        %v2589 = vadd.f32 %v1869, %v2335
        %v2590 = vadd.f32 %v1874, %v2340
        %v2591 = vadd.f32 %v1879, %v2345
        %v2592 = vadd.f32 %v1884, %v2350
        %v2593 = vadd.f32 %v1889, %v2355
        %v2594 = vadd.f32 %v1894, %v2360
        %v2595 = vadd.f32 %v1899, %v2365
        %v2596 = vadd.f32 %v1904, %v2370
        %v2597 = vadd.f32 %v1909, %v2375
        %v2598 = vadd.f32 %v1914, %v2380
        %v2599 = vadd.f32 %v1919, %v2385
        %v2600 = vadd.f32 %v1924, %v2390
        %v2601 = vadd.f32 %v1929, %v2395
        %v2602 = vadd.f32 %v1934, %v2400
        %v2603 = vadd.f32 %v1939, %v2405
        %v2604 = vadd.f32 %v1944, %v2410
        %v2605 = vadd.f32 %v1949, %v2415
        %v2606 = vadd.f32 %v1954, %v2420
        %v2607 = vadd.f32 %v1959, %v2425
        %v2608 = vadd.f32 %v1964, %v2430
        %v2609 = vadd.f32 %v1969, %v2435
        %v2610 = vadd.f32 %v1974, %v2440
        %v2611 = vadd.f32 %v1979, %v2445
        %v2612 = vadd.f32 %v1984, %v2450
        %v2613 = vadd.f32 %v1989, %v2455
        %v2614 = vadd.f32 %v1994, %v2460
        %v2615 = vadd.f32 %v1999, %v2465
        %v2616 = vadd.f32 %v2004, %v2470
        %v2617 = vadd.f32 %v2009, %v2475
        %v2618 = vadd.f32 %v2014, %v2480
        %v2619 = vadd.f32 %v2019, %v2485
        %v2620 = vadd.f32 %v2024, %v2490
        %v2621 = vadd.f32 %v2029, %v2495
        %v2622 = vadd.f32 %v2034, %v2500
        %v2623 = vadd.f32 %v2039, %v2505
        %v2624 = vadd.f32 %v2044, %v2510
        %v2625 = vadd.f32 %v2049, %v2515
        %v2626 = vadd.f32 %v2054, %v2520
        %v2627 = vadd.f32 %v2059, %v2525
        %v2628 = vadd.f32 %v2064, %v2530
        %v2629 = vadd.f32 %v2069, %v2535
        %v2630 = vadd.f32 %v2074, %v2540
        %v2631 = vadd.f32 %v2079, %v2545
        %v2632 = vadd.f32 %v2084, %v2550
        %v2633 = vadd.f32 %v2089, %v2555
        %v2634 = vadd.f32 %v2094, %v2560
        %v2635 = vadd.f32 %v2099, %v2565
        %v2636 = vadd.f32 %v2104, %v2570
        %v2637 = vld [vmem:[%s1111] sm:$0xff]
        %v2638 = vld [vmem:[%s1111 + $0x10] sm:$0xff]
        %v2639 = vld [vmem:[%s1111 + $0x20] sm:$0xff]
        %v2640 = vld [vmem:[%s1111 + $0x30] sm:$0xff]
        %v2641 = vld [vmem:[%s1111 + $0x40] sm:$0xff]
        %v2642 = vld [vmem:[%s1111 + $0x50] sm:$0xff]
        %v2643 = vld [vmem:[%s1111 + $0x60] sm:$0xff]
        %v2644 = vld [vmem:[%s1111 + $0x70] sm:$0xff]
        %v2645 = vld [vmem:[%s1111 + $0xa0] sm:$0xff]
        %v2646 = vld [vmem:[%s1111 + $0xb0] sm:$0xff]
        %v2647 = vld [vmem:[%s1111 + $0xc0] sm:$0xff]
        %v2648 = vld [vmem:[%s1111 + $0xd0] sm:$0xff]
        %v2649 = vld [vmem:[%s1111 + $0xe0] sm:$0xff]
        %v2650 = vld [vmem:[%s1111 + $0xf0] sm:$0xff]
        %v2651 = vld [vmem:[%s1111 + $0x100] sm:$0xff]
        %v2652 = vld [vmem:[%s1111 + $0x110] sm:$0xff]
        %v2653 = vld [vmem:[%s1111 + $0x140] sm:$0xff]
        %v2654 = vld [vmem:[%s1111 + $0x150] sm:$0xff]
        %v2655 = vld [vmem:[%s1111 + $0x160] sm:$0xff]
        %v2656 = vld [vmem:[%s1111 + $0x170] sm:$0xff]
        %v2657 = vld [vmem:[%s1111 + $0x180] sm:$0xff]
        %v2658 = vld [vmem:[%s1111 + $0x190] sm:$0xff]
        %v2659 = vld [vmem:[%s1111 + $0x1a0] sm:$0xff]
        %v2660 = vld [vmem:[%s1111 + $0x1b0] sm:$0xff]
        %v2661 = vld [vmem:[%s1111 + $0x1e0] sm:$0xff]
        %v2662 = vld [vmem:[%s1111 + $0x1f0] sm:$0xff]
        %v2663 = vld [vmem:[%s1111 + $0x200] sm:$0xff]
        %v2664 = vld [vmem:[%s1111 + $0x210] sm:$0xff]
        %v2665 = vld [vmem:[%s1111 + $0x220] sm:$0xff]
        %v2666 = vld [vmem:[%s1111 + $0x230] sm:$0xff]
        %v2667 = vld [vmem:[%s1111 + $0x240] sm:$0xff]
        %v2668 = vld [vmem:[%s1111 + $0x250] sm:$0xff]
        %v2669 = vld [vmem:[%s1111 + $0x280] sm:$0xff]
        %v2670 = vld [vmem:[%s1111 + $0x290] sm:$0xff]
        %v2671 = vld [vmem:[%s1111 + $0x2a0] sm:$0xff]
        %v2672 = vld [vmem:[%s1111 + $0x2b0] sm:$0xff]
        %v2673 = vld [vmem:[%s1111 + $0x2c0] sm:$0xff]
        %v2674 = vld [vmem:[%s1111 + $0x2d0] sm:$0xff]
        %v2675 = vld [vmem:[%s1111 + $0x2e0] sm:$0xff]
        %v2676 = vld [vmem:[%s1111 + $0x2f0] sm:$0xff]
        %v2677 = vld [vmem:[%s1111 + $0x320] sm:$0xff]
        %v2678 = vld [vmem:[%s1111 + $0x330] sm:$0xff]
        %v2679 = vld [vmem:[%s1111 + $0x340] sm:$0xff]
        %v2680 = vld [vmem:[%s1111 + $0x350] sm:$0xff]
        %v2681 = vld [vmem:[%s1111 + $0x360] sm:$0xff]
        %v2682 = vld [vmem:[%s1111 + $0x370] sm:$0xff]
        %v2683 = vld [vmem:[%s1111 + $0x380] sm:$0xff]
        %v2684 = vld [vmem:[%s1111 + $0x390] sm:$0xff]
        %v2685 = vld [vmem:[%s1111 + $0x3c0] sm:$0xff]
        %v2686 = vld [vmem:[%s1111 + $0x3d0] sm:$0xff]
        %v2687 = vld [vmem:[%s1111 + $0x3e0] sm:$0xff]
        %v2688 = vld [vmem:[%s1111 + $0x3f0] sm:$0xff]
        %v2689 = vld [vmem:[%s1111 + $0x400] sm:$0xff]
        %v2690 = vld [vmem:[%s1111 + $0x410] sm:$0xff]
        %v2691 = vld [vmem:[%s1111 + $0x420] sm:$0xff]
        %v2692 = vld [vmem:[%s1111 + $0x430] sm:$0xff]
        %v2693 = vld [vmem:[%s1111 + $0x460] sm:$0xff]
        %v2694 = vld [vmem:[%s1111 + $0x470] sm:$0xff]
        %v2695 = vld [vmem:[%s1111 + $0x480] sm:$0xff]
        %v2696 = vld [vmem:[%s1111 + $0x490] sm:$0xff]
        %v2697 = vld [vmem:[%s1111 + $0x4a0] sm:$0xff]
        %v2698 = vld [vmem:[%s1111 + $0x4b0] sm:$0xff]
        %v2699 = vld [vmem:[%s1111 + $0x4c0] sm:$0xff]
        %v2700 = vld [vmem:[%s1111 + $0x4d0] sm:$0xff]
        %s2701 = scalar_lea.vmem %s3, 384
        %v2702 = vld [vmem:[%s2701] sm:$0xff]
        %v2703 = vld [vmem:[%s2701 + $0x8] sm:$0xff]
        %v2704 = vld [vmem:[%s2701 + $0x10] sm:$0xff]
        %v2705 = vld [vmem:[%s2701 + $0x18] sm:$0xff]
        %v2706 = vld [vmem:[%s2701 + $0x20] sm:$0xff]
        %v2707 = vld [vmem:[%s2701 + $0x28] sm:$0xff]
        %v2708 = vld [vmem:[%s2701 + $0x30] sm:$0xff]
        %v2709 = vld [vmem:[%s2701 + $0x38] sm:$0xff]
        %v2710 = vld [vmem:[%s2701 + $0x40] sm:$0xff]
        %v2711 = vld [vmem:[%s2701 + $0x48] sm:$0xff]
        %v2712 = vld [vmem:[%s2701 + $0x50] sm:$0xff]
        %v2713 = vld [vmem:[%s2701 + $0x58] sm:$0xff]
        %v2714 = vld [vmem:[%s2701 + $0x60] sm:$0xff]
        %v2715 = vld [vmem:[%s2701 + $0x68] sm:$0xff]
        %v2716 = vld [vmem:[%s2701 + $0x70] sm:$0xff]
        %v2717 = vld [vmem:[%s2701 + $0x78] sm:$0xff]
        %2718 = vmatprep.subr.mxu0 0.0
        %2719 = vmatpush1.msra.mxu0 %v2702
        %2720 = vmatprep.subr.mxu0 0.0
        %2721 = vmatpush1.msra.mxu0 %v2703
        %2722 = vmatprep.subr.mxu0 0.0
        %2723 = vmatpush1.msra.mxu0 %v2704
        %2724 = vmatprep.subr.mxu0 0.0
        %2725 = vmatpush1.msra.mxu0 %v2705
        %2726 = vmatprep.subr.mxu0 0.0
        %2727 = vmatpush1.msra.mxu0 %v2706
        %2728 = vmatprep.subr.mxu0 0.0
        %2729 = vmatpush1.msra.mxu0 %v2707
        %2730 = vmatprep.subr.mxu0 0.0
        %2731 = vmatpush1.msra.mxu0 %v2708
        %2732 = vmatprep.subr.mxu0 0.0
        %2733 = vmatpush1.msra.mxu0 %v2709
        %2734 = vmatprep.subr.mxu0 0.0
        %2735 = vmatpush1.msra.mxu0 %v2710
        %2736 = vmatprep.subr.mxu0 0.0
        %2737 = vmatpush1.msra.mxu0 %v2711
        %2738 = vmatprep.subr.mxu0 0.0
        %2739 = vmatpush1.msra.mxu0 %v2712
        %2740 = vmatprep.subr.mxu0 0.0
        %2741 = vmatpush1.msra.mxu0 %v2713
        %2742 = vmatprep.subr.mxu0 0.0
        %2743 = vmatpush1.msra.mxu0 %v2714
        %2744 = vmatprep.subr.mxu0 0.0
        %2745 = vmatpush1.msra.mxu0 %v2715
        %2746 = vmatprep.subr.mxu0 0.0
        %2747 = vmatpush1.msra.mxu0 %v2716
        %2748 = vmatprep.subr.mxu0 0.0
        %2749 = vmatpush1.msra.mxu0 %v2717
        %2750 = vmatprep.subr.mxu0 0.0
        %2751 = vmatpush1.msra.mxu0 0.0
        %2752 = vmatprep.subr.mxu0 0.0
        %2753 = vmatpush1.msra.mxu0 0.0
        %2754 = vmatprep.subr.mxu0 0.0
        %2755 = vmatpush1.msra.mxu0 0.0
        %2756 = vmatprep.subr.mxu0 0.0
        %2757 = vmatpush1.msra.mxu0 0.0
        %2758 = vmatprep.subr.mxu0 0.0
        %2759 = vmatpush1.msra.mxu0 0.0
        %2760 = vmatprep.subr.mxu0 0.0
        %2761 = vmatpush1.msra.mxu0 0.0
        %2762 = vmatprep.subr.mxu0 0.0
        %2763 = vmatpush1.msra.mxu0 0.0
        %2764 = vmatprep.subr.mxu0 0.0
        %2765 = vmatpush1.msra.mxu0 0.0
        %2766 = vmatprep.subr.mxu0 0.0
        %2767 = vmatpush1.msra.mxu0 0.0
        %2768 = vmatprep.subr.mxu0 0.0
        %2769 = vmatpush1.msra.mxu0 0.0
        %2770 = vmatprep.subr.mxu0 0.0
        %2771 = vmatpush1.msra.mxu0 0.0
        %2772 = vmatprep.subr.mxu0 0.0
        %2773 = vmatpush1.msra.mxu0 0.0
        %2774 = vmatprep.subr.mxu0 0.0
        %2775 = vmatpush1.msra.mxu0 0.0
        %2776 = vmatprep.subr.mxu0 0.0
        %2777 = vmatpush1.msra.mxu0 0.0
        %2778 = vmatprep.subr.mxu0 0.0
        %2779 = vmatpush1.msra.mxu0 0.0
        %2780 = vmatprep.subr.mxu0 0.0
        %2781 = vmatpush1.msra.mxu0 0.0
        %2782 = vmatprep.mubr.f32.mxu0 0.0
        %2783 = vmatmul.mubr.f32.gmra.mrb[0].mxu0 %v2637
        %v2784 = vpop.f32.mrb[0].mxu0
        %v2785 = vadd.f32 0.0, %v2784
        %v2786 = vpop.f32.mrb[0].mxu0
        %2787 = vmatprep.mubr.f32.mxu0 0.0
        %2788 = vmatmul.mubr.f32.gmra.mrb[0].mxu0 %v2638
        %v2789 = vpop.f32.mrb[0].mxu0
        %v2790 = vadd.f32 0.0, %v2789
        %v2791 = vpop.f32.mrb[0].mxu0
        %2792 = vmatprep.mubr.f32.mxu0 0.0
        %2793 = vmatmul.mubr.f32.gmra.mrb[0].mxu0 %v2639
        %v2794 = vpop.f32.mrb[0].mxu0
        %v2795 = vadd.f32 0.0, %v2794
        %v2796 = vpop.f32.mrb[0].mxu0
        %2797 = vmatprep.mubr.f32.mxu0 0.0
        %2798 = vmatmul.mubr.f32.gmra.mrb[0].mxu0 %v2640
        %v2799 = vpop.f32.mrb[0].mxu0
        %v2800 = vadd.f32 0.0, %v2799
        %v2801 = vpop.f32.mrb[0].mxu0
        %2802 = vmatprep.mubr.f32.mxu0 0.0
        %2803 = vmatmul.mubr.f32.gmra.mrb[0].mxu0 %v2641
        %v2804 = vpop.f32.mrb[0].mxu0
        %v2805 = vadd.f32 0.0, %v2804
        %v2806 = vpop.f32.mrb[0].mxu0
        %2807 = vmatprep.mubr.f32.mxu0 0.0
        %2808 = vmatmul.mubr.f32.gmra.mrb[0].mxu0 %v2642
        %v2809 = vpop.f32.mrb[0].mxu0
        %v2810 = vadd.f32 0.0, %v2809
        %v2811 = vpop.f32.mrb[0].mxu0
        %2812 = vmatprep.mubr.f32.mxu0 0.0
        %2813 = vmatmul.mubr.f32.gmra.mrb[0].mxu0 %v2643
        %v2814 = vpop.f32.mrb[0].mxu0
        %v2815 = vadd.f32 0.0, %v2814
        %v2816 = vpop.f32.mrb[0].mxu0
        %2817 = vmatprep.mubr.f32.mxu0 0.0
        %2818 = vmatmul.mubr.f32.gmra.mrb[0].mxu0 %v2644
        %v2819 = vpop.f32.mrb[0].mxu0
        %v2820 = vadd.f32 0.0, %v2819
        %v2821 = vpop.f32.mrb[0].mxu0
        %2822 = vmatprep.mubr.f32.mxu0 0.0
        %2823 = vmatmul.mubr.f32.gmra.mrb[0].mxu0 %v2645
        %v2824 = vpop.f32.mrb[0].mxu0
        %v2825 = vadd.f32 0.0, %v2824
        %v2826 = vpop.f32.mrb[0].mxu0
        %2827 = vmatprep.mubr.f32.mxu0 0.0
        %2828 = vmatmul.mubr.f32.gmra.mrb[0].mxu0 %v2646
        %v2829 = vpop.f32.mrb[0].mxu0
        %v2830 = vadd.f32 0.0, %v2829
        %v2831 = vpop.f32.mrb[0].mxu0
        %2832 = vmatprep.mubr.f32.mxu0 0.0
        %2833 = vmatmul.mubr.f32.gmra.mrb[0].mxu0 %v2647
        %v2834 = vpop.f32.mrb[0].mxu0
        %v2835 = vadd.f32 0.0, %v2834
        %v2836 = vpop.f32.mrb[0].mxu0
        %2837 = vmatprep.mubr.f32.mxu0 0.0
        %2838 = vmatmul.mubr.f32.gmra.mrb[0].mxu0 %v2648
        %v2839 = vpop.f32.mrb[0].mxu0
        %v2840 = vadd.f32 0.0, %v2839
        %v2841 = vpop.f32.mrb[0].mxu0
        %2842 = vmatprep.mubr.f32.mxu0 0.0
        %2843 = vmatmul.mubr.f32.gmra.mrb[0].mxu0 %v2649
        %v2844 = vpop.f32.mrb[0].mxu0
        %v2845 = vadd.f32 0.0, %v2844
        %v2846 = vpop.f32.mrb[0].mxu0
        %2847 = vmatprep.mubr.f32.mxu0 0.0
        %2848 = vmatmul.mubr.f32.gmra.mrb[0].mxu0 %v2650
        %v2849 = vpop.f32.mrb[0].mxu0
        %v2850 = vadd.f32 0.0, %v2849
        %v2851 = vpop.f32.mrb[0].mxu0
        %2852 = vmatprep.mubr.f32.mxu0 0.0
        %2853 = vmatmul.mubr.f32.gmra.mrb[0].mxu0 %v2651
        %v2854 = vpop.f32.mrb[0].mxu0
        %v2855 = vadd.f32 0.0, %v2854
        %v2856 = vpop.f32.mrb[0].mxu0
        %2857 = vmatprep.mubr.f32.mxu0 0.0
        %2858 = vmatmul.mubr.f32.gmra.mrb[0].mxu0 %v2652
        %v2859 = vpop.f32.mrb[0].mxu0
        %v2860 = vadd.f32 0.0, %v2859
        %v2861 = vpop.f32.mrb[0].mxu0
        %2862 = vmatprep.mubr.f32.mxu0 0.0
        %2863 = vmatmul.mubr.f32.gmra.mrb[0].mxu0 %v2653
        %v2864 = vpop.f32.mrb[0].mxu0
        %v2865 = vadd.f32 0.0, %v2864
        %v2866 = vpop.f32.mrb[0].mxu0
        %2867 = vmatprep.mubr.f32.mxu0 0.0
        %2868 = vmatmul.mubr.f32.gmra.mrb[0].mxu0 %v2654
        %v2869 = vpop.f32.mrb[0].mxu0
        %v2870 = vadd.f32 0.0, %v2869
        %v2871 = vpop.f32.mrb[0].mxu0
        %2872 = vmatprep.mubr.f32.mxu0 0.0
        %2873 = vmatmul.mubr.f32.gmra.mrb[0].mxu0 %v2655
        %v2874 = vpop.f32.mrb[0].mxu0
        %v2875 = vadd.f32 0.0, %v2874
        %v2876 = vpop.f32.mrb[0].mxu0
        %2877 = vmatprep.mubr.f32.mxu0 0.0
        %2878 = vmatmul.mubr.f32.gmra.mrb[0].mxu0 %v2656
        %v2879 = vpop.f32.mrb[0].mxu0
        %v2880 = vadd.f32 0.0, %v2879
        %v2881 = vpop.f32.mrb[0].mxu0
        %2882 = vmatprep.mubr.f32.mxu0 0.0
        %2883 = vmatmul.mubr.f32.gmra.mrb[0].mxu0 %v2657
        %v2884 = vpop.f32.mrb[0].mxu0
        %v2885 = vadd.f32 0.0, %v2884
        %v2886 = vpop.f32.mrb[0].mxu0
        %2887 = vmatprep.mubr.f32.mxu0 0.0
        %2888 = vmatmul.mubr.f32.gmra.mrb[0].mxu0 %v2658
        %v2889 = vpop.f32.mrb[0].mxu0
        %v2890 = vadd.f32 0.0, %v2889
        %v2891 = vpop.f32.mrb[0].mxu0
        %2892 = vmatprep.mubr.f32.mxu0 0.0
        %2893 = vmatmul.mubr.f32.gmra.mrb[0].mxu0 %v2659
        %v2894 = vpop.f32.mrb[0].mxu0
        %v2895 = vadd.f32 0.0, %v2894
        %v2896 = vpop.f32.mrb[0].mxu0
        %2897 = vmatprep.mubr.f32.mxu0 0.0
        %2898 = vmatmul.mubr.f32.gmra.mrb[0].mxu0 %v2660
        %v2899 = vpop.f32.mrb[0].mxu0
        %v2900 = vadd.f32 0.0, %v2899
        %v2901 = vpop.f32.mrb[0].mxu0
        %2902 = vmatprep.mubr.f32.mxu0 0.0
        %2903 = vmatmul.mubr.f32.gmra.mrb[0].mxu0 %v2661
        %v2904 = vpop.f32.mrb[0].mxu0
        %v2905 = vadd.f32 0.0, %v2904
        %v2906 = vpop.f32.mrb[0].mxu0
        %2907 = vmatprep.mubr.f32.mxu0 0.0
        %2908 = vmatmul.mubr.f32.gmra.mrb[0].mxu0 %v2662
        %v2909 = vpop.f32.mrb[0].mxu0
        %v2910 = vadd.f32 0.0, %v2909
        %v2911 = vpop.f32.mrb[0].mxu0
        %2912 = vmatprep.mubr.f32.mxu0 0.0
        %2913 = vmatmul.mubr.f32.gmra.mrb[0].mxu0 %v2663
        %v2914 = vpop.f32.mrb[0].mxu0
        %v2915 = vadd.f32 0.0, %v2914
        %v2916 = vpop.f32.mrb[0].mxu0
        %2917 = vmatprep.mubr.f32.mxu0 0.0
        %2918 = vmatmul.mubr.f32.gmra.mrb[0].mxu0 %v2664
        %v2919 = vpop.f32.mrb[0].mxu0
        %v2920 = vadd.f32 0.0, %v2919
        %v2921 = vpop.f32.mrb[0].mxu0
        %2922 = vmatprep.mubr.f32.mxu0 0.0
        %2923 = vmatmul.mubr.f32.gmra.mrb[0].mxu0 %v2665
        %v2924 = vpop.f32.mrb[0].mxu0
        %v2925 = vadd.f32 0.0, %v2924
        %v2926 = vpop.f32.mrb[0].mxu0
        %2927 = vmatprep.mubr.f32.mxu0 0.0
        %2928 = vmatmul.mubr.f32.gmra.mrb[0].mxu0 %v2666
        %v2929 = vpop.f32.mrb[0].mxu0
        %v2930 = vadd.f32 0.0, %v2929
        %v2931 = vpop.f32.mrb[0].mxu0
        %2932 = vmatprep.mubr.f32.mxu0 0.0
        %2933 = vmatmul.mubr.f32.gmra.mrb[0].mxu0 %v2667
        %v2934 = vpop.f32.mrb[0].mxu0
        %v2935 = vadd.f32 0.0, %v2934
        %v2936 = vpop.f32.mrb[0].mxu0
        %2937 = vmatprep.mubr.f32.mxu0 0.0
        %2938 = vmatmul.mubr.f32.gmra.mrb[0].mxu0 %v2668
        %v2939 = vpop.f32.mrb[0].mxu0
        %v2940 = vadd.f32 0.0, %v2939
        %v2941 = vpop.f32.mrb[0].mxu0
        %2942 = vmatprep.mubr.f32.mxu0 0.0
        %2943 = vmatmul.mubr.f32.gmra.mrb[0].mxu0 %v2669
        %v2944 = vpop.f32.mrb[0].mxu0
        %v2945 = vadd.f32 0.0, %v2944
        %v2946 = vpop.f32.mrb[0].mxu0
        %2947 = vmatprep.mubr.f32.mxu0 0.0
        %2948 = vmatmul.mubr.f32.gmra.mrb[0].mxu0 %v2670
        %v2949 = vpop.f32.mrb[0].mxu0
        %v2950 = vadd.f32 0.0, %v2949
        %v2951 = vpop.f32.mrb[0].mxu0
        %2952 = vmatprep.mubr.f32.mxu0 0.0
        %2953 = vmatmul.mubr.f32.gmra.mrb[0].mxu0 %v2671
        %v2954 = vpop.f32.mrb[0].mxu0
        %v2955 = vadd.f32 0.0, %v2954
        %v2956 = vpop.f32.mrb[0].mxu0
        %2957 = vmatprep.mubr.f32.mxu0 0.0
        %2958 = vmatmul.mubr.f32.gmra.mrb[0].mxu0 %v2672
        %v2959 = vpop.f32.mrb[0].mxu0
        %v2960 = vadd.f32 0.0, %v2959
        %v2961 = vpop.f32.mrb[0].mxu0
        %2962 = vmatprep.mubr.f32.mxu0 0.0
        %2963 = vmatmul.mubr.f32.gmra.mrb[0].mxu0 %v2673
        %v2964 = vpop.f32.mrb[0].mxu0
        %v2965 = vadd.f32 0.0, %v2964
        %v2966 = vpop.f32.mrb[0].mxu0
        %2967 = vmatprep.mubr.f32.mxu0 0.0
        %2968 = vmatmul.mubr.f32.gmra.mrb[0].mxu0 %v2674
        %v2969 = vpop.f32.mrb[0].mxu0
        %v2970 = vadd.f32 0.0, %v2969
        %v2971 = vpop.f32.mrb[0].mxu0
        %2972 = vmatprep.mubr.f32.mxu0 0.0
        %2973 = vmatmul.mubr.f32.gmra.mrb[0].mxu0 %v2675
        %v2974 = vpop.f32.mrb[0].mxu0
        %v2975 = vadd.f32 0.0, %v2974
        %v2976 = vpop.f32.mrb[0].mxu0
        %2977 = vmatprep.mubr.f32.mxu0 0.0
        %2978 = vmatmul.mubr.f32.gmra.mrb[0].mxu0 %v2676
        %v2979 = vpop.f32.mrb[0].mxu0
        %v2980 = vadd.f32 0.0, %v2979
        %v2981 = vpop.f32.mrb[0].mxu0
        %2982 = vmatprep.mubr.f32.mxu0 0.0
        %2983 = vmatmul.mubr.f32.gmra.mrb[0].mxu0 %v2677
        %v2984 = vpop.f32.mrb[0].mxu0
        %v2985 = vadd.f32 0.0, %v2984
        %v2986 = vpop.f32.mrb[0].mxu0
        %2987 = vmatprep.mubr.f32.mxu0 0.0
        %2988 = vmatmul.mubr.f32.gmra.mrb[0].mxu0 %v2678
        %v2989 = vpop.f32.mrb[0].mxu0
        %v2990 = vadd.f32 0.0, %v2989
        %v2991 = vpop.f32.mrb[0].mxu0
        %2992 = vmatprep.mubr.f32.mxu0 0.0
        %2993 = vmatmul.mubr.f32.gmra.mrb[0].mxu0 %v2679
        %v2994 = vpop.f32.mrb[0].mxu0
        %v2995 = vadd.f32 0.0, %v2994
        %v2996 = vpop.f32.mrb[0].mxu0
        %2997 = vmatprep.mubr.f32.mxu0 0.0
        %2998 = vmatmul.mubr.f32.gmra.mrb[0].mxu0 %v2680
        %v2999 = vpop.f32.mrb[0].mxu0
        %v3000 = vadd.f32 0.0, %v2999
        %v3001 = vpop.f32.mrb[0].mxu0
        %3002 = vmatprep.mubr.f32.mxu0 0.0
        %3003 = vmatmul.mubr.f32.gmra.mrb[0].mxu0 %v2681
        %v3004 = vpop.f32.mrb[0].mxu0
        %v3005 = vadd.f32 0.0, %v3004
        %v3006 = vpop.f32.mrb[0].mxu0
        %3007 = vmatprep.mubr.f32.mxu0 0.0
        %3008 = vmatmul.mubr.f32.gmra.mrb[0].mxu0 %v2682
        %v3009 = vpop.f32.mrb[0].mxu0
        %v3010 = vadd.f32 0.0, %v3009
        %v3011 = vpop.f32.mrb[0].mxu0
        %3012 = vmatprep.mubr.f32.mxu0 0.0
        %3013 = vmatmul.mubr.f32.gmra.mrb[0].mxu0 %v2683
        %v3014 = vpop.f32.mrb[0].mxu0
        %v3015 = vadd.f32 0.0, %v3014
        %v3016 = vpop.f32.mrb[0].mxu0
        %3017 = vmatprep.mubr.f32.mxu0 0.0
        %3018 = vmatmul.mubr.f32.gmra.mrb[0].mxu0 %v2684
        %v3019 = vpop.f32.mrb[0].mxu0
        %v3020 = vadd.f32 0.0, %v3019
        %v3021 = vpop.f32.mrb[0].mxu0
        %3022 = vmatprep.mubr.f32.mxu0 0.0
        %3023 = vmatmul.mubr.f32.gmra.mrb[0].mxu0 %v2685
        %v3024 = vpop.f32.mrb[0].mxu0
        %v3025 = vadd.f32 0.0, %v3024
        %v3026 = vpop.f32.mrb[0].mxu0
        %3027 = vmatprep.mubr.f32.mxu0 0.0
        %3028 = vmatmul.mubr.f32.gmra.mrb[0].mxu0 %v2686
        %v3029 = vpop.f32.mrb[0].mxu0
        %v3030 = vadd.f32 0.0, %v3029
        %v3031 = vpop.f32.mrb[0].mxu0
        %3032 = vmatprep.mubr.f32.mxu0 0.0
        %3033 = vmatmul.mubr.f32.gmra.mrb[0].mxu0 %v2687
        %v3034 = vpop.f32.mrb[0].mxu0
        %v3035 = vadd.f32 0.0, %v3034
        %v3036 = vpop.f32.mrb[0].mxu0
        %3037 = vmatprep.mubr.f32.mxu0 0.0
        %3038 = vmatmul.mubr.f32.gmra.mrb[0].mxu0 %v2688
        %v3039 = vpop.f32.mrb[0].mxu0
        %v3040 = vadd.f32 0.0, %v3039
        %v3041 = vpop.f32.mrb[0].mxu0
        %3042 = vmatprep.mubr.f32.mxu0 0.0
        %3043 = vmatmul.mubr.f32.gmra.mrb[0].mxu0 %v2689
        %v3044 = vpop.f32.mrb[0].mxu0
        %v3045 = vadd.f32 0.0, %v3044
        %v3046 = vpop.f32.mrb[0].mxu0
        %3047 = vmatprep.mubr.f32.mxu0 0.0
        %3048 = vmatmul.mubr.f32.gmra.mrb[0].mxu0 %v2690
        %v3049 = vpop.f32.mrb[0].mxu0
        %v3050 = vadd.f32 0.0, %v3049
        %v3051 = vpop.f32.mrb[0].mxu0
        %3052 = vmatprep.mubr.f32.mxu0 0.0
        %3053 = vmatmul.mubr.f32.gmra.mrb[0].mxu0 %v2691
        %v3054 = vpop.f32.mrb[0].mxu0
        %v3055 = vadd.f32 0.0, %v3054
        %v3056 = vpop.f32.mrb[0].mxu0
        %3057 = vmatprep.mubr.f32.mxu0 0.0
        %3058 = vmatmul.mubr.f32.gmra.mrb[0].mxu0 %v2692
        %v3059 = vpop.f32.mrb[0].mxu0
        %v3060 = vadd.f32 0.0, %v3059
        %v3061 = vpop.f32.mrb[0].mxu0
        %3062 = vmatprep.mubr.f32.mxu0 0.0
        %3063 = vmatmul.mubr.f32.gmra.mrb[0].mxu0 %v2693
        %v3064 = vpop.f32.mrb[0].mxu0
        %v3065 = vadd.f32 0.0, %v3064
        %v3066 = vpop.f32.mrb[0].mxu0
        %3067 = vmatprep.mubr.f32.mxu0 0.0
        %3068 = vmatmul.mubr.f32.gmra.mrb[0].mxu0 %v2694
        %v3069 = vpop.f32.mrb[0].mxu0
        %v3070 = vadd.f32 0.0, %v3069
        %v3071 = vpop.f32.mrb[0].mxu0
        %3072 = vmatprep.mubr.f32.mxu0 0.0
        %3073 = vmatmul.mubr.f32.gmra.mrb[0].mxu0 %v2695
        %v3074 = vpop.f32.mrb[0].mxu0
        %v3075 = vadd.f32 0.0, %v3074
        %v3076 = vpop.f32.mrb[0].mxu0
        %3077 = vmatprep.mubr.f32.mxu0 0.0
        %3078 = vmatmul.mubr.f32.gmra.mrb[0].mxu0 %v2696
        %v3079 = vpop.f32.mrb[0].mxu0
        %v3080 = vadd.f32 0.0, %v3079
        %v3081 = vpop.f32.mrb[0].mxu0
        %3082 = vmatprep.mubr.f32.mxu0 0.0
        %3083 = vmatmul.mubr.f32.gmra.mrb[0].mxu0 %v2697
        %v3084 = vpop.f32.mrb[0].mxu0
        %v3085 = vadd.f32 0.0, %v3084
        %v3086 = vpop.f32.mrb[0].mxu0
        %3087 = vmatprep.mubr.f32.mxu0 0.0
        %3088 = vmatmul.mubr.f32.gmra.mrb[0].mxu0 %v2698
        %v3089 = vpop.f32.mrb[0].mxu0
        %v3090 = vadd.f32 0.0, %v3089
        %v3091 = vpop.f32.mrb[0].mxu0
        %3092 = vmatprep.mubr.f32.mxu0 0.0
        %3093 = vmatmul.mubr.f32.gmra.mrb[0].mxu0 %v2699
        %v3094 = vpop.f32.mrb[0].mxu0
        %v3095 = vadd.f32 0.0, %v3094
        %v3096 = vpop.f32.mrb[0].mxu0
        %3097 = vmatprep.mubr.f32.mxu0 0.0
        %3098 = vmatmul.mubr.f32.gmra.mrb[0].mxu0 %v2700
        %v3099 = vpop.f32.mrb[0].mxu0
        %v3100 = vadd.f32 0.0, %v3099
        %v3101 = vpop.f32.mrb[0].mxu0
        %3102 = vdwg.mxu0
        %v3103 = vadd.f32 %v2573, %v2785
        %v3104 = vadd.f32 %v2574, %v2790
        %v3105 = vadd.f32 %v2575, %v2795
        %v3106 = vadd.f32 %v2576, %v2800
        %v3107 = vadd.f32 %v2577, %v2805
        %v3108 = vadd.f32 %v2578, %v2810
        %v3109 = vadd.f32 %v2579, %v2815
        %v3110 = vadd.f32 %v2580, %v2820
        %v3111 = vadd.f32 %v2581, %v2825
        %v3112 = vadd.f32 %v2582, %v2830
        %v3113 = vadd.f32 %v2583, %v2835
        %v3114 = vadd.f32 %v2584, %v2840
        %v3115 = vadd.f32 %v2585, %v2845
        %v3116 = vadd.f32 %v2586, %v2850
        %v3117 = vadd.f32 %v2587, %v2855
        %v3118 = vadd.f32 %v2588, %v2860
        %v3119 = vadd.f32 %v2589, %v2865
        %v3120 = vadd.f32 %v2590, %v2870
        %v3121 = vadd.f32 %v2591, %v2875
        %v3122 = vadd.f32 %v2592, %v2880
        %v3123 = vadd.f32 %v2593, %v2885
        %v3124 = vadd.f32 %v2594, %v2890
        %v3125 = vadd.f32 %v2595, %v2895
        %v3126 = vadd.f32 %v2596, %v2900
        %v3127 = vadd.f32 %v2597, %v2905
        %v3128 = vadd.f32 %v2598, %v2910
        %v3129 = vadd.f32 %v2599, %v2915
        %v3130 = vadd.f32 %v2600, %v2920
        %v3131 = vadd.f32 %v2601, %v2925
        %v3132 = vadd.f32 %v2602, %v2930
        %v3133 = vadd.f32 %v2603, %v2935
        %v3134 = vadd.f32 %v2604, %v2940
        %v3135 = vadd.f32 %v2605, %v2945
        %v3136 = vadd.f32 %v2606, %v2950
        %v3137 = vadd.f32 %v2607, %v2955
        %v3138 = vadd.f32 %v2608, %v2960
        %v3139 = vadd.f32 %v2609, %v2965
        %v3140 = vadd.f32 %v2610, %v2970
        %v3141 = vadd.f32 %v2611, %v2975
        %v3142 = vadd.f32 %v2612, %v2980
        %v3143 = vadd.f32 %v2613, %v2985
        %v3144 = vadd.f32 %v2614, %v2990
        %v3145 = vadd.f32 %v2615, %v2995
        %v3146 = vadd.f32 %v2616, %v3000
        %v3147 = vadd.f32 %v2617, %v3005
        %v3148 = vadd.f32 %v2618, %v3010
        %v3149 = vadd.f32 %v2619, %v3015
        %v3150 = vadd.f32 %v2620, %v3020
        %v3151 = vadd.f32 %v2621, %v3025
        %v3152 = vadd.f32 %v2622, %v3030
        %v3153 = vadd.f32 %v2623, %v3035
        %v3154 = vadd.f32 %v2624, %v3040
        %v3155 = vadd.f32 %v2625, %v3045
        %v3156 = vadd.f32 %v2626, %v3050
        %v3157 = vadd.f32 %v2627, %v3055
        %v3158 = vadd.f32 %v2628, %v3060
        %v3159 = vadd.f32 %v2629, %v3065
        %v3160 = vadd.f32 %v2630, %v3070
        %v3161 = vadd.f32 %v2631, %v3075
        %v3162 = vadd.f32 %v2632, %v3080
        %v3163 = vadd.f32 %v2633, %v3085
        %v3164 = vadd.f32 %v2634, %v3090
        %v3165 = vadd.f32 %v2635, %v3095
        %v3166 = vadd.f32 %v2636, %v3100
        %v3167 = vld [vmem:[%s1111 + $0x1] sm:$0xff]
        %v3168 = vld [vmem:[%s1111 + $0x11] sm:$0xff]
        %v3169 = vld [vmem:[%s1111 + $0x21] sm:$0xff]
        %v3170 = vld [vmem:[%s1111 + $0x31] sm:$0xff]
        %v3171 = vld [vmem:[%s1111 + $0x41] sm:$0xff]
        %v3172 = vld [vmem:[%s1111 + $0x51] sm:$0xff]
        %v3173 = vld [vmem:[%s1111 + $0x61] sm:$0xff]
        %v3174 = vld [vmem:[%s1111 + $0x71] sm:$0xff]
        %v3175 = vld [vmem:[%s1111 + $0xa1] sm:$0xff]
        %v3176 = vld [vmem:[%s1111 + $0xb1] sm:$0xff]
        %v3177 = vld [vmem:[%s1111 + $0xc1] sm:$0xff]
        %v3178 = vld [vmem:[%s1111 + $0xd1] sm:$0xff]
        %v3179 = vld [vmem:[%s1111 + $0xe1] sm:$0xff]
        %v3180 = vld [vmem:[%s1111 + $0xf1] sm:$0xff]
        %v3181 = vld [vmem:[%s1111 + $0x101] sm:$0xff]
        %v3182 = vld [vmem:[%s1111 + $0x111] sm:$0xff]
        %v3183 = vld [vmem:[%s1111 + $0x141] sm:$0xff]
        %v3184 = vld [vmem:[%s1111 + $0x151] sm:$0xff]
        %v3185 = vld [vmem:[%s1111 + $0x161] sm:$0xff]
        %v3186 = vld [vmem:[%s1111 + $0x171] sm:$0xff]
        %v3187 = vld [vmem:[%s1111 + $0x181] sm:$0xff]
        %v3188 = vld [vmem:[%s1111 + $0x191] sm:$0xff]
        %v3189 = vld [vmem:[%s1111 + $0x1a1] sm:$0xff]
        %v3190 = vld [vmem:[%s1111 + $0x1b1] sm:$0xff]
        %v3191 = vld [vmem:[%s1111 + $0x1e1] sm:$0xff]
        %v3192 = vld [vmem:[%s1111 + $0x1f1] sm:$0xff]
        %v3193 = vld [vmem:[%s1111 + $0x201] sm:$0xff]
        %v3194 = vld [vmem:[%s1111 + $0x211] sm:$0xff]
        %v3195 = vld [vmem:[%s1111 + $0x221] sm:$0xff]
        %v3196 = vld [vmem:[%s1111 + $0x231] sm:$0xff]
        %v3197 = vld [vmem:[%s1111 + $0x241] sm:$0xff]
        %v3198 = vld [vmem:[%s1111 + $0x251] sm:$0xff]
        %v3199 = vld [vmem:[%s1111 + $0x281] sm:$0xff]
        %v3200 = vld [vmem:[%s1111 + $0x291] sm:$0xff]
        %v3201 = vld [vmem:[%s1111 + $0x2a1] sm:$0xff]
        %v3202 = vld [vmem:[%s1111 + $0x2b1] sm:$0xff]
        %v3203 = vld [vmem:[%s1111 + $0x2c1] sm:$0xff]
        %v3204 = vld [vmem:[%s1111 + $0x2d1] sm:$0xff]
        %v3205 = vld [vmem:[%s1111 + $0x2e1] sm:$0xff]
        %v3206 = vld [vmem:[%s1111 + $0x2f1] sm:$0xff]
        %v3207 = vld [vmem:[%s1111 + $0x321] sm:$0xff]
        %v3208 = vld [vmem:[%s1111 + $0x331] sm:$0xff]
        %v3209 = vld [vmem:[%s1111 + $0x341] sm:$0xff]
        %v3210 = vld [vmem:[%s1111 + $0x351] sm:$0xff]
        %v3211 = vld [vmem:[%s1111 + $0x361] sm:$0xff]
        %v3212 = vld [vmem:[%s1111 + $0x371] sm:$0xff]
        %v3213 = vld [vmem:[%s1111 + $0x381] sm:$0xff]
        %v3214 = vld [vmem:[%s1111 + $0x391] sm:$0xff]
        %v3215 = vld [vmem:[%s1111 + $0x3c1] sm:$0xff]
        %v3216 = vld [vmem:[%s1111 + $0x3d1] sm:$0xff]
        %v3217 = vld [vmem:[%s1111 + $0x3e1] sm:$0xff]
        %v3218 = vld [vmem:[%s1111 + $0x3f1] sm:$0xff]
        %v3219 = vld [vmem:[%s1111 + $0x401] sm:$0xff]
        %v3220 = vld [vmem:[%s1111 + $0x411] sm:$0xff]
        %v3221 = vld [vmem:[%s1111 + $0x421] sm:$0xff]
        %v3222 = vld [vmem:[%s1111 + $0x431] sm:$0xff]
        %v3223 = vld [vmem:[%s1111 + $0x461] sm:$0xff]
        %v3224 = vld [vmem:[%s1111 + $0x471] sm:$0xff]
        %v3225 = vld [vmem:[%s1111 + $0x481] sm:$0xff]
        %v3226 = vld [vmem:[%s1111 + $0x491] sm:$0xff]
        %v3227 = vld [vmem:[%s1111 + $0x4a1] sm:$0xff]
        %v3228 = vld [vmem:[%s1111 + $0x4b1] sm:$0xff]
        %v3229 = vld [vmem:[%s1111 + $0x4c1] sm:$0xff]
        %v3230 = vld [vmem:[%s1111 + $0x4d1] sm:$0xff]
        %s3231 = scalar_lea.vmem %s3, 512
        %v3232 = vld [vmem:[%s3231] sm:$0xff]
        %v3233 = vld [vmem:[%s3231 + $0x8] sm:$0xff]
        %v3234 = vld [vmem:[%s3231 + $0x10] sm:$0xff]
        %v3235 = vld [vmem:[%s3231 + $0x18] sm:$0xff]
        %v3236 = vld [vmem:[%s3231 + $0x20] sm:$0xff]
        %v3237 = vld [vmem:[%s3231 + $0x28] sm:$0xff]
        %v3238 = vld [vmem:[%s3231 + $0x30] sm:$0xff]
        %v3239 = vld [vmem:[%s3231 + $0x38] sm:$0xff]
        %v3240 = vld [vmem:[%s3231 + $0x40] sm:$0xff]
        %v3241 = vld [vmem:[%s3231 + $0x48] sm:$0xff]
        %v3242 = vld [vmem:[%s3231 + $0x50] sm:$0xff]
        %v3243 = vld [vmem:[%s3231 + $0x58] sm:$0xff]
        %v3244 = vld [vmem:[%s3231 + $0x60] sm:$0xff]
        %v3245 = vld [vmem:[%s3231 + $0x68] sm:$0xff]
        %v3246 = vld [vmem:[%s3231 + $0x70] sm:$0xff]
        %v3247 = vld [vmem:[%s3231 + $0x78] sm:$0xff]
        %3248 = vmatprep.subr.mxu0 0.0
        %3249 = vmatpush1.msra.mxu0 %v3232
        %3250 = vmatprep.subr.mxu0 0.0
        %3251 = vmatpush1.msra.mxu0 %v3233
        %3252 = vmatprep.subr.mxu0 0.0
        %3253 = vmatpush1.msra.mxu0 %v3234
        %3254 = vmatprep.subr.mxu0 0.0
        %3255 = vmatpush1.msra.mxu0 %v3235
        %3256 = vmatprep.subr.mxu0 0.0
        %3257 = vmatpush1.msra.mxu0 %v3236
        %3258 = vmatprep.subr.mxu0 0.0
        %3259 = vmatpush1.msra.mxu0 %v3237
        %3260 = vmatprep.subr.mxu0 0.0
        %3261 = vmatpush1.msra.mxu0 %v3238
        %3262 = vmatprep.subr.mxu0 0.0
        %3263 = vmatpush1.msra.mxu0 %v3239
        %3264 = vmatprep.subr.mxu0 0.0
        %3265 = vmatpush1.msra.mxu0 %v3240
        %3266 = vmatprep.subr.mxu0 0.0
        %3267 = vmatpush1.msra.mxu0 %v3241
        %3268 = vmatprep.subr.mxu0 0.0
        %3269 = vmatpush1.msra.mxu0 %v3242
        %3270 = vmatprep.subr.mxu0 0.0
        %3271 = vmatpush1.msra.mxu0 %v3243
        %3272 = vmatprep.subr.mxu0 0.0
        %3273 = vmatpush1.msra.mxu0 %v3244
        %3274 = vmatprep.subr.mxu0 0.0
        %3275 = vmatpush1.msra.mxu0 %v3245
        %3276 = vmatprep.subr.mxu0 0.0
        %3277 = vmatpush1.msra.mxu0 %v3246
        %3278 = vmatprep.subr.mxu0 0.0
        %3279 = vmatpush1.msra.mxu0 %v3247
        %3280 = vmatprep.subr.mxu0 0.0
        %3281 = vmatpush1.msra.mxu0 0.0
        %3282 = vmatprep.subr.mxu0 0.0
        %3283 = vmatpush1.msra.mxu0 0.0
        %3284 = vmatprep.subr.mxu0 0.0
        %3285 = vmatpush1.msra.mxu0 0.0
        %3286 = vmatprep.subr.mxu0 0.0
        %3287 = vmatpush1.msra.mxu0 0.0
        %3288 = vmatprep.subr.mxu0 0.0
        %3289 = vmatpush1.msra.mxu0 0.0
        %3290 = vmatprep.subr.mxu0 0.0
        %3291 = vmatpush1.msra.mxu0 0.0
        %3292 = vmatprep.subr.mxu0 0.0
        %3293 = vmatpush1.msra.mxu0 0.0
        %3294 = vmatprep.subr.mxu0 0.0
        %3295 = vmatpush1.msra.mxu0 0.0
        %3296 = vmatprep.subr.mxu0 0.0
        %3297 = vmatpush1.msra.mxu0 0.0
        %3298 = vmatprep.subr.mxu0 0.0
        %3299 = vmatpush1.msra.mxu0 0.0
        %3300 = vmatprep.subr.mxu0 0.0
        %3301 = vmatpush1.msra.mxu0 0.0
        %3302 = vmatprep.subr.mxu0 0.0
        %3303 = vmatpush1.msra.mxu0 0.0
        %3304 = vmatprep.subr.mxu0 0.0
        %3305 = vmatpush1.msra.mxu0 0.0
        %3306 = vmatprep.subr.mxu0 0.0
        %3307 = vmatpush1.msra.mxu0 0.0
        %3308 = vmatprep.subr.mxu0 0.0
        %3309 = vmatpush1.msra.mxu0 0.0
        %3310 = vmatprep.subr.mxu0 0.0
        %3311 = vmatpush1.msra.mxu0 0.0
        %3312 = vmatprep.mubr.f32.mxu0 0.0
        %3313 = vmatmul.mubr.f32.gmra.mrb[0].mxu0 %v3167
        %v3314 = vpop.f32.mrb[0].mxu0
        %v3315 = vadd.f32 0.0, %v3314
        %v3316 = vpop.f32.mrb[0].mxu0
        %3317 = vmatprep.mubr.f32.mxu0 0.0
        %3318 = vmatmul.mubr.f32.gmra.mrb[0].mxu0 %v3168
        %v3319 = vpop.f32.mrb[0].mxu0
        %v3320 = vadd.f32 0.0, %v3319
        %v3321 = vpop.f32.mrb[0].mxu0
        %3322 = vmatprep.mubr.f32.mxu0 0.0
        %3323 = vmatmul.mubr.f32.gmra.mrb[0].mxu0 %v3169
        %v3324 = vpop.f32.mrb[0].mxu0
        %v3325 = vadd.f32 0.0, %v3324
        %v3326 = vpop.f32.mrb[0].mxu0
        %3327 = vmatprep.mubr.f32.mxu0 0.0
        %3328 = vmatmul.mubr.f32.gmra.mrb[0].mxu0 %v3170
        %v3329 = vpop.f32.mrb[0].mxu0
        %v3330 = vadd.f32 0.0, %v3329
        %v3331 = vpop.f32.mrb[0].mxu0
        %3332 = vmatprep.mubr.f32.mxu0 0.0
        %3333 = vmatmul.mubr.f32.gmra.mrb[0].mxu0 %v3171
        %v3334 = vpop.f32.mrb[0].mxu0
        %v3335 = vadd.f32 0.0, %v3334
        %v3336 = vpop.f32.mrb[0].mxu0
        %3337 = vmatprep.mubr.f32.mxu0 0.0
        %3338 = vmatmul.mubr.f32.gmra.mrb[0].mxu0 %v3172
        %v3339 = vpop.f32.mrb[0].mxu0
        %v3340 = vadd.f32 0.0, %v3339
        %v3341 = vpop.f32.mrb[0].mxu0
        %3342 = vmatprep.mubr.f32.mxu0 0.0
        %3343 = vmatmul.mubr.f32.gmra.mrb[0].mxu0 %v3173
        %v3344 = vpop.f32.mrb[0].mxu0
        %v3345 = vadd.f32 0.0, %v3344
        %v3346 = vpop.f32.mrb[0].mxu0
        %3347 = vmatprep.mubr.f32.mxu0 0.0
        %3348 = vmatmul.mubr.f32.gmra.mrb[0].mxu0 %v3174
        %v3349 = vpop.f32.mrb[0].mxu0
        %v3350 = vadd.f32 0.0, %v3349
        %v3351 = vpop.f32.mrb[0].mxu0
        %3352 = vmatprep.mubr.f32.mxu0 0.0
        %3353 = vmatmul.mubr.f32.gmra.mrb[0].mxu0 %v3175
        %v3354 = vpop.f32.mrb[0].mxu0
        %v3355 = vadd.f32 0.0, %v3354
        %v3356 = vpop.f32.mrb[0].mxu0
        %3357 = vmatprep.mubr.f32.mxu0 0.0
        %3358 = vmatmul.mubr.f32.gmra.mrb[0].mxu0 %v3176
        %v3359 = vpop.f32.mrb[0].mxu0
        %v3360 = vadd.f32 0.0, %v3359
        %v3361 = vpop.f32.mrb[0].mxu0
        %3362 = vmatprep.mubr.f32.mxu0 0.0
        %3363 = vmatmul.mubr.f32.gmra.mrb[0].mxu0 %v3177
        %v3364 = vpop.f32.mrb[0].mxu0
        %v3365 = vadd.f32 0.0, %v3364
        %v3366 = vpop.f32.mrb[0].mxu0
        %3367 = vmatprep.mubr.f32.mxu0 0.0
        %3368 = vmatmul.mubr.f32.gmra.mrb[0].mxu0 %v3178
        %v3369 = vpop.f32.mrb[0].mxu0
        %v3370 = vadd.f32 0.0, %v3369
        %v3371 = vpop.f32.mrb[0].mxu0
        %3372 = vmatprep.mubr.f32.mxu0 0.0
        %3373 = vmatmul.mubr.f32.gmra.mrb[0].mxu0 %v3179
        %v3374 = vpop.f32.mrb[0].mxu0
        %v3375 = vadd.f32 0.0, %v3374
        %v3376 = vpop.f32.mrb[0].mxu0
        %3377 = vmatprep.mubr.f32.mxu0 0.0
        %3378 = vmatmul.mubr.f32.gmra.mrb[0].mxu0 %v3180
        %v3379 = vpop.f32.mrb[0].mxu0
        %v3380 = vadd.f32 0.0, %v3379
        %v3381 = vpop.f32.mrb[0].mxu0
        %3382 = vmatprep.mubr.f32.mxu0 0.0
        %3383 = vmatmul.mubr.f32.gmra.mrb[0].mxu0 %v3181
        %v3384 = vpop.f32.mrb[0].mxu0
        %v3385 = vadd.f32 0.0, %v3384
        %v3386 = vpop.f32.mrb[0].mxu0
        %3387 = vmatprep.mubr.f32.mxu0 0.0
        %3388 = vmatmul.mubr.f32.gmra.mrb[0].mxu0 %v3182
        %v3389 = vpop.f32.mrb[0].mxu0
        %v3390 = vadd.f32 0.0, %v3389
        %v3391 = vpop.f32.mrb[0].mxu0
        %3392 = vmatprep.mubr.f32.mxu0 0.0
        %3393 = vmatmul.mubr.f32.gmra.mrb[0].mxu0 %v3183
        %v3394 = vpop.f32.mrb[0].mxu0
        %v3395 = vadd.f32 0.0, %v3394
        %v3396 = vpop.f32.mrb[0].mxu0
        %3397 = vmatprep.mubr.f32.mxu0 0.0
        %3398 = vmatmul.mubr.f32.gmra.mrb[0].mxu0 %v3184
        %v3399 = vpop.f32.mrb[0].mxu0
        %v3400 = vadd.f32 0.0, %v3399
        %v3401 = vpop.f32.mrb[0].mxu0
        %3402 = vmatprep.mubr.f32.mxu0 0.0
        %3403 = vmatmul.mubr.f32.gmra.mrb[0].mxu0 %v3185
        %v3404 = vpop.f32.mrb[0].mxu0
        %v3405 = vadd.f32 0.0, %v3404
        %v3406 = vpop.f32.mrb[0].mxu0
        %3407 = vmatprep.mubr.f32.mxu0 0.0
        %3408 = vmatmul.mubr.f32.gmra.mrb[0].mxu0 %v3186
        %v3409 = vpop.f32.mrb[0].mxu0
        %v3410 = vadd.f32 0.0, %v3409
        %v3411 = vpop.f32.mrb[0].mxu0
        %3412 = vmatprep.mubr.f32.mxu0 0.0
        %3413 = vmatmul.mubr.f32.gmra.mrb[0].mxu0 %v3187
        %v3414 = vpop.f32.mrb[0].mxu0
        %v3415 = vadd.f32 0.0, %v3414
        %v3416 = vpop.f32.mrb[0].mxu0
        %3417 = vmatprep.mubr.f32.mxu0 0.0
        %3418 = vmatmul.mubr.f32.gmra.mrb[0].mxu0 %v3188
        %v3419 = vpop.f32.mrb[0].mxu0
        %v3420 = vadd.f32 0.0, %v3419
        %v3421 = vpop.f32.mrb[0].mxu0
        %3422 = vmatprep.mubr.f32.mxu0 0.0
        %3423 = vmatmul.mubr.f32.gmra.mrb[0].mxu0 %v3189
        %v3424 = vpop.f32.mrb[0].mxu0
        %v3425 = vadd.f32 0.0, %v3424
        %v3426 = vpop.f32.mrb[0].mxu0
        %3427 = vmatprep.mubr.f32.mxu0 0.0
        %3428 = vmatmul.mubr.f32.gmra.mrb[0].mxu0 %v3190
        %v3429 = vpop.f32.mrb[0].mxu0
        %v3430 = vadd.f32 0.0, %v3429
        %v3431 = vpop.f32.mrb[0].mxu0
        %3432 = vmatprep.mubr.f32.mxu0 0.0
        %3433 = vmatmul.mubr.f32.gmra.mrb[0].mxu0 %v3191
        %v3434 = vpop.f32.mrb[0].mxu0
        %v3435 = vadd.f32 0.0, %v3434
        %v3436 = vpop.f32.mrb[0].mxu0
        %3437 = vmatprep.mubr.f32.mxu0 0.0
        %3438 = vmatmul.mubr.f32.gmra.mrb[0].mxu0 %v3192
        %v3439 = vpop.f32.mrb[0].mxu0
        %v3440 = vadd.f32 0.0, %v3439
        %v3441 = vpop.f32.mrb[0].mxu0
        %3442 = vmatprep.mubr.f32.mxu0 0.0
        %3443 = vmatmul.mubr.f32.gmra.mrb[0].mxu0 %v3193
        %v3444 = vpop.f32.mrb[0].mxu0
        %v3445 = vadd.f32 0.0, %v3444
        %v3446 = vpop.f32.mrb[0].mxu0
        %3447 = vmatprep.mubr.f32.mxu0 0.0
        %3448 = vmatmul.mubr.f32.gmra.mrb[0].mxu0 %v3194
        %v3449 = vpop.f32.mrb[0].mxu0
        %v3450 = vadd.f32 0.0, %v3449
        %v3451 = vpop.f32.mrb[0].mxu0
        %3452 = vmatprep.mubr.f32.mxu0 0.0
        %3453 = vmatmul.mubr.f32.gmra.mrb[0].mxu0 %v3195
        %v3454 = vpop.f32.mrb[0].mxu0
        %v3455 = vadd.f32 0.0, %v3454
        %v3456 = vpop.f32.mrb[0].mxu0
        %3457 = vmatprep.mubr.f32.mxu0 0.0
        %3458 = vmatmul.mubr.f32.gmra.mrb[0].mxu0 %v3196
        %v3459 = vpop.f32.mrb[0].mxu0
        %v3460 = vadd.f32 0.0, %v3459
        %v3461 = vpop.f32.mrb[0].mxu0
        %3462 = vmatprep.mubr.f32.mxu0 0.0
        %3463 = vmatmul.mubr.f32.gmra.mrb[0].mxu0 %v3197
        %v3464 = vpop.f32.mrb[0].mxu0
        %v3465 = vadd.f32 0.0, %v3464
        %v3466 = vpop.f32.mrb[0].mxu0
        %3467 = vmatprep.mubr.f32.mxu0 0.0
        %3468 = vmatmul.mubr.f32.gmra.mrb[0].mxu0 %v3198
        %v3469 = vpop.f32.mrb[0].mxu0
        %v3470 = vadd.f32 0.0, %v3469
        %v3471 = vpop.f32.mrb[0].mxu0
        %3472 = vmatprep.mubr.f32.mxu0 0.0
        %3473 = vmatmul.mubr.f32.gmra.mrb[0].mxu0 %v3199
        %v3474 = vpop.f32.mrb[0].mxu0
        %v3475 = vadd.f32 0.0, %v3474
        %v3476 = vpop.f32.mrb[0].mxu0
        %3477 = vmatprep.mubr.f32.mxu0 0.0
        %3478 = vmatmul.mubr.f32.gmra.mrb[0].mxu0 %v3200
        %v3479 = vpop.f32.mrb[0].mxu0
        %v3480 = vadd.f32 0.0, %v3479
        %v3481 = vpop.f32.mrb[0].mxu0
        %3482 = vmatprep.mubr.f32.mxu0 0.0
        %3483 = vmatmul.mubr.f32.gmra.mrb[0].mxu0 %v3201
        %v3484 = vpop.f32.mrb[0].mxu0
        %v3485 = vadd.f32 0.0, %v3484
        %v3486 = vpop.f32.mrb[0].mxu0
        %3487 = vmatprep.mubr.f32.mxu0 0.0
        %3488 = vmatmul.mubr.f32.gmra.mrb[0].mxu0 %v3202
        %v3489 = vpop.f32.mrb[0].mxu0
        %v3490 = vadd.f32 0.0, %v3489
        %v3491 = vpop.f32.mrb[0].mxu0
        %3492 = vmatprep.mubr.f32.mxu0 0.0
        %3493 = vmatmul.mubr.f32.gmra.mrb[0].mxu0 %v3203
        %v3494 = vpop.f32.mrb[0].mxu0
        %v3495 = vadd.f32 0.0, %v3494
        %v3496 = vpop.f32.mrb[0].mxu0
        %3497 = vmatprep.mubr.f32.mxu0 0.0
        %3498 = vmatmul.mubr.f32.gmra.mrb[0].mxu0 %v3204
        %v3499 = vpop.f32.mrb[0].mxu0
        %v3500 = vadd.f32 0.0, %v3499
        %v3501 = vpop.f32.mrb[0].mxu0
        %3502 = vmatprep.mubr.f32.mxu0 0.0
        %3503 = vmatmul.mubr.f32.gmra.mrb[0].mxu0 %v3205
        %v3504 = vpop.f32.mrb[0].mxu0
        %v3505 = vadd.f32 0.0, %v3504
        %v3506 = vpop.f32.mrb[0].mxu0
        %3507 = vmatprep.mubr.f32.mxu0 0.0
        %3508 = vmatmul.mubr.f32.gmra.mrb[0].mxu0 %v3206
        %v3509 = vpop.f32.mrb[0].mxu0
        %v3510 = vadd.f32 0.0, %v3509
        %v3511 = vpop.f32.mrb[0].mxu0
        %3512 = vmatprep.mubr.f32.mxu0 0.0
        %3513 = vmatmul.mubr.f32.gmra.mrb[0].mxu0 %v3207
        %v3514 = vpop.f32.mrb[0].mxu0
        %v3515 = vadd.f32 0.0, %v3514
        %v3516 = vpop.f32.mrb[0].mxu0
        %3517 = vmatprep.mubr.f32.mxu0 0.0
        %3518 = vmatmul.mubr.f32.gmra.mrb[0].mxu0 %v3208
        %v3519 = vpop.f32.mrb[0].mxu0
        %v3520 = vadd.f32 0.0, %v3519
        %v3521 = vpop.f32.mrb[0].mxu0
        %3522 = vmatprep.mubr.f32.mxu0 0.0
        %3523 = vmatmul.mubr.f32.gmra.mrb[0].mxu0 %v3209
        %v3524 = vpop.f32.mrb[0].mxu0
        %v3525 = vadd.f32 0.0, %v3524
        %v3526 = vpop.f32.mrb[0].mxu0
        %3527 = vmatprep.mubr.f32.mxu0 0.0
        %3528 = vmatmul.mubr.f32.gmra.mrb[0].mxu0 %v3210
        %v3529 = vpop.f32.mrb[0].mxu0
        %v3530 = vadd.f32 0.0, %v3529
        %v3531 = vpop.f32.mrb[0].mxu0
        %3532 = vmatprep.mubr.f32.mxu0 0.0
        %3533 = vmatmul.mubr.f32.gmra.mrb[0].mxu0 %v3211
        %v3534 = vpop.f32.mrb[0].mxu0
        %v3535 = vadd.f32 0.0, %v3534
        %v3536 = vpop.f32.mrb[0].mxu0
        %3537 = vmatprep.mubr.f32.mxu0 0.0
        %3538 = vmatmul.mubr.f32.gmra.mrb[0].mxu0 %v3212
        %v3539 = vpop.f32.mrb[0].mxu0
        %v3540 = vadd.f32 0.0, %v3539
        %v3541 = vpop.f32.mrb[0].mxu0
        %3542 = vmatprep.mubr.f32.mxu0 0.0
        %3543 = vmatmul.mubr.f32.gmra.mrb[0].mxu0 %v3213
        %v3544 = vpop.f32.mrb[0].mxu0
        %v3545 = vadd.f32 0.0, %v3544
        %v3546 = vpop.f32.mrb[0].mxu0
        %3547 = vmatprep.mubr.f32.mxu0 0.0
        %3548 = vmatmul.mubr.f32.gmra.mrb[0].mxu0 %v3214
        %v3549 = vpop.f32.mrb[0].mxu0
        %v3550 = vadd.f32 0.0, %v3549
        %v3551 = vpop.f32.mrb[0].mxu0
        %3552 = vmatprep.mubr.f32.mxu0 0.0
        %3553 = vmatmul.mubr.f32.gmra.mrb[0].mxu0 %v3215
        %v3554 = vpop.f32.mrb[0].mxu0
        %v3555 = vadd.f32 0.0, %v3554
        %v3556 = vpop.f32.mrb[0].mxu0
        %3557 = vmatprep.mubr.f32.mxu0 0.0
        %3558 = vmatmul.mubr.f32.gmra.mrb[0].mxu0 %v3216
        %v3559 = vpop.f32.mrb[0].mxu0
        %v3560 = vadd.f32 0.0, %v3559
        %v3561 = vpop.f32.mrb[0].mxu0
        %3562 = vmatprep.mubr.f32.mxu0 0.0
        %3563 = vmatmul.mubr.f32.gmra.mrb[0].mxu0 %v3217
        %v3564 = vpop.f32.mrb[0].mxu0
        %v3565 = vadd.f32 0.0, %v3564
        %v3566 = vpop.f32.mrb[0].mxu0
        %3567 = vmatprep.mubr.f32.mxu0 0.0
        %3568 = vmatmul.mubr.f32.gmra.mrb[0].mxu0 %v3218
        %v3569 = vpop.f32.mrb[0].mxu0
        %v3570 = vadd.f32 0.0, %v3569
        %v3571 = vpop.f32.mrb[0].mxu0
        %3572 = vmatprep.mubr.f32.mxu0 0.0
        %3573 = vmatmul.mubr.f32.gmra.mrb[0].mxu0 %v3219
        %v3574 = vpop.f32.mrb[0].mxu0
        %v3575 = vadd.f32 0.0, %v3574
        %v3576 = vpop.f32.mrb[0].mxu0
        %3577 = vmatprep.mubr.f32.mxu0 0.0
        %3578 = vmatmul.mubr.f32.gmra.mrb[0].mxu0 %v3220
        %v3579 = vpop.f32.mrb[0].mxu0
        %v3580 = vadd.f32 0.0, %v3579
        %v3581 = vpop.f32.mrb[0].mxu0
        %3582 = vmatprep.mubr.f32.mxu0 0.0
        %3583 = vmatmul.mubr.f32.gmra.mrb[0].mxu0 %v3221
        %v3584 = vpop.f32.mrb[0].mxu0
        %v3585 = vadd.f32 0.0, %v3584
        %v3586 = vpop.f32.mrb[0].mxu0
        %3587 = vmatprep.mubr.f32.mxu0 0.0
        %3588 = vmatmul.mubr.f32.gmra.mrb[0].mxu0 %v3222
        %v3589 = vpop.f32.mrb[0].mxu0
        %v3590 = vadd.f32 0.0, %v3589
        %v3591 = vpop.f32.mrb[0].mxu0
        %3592 = vmatprep.mubr.f32.mxu0 0.0
        %3593 = vmatmul.mubr.f32.gmra.mrb[0].mxu0 %v3223
        %v3594 = vpop.f32.mrb[0].mxu0
        %v3595 = vadd.f32 0.0, %v3594
        %v3596 = vpop.f32.mrb[0].mxu0
        %3597 = vmatprep.mubr.f32.mxu0 0.0
        %3598 = vmatmul.mubr.f32.gmra.mrb[0].mxu0 %v3224
        %v3599 = vpop.f32.mrb[0].mxu0
        %v3600 = vadd.f32 0.0, %v3599
        %v3601 = vpop.f32.mrb[0].mxu0
        %3602 = vmatprep.mubr.f32.mxu0 0.0
        %3603 = vmatmul.mubr.f32.gmra.mrb[0].mxu0 %v3225
        %v3604 = vpop.f32.mrb[0].mxu0
        %v3605 = vadd.f32 0.0, %v3604
        %v3606 = vpop.f32.mrb[0].mxu0
        %3607 = vmatprep.mubr.f32.mxu0 0.0
        %3608 = vmatmul.mubr.f32.gmra.mrb[0].mxu0 %v3226
        %v3609 = vpop.f32.mrb[0].mxu0
        %v3610 = vadd.f32 0.0, %v3609
        %v3611 = vpop.f32.mrb[0].mxu0
        %3612 = vmatprep.mubr.f32.mxu0 0.0
        %3613 = vmatmul.mubr.f32.gmra.mrb[0].mxu0 %v3227
        %v3614 = vpop.f32.mrb[0].mxu0
        %v3615 = vadd.f32 0.0, %v3614
        %v3616 = vpop.f32.mrb[0].mxu0
        %3617 = vmatprep.mubr.f32.mxu0 0.0
        %3618 = vmatmul.mubr.f32.gmra.mrb[0].mxu0 %v3228
        %v3619 = vpop.f32.mrb[0].mxu0
        %v3620 = vadd.f32 0.0, %v3619
        %v3621 = vpop.f32.mrb[0].mxu0
        %3622 = vmatprep.mubr.f32.mxu0 0.0
        %3623 = vmatmul.mubr.f32.gmra.mrb[0].mxu0 %v3229
        %v3624 = vpop.f32.mrb[0].mxu0
        %v3625 = vadd.f32 0.0, %v3624
        %v3626 = vpop.f32.mrb[0].mxu0
        %3627 = vmatprep.mubr.f32.mxu0 0.0
        %3628 = vmatmul.mubr.f32.gmra.mrb[0].mxu0 %v3230
        %v3629 = vpop.f32.mrb[0].mxu0
        %v3630 = vadd.f32 0.0, %v3629
        %v3631 = vpop.f32.mrb[0].mxu0
        %3632 = vdwg.mxu0
        %v3633 = vadd.f32 %v3103, %v3315
        %v3634 = vadd.f32 %v3104, %v3320
        %v3635 = vadd.f32 %v3105, %v3325
        %v3636 = vadd.f32 %v3106, %v3330
        %v3637 = vadd.f32 %v3107, %v3335
        %v3638 = vadd.f32 %v3108, %v3340
        %v3639 = vadd.f32 %v3109, %v3345
        %v3640 = vadd.f32 %v3110, %v3350
        %v3641 = vadd.f32 %v3111, %v3355
        %v3642 = vadd.f32 %v3112, %v3360
        %v3643 = vadd.f32 %v3113, %v3365
        %v3644 = vadd.f32 %v3114, %v3370
        %v3645 = vadd.f32 %v3115, %v3375
        %v3646 = vadd.f32 %v3116, %v3380
        %v3647 = vadd.f32 %v3117, %v3385
        %v3648 = vadd.f32 %v3118, %v3390
        %v3649 = vadd.f32 %v3119, %v3395
        %v3650 = vadd.f32 %v3120, %v3400
        %v3651 = vadd.f32 %v3121, %v3405
        %v3652 = vadd.f32 %v3122, %v3410
        %v3653 = vadd.f32 %v3123, %v3415
        %v3654 = vadd.f32 %v3124, %v3420
        %v3655 = vadd.f32 %v3125, %v3425
        %v3656 = vadd.f32 %v3126, %v3430
        %v3657 = vadd.f32 %v3127, %v3435
        %v3658 = vadd.f32 %v3128, %v3440
        %v3659 = vadd.f32 %v3129, %v3445
        %v3660 = vadd.f32 %v3130, %v3450
        %v3661 = vadd.f32 %v3131, %v3455
        %v3662 = vadd.f32 %v3132, %v3460
        %v3663 = vadd.f32 %v3133, %v3465
        %v3664 = vadd.f32 %v3134, %v3470
        %v3665 = vadd.f32 %v3135, %v3475
        %v3666 = vadd.f32 %v3136, %v3480
        %v3667 = vadd.f32 %v3137, %v3485
        %v3668 = vadd.f32 %v3138, %v3490
        %v3669 = vadd.f32 %v3139, %v3495
        %v3670 = vadd.f32 %v3140, %v3500
        %v3671 = vadd.f32 %v3141, %v3505
        %v3672 = vadd.f32 %v3142, %v3510
        %v3673 = vadd.f32 %v3143, %v3515
        %v3674 = vadd.f32 %v3144, %v3520
        %v3675 = vadd.f32 %v3145, %v3525
        %v3676 = vadd.f32 %v3146, %v3530
        %v3677 = vadd.f32 %v3147, %v3535
        %v3678 = vadd.f32 %v3148, %v3540
        %v3679 = vadd.f32 %v3149, %v3545
        %v3680 = vadd.f32 %v3150, %v3550
        %v3681 = vadd.f32 %v3151, %v3555
        %v3682 = vadd.f32 %v3152, %v3560
        %v3683 = vadd.f32 %v3153, %v3565
        %v3684 = vadd.f32 %v3154, %v3570
        %v3685 = vadd.f32 %v3155, %v3575
        %v3686 = vadd.f32 %v3156, %v3580
        %v3687 = vadd.f32 %v3157, %v3585
        %v3688 = vadd.f32 %v3158, %v3590
        %v3689 = vadd.f32 %v3159, %v3595
        %v3690 = vadd.f32 %v3160, %v3600
        %v3691 = vadd.f32 %v3161, %v3605
        %v3692 = vadd.f32 %v3162, %v3610
        %v3693 = vadd.f32 %v3163, %v3615
        %v3694 = vadd.f32 %v3164, %v3620
        %v3695 = vadd.f32 %v3165, %v3625
        %v3696 = vadd.f32 %v3166, %v3630
        %v3697 = vld [vmem:[%s1111 + $0x2] sm:$0xff]
        %v3698 = vld [vmem:[%s1111 + $0x12] sm:$0xff]
        %v3699 = vld [vmem:[%s1111 + $0x22] sm:$0xff]
        %v3700 = vld [vmem:[%s1111 + $0x32] sm:$0xff]
        %v3701 = vld [vmem:[%s1111 + $0x42] sm:$0xff]
        %v3702 = vld [vmem:[%s1111 + $0x52] sm:$0xff]
        %v3703 = vld [vmem:[%s1111 + $0x62] sm:$0xff]
        %v3704 = vld [vmem:[%s1111 + $0x72] sm:$0xff]
        %v3705 = vld [vmem:[%s1111 + $0xa2] sm:$0xff]
        %v3706 = vld [vmem:[%s1111 + $0xb2] sm:$0xff]
        %v3707 = vld [vmem:[%s1111 + $0xc2] sm:$0xff]
        %v3708 = vld [vmem:[%s1111 + $0xd2] sm:$0xff]
        %v3709 = vld [vmem:[%s1111 + $0xe2] sm:$0xff]
        %v3710 = vld [vmem:[%s1111 + $0xf2] sm:$0xff]
        %v3711 = vld [vmem:[%s1111 + $0x102] sm:$0xff]
        %v3712 = vld [vmem:[%s1111 + $0x112] sm:$0xff]
        %v3713 = vld [vmem:[%s1111 + $0x142] sm:$0xff]
        %v3714 = vld [vmem:[%s1111 + $0x152] sm:$0xff]
        %v3715 = vld [vmem:[%s1111 + $0x162] sm:$0xff]
        %v3716 = vld [vmem:[%s1111 + $0x172] sm:$0xff]
        %v3717 = vld [vmem:[%s1111 + $0x182] sm:$0xff]
        %v3718 = vld [vmem:[%s1111 + $0x192] sm:$0xff]
        %v3719 = vld [vmem:[%s1111 + $0x1a2] sm:$0xff]
        %v3720 = vld [vmem:[%s1111 + $0x1b2] sm:$0xff]
        %v3721 = vld [vmem:[%s1111 + $0x1e2] sm:$0xff]
        %v3722 = vld [vmem:[%s1111 + $0x1f2] sm:$0xff]
        %v3723 = vld [vmem:[%s1111 + $0x202] sm:$0xff]
        %v3724 = vld [vmem:[%s1111 + $0x212] sm:$0xff]
        %v3725 = vld [vmem:[%s1111 + $0x222] sm:$0xff]
        %v3726 = vld [vmem:[%s1111 + $0x232] sm:$0xff]
        %v3727 = vld [vmem:[%s1111 + $0x242] sm:$0xff]
        %v3728 = vld [vmem:[%s1111 + $0x252] sm:$0xff]
        %v3729 = vld [vmem:[%s1111 + $0x282] sm:$0xff]
        %v3730 = vld [vmem:[%s1111 + $0x292] sm:$0xff]
        %v3731 = vld [vmem:[%s1111 + $0x2a2] sm:$0xff]
        %v3732 = vld [vmem:[%s1111 + $0x2b2] sm:$0xff]
        %v3733 = vld [vmem:[%s1111 + $0x2c2] sm:$0xff]
        %v3734 = vld [vmem:[%s1111 + $0x2d2] sm:$0xff]
        %v3735 = vld [vmem:[%s1111 + $0x2e2] sm:$0xff]
        %v3736 = vld [vmem:[%s1111 + $0x2f2] sm:$0xff]
        %v3737 = vld [vmem:[%s1111 + $0x322] sm:$0xff]
        %v3738 = vld [vmem:[%s1111 + $0x332] sm:$0xff]
        %v3739 = vld [vmem:[%s1111 + $0x342] sm:$0xff]
        %v3740 = vld [vmem:[%s1111 + $0x352] sm:$0xff]
        %v3741 = vld [vmem:[%s1111 + $0x362] sm:$0xff]
        %v3742 = vld [vmem:[%s1111 + $0x372] sm:$0xff]
        %v3743 = vld [vmem:[%s1111 + $0x382] sm:$0xff]
        %v3744 = vld [vmem:[%s1111 + $0x392] sm:$0xff]
        %v3745 = vld [vmem:[%s1111 + $0x3c2] sm:$0xff]
        %v3746 = vld [vmem:[%s1111 + $0x3d2] sm:$0xff]
        %v3747 = vld [vmem:[%s1111 + $0x3e2] sm:$0xff]
        %v3748 = vld [vmem:[%s1111 + $0x3f2] sm:$0xff]
        %v3749 = vld [vmem:[%s1111 + $0x402] sm:$0xff]
        %v3750 = vld [vmem:[%s1111 + $0x412] sm:$0xff]
        %v3751 = vld [vmem:[%s1111 + $0x422] sm:$0xff]
        %v3752 = vld [vmem:[%s1111 + $0x432] sm:$0xff]
        %v3753 = vld [vmem:[%s1111 + $0x462] sm:$0xff]
        %v3754 = vld [vmem:[%s1111 + $0x472] sm:$0xff]
        %v3755 = vld [vmem:[%s1111 + $0x482] sm:$0xff]
        %v3756 = vld [vmem:[%s1111 + $0x492] sm:$0xff]
        %v3757 = vld [vmem:[%s1111 + $0x4a2] sm:$0xff]
        %v3758 = vld [vmem:[%s1111 + $0x4b2] sm:$0xff]
        %v3759 = vld [vmem:[%s1111 + $0x4c2] sm:$0xff]
        %v3760 = vld [vmem:[%s1111 + $0x4d2] sm:$0xff]
        %s3761 = scalar_lea.vmem %s3, 640
        %v3762 = vld [vmem:[%s3761] sm:$0xff]
        %v3763 = vld [vmem:[%s3761 + $0x8] sm:$0xff]
        %v3764 = vld [vmem:[%s3761 + $0x10] sm:$0xff]
        %v3765 = vld [vmem:[%s3761 + $0x18] sm:$0xff]
        %v3766 = vld [vmem:[%s3761 + $0x20] sm:$0xff]
        %v3767 = vld [vmem:[%s3761 + $0x28] sm:$0xff]
        %v3768 = vld [vmem:[%s3761 + $0x30] sm:$0xff]
        %v3769 = vld [vmem:[%s3761 + $0x38] sm:$0xff]
        %v3770 = vld [vmem:[%s3761 + $0x40] sm:$0xff]
        %v3771 = vld [vmem:[%s3761 + $0x48] sm:$0xff]
        %v3772 = vld [vmem:[%s3761 + $0x50] sm:$0xff]
        %v3773 = vld [vmem:[%s3761 + $0x58] sm:$0xff]
        %v3774 = vld [vmem:[%s3761 + $0x60] sm:$0xff]
        %v3775 = vld [vmem:[%s3761 + $0x68] sm:$0xff]
        %v3776 = vld [vmem:[%s3761 + $0x70] sm:$0xff]
        %v3777 = vld [vmem:[%s3761 + $0x78] sm:$0xff]
        %3778 = vmatprep.subr.mxu0 0.0
        %3779 = vmatpush1.msra.mxu0 %v3762
        %3780 = vmatprep.subr.mxu0 0.0
        %3781 = vmatpush1.msra.mxu0 %v3763
        %3782 = vmatprep.subr.mxu0 0.0
        %3783 = vmatpush1.msra.mxu0 %v3764
        %3784 = vmatprep.subr.mxu0 0.0
        %3785 = vmatpush1.msra.mxu0 %v3765
        %3786 = vmatprep.subr.mxu0 0.0
        %3787 = vmatpush1.msra.mxu0 %v3766
        %3788 = vmatprep.subr.mxu0 0.0
        %3789 = vmatpush1.msra.mxu0 %v3767
        %3790 = vmatprep.subr.mxu0 0.0
        %3791 = vmatpush1.msra.mxu0 %v3768
        %3792 = vmatprep.subr.mxu0 0.0
        %3793 = vmatpush1.msra.mxu0 %v3769
        %3794 = vmatprep.subr.mxu0 0.0
        %3795 = vmatpush1.msra.mxu0 %v3770
        %3796 = vmatprep.subr.mxu0 0.0
        %3797 = vmatpush1.msra.mxu0 %v3771
        %3798 = vmatprep.subr.mxu0 0.0
        %3799 = vmatpush1.msra.mxu0 %v3772
        %3800 = vmatprep.subr.mxu0 0.0
        %3801 = vmatpush1.msra.mxu0 %v3773
        %3802 = vmatprep.subr.mxu0 0.0
        %3803 = vmatpush1.msra.mxu0 %v3774
        %3804 = vmatprep.subr.mxu0 0.0
        %3805 = vmatpush1.msra.mxu0 %v3775
        %3806 = vmatprep.subr.mxu0 0.0
        %3807 = vmatpush1.msra.mxu0 %v3776
        %3808 = vmatprep.subr.mxu0 0.0
        %3809 = vmatpush1.msra.mxu0 %v3777
        %3810 = vmatprep.subr.mxu0 0.0
        %3811 = vmatpush1.msra.mxu0 0.0
        %3812 = vmatprep.subr.mxu0 0.0
        %3813 = vmatpush1.msra.mxu0 0.0
        %3814 = vmatprep.subr.mxu0 0.0
        %3815 = vmatpush1.msra.mxu0 0.0
        %3816 = vmatprep.subr.mxu0 0.0
        %3817 = vmatpush1.msra.mxu0 0.0
        %3818 = vmatprep.subr.mxu0 0.0
        %3819 = vmatpush1.msra.mxu0 0.0
        %3820 = vmatprep.subr.mxu0 0.0
        %3821 = vmatpush1.msra.mxu0 0.0
        %3822 = vmatprep.subr.mxu0 0.0
        %3823 = vmatpush1.msra.mxu0 0.0
        %3824 = vmatprep.subr.mxu0 0.0
        %3825 = vmatpush1.msra.mxu0 0.0
        %3826 = vmatprep.subr.mxu0 0.0
        %3827 = vmatpush1.msra.mxu0 0.0
        %3828 = vmatprep.subr.mxu0 0.0
        %3829 = vmatpush1.msra.mxu0 0.0
        %3830 = vmatprep.subr.mxu0 0.0
        %3831 = vmatpush1.msra.mxu0 0.0
        %3832 = vmatprep.subr.mxu0 0.0
        %3833 = vmatpush1.msra.mxu0 0.0
        %3834 = vmatprep.subr.mxu0 0.0
        %3835 = vmatpush1.msra.mxu0 0.0
        %3836 = vmatprep.subr.mxu0 0.0
        %3837 = vmatpush1.msra.mxu0 0.0
        %3838 = vmatprep.subr.mxu0 0.0
        %3839 = vmatpush1.msra.mxu0 0.0
        %3840 = vmatprep.subr.mxu0 0.0
        %3841 = vmatpush1.msra.mxu0 0.0
        %3842 = vmatprep.mubr.f32.mxu0 0.0
        %3843 = vmatmul.mubr.f32.gmra.mrb[0].mxu0 %v3697
        %v3844 = vpop.f32.mrb[0].mxu0
        %v3845 = vadd.f32 0.0, %v3844
        %v3846 = vpop.f32.mrb[0].mxu0
        %3847 = vmatprep.mubr.f32.mxu0 0.0
        %3848 = vmatmul.mubr.f32.gmra.mrb[0].mxu0 %v3698
        %v3849 = vpop.f32.mrb[0].mxu0
        %v3850 = vadd.f32 0.0, %v3849
        %v3851 = vpop.f32.mrb[0].mxu0
        %3852 = vmatprep.mubr.f32.mxu0 0.0
        %3853 = vmatmul.mubr.f32.gmra.mrb[0].mxu0 %v3699
        %v3854 = vpop.f32.mrb[0].mxu0
        %v3855 = vadd.f32 0.0, %v3854
        %v3856 = vpop.f32.mrb[0].mxu0
        %3857 = vmatprep.mubr.f32.mxu0 0.0
        %3858 = vmatmul.mubr.f32.gmra.mrb[0].mxu0 %v3700
        %v3859 = vpop.f32.mrb[0].mxu0
        %v3860 = vadd.f32 0.0, %v3859
        %v3861 = vpop.f32.mrb[0].mxu0
        %3862 = vmatprep.mubr.f32.mxu0 0.0
        %3863 = vmatmul.mubr.f32.gmra.mrb[0].mxu0 %v3701
        %v3864 = vpop.f32.mrb[0].mxu0
        %v3865 = vadd.f32 0.0, %v3864
        %v3866 = vpop.f32.mrb[0].mxu0
        %3867 = vmatprep.mubr.f32.mxu0 0.0
        %3868 = vmatmul.mubr.f32.gmra.mrb[0].mxu0 %v3702
        %v3869 = vpop.f32.mrb[0].mxu0
        %v3870 = vadd.f32 0.0, %v3869
        %v3871 = vpop.f32.mrb[0].mxu0
        %3872 = vmatprep.mubr.f32.mxu0 0.0
        %3873 = vmatmul.mubr.f32.gmra.mrb[0].mxu0 %v3703
        %v3874 = vpop.f32.mrb[0].mxu0
        %v3875 = vadd.f32 0.0, %v3874
        %v3876 = vpop.f32.mrb[0].mxu0
        %3877 = vmatprep.mubr.f32.mxu0 0.0
        %3878 = vmatmul.mubr.f32.gmra.mrb[0].mxu0 %v3704
        %v3879 = vpop.f32.mrb[0].mxu0
        %v3880 = vadd.f32 0.0, %v3879
        %v3881 = vpop.f32.mrb[0].mxu0
        %3882 = vmatprep.mubr.f32.mxu0 0.0
        %3883 = vmatmul.mubr.f32.gmra.mrb[0].mxu0 %v3705
        %v3884 = vpop.f32.mrb[0].mxu0
        %v3885 = vadd.f32 0.0, %v3884
        %v3886 = vpop.f32.mrb[0].mxu0
        %3887 = vmatprep.mubr.f32.mxu0 0.0
        %3888 = vmatmul.mubr.f32.gmra.mrb[0].mxu0 %v3706
        %v3889 = vpop.f32.mrb[0].mxu0
        %v3890 = vadd.f32 0.0, %v3889
        %v3891 = vpop.f32.mrb[0].mxu0
        %3892 = vmatprep.mubr.f32.mxu0 0.0
        %3893 = vmatmul.mubr.f32.gmra.mrb[0].mxu0 %v3707
        %v3894 = vpop.f32.mrb[0].mxu0
        %v3895 = vadd.f32 0.0, %v3894
        %v3896 = vpop.f32.mrb[0].mxu0
        %3897 = vmatprep.mubr.f32.mxu0 0.0
        %3898 = vmatmul.mubr.f32.gmra.mrb[0].mxu0 %v3708
        %v3899 = vpop.f32.mrb[0].mxu0
        %v3900 = vadd.f32 0.0, %v3899
        %v3901 = vpop.f32.mrb[0].mxu0
        %3902 = vmatprep.mubr.f32.mxu0 0.0
        %3903 = vmatmul.mubr.f32.gmra.mrb[0].mxu0 %v3709
        %v3904 = vpop.f32.mrb[0].mxu0
        %v3905 = vadd.f32 0.0, %v3904
        %v3906 = vpop.f32.mrb[0].mxu0
        %3907 = vmatprep.mubr.f32.mxu0 0.0
        %3908 = vmatmul.mubr.f32.gmra.mrb[0].mxu0 %v3710
        %v3909 = vpop.f32.mrb[0].mxu0
        %v3910 = vadd.f32 0.0, %v3909
        %v3911 = vpop.f32.mrb[0].mxu0
        %3912 = vmatprep.mubr.f32.mxu0 0.0
        %3913 = vmatmul.mubr.f32.gmra.mrb[0].mxu0 %v3711
        %v3914 = vpop.f32.mrb[0].mxu0
        %v3915 = vadd.f32 0.0, %v3914
        %v3916 = vpop.f32.mrb[0].mxu0
        %3917 = vmatprep.mubr.f32.mxu0 0.0
        %3918 = vmatmul.mubr.f32.gmra.mrb[0].mxu0 %v3712
        %v3919 = vpop.f32.mrb[0].mxu0
        %v3920 = vadd.f32 0.0, %v3919
        %v3921 = vpop.f32.mrb[0].mxu0
        %3922 = vmatprep.mubr.f32.mxu0 0.0
        %3923 = vmatmul.mubr.f32.gmra.mrb[0].mxu0 %v3713
        %v3924 = vpop.f32.mrb[0].mxu0
        %v3925 = vadd.f32 0.0, %v3924
        %v3926 = vpop.f32.mrb[0].mxu0
        %3927 = vmatprep.mubr.f32.mxu0 0.0
        %3928 = vmatmul.mubr.f32.gmra.mrb[0].mxu0 %v3714
        %v3929 = vpop.f32.mrb[0].mxu0
        %v3930 = vadd.f32 0.0, %v3929
        %v3931 = vpop.f32.mrb[0].mxu0
        %3932 = vmatprep.mubr.f32.mxu0 0.0
        %3933 = vmatmul.mubr.f32.gmra.mrb[0].mxu0 %v3715
        %v3934 = vpop.f32.mrb[0].mxu0
        %v3935 = vadd.f32 0.0, %v3934
        %v3936 = vpop.f32.mrb[0].mxu0
        %3937 = vmatprep.mubr.f32.mxu0 0.0
        %3938 = vmatmul.mubr.f32.gmra.mrb[0].mxu0 %v3716
        %v3939 = vpop.f32.mrb[0].mxu0
        %v3940 = vadd.f32 0.0, %v3939
        %v3941 = vpop.f32.mrb[0].mxu0
        %3942 = vmatprep.mubr.f32.mxu0 0.0
        %3943 = vmatmul.mubr.f32.gmra.mrb[0].mxu0 %v3717
        %v3944 = vpop.f32.mrb[0].mxu0
        %v3945 = vadd.f32 0.0, %v3944
        %v3946 = vpop.f32.mrb[0].mxu0
        %3947 = vmatprep.mubr.f32.mxu0 0.0
        %3948 = vmatmul.mubr.f32.gmra.mrb[0].mxu0 %v3718
        %v3949 = vpop.f32.mrb[0].mxu0
        %v3950 = vadd.f32 0.0, %v3949
        %v3951 = vpop.f32.mrb[0].mxu0
        %3952 = vmatprep.mubr.f32.mxu0 0.0
        %3953 = vmatmul.mubr.f32.gmra.mrb[0].mxu0 %v3719
        %v3954 = vpop.f32.mrb[0].mxu0
        %v3955 = vadd.f32 0.0, %v3954
        %v3956 = vpop.f32.mrb[0].mxu0
        %3957 = vmatprep.mubr.f32.mxu0 0.0
        %3958 = vmatmul.mubr.f32.gmra.mrb[0].mxu0 %v3720
        %v3959 = vpop.f32.mrb[0].mxu0
        %v3960 = vadd.f32 0.0, %v3959
        %v3961 = vpop.f32.mrb[0].mxu0
        %3962 = vmatprep.mubr.f32.mxu0 0.0
        %3963 = vmatmul.mubr.f32.gmra.mrb[0].mxu0 %v3721
        %v3964 = vpop.f32.mrb[0].mxu0
        %v3965 = vadd.f32 0.0, %v3964
        %v3966 = vpop.f32.mrb[0].mxu0
        %3967 = vmatprep.mubr.f32.mxu0 0.0
        %3968 = vmatmul.mubr.f32.gmra.mrb[0].mxu0 %v3722
        %v3969 = vpop.f32.mrb[0].mxu0
        %v3970 = vadd.f32 0.0, %v3969
        %v3971 = vpop.f32.mrb[0].mxu0
        %3972 = vmatprep.mubr.f32.mxu0 0.0
        %3973 = vmatmul.mubr.f32.gmra.mrb[0].mxu0 %v3723
        %v3974 = vpop.f32.mrb[0].mxu0
        %v3975 = vadd.f32 0.0, %v3974
        %v3976 = vpop.f32.mrb[0].mxu0
        %3977 = vmatprep.mubr.f32.mxu0 0.0
        %3978 = vmatmul.mubr.f32.gmra.mrb[0].mxu0 %v3724
        %v3979 = vpop.f32.mrb[0].mxu0
        %v3980 = vadd.f32 0.0, %v3979
        %v3981 = vpop.f32.mrb[0].mxu0
        %3982 = vmatprep.mubr.f32.mxu0 0.0
        %3983 = vmatmul.mubr.f32.gmra.mrb[0].mxu0 %v3725
        %v3984 = vpop.f32.mrb[0].mxu0
        %v3985 = vadd.f32 0.0, %v3984
        %v3986 = vpop.f32.mrb[0].mxu0
        %3987 = vmatprep.mubr.f32.mxu0 0.0
        %3988 = vmatmul.mubr.f32.gmra.mrb[0].mxu0 %v3726
        %v3989 = vpop.f32.mrb[0].mxu0
        %v3990 = vadd.f32 0.0, %v3989
        %v3991 = vpop.f32.mrb[0].mxu0
        %3992 = vmatprep.mubr.f32.mxu0 0.0
        %3993 = vmatmul.mubr.f32.gmra.mrb[0].mxu0 %v3727
        %v3994 = vpop.f32.mrb[0].mxu0
        %v3995 = vadd.f32 0.0, %v3994
        %v3996 = vpop.f32.mrb[0].mxu0
        %3997 = vmatprep.mubr.f32.mxu0 0.0
        %3998 = vmatmul.mubr.f32.gmra.mrb[0].mxu0 %v3728
        %v3999 = vpop.f32.mrb[0].mxu0
        %v4000 = vadd.f32 0.0, %v3999
        %v4001 = vpop.f32.mrb[0].mxu0
        %4002 = vmatprep.mubr.f32.mxu0 0.0
        %4003 = vmatmul.mubr.f32.gmra.mrb[0].mxu0 %v3729
        %v4004 = vpop.f32.mrb[0].mxu0
        %v4005 = vadd.f32 0.0, %v4004
        %v4006 = vpop.f32.mrb[0].mxu0
        %4007 = vmatprep.mubr.f32.mxu0 0.0
        %4008 = vmatmul.mubr.f32.gmra.mrb[0].mxu0 %v3730
        %v4009 = vpop.f32.mrb[0].mxu0
        %v4010 = vadd.f32 0.0, %v4009
        %v4011 = vpop.f32.mrb[0].mxu0
        %4012 = vmatprep.mubr.f32.mxu0 0.0
        %4013 = vmatmul.mubr.f32.gmra.mrb[0].mxu0 %v3731
        %v4014 = vpop.f32.mrb[0].mxu0
        %v4015 = vadd.f32 0.0, %v4014
        %v4016 = vpop.f32.mrb[0].mxu0
        %4017 = vmatprep.mubr.f32.mxu0 0.0
        %4018 = vmatmul.mubr.f32.gmra.mrb[0].mxu0 %v3732
        %v4019 = vpop.f32.mrb[0].mxu0
        %v4020 = vadd.f32 0.0, %v4019
        %v4021 = vpop.f32.mrb[0].mxu0
        %4022 = vmatprep.mubr.f32.mxu0 0.0
        %4023 = vmatmul.mubr.f32.gmra.mrb[0].mxu0 %v3733
        %v4024 = vpop.f32.mrb[0].mxu0
        %v4025 = vadd.f32 0.0, %v4024
        %v4026 = vpop.f32.mrb[0].mxu0
        %4027 = vmatprep.mubr.f32.mxu0 0.0
        %4028 = vmatmul.mubr.f32.gmra.mrb[0].mxu0 %v3734
        %v4029 = vpop.f32.mrb[0].mxu0
        %v4030 = vadd.f32 0.0, %v4029
        %v4031 = vpop.f32.mrb[0].mxu0
        %4032 = vmatprep.mubr.f32.mxu0 0.0
        %4033 = vmatmul.mubr.f32.gmra.mrb[0].mxu0 %v3735
        %v4034 = vpop.f32.mrb[0].mxu0
        %v4035 = vadd.f32 0.0, %v4034
        %v4036 = vpop.f32.mrb[0].mxu0
        %4037 = vmatprep.mubr.f32.mxu0 0.0
        %4038 = vmatmul.mubr.f32.gmra.mrb[0].mxu0 %v3736
        %v4039 = vpop.f32.mrb[0].mxu0
        %v4040 = vadd.f32 0.0, %v4039
        %v4041 = vpop.f32.mrb[0].mxu0
        %4042 = vmatprep.mubr.f32.mxu0 0.0
        %4043 = vmatmul.mubr.f32.gmra.mrb[0].mxu0 %v3737
        %v4044 = vpop.f32.mrb[0].mxu0
        %v4045 = vadd.f32 0.0, %v4044
        %v4046 = vpop.f32.mrb[0].mxu0
        %4047 = vmatprep.mubr.f32.mxu0 0.0
        %4048 = vmatmul.mubr.f32.gmra.mrb[0].mxu0 %v3738
        %v4049 = vpop.f32.mrb[0].mxu0
        %v4050 = vadd.f32 0.0, %v4049
        %v4051 = vpop.f32.mrb[0].mxu0
        %4052 = vmatprep.mubr.f32.mxu0 0.0
        %4053 = vmatmul.mubr.f32.gmra.mrb[0].mxu0 %v3739
        %v4054 = vpop.f32.mrb[0].mxu0
        %v4055 = vadd.f32 0.0, %v4054
        %v4056 = vpop.f32.mrb[0].mxu0
        %4057 = vmatprep.mubr.f32.mxu0 0.0
        %4058 = vmatmul.mubr.f32.gmra.mrb[0].mxu0 %v3740
        %v4059 = vpop.f32.mrb[0].mxu0
        %v4060 = vadd.f32 0.0, %v4059
        %v4061 = vpop.f32.mrb[0].mxu0
        %4062 = vmatprep.mubr.f32.mxu0 0.0
        %4063 = vmatmul.mubr.f32.gmra.mrb[0].mxu0 %v3741
        %v4064 = vpop.f32.mrb[0].mxu0
        %v4065 = vadd.f32 0.0, %v4064
        %v4066 = vpop.f32.mrb[0].mxu0
        %4067 = vmatprep.mubr.f32.mxu0 0.0
        %4068 = vmatmul.mubr.f32.gmra.mrb[0].mxu0 %v3742
        %v4069 = vpop.f32.mrb[0].mxu0
        %v4070 = vadd.f32 0.0, %v4069
        %v4071 = vpop.f32.mrb[0].mxu0
        %4072 = vmatprep.mubr.f32.mxu0 0.0
        %4073 = vmatmul.mubr.f32.gmra.mrb[0].mxu0 %v3743
        %v4074 = vpop.f32.mrb[0].mxu0
        %v4075 = vadd.f32 0.0, %v4074
        %v4076 = vpop.f32.mrb[0].mxu0
        %4077 = vmatprep.mubr.f32.mxu0 0.0
        %4078 = vmatmul.mubr.f32.gmra.mrb[0].mxu0 %v3744
        %v4079 = vpop.f32.mrb[0].mxu0
        %v4080 = vadd.f32 0.0, %v4079
        %v4081 = vpop.f32.mrb[0].mxu0
        %4082 = vmatprep.mubr.f32.mxu0 0.0
        %4083 = vmatmul.mubr.f32.gmra.mrb[0].mxu0 %v3745
        %v4084 = vpop.f32.mrb[0].mxu0
        %v4085 = vadd.f32 0.0, %v4084
        %v4086 = vpop.f32.mrb[0].mxu0
        %4087 = vmatprep.mubr.f32.mxu0 0.0
        %4088 = vmatmul.mubr.f32.gmra.mrb[0].mxu0 %v3746
        %v4089 = vpop.f32.mrb[0].mxu0
        %v4090 = vadd.f32 0.0, %v4089
        %v4091 = vpop.f32.mrb[0].mxu0
        %4092 = vmatprep.mubr.f32.mxu0 0.0
        %4093 = vmatmul.mubr.f32.gmra.mrb[0].mxu0 %v3747
        %v4094 = vpop.f32.mrb[0].mxu0
        %v4095 = vadd.f32 0.0, %v4094
        %v4096 = vpop.f32.mrb[0].mxu0
        %4097 = vmatprep.mubr.f32.mxu0 0.0
        %4098 = vmatmul.mubr.f32.gmra.mrb[0].mxu0 %v3748
        %v4099 = vpop.f32.mrb[0].mxu0
        %v4100 = vadd.f32 0.0, %v4099
        %v4101 = vpop.f32.mrb[0].mxu0
        %4102 = vmatprep.mubr.f32.mxu0 0.0
        %4103 = vmatmul.mubr.f32.gmra.mrb[0].mxu0 %v3749
        %v4104 = vpop.f32.mrb[0].mxu0
        %v4105 = vadd.f32 0.0, %v4104
        %v4106 = vpop.f32.mrb[0].mxu0
        %4107 = vmatprep.mubr.f32.mxu0 0.0
        %4108 = vmatmul.mubr.f32.gmra.mrb[0].mxu0 %v3750
        %v4109 = vpop.f32.mrb[0].mxu0
        %v4110 = vadd.f32 0.0, %v4109
        %v4111 = vpop.f32.mrb[0].mxu0
        %4112 = vmatprep.mubr.f32.mxu0 0.0
        %4113 = vmatmul.mubr.f32.gmra.mrb[0].mxu0 %v3751
        %v4114 = vpop.f32.mrb[0].mxu0
        %v4115 = vadd.f32 0.0, %v4114
        %v4116 = vpop.f32.mrb[0].mxu0
        %4117 = vmatprep.mubr.f32.mxu0 0.0
        %4118 = vmatmul.mubr.f32.gmra.mrb[0].mxu0 %v3752
        %v4119 = vpop.f32.mrb[0].mxu0
        %v4120 = vadd.f32 0.0, %v4119
        %v4121 = vpop.f32.mrb[0].mxu0
        %4122 = vmatprep.mubr.f32.mxu0 0.0
        %4123 = vmatmul.mubr.f32.gmra.mrb[0].mxu0 %v3753
        %v4124 = vpop.f32.mrb[0].mxu0
        %v4125 = vadd.f32 0.0, %v4124
        %v4126 = vpop.f32.mrb[0].mxu0
        %4127 = vmatprep.mubr.f32.mxu0 0.0
        %4128 = vmatmul.mubr.f32.gmra.mrb[0].mxu0 %v3754
        %v4129 = vpop.f32.mrb[0].mxu0
        %v4130 = vadd.f32 0.0, %v4129
        %v4131 = vpop.f32.mrb[0].mxu0
        %4132 = vmatprep.mubr.f32.mxu0 0.0
        %4133 = vmatmul.mubr.f32.gmra.mrb[0].mxu0 %v3755
        %v4134 = vpop.f32.mrb[0].mxu0
        %v4135 = vadd.f32 0.0, %v4134
        %v4136 = vpop.f32.mrb[0].mxu0
        %4137 = vmatprep.mubr.f32.mxu0 0.0
        %4138 = vmatmul.mubr.f32.gmra.mrb[0].mxu0 %v3756
        %v4139 = vpop.f32.mrb[0].mxu0
        %v4140 = vadd.f32 0.0, %v4139
        %v4141 = vpop.f32.mrb[0].mxu0
        %4142 = vmatprep.mubr.f32.mxu0 0.0
        %4143 = vmatmul.mubr.f32.gmra.mrb[0].mxu0 %v3757
        %v4144 = vpop.f32.mrb[0].mxu0
        %v4145 = vadd.f32 0.0, %v4144
        %v4146 = vpop.f32.mrb[0].mxu0
        %4147 = vmatprep.mubr.f32.mxu0 0.0
        %4148 = vmatmul.mubr.f32.gmra.mrb[0].mxu0 %v3758
        %v4149 = vpop.f32.mrb[0].mxu0
        %v4150 = vadd.f32 0.0, %v4149
        %v4151 = vpop.f32.mrb[0].mxu0
        %4152 = vmatprep.mubr.f32.mxu0 0.0
        %4153 = vmatmul.mubr.f32.gmra.mrb[0].mxu0 %v3759
        %v4154 = vpop.f32.mrb[0].mxu0
        %v4155 = vadd.f32 0.0, %v4154
        %v4156 = vpop.f32.mrb[0].mxu0
        %4157 = vmatprep.mubr.f32.mxu0 0.0
        %4158 = vmatmul.mubr.f32.gmra.mrb[0].mxu0 %v3760
        %v4159 = vpop.f32.mrb[0].mxu0
        %v4160 = vadd.f32 0.0, %v4159
        %v4161 = vpop.f32.mrb[0].mxu0
        %4162 = vdwg.mxu0
        %v4163 = vadd.f32 %v3633, %v3845
        %v4164 = vadd.f32 %v3634, %v3850
        %v4165 = vadd.f32 %v3635, %v3855
        %v4166 = vadd.f32 %v3636, %v3860
        %v4167 = vadd.f32 %v3637, %v3865
        %v4168 = vadd.f32 %v3638, %v3870
        %v4169 = vadd.f32 %v3639, %v3875
        %v4170 = vadd.f32 %v3640, %v3880
        %v4171 = vadd.f32 %v3641, %v3885
        %v4172 = vadd.f32 %v3642, %v3890
        %v4173 = vadd.f32 %v3643, %v3895
        %v4174 = vadd.f32 %v3644, %v3900
        %v4175 = vadd.f32 %v3645, %v3905
        %v4176 = vadd.f32 %v3646, %v3910
        %v4177 = vadd.f32 %v3647, %v3915
        %v4178 = vadd.f32 %v3648, %v3920
        %v4179 = vadd.f32 %v3649, %v3925
        %v4180 = vadd.f32 %v3650, %v3930
        %v4181 = vadd.f32 %v3651, %v3935
        %v4182 = vadd.f32 %v3652, %v3940
        %v4183 = vadd.f32 %v3653, %v3945
        %v4184 = vadd.f32 %v3654, %v3950
        %v4185 = vadd.f32 %v3655, %v3955
        %v4186 = vadd.f32 %v3656, %v3960
        %v4187 = vadd.f32 %v3657, %v3965
        %v4188 = vadd.f32 %v3658, %v3970
        %v4189 = vadd.f32 %v3659, %v3975
        %v4190 = vadd.f32 %v3660, %v3980
        %v4191 = vadd.f32 %v3661, %v3985
        %v4192 = vadd.f32 %v3662, %v3990
        %v4193 = vadd.f32 %v3663, %v3995
        %v4194 = vadd.f32 %v3664, %v4000
        %v4195 = vadd.f32 %v3665, %v4005
        %v4196 = vadd.f32 %v3666, %v4010
        %v4197 = vadd.f32 %v3667, %v4015
        %v4198 = vadd.f32 %v3668, %v4020
        %v4199 = vadd.f32 %v3669, %v4025
        %v4200 = vadd.f32 %v3670, %v4030
        %v4201 = vadd.f32 %v3671, %v4035
        %v4202 = vadd.f32 %v3672, %v4040
        %v4203 = vadd.f32 %v3673, %v4045
        %v4204 = vadd.f32 %v3674, %v4050
        %v4205 = vadd.f32 %v3675, %v4055
        %v4206 = vadd.f32 %v3676, %v4060
        %v4207 = vadd.f32 %v3677, %v4065
        %v4208 = vadd.f32 %v3678, %v4070
        %v4209 = vadd.f32 %v3679, %v4075
        %v4210 = vadd.f32 %v3680, %v4080
        %v4211 = vadd.f32 %v3681, %v4085
        %v4212 = vadd.f32 %v3682, %v4090
        %v4213 = vadd.f32 %v3683, %v4095
        %v4214 = vadd.f32 %v3684, %v4100
        %v4215 = vadd.f32 %v3685, %v4105
        %v4216 = vadd.f32 %v3686, %v4110
        %v4217 = vadd.f32 %v3687, %v4115
        %v4218 = vadd.f32 %v3688, %v4120
        %v4219 = vadd.f32 %v3689, %v4125
        %v4220 = vadd.f32 %v3690, %v4130
        %v4221 = vadd.f32 %v3691, %v4135
        %v4222 = vadd.f32 %v3692, %v4140
        %v4223 = vadd.f32 %v3693, %v4145
        %v4224 = vadd.f32 %v3694, %v4150
        %v4225 = vadd.f32 %v3695, %v4155
        %v4226 = vadd.f32 %v3696, %v4160
        %s4227 = scalar_lea.vmem [#allocation2], 32
        %v4228 = vld [vmem:[%s4227] sm:$0xff]
        %v4229 = vld [vmem:[%s4227 + $0x10] sm:$0xff]
        %v4230 = vld [vmem:[%s4227 + $0x20] sm:$0xff]
        %v4231 = vld [vmem:[%s4227 + $0x30] sm:$0xff]
        %v4232 = vld [vmem:[%s4227 + $0x40] sm:$0xff]
        %v4233 = vld [vmem:[%s4227 + $0x50] sm:$0xff]
        %v4234 = vld [vmem:[%s4227 + $0x60] sm:$0xff]
        %v4235 = vld [vmem:[%s4227 + $0x70] sm:$0xff]
        %v4236 = vld [vmem:[%s4227 + $0xa0] sm:$0xff]
        %v4237 = vld [vmem:[%s4227 + $0xb0] sm:$0xff]
        %v4238 = vld [vmem:[%s4227 + $0xc0] sm:$0xff]
        %v4239 = vld [vmem:[%s4227 + $0xd0] sm:$0xff]
        %v4240 = vld [vmem:[%s4227 + $0xe0] sm:$0xff]
        %v4241 = vld [vmem:[%s4227 + $0xf0] sm:$0xff]
        %v4242 = vld [vmem:[%s4227 + $0x100] sm:$0xff]
        %v4243 = vld [vmem:[%s4227 + $0x110] sm:$0xff]
        %v4244 = vld [vmem:[%s4227 + $0x140] sm:$0xff]
        %v4245 = vld [vmem:[%s4227 + $0x150] sm:$0xff]
        %v4246 = vld [vmem:[%s4227 + $0x160] sm:$0xff]
        %v4247 = vld [vmem:[%s4227 + $0x170] sm:$0xff]
        %v4248 = vld [vmem:[%s4227 + $0x180] sm:$0xff]
        %v4249 = vld [vmem:[%s4227 + $0x190] sm:$0xff]
        %v4250 = vld [vmem:[%s4227 + $0x1a0] sm:$0xff]
        %v4251 = vld [vmem:[%s4227 + $0x1b0] sm:$0xff]
        %v4252 = vld [vmem:[%s4227 + $0x1e0] sm:$0xff]
        %v4253 = vld [vmem:[%s4227 + $0x1f0] sm:$0xff]
        %v4254 = vld [vmem:[%s4227 + $0x200] sm:$0xff]
        %v4255 = vld [vmem:[%s4227 + $0x210] sm:$0xff]
        %v4256 = vld [vmem:[%s4227 + $0x220] sm:$0xff]
        %v4257 = vld [vmem:[%s4227 + $0x230] sm:$0xff]
        %v4258 = vld [vmem:[%s4227 + $0x240] sm:$0xff]
        %v4259 = vld [vmem:[%s4227 + $0x250] sm:$0xff]
        %v4260 = vld [vmem:[%s4227 + $0x280] sm:$0xff]
        %v4261 = vld [vmem:[%s4227 + $0x290] sm:$0xff]
        %v4262 = vld [vmem:[%s4227 + $0x2a0] sm:$0xff]
        %v4263 = vld [vmem:[%s4227 + $0x2b0] sm:$0xff]
        %v4264 = vld [vmem:[%s4227 + $0x2c0] sm:$0xff]
        %v4265 = vld [vmem:[%s4227 + $0x2d0] sm:$0xff]
        %v4266 = vld [vmem:[%s4227 + $0x2e0] sm:$0xff]
        %v4267 = vld [vmem:[%s4227 + $0x2f0] sm:$0xff]
        %v4268 = vld [vmem:[%s4227 + $0x320] sm:$0xff]
        %v4269 = vld [vmem:[%s4227 + $0x330] sm:$0xff]
        %v4270 = vld [vmem:[%s4227 + $0x340] sm:$0xff]
        %v4271 = vld [vmem:[%s4227 + $0x350] sm:$0xff]
        %v4272 = vld [vmem:[%s4227 + $0x360] sm:$0xff]
        %v4273 = vld [vmem:[%s4227 + $0x370] sm:$0xff]
        %v4274 = vld [vmem:[%s4227 + $0x380] sm:$0xff]
        %v4275 = vld [vmem:[%s4227 + $0x390] sm:$0xff]
        %v4276 = vld [vmem:[%s4227 + $0x3c0] sm:$0xff]
        %v4277 = vld [vmem:[%s4227 + $0x3d0] sm:$0xff]
        %v4278 = vld [vmem:[%s4227 + $0x3e0] sm:$0xff]
        %v4279 = vld [vmem:[%s4227 + $0x3f0] sm:$0xff]
        %v4280 = vld [vmem:[%s4227 + $0x400] sm:$0xff]
        %v4281 = vld [vmem:[%s4227 + $0x410] sm:$0xff]
        %v4282 = vld [vmem:[%s4227 + $0x420] sm:$0xff]
        %v4283 = vld [vmem:[%s4227 + $0x430] sm:$0xff]
        %v4284 = vld [vmem:[%s4227 + $0x460] sm:$0xff]
        %v4285 = vld [vmem:[%s4227 + $0x470] sm:$0xff]
        %v4286 = vld [vmem:[%s4227 + $0x480] sm:$0xff]
        %v4287 = vld [vmem:[%s4227 + $0x490] sm:$0xff]
        %v4288 = vld [vmem:[%s4227 + $0x4a0] sm:$0xff]
        %v4289 = vld [vmem:[%s4227 + $0x4b0] sm:$0xff]
        %v4290 = vld [vmem:[%s4227 + $0x4c0] sm:$0xff]
        %v4291 = vld [vmem:[%s4227 + $0x4d0] sm:$0xff]
        %s4292 = scalar_lea.vmem %s3, 768
        %v4293 = vld [vmem:[%s4292] sm:$0xff]
        %v4294 = vld [vmem:[%s4292 + $0x8] sm:$0xff]
        %v4295 = vld [vmem:[%s4292 + $0x10] sm:$0xff]
        %v4296 = vld [vmem:[%s4292 + $0x18] sm:$0xff]
        %v4297 = vld [vmem:[%s4292 + $0x20] sm:$0xff]
        %v4298 = vld [vmem:[%s4292 + $0x28] sm:$0xff]
        %v4299 = vld [vmem:[%s4292 + $0x30] sm:$0xff]
        %v4300 = vld [vmem:[%s4292 + $0x38] sm:$0xff]
        %v4301 = vld [vmem:[%s4292 + $0x40] sm:$0xff]
        %v4302 = vld [vmem:[%s4292 + $0x48] sm:$0xff]
        %v4303 = vld [vmem:[%s4292 + $0x50] sm:$0xff]
        %v4304 = vld [vmem:[%s4292 + $0x58] sm:$0xff]
        %v4305 = vld [vmem:[%s4292 + $0x60] sm:$0xff]
        %v4306 = vld [vmem:[%s4292 + $0x68] sm:$0xff]
        %v4307 = vld [vmem:[%s4292 + $0x70] sm:$0xff]
        %v4308 = vld [vmem:[%s4292 + $0x78] sm:$0xff]
        %4309 = vmatprep.subr.mxu0 0.0
        %4310 = vmatpush1.msra.mxu0 %v4293
        %4311 = vmatprep.subr.mxu0 0.0
        %4312 = vmatpush1.msra.mxu0 %v4294
        %4313 = vmatprep.subr.mxu0 0.0
        %4314 = vmatpush1.msra.mxu0 %v4295
        %4315 = vmatprep.subr.mxu0 0.0
        %4316 = vmatpush1.msra.mxu0 %v4296
        %4317 = vmatprep.subr.mxu0 0.0
        %4318 = vmatpush1.msra.mxu0 %v4297
        %4319 = vmatprep.subr.mxu0 0.0
        %4320 = vmatpush1.msra.mxu0 %v4298
        %4321 = vmatprep.subr.mxu0 0.0
        %4322 = vmatpush1.msra.mxu0 %v4299
        %4323 = vmatprep.subr.mxu0 0.0
        %4324 = vmatpush1.msra.mxu0 %v4300
        %4325 = vmatprep.subr.mxu0 0.0
        %4326 = vmatpush1.msra.mxu0 %v4301
        %4327 = vmatprep.subr.mxu0 0.0
        %4328 = vmatpush1.msra.mxu0 %v4302
        %4329 = vmatprep.subr.mxu0 0.0
        %4330 = vmatpush1.msra.mxu0 %v4303
        %4331 = vmatprep.subr.mxu0 0.0
        %4332 = vmatpush1.msra.mxu0 %v4304
        %4333 = vmatprep.subr.mxu0 0.0
        %4334 = vmatpush1.msra.mxu0 %v4305
        %4335 = vmatprep.subr.mxu0 0.0
        %4336 = vmatpush1.msra.mxu0 %v4306
        %4337 = vmatprep.subr.mxu0 0.0
        %4338 = vmatpush1.msra.mxu0 %v4307
        %4339 = vmatprep.subr.mxu0 0.0
        %4340 = vmatpush1.msra.mxu0 %v4308
        %4341 = vmatprep.subr.mxu0 0.0
        %4342 = vmatpush1.msra.mxu0 0.0
        %4343 = vmatprep.subr.mxu0 0.0
        %4344 = vmatpush1.msra.mxu0 0.0
        %4345 = vmatprep.subr.mxu0 0.0
        %4346 = vmatpush1.msra.mxu0 0.0
        %4347 = vmatprep.subr.mxu0 0.0
        %4348 = vmatpush1.msra.mxu0 0.0
        %4349 = vmatprep.subr.mxu0 0.0
        %4350 = vmatpush1.msra.mxu0 0.0
        %4351 = vmatprep.subr.mxu0 0.0
        %4352 = vmatpush1.msra.mxu0 0.0
        %4353 = vmatprep.subr.mxu0 0.0
        %4354 = vmatpush1.msra.mxu0 0.0
        %4355 = vmatprep.subr.mxu0 0.0
        %4356 = vmatpush1.msra.mxu0 0.0
        %4357 = vmatprep.subr.mxu0 0.0
        %4358 = vmatpush1.msra.mxu0 0.0
        %4359 = vmatprep.subr.mxu0 0.0
        %4360 = vmatpush1.msra.mxu0 0.0
        %4361 = vmatprep.subr.mxu0 0.0
        %4362 = vmatpush1.msra.mxu0 0.0
        %4363 = vmatprep.subr.mxu0 0.0
        %4364 = vmatpush1.msra.mxu0 0.0
        %4365 = vmatprep.subr.mxu0 0.0
        %4366 = vmatpush1.msra.mxu0 0.0
        %4367 = vmatprep.subr.mxu0 0.0
        %4368 = vmatpush1.msra.mxu0 0.0
        %4369 = vmatprep.subr.mxu0 0.0
        %4370 = vmatpush1.msra.mxu0 0.0
        %4371 = vmatprep.subr.mxu0 0.0
        %4372 = vmatpush1.msra.mxu0 0.0
        %4373 = vmatprep.mubr.f32.mxu0 0.0
        %4374 = vmatmul.mubr.f32.gmra.mrb[0].mxu0 %v4228
        %v4375 = vpop.f32.mrb[0].mxu0
        %v4376 = vadd.f32 0.0, %v4375
        %v4377 = vpop.f32.mrb[0].mxu0
        %4378 = vmatprep.mubr.f32.mxu0 0.0
        %4379 = vmatmul.mubr.f32.gmra.mrb[0].mxu0 %v4229
        %v4380 = vpop.f32.mrb[0].mxu0
        %v4381 = vadd.f32 0.0, %v4380
        %v4382 = vpop.f32.mrb[0].mxu0
        %4383 = vmatprep.mubr.f32.mxu0 0.0
        %4384 = vmatmul.mubr.f32.gmra.mrb[0].mxu0 %v4230
        %v4385 = vpop.f32.mrb[0].mxu0
        %v4386 = vadd.f32 0.0, %v4385
        %v4387 = vpop.f32.mrb[0].mxu0
        %4388 = vmatprep.mubr.f32.mxu0 0.0
        %4389 = vmatmul.mubr.f32.gmra.mrb[0].mxu0 %v4231
        %v4390 = vpop.f32.mrb[0].mxu0
        %v4391 = vadd.f32 0.0, %v4390
        %v4392 = vpop.f32.mrb[0].mxu0
        %4393 = vmatprep.mubr.f32.mxu0 0.0
        %4394 = vmatmul.mubr.f32.gmra.mrb[0].mxu0 %v4232
        %v4395 = vpop.f32.mrb[0].mxu0
        %v4396 = vadd.f32 0.0, %v4395
        %v4397 = vpop.f32.mrb[0].mxu0
        %4398 = vmatprep.mubr.f32.mxu0 0.0
        %4399 = vmatmul.mubr.f32.gmra.mrb[0].mxu0 %v4233
        %v4400 = vpop.f32.mrb[0].mxu0
        %v4401 = vadd.f32 0.0, %v4400
        %v4402 = vpop.f32.mrb[0].mxu0
        %4403 = vmatprep.mubr.f32.mxu0 0.0
        %4404 = vmatmul.mubr.f32.gmra.mrb[0].mxu0 %v4234
        %v4405 = vpop.f32.mrb[0].mxu0
        %v4406 = vadd.f32 0.0, %v4405
        %v4407 = vpop.f32.mrb[0].mxu0
        %4408 = vmatprep.mubr.f32.mxu0 0.0
        %4409 = vmatmul.mubr.f32.gmra.mrb[0].mxu0 %v4235
        %v4410 = vpop.f32.mrb[0].mxu0
        %v4411 = vadd.f32 0.0, %v4410
        %v4412 = vpop.f32.mrb[0].mxu0
        %4413 = vmatprep.mubr.f32.mxu0 0.0
        %4414 = vmatmul.mubr.f32.gmra.mrb[0].mxu0 %v4236
        %v4415 = vpop.f32.mrb[0].mxu0
        %v4416 = vadd.f32 0.0, %v4415
        %v4417 = vpop.f32.mrb[0].mxu0
        %4418 = vmatprep.mubr.f32.mxu0 0.0
        %4419 = vmatmul.mubr.f32.gmra.mrb[0].mxu0 %v4237
        %v4420 = vpop.f32.mrb[0].mxu0
        %v4421 = vadd.f32 0.0, %v4420
        %v4422 = vpop.f32.mrb[0].mxu0
        %4423 = vmatprep.mubr.f32.mxu0 0.0
        %4424 = vmatmul.mubr.f32.gmra.mrb[0].mxu0 %v4238
        %v4425 = vpop.f32.mrb[0].mxu0
        %v4426 = vadd.f32 0.0, %v4425
        %v4427 = vpop.f32.mrb[0].mxu0
        %4428 = vmatprep.mubr.f32.mxu0 0.0
        %4429 = vmatmul.mubr.f32.gmra.mrb[0].mxu0 %v4239
        %v4430 = vpop.f32.mrb[0].mxu0
        %v4431 = vadd.f32 0.0, %v4430
        %v4432 = vpop.f32.mrb[0].mxu0
        %4433 = vmatprep.mubr.f32.mxu0 0.0
        %4434 = vmatmul.mubr.f32.gmra.mrb[0].mxu0 %v4240
        %v4435 = vpop.f32.mrb[0].mxu0
        %v4436 = vadd.f32 0.0, %v4435
        %v4437 = vpop.f32.mrb[0].mxu0
        %4438 = vmatprep.mubr.f32.mxu0 0.0
        %4439 = vmatmul.mubr.f32.gmra.mrb[0].mxu0 %v4241
        %v4440 = vpop.f32.mrb[0].mxu0
        %v4441 = vadd.f32 0.0, %v4440
        %v4442 = vpop.f32.mrb[0].mxu0
        %4443 = vmatprep.mubr.f32.mxu0 0.0
        %4444 = vmatmul.mubr.f32.gmra.mrb[0].mxu0 %v4242
        %v4445 = vpop.f32.mrb[0].mxu0
        %v4446 = vadd.f32 0.0, %v4445
        %v4447 = vpop.f32.mrb[0].mxu0
        %4448 = vmatprep.mubr.f32.mxu0 0.0
        %4449 = vmatmul.mubr.f32.gmra.mrb[0].mxu0 %v4243
        %v4450 = vpop.f32.mrb[0].mxu0
        %v4451 = vadd.f32 0.0, %v4450
        %v4452 = vpop.f32.mrb[0].mxu0
        %4453 = vmatprep.mubr.f32.mxu0 0.0
        %4454 = vmatmul.mubr.f32.gmra.mrb[0].mxu0 %v4244
        %v4455 = vpop.f32.mrb[0].mxu0
        %v4456 = vadd.f32 0.0, %v4455
        %v4457 = vpop.f32.mrb[0].mxu0
        %4458 = vmatprep.mubr.f32.mxu0 0.0
        %4459 = vmatmul.mubr.f32.gmra.mrb[0].mxu0 %v4245
        %v4460 = vpop.f32.mrb[0].mxu0
        %v4461 = vadd.f32 0.0, %v4460
        %v4462 = vpop.f32.mrb[0].mxu0
        %4463 = vmatprep.mubr.f32.mxu0 0.0
        %4464 = vmatmul.mubr.f32.gmra.mrb[0].mxu0 %v4246
        %v4465 = vpop.f32.mrb[0].mxu0
        %v4466 = vadd.f32 0.0, %v4465
        %v4467 = vpop.f32.mrb[0].mxu0
        %4468 = vmatprep.mubr.f32.mxu0 0.0
        %4469 = vmatmul.mubr.f32.gmra.mrb[0].mxu0 %v4247
        %v4470 = vpop.f32.mrb[0].mxu0
        %v4471 = vadd.f32 0.0, %v4470
        %v4472 = vpop.f32.mrb[0].mxu0
        %4473 = vmatprep.mubr.f32.mxu0 0.0
        %4474 = vmatmul.mubr.f32.gmra.mrb[0].mxu0 %v4248
        %v4475 = vpop.f32.mrb[0].mxu0
        %v4476 = vadd.f32 0.0, %v4475
        %v4477 = vpop.f32.mrb[0].mxu0
        %4478 = vmatprep.mubr.f32.mxu0 0.0
        %4479 = vmatmul.mubr.f32.gmra.mrb[0].mxu0 %v4249
        %v4480 = vpop.f32.mrb[0].mxu0
        %v4481 = vadd.f32 0.0, %v4480
        %v4482 = vpop.f32.mrb[0].mxu0
        %4483 = vmatprep.mubr.f32.mxu0 0.0
        %4484 = vmatmul.mubr.f32.gmra.mrb[0].mxu0 %v4250
        %v4485 = vpop.f32.mrb[0].mxu0
        %v4486 = vadd.f32 0.0, %v4485
        %v4487 = vpop.f32.mrb[0].mxu0
        %4488 = vmatprep.mubr.f32.mxu0 0.0
        %4489 = vmatmul.mubr.f32.gmra.mrb[0].mxu0 %v4251
        %v4490 = vpop.f32.mrb[0].mxu0
        %v4491 = vadd.f32 0.0, %v4490
        %v4492 = vpop.f32.mrb[0].mxu0
        %4493 = vmatprep.mubr.f32.mxu0 0.0
        %4494 = vmatmul.mubr.f32.gmra.mrb[0].mxu0 %v4252
        %v4495 = vpop.f32.mrb[0].mxu0
        %v4496 = vadd.f32 0.0, %v4495
        %v4497 = vpop.f32.mrb[0].mxu0
        %4498 = vmatprep.mubr.f32.mxu0 0.0
        %4499 = vmatmul.mubr.f32.gmra.mrb[0].mxu0 %v4253
        %v4500 = vpop.f32.mrb[0].mxu0
        %v4501 = vadd.f32 0.0, %v4500
        %v4502 = vpop.f32.mrb[0].mxu0
        %4503 = vmatprep.mubr.f32.mxu0 0.0
        %4504 = vmatmul.mubr.f32.gmra.mrb[0].mxu0 %v4254
        %v4505 = vpop.f32.mrb[0].mxu0
        %v4506 = vadd.f32 0.0, %v4505
        %v4507 = vpop.f32.mrb[0].mxu0
        %4508 = vmatprep.mubr.f32.mxu0 0.0
        %4509 = vmatmul.mubr.f32.gmra.mrb[0].mxu0 %v4255
        %v4510 = vpop.f32.mrb[0].mxu0
        %v4511 = vadd.f32 0.0, %v4510
        %v4512 = vpop.f32.mrb[0].mxu0
        %4513 = vmatprep.mubr.f32.mxu0 0.0
        %4514 = vmatmul.mubr.f32.gmra.mrb[0].mxu0 %v4256
        %v4515 = vpop.f32.mrb[0].mxu0
        %v4516 = vadd.f32 0.0, %v4515
        %v4517 = vpop.f32.mrb[0].mxu0
        %4518 = vmatprep.mubr.f32.mxu0 0.0
        %4519 = vmatmul.mubr.f32.gmra.mrb[0].mxu0 %v4257
        %v4520 = vpop.f32.mrb[0].mxu0
        %v4521 = vadd.f32 0.0, %v4520
        %v4522 = vpop.f32.mrb[0].mxu0
        %4523 = vmatprep.mubr.f32.mxu0 0.0
        %4524 = vmatmul.mubr.f32.gmra.mrb[0].mxu0 %v4258
        %v4525 = vpop.f32.mrb[0].mxu0
        %v4526 = vadd.f32 0.0, %v4525
        %v4527 = vpop.f32.mrb[0].mxu0
        %4528 = vmatprep.mubr.f32.mxu0 0.0
        %4529 = vmatmul.mubr.f32.gmra.mrb[0].mxu0 %v4259
        %v4530 = vpop.f32.mrb[0].mxu0
        %v4531 = vadd.f32 0.0, %v4530
        %v4532 = vpop.f32.mrb[0].mxu0
        %4533 = vmatprep.mubr.f32.mxu0 0.0
        %4534 = vmatmul.mubr.f32.gmra.mrb[0].mxu0 %v4260
        %v4535 = vpop.f32.mrb[0].mxu0
        %v4536 = vadd.f32 0.0, %v4535
        %v4537 = vpop.f32.mrb[0].mxu0
        %4538 = vmatprep.mubr.f32.mxu0 0.0
        %4539 = vmatmul.mubr.f32.gmra.mrb[0].mxu0 %v4261
        %v4540 = vpop.f32.mrb[0].mxu0
        %v4541 = vadd.f32 0.0, %v4540
        %v4542 = vpop.f32.mrb[0].mxu0
        %4543 = vmatprep.mubr.f32.mxu0 0.0
        %4544 = vmatmul.mubr.f32.gmra.mrb[0].mxu0 %v4262
        %v4545 = vpop.f32.mrb[0].mxu0
        %v4546 = vadd.f32 0.0, %v4545
        %v4547 = vpop.f32.mrb[0].mxu0
        %4548 = vmatprep.mubr.f32.mxu0 0.0
        %4549 = vmatmul.mubr.f32.gmra.mrb[0].mxu0 %v4263
        %v4550 = vpop.f32.mrb[0].mxu0
        %v4551 = vadd.f32 0.0, %v4550
        %v4552 = vpop.f32.mrb[0].mxu0
        %4553 = vmatprep.mubr.f32.mxu0 0.0
        %4554 = vmatmul.mubr.f32.gmra.mrb[0].mxu0 %v4264
        %v4555 = vpop.f32.mrb[0].mxu0
        %v4556 = vadd.f32 0.0, %v4555
        %v4557 = vpop.f32.mrb[0].mxu0
        %4558 = vmatprep.mubr.f32.mxu0 0.0
        %4559 = vmatmul.mubr.f32.gmra.mrb[0].mxu0 %v4265
        %v4560 = vpop.f32.mrb[0].mxu0
        %v4561 = vadd.f32 0.0, %v4560
        %v4562 = vpop.f32.mrb[0].mxu0
        %4563 = vmatprep.mubr.f32.mxu0 0.0
        %4564 = vmatmul.mubr.f32.gmra.mrb[0].mxu0 %v4266
        %v4565 = vpop.f32.mrb[0].mxu0
        %v4566 = vadd.f32 0.0, %v4565
        %v4567 = vpop.f32.mrb[0].mxu0
        %4568 = vmatprep.mubr.f32.mxu0 0.0
        %4569 = vmatmul.mubr.f32.gmra.mrb[0].mxu0 %v4267
        %v4570 = vpop.f32.mrb[0].mxu0
        %v4571 = vadd.f32 0.0, %v4570
        %v4572 = vpop.f32.mrb[0].mxu0
        %4573 = vmatprep.mubr.f32.mxu0 0.0
        %4574 = vmatmul.mubr.f32.gmra.mrb[0].mxu0 %v4268
        %v4575 = vpop.f32.mrb[0].mxu0
        %v4576 = vadd.f32 0.0, %v4575
        %v4577 = vpop.f32.mrb[0].mxu0
        %4578 = vmatprep.mubr.f32.mxu0 0.0
        %4579 = vmatmul.mubr.f32.gmra.mrb[0].mxu0 %v4269
        %v4580 = vpop.f32.mrb[0].mxu0
        %v4581 = vadd.f32 0.0, %v4580
        %v4582 = vpop.f32.mrb[0].mxu0
        %4583 = vmatprep.mubr.f32.mxu0 0.0
        %4584 = vmatmul.mubr.f32.gmra.mrb[0].mxu0 %v4270
        %v4585 = vpop.f32.mrb[0].mxu0
        %v4586 = vadd.f32 0.0, %v4585
        %v4587 = vpop.f32.mrb[0].mxu0
        %4588 = vmatprep.mubr.f32.mxu0 0.0
        %4589 = vmatmul.mubr.f32.gmra.mrb[0].mxu0 %v4271
        %v4590 = vpop.f32.mrb[0].mxu0
        %v4591 = vadd.f32 0.0, %v4590
        %v4592 = vpop.f32.mrb[0].mxu0
        %4593 = vmatprep.mubr.f32.mxu0 0.0
        %4594 = vmatmul.mubr.f32.gmra.mrb[0].mxu0 %v4272
        %v4595 = vpop.f32.mrb[0].mxu0
        %v4596 = vadd.f32 0.0, %v4595
        %v4597 = vpop.f32.mrb[0].mxu0
        %4598 = vmatprep.mubr.f32.mxu0 0.0
        %4599 = vmatmul.mubr.f32.gmra.mrb[0].mxu0 %v4273
        %v4600 = vpop.f32.mrb[0].mxu0
        %v4601 = vadd.f32 0.0, %v4600
        %v4602 = vpop.f32.mrb[0].mxu0
        %4603 = vmatprep.mubr.f32.mxu0 0.0
        %4604 = vmatmul.mubr.f32.gmra.mrb[0].mxu0 %v4274
        %v4605 = vpop.f32.mrb[0].mxu0
        %v4606 = vadd.f32 0.0, %v4605
        %v4607 = vpop.f32.mrb[0].mxu0
        %4608 = vmatprep.mubr.f32.mxu0 0.0
        %4609 = vmatmul.mubr.f32.gmra.mrb[0].mxu0 %v4275
        %v4610 = vpop.f32.mrb[0].mxu0
        %v4611 = vadd.f32 0.0, %v4610
        %v4612 = vpop.f32.mrb[0].mxu0
        %4613 = vmatprep.mubr.f32.mxu0 0.0
        %4614 = vmatmul.mubr.f32.gmra.mrb[0].mxu0 %v4276
        %v4615 = vpop.f32.mrb[0].mxu0
        %v4616 = vadd.f32 0.0, %v4615
        %v4617 = vpop.f32.mrb[0].mxu0
        %4618 = vmatprep.mubr.f32.mxu0 0.0
        %4619 = vmatmul.mubr.f32.gmra.mrb[0].mxu0 %v4277
        %v4620 = vpop.f32.mrb[0].mxu0
        %v4621 = vadd.f32 0.0, %v4620
        %v4622 = vpop.f32.mrb[0].mxu0
        %4623 = vmatprep.mubr.f32.mxu0 0.0
        %4624 = vmatmul.mubr.f32.gmra.mrb[0].mxu0 %v4278
        %v4625 = vpop.f32.mrb[0].mxu0
        %v4626 = vadd.f32 0.0, %v4625
        %v4627 = vpop.f32.mrb[0].mxu0
        %4628 = vmatprep.mubr.f32.mxu0 0.0
        %4629 = vmatmul.mubr.f32.gmra.mrb[0].mxu0 %v4279
        %v4630 = vpop.f32.mrb[0].mxu0
        %v4631 = vadd.f32 0.0, %v4630
        %v4632 = vpop.f32.mrb[0].mxu0
        %4633 = vmatprep.mubr.f32.mxu0 0.0
        %4634 = vmatmul.mubr.f32.gmra.mrb[0].mxu0 %v4280
        %v4635 = vpop.f32.mrb[0].mxu0
        %v4636 = vadd.f32 0.0, %v4635
        %v4637 = vpop.f32.mrb[0].mxu0
        %4638 = vmatprep.mubr.f32.mxu0 0.0
        %4639 = vmatmul.mubr.f32.gmra.mrb[0].mxu0 %v4281
        %v4640 = vpop.f32.mrb[0].mxu0
        %v4641 = vadd.f32 0.0, %v4640
        %v4642 = vpop.f32.mrb[0].mxu0
        %4643 = vmatprep.mubr.f32.mxu0 0.0
        %4644 = vmatmul.mubr.f32.gmra.mrb[0].mxu0 %v4282
        %v4645 = vpop.f32.mrb[0].mxu0
        %v4646 = vadd.f32 0.0, %v4645
        %v4647 = vpop.f32.mrb[0].mxu0
        %4648 = vmatprep.mubr.f32.mxu0 0.0
        %4649 = vmatmul.mubr.f32.gmra.mrb[0].mxu0 %v4283
        %v4650 = vpop.f32.mrb[0].mxu0
        %v4651 = vadd.f32 0.0, %v4650
        %v4652 = vpop.f32.mrb[0].mxu0
        %4653 = vmatprep.mubr.f32.mxu0 0.0
        %4654 = vmatmul.mubr.f32.gmra.mrb[0].mxu0 %v4284
        %v4655 = vpop.f32.mrb[0].mxu0
        %v4656 = vadd.f32 0.0, %v4655
        %v4657 = vpop.f32.mrb[0].mxu0
        %4658 = vmatprep.mubr.f32.mxu0 0.0
        %4659 = vmatmul.mubr.f32.gmra.mrb[0].mxu0 %v4285
        %v4660 = vpop.f32.mrb[0].mxu0
        %v4661 = vadd.f32 0.0, %v4660
        %v4662 = vpop.f32.mrb[0].mxu0
        %4663 = vmatprep.mubr.f32.mxu0 0.0
        %4664 = vmatmul.mubr.f32.gmra.mrb[0].mxu0 %v4286
        %v4665 = vpop.f32.mrb[0].mxu0
        %v4666 = vadd.f32 0.0, %v4665
        %v4667 = vpop.f32.mrb[0].mxu0
        %4668 = vmatprep.mubr.f32.mxu0 0.0
        %4669 = vmatmul.mubr.f32.gmra.mrb[0].mxu0 %v4287
        %v4670 = vpop.f32.mrb[0].mxu0
        %v4671 = vadd.f32 0.0, %v4670
        %v4672 = vpop.f32.mrb[0].mxu0
        %4673 = vmatprep.mubr.f32.mxu0 0.0
        %4674 = vmatmul.mubr.f32.gmra.mrb[0].mxu0 %v4288
        %v4675 = vpop.f32.mrb[0].mxu0
        %v4676 = vadd.f32 0.0, %v4675
        %v4677 = vpop.f32.mrb[0].mxu0
        %4678 = vmatprep.mubr.f32.mxu0 0.0
        %4679 = vmatmul.mubr.f32.gmra.mrb[0].mxu0 %v4289
        %v4680 = vpop.f32.mrb[0].mxu0
        %v4681 = vadd.f32 0.0, %v4680
        %v4682 = vpop.f32.mrb[0].mxu0
        %4683 = vmatprep.mubr.f32.mxu0 0.0
        %4684 = vmatmul.mubr.f32.gmra.mrb[0].mxu0 %v4290
        %v4685 = vpop.f32.mrb[0].mxu0
        %v4686 = vadd.f32 0.0, %v4685
        %v4687 = vpop.f32.mrb[0].mxu0
        %4688 = vmatprep.mubr.f32.mxu0 0.0
        %4689 = vmatmul.mubr.f32.gmra.mrb[0].mxu0 %v4291
        %v4690 = vpop.f32.mrb[0].mxu0
        %v4691 = vadd.f32 0.0, %v4690
        %v4692 = vpop.f32.mrb[0].mxu0
        %4693 = vdwg.mxu0
        %v4694 = vadd.f32 %v4163, %v4376
        %v4695 = vadd.f32 %v4164, %v4381
        %v4696 = vadd.f32 %v4165, %v4386
        %v4697 = vadd.f32 %v4166, %v4391
        %v4698 = vadd.f32 %v4167, %v4396
        %v4699 = vadd.f32 %v4168, %v4401
        %v4700 = vadd.f32 %v4169, %v4406
        %v4701 = vadd.f32 %v4170, %v4411
        %v4702 = vadd.f32 %v4171, %v4416
        %v4703 = vadd.f32 %v4172, %v4421
        %v4704 = vadd.f32 %v4173, %v4426
        %v4705 = vadd.f32 %v4174, %v4431
        %v4706 = vadd.f32 %v4175, %v4436
        %v4707 = vadd.f32 %v4176, %v4441
        %v4708 = vadd.f32 %v4177, %v4446
        %v4709 = vadd.f32 %v4178, %v4451
        %v4710 = vadd.f32 %v4179, %v4456
        %v4711 = vadd.f32 %v4180, %v4461
        %v4712 = vadd.f32 %v4181, %v4466
        %v4713 = vadd.f32 %v4182, %v4471
        %v4714 = vadd.f32 %v4183, %v4476
        %v4715 = vadd.f32 %v4184, %v4481
        %v4716 = vadd.f32 %v4185, %v4486
        %v4717 = vadd.f32 %v4186, %v4491
        %v4718 = vadd.f32 %v4187, %v4496
        %v4719 = vadd.f32 %v4188, %v4501
        %v4720 = vadd.f32 %v4189, %v4506
        %v4721 = vadd.f32 %v4190, %v4511
        %v4722 = vadd.f32 %v4191, %v4516
        %v4723 = vadd.f32 %v4192, %v4521
        %v4724 = vadd.f32 %v4193, %v4526
        %v4725 = vadd.f32 %v4194, %v4531
        %v4726 = vadd.f32 %v4195, %v4536
        %v4727 = vadd.f32 %v4196, %v4541
        %v4728 = vadd.f32 %v4197, %v4546
        %v4729 = vadd.f32 %v4198, %v4551
        %v4730 = vadd.f32 %v4199, %v4556
        %v4731 = vadd.f32 %v4200, %v4561
        %v4732 = vadd.f32 %v4201, %v4566
        %v4733 = vadd.f32 %v4202, %v4571
        %v4734 = vadd.f32 %v4203, %v4576
        %v4735 = vadd.f32 %v4204, %v4581
        %v4736 = vadd.f32 %v4205, %v4586
        %v4737 = vadd.f32 %v4206, %v4591
        %v4738 = vadd.f32 %v4207, %v4596
        %v4739 = vadd.f32 %v4208, %v4601
        %v4740 = vadd.f32 %v4209, %v4606
        %v4741 = vadd.f32 %v4210, %v4611
        %v4742 = vadd.f32 %v4211, %v4616
        %v4743 = vadd.f32 %v4212, %v4621
        %v4744 = vadd.f32 %v4213, %v4626
        %v4745 = vadd.f32 %v4214, %v4631
        %v4746 = vadd.f32 %v4215, %v4636
        %v4747 = vadd.f32 %v4216, %v4641
        %v4748 = vadd.f32 %v4217, %v4646
        %v4749 = vadd.f32 %v4218, %v4651
        %v4750 = vadd.f32 %v4219, %v4656
        %v4751 = vadd.f32 %v4220, %v4661
        %v4752 = vadd.f32 %v4221, %v4666
        %v4753 = vadd.f32 %v4222, %v4671
        %v4754 = vadd.f32 %v4223, %v4676
        %v4755 = vadd.f32 %v4224, %v4681
        %v4756 = vadd.f32 %v4225, %v4686
        %v4757 = vadd.f32 %v4226, %v4691
        %v4758 = vld [vmem:[%s4227 + $0x1] sm:$0xff]
        %v4759 = vld [vmem:[%s4227 + $0x11] sm:$0xff]
        %v4760 = vld [vmem:[%s4227 + $0x21] sm:$0xff]
        %v4761 = vld [vmem:[%s4227 + $0x31] sm:$0xff]
        %v4762 = vld [vmem:[%s4227 + $0x41] sm:$0xff]
        %v4763 = vld [vmem:[%s4227 + $0x51] sm:$0xff]
        %v4764 = vld [vmem:[%s4227 + $0x61] sm:$0xff]
        %v4765 = vld [vmem:[%s4227 + $0x71] sm:$0xff]
        %v4766 = vld [vmem:[%s4227 + $0xa1] sm:$0xff]
        %v4767 = vld [vmem:[%s4227 + $0xb1] sm:$0xff]
        %v4768 = vld [vmem:[%s4227 + $0xc1] sm:$0xff]
        %v4769 = vld [vmem:[%s4227 + $0xd1] sm:$0xff]
        %v4770 = vld [vmem:[%s4227 + $0xe1] sm:$0xff]
        %v4771 = vld [vmem:[%s4227 + $0xf1] sm:$0xff]
        %v4772 = vld [vmem:[%s4227 + $0x101] sm:$0xff]
        %v4773 = vld [vmem:[%s4227 + $0x111] sm:$0xff]
        %v4774 = vld [vmem:[%s4227 + $0x141] sm:$0xff]
        %v4775 = vld [vmem:[%s4227 + $0x151] sm:$0xff]
        %v4776 = vld [vmem:[%s4227 + $0x161] sm:$0xff]
        %v4777 = vld [vmem:[%s4227 + $0x171] sm:$0xff]
        %v4778 = vld [vmem:[%s4227 + $0x181] sm:$0xff]
        %v4779 = vld [vmem:[%s4227 + $0x191] sm:$0xff]
        %v4780 = vld [vmem:[%s4227 + $0x1a1] sm:$0xff]
        %v4781 = vld [vmem:[%s4227 + $0x1b1] sm:$0xff]
        %v4782 = vld [vmem:[%s4227 + $0x1e1] sm:$0xff]
        %v4783 = vld [vmem:[%s4227 + $0x1f1] sm:$0xff]
        %v4784 = vld [vmem:[%s4227 + $0x201] sm:$0xff]
        %v4785 = vld [vmem:[%s4227 + $0x211] sm:$0xff]
        %v4786 = vld [vmem:[%s4227 + $0x221] sm:$0xff]
        %v4787 = vld [vmem:[%s4227 + $0x231] sm:$0xff]
        %v4788 = vld [vmem:[%s4227 + $0x241] sm:$0xff]
        %v4789 = vld [vmem:[%s4227 + $0x251] sm:$0xff]
        %v4790 = vld [vmem:[%s4227 + $0x281] sm:$0xff]
        %v4791 = vld [vmem:[%s4227 + $0x291] sm:$0xff]
        %v4792 = vld [vmem:[%s4227 + $0x2a1] sm:$0xff]
        %v4793 = vld [vmem:[%s4227 + $0x2b1] sm:$0xff]
        %v4794 = vld [vmem:[%s4227 + $0x2c1] sm:$0xff]
        %v4795 = vld [vmem:[%s4227 + $0x2d1] sm:$0xff]
        %v4796 = vld [vmem:[%s4227 + $0x2e1] sm:$0xff]
        %v4797 = vld [vmem:[%s4227 + $0x2f1] sm:$0xff]
        %v4798 = vld [vmem:[%s4227 + $0x321] sm:$0xff]
        %v4799 = vld [vmem:[%s4227 + $0x331] sm:$0xff]
        %v4800 = vld [vmem:[%s4227 + $0x341] sm:$0xff]
        %v4801 = vld [vmem:[%s4227 + $0x351] sm:$0xff]
        %v4802 = vld [vmem:[%s4227 + $0x361] sm:$0xff]
        %v4803 = vld [vmem:[%s4227 + $0x371] sm:$0xff]
        %v4804 = vld [vmem:[%s4227 + $0x381] sm:$0xff]
        %v4805 = vld [vmem:[%s4227 + $0x391] sm:$0xff]
        %v4806 = vld [vmem:[%s4227 + $0x3c1] sm:$0xff]
        %v4807 = vld [vmem:[%s4227 + $0x3d1] sm:$0xff]
        %v4808 = vld [vmem:[%s4227 + $0x3e1] sm:$0xff]
        %v4809 = vld [vmem:[%s4227 + $0x3f1] sm:$0xff]
        %v4810 = vld [vmem:[%s4227 + $0x401] sm:$0xff]
        %v4811 = vld [vmem:[%s4227 + $0x411] sm:$0xff]
        %v4812 = vld [vmem:[%s4227 + $0x421] sm:$0xff]
        %v4813 = vld [vmem:[%s4227 + $0x431] sm:$0xff]
        %v4814 = vld [vmem:[%s4227 + $0x461] sm:$0xff]
        %v4815 = vld [vmem:[%s4227 + $0x471] sm:$0xff]
        %v4816 = vld [vmem:[%s4227 + $0x481] sm:$0xff]
        %v4817 = vld [vmem:[%s4227 + $0x491] sm:$0xff]
        %v4818 = vld [vmem:[%s4227 + $0x4a1] sm:$0xff]
        %v4819 = vld [vmem:[%s4227 + $0x4b1] sm:$0xff]
        %v4820 = vld [vmem:[%s4227 + $0x4c1] sm:$0xff]
        %v4821 = vld [vmem:[%s4227 + $0x4d1] sm:$0xff]
        %s4822 = scalar_lea.vmem %s3, 896
        %v4823 = vld [vmem:[%s4822] sm:$0xff]
        %v4824 = vld [vmem:[%s4822 + $0x8] sm:$0xff]
        %v4825 = vld [vmem:[%s4822 + $0x10] sm:$0xff]
        %v4826 = vld [vmem:[%s4822 + $0x18] sm:$0xff]
        %v4827 = vld [vmem:[%s4822 + $0x20] sm:$0xff]
        %v4828 = vld [vmem:[%s4822 + $0x28] sm:$0xff]
        %v4829 = vld [vmem:[%s4822 + $0x30] sm:$0xff]
        %v4830 = vld [vmem:[%s4822 + $0x38] sm:$0xff]
        %v4831 = vld [vmem:[%s4822 + $0x40] sm:$0xff]
        %v4832 = vld [vmem:[%s4822 + $0x48] sm:$0xff]
        %v4833 = vld [vmem:[%s4822 + $0x50] sm:$0xff]
        %v4834 = vld [vmem:[%s4822 + $0x58] sm:$0xff]
        %v4835 = vld [vmem:[%s4822 + $0x60] sm:$0xff]
        %v4836 = vld [vmem:[%s4822 + $0x68] sm:$0xff]
        %v4837 = vld [vmem:[%s4822 + $0x70] sm:$0xff]
        %v4838 = vld [vmem:[%s4822 + $0x78] sm:$0xff]
        %4839 = vmatprep.subr.mxu0 0.0
        %4840 = vmatpush1.msra.mxu0 %v4823
        %4841 = vmatprep.subr.mxu0 0.0
        %4842 = vmatpush1.msra.mxu0 %v4824
        %4843 = vmatprep.subr.mxu0 0.0
        %4844 = vmatpush1.msra.mxu0 %v4825
        %4845 = vmatprep.subr.mxu0 0.0
        %4846 = vmatpush1.msra.mxu0 %v4826
        %4847 = vmatprep.subr.mxu0 0.0
        %4848 = vmatpush1.msra.mxu0 %v4827
        %4849 = vmatprep.subr.mxu0 0.0
        %4850 = vmatpush1.msra.mxu0 %v4828
        %4851 = vmatprep.subr.mxu0 0.0
        %4852 = vmatpush1.msra.mxu0 %v4829
        %4853 = vmatprep.subr.mxu0 0.0
        %4854 = vmatpush1.msra.mxu0 %v4830
        %4855 = vmatprep.subr.mxu0 0.0
        %4856 = vmatpush1.msra.mxu0 %v4831
        %4857 = vmatprep.subr.mxu0 0.0
        %4858 = vmatpush1.msra.mxu0 %v4832
        %4859 = vmatprep.subr.mxu0 0.0
        %4860 = vmatpush1.msra.mxu0 %v4833
        %4861 = vmatprep.subr.mxu0 0.0
        %4862 = vmatpush1.msra.mxu0 %v4834
        %4863 = vmatprep.subr.mxu0 0.0
        %4864 = vmatpush1.msra.mxu0 %v4835
        %4865 = vmatprep.subr.mxu0 0.0
        %4866 = vmatpush1.msra.mxu0 %v4836
        %4867 = vmatprep.subr.mxu0 0.0
        %4868 = vmatpush1.msra.mxu0 %v4837
        %4869 = vmatprep.subr.mxu0 0.0
        %4870 = vmatpush1.msra.mxu0 %v4838
        %4871 = vmatprep.subr.mxu0 0.0
        %4872 = vmatpush1.msra.mxu0 0.0
        %4873 = vmatprep.subr.mxu0 0.0
        %4874 = vmatpush1.msra.mxu0 0.0
        %4875 = vmatprep.subr.mxu0 0.0
        %4876 = vmatpush1.msra.mxu0 0.0
        %4877 = vmatprep.subr.mxu0 0.0
        %4878 = vmatpush1.msra.mxu0 0.0
        %4879 = vmatprep.subr.mxu0 0.0
        %4880 = vmatpush1.msra.mxu0 0.0
        %4881 = vmatprep.subr.mxu0 0.0
        %4882 = vmatpush1.msra.mxu0 0.0
        %4883 = vmatprep.subr.mxu0 0.0
        %4884 = vmatpush1.msra.mxu0 0.0
        %4885 = vmatprep.subr.mxu0 0.0
        %4886 = vmatpush1.msra.mxu0 0.0
        %4887 = vmatprep.subr.mxu0 0.0
        %4888 = vmatpush1.msra.mxu0 0.0
        %4889 = vmatprep.subr.mxu0 0.0
        %4890 = vmatpush1.msra.mxu0 0.0
        %4891 = vmatprep.subr.mxu0 0.0
        %4892 = vmatpush1.msra.mxu0 0.0
        %4893 = vmatprep.subr.mxu0 0.0
        %4894 = vmatpush1.msra.mxu0 0.0
        %4895 = vmatprep.subr.mxu0 0.0
        %4896 = vmatpush1.msra.mxu0 0.0
        %4897 = vmatprep.subr.mxu0 0.0
        %4898 = vmatpush1.msra.mxu0 0.0
        %4899 = vmatprep.subr.mxu0 0.0
        %4900 = vmatpush1.msra.mxu0 0.0
        %4901 = vmatprep.subr.mxu0 0.0
        %4902 = vmatpush1.msra.mxu0 0.0
        %4903 = vmatprep.mubr.f32.mxu0 0.0
        %4904 = vmatmul.mubr.f32.gmra.mrb[0].mxu0 %v4758
        %v4905 = vpop.f32.mrb[0].mxu0
        %v4906 = vadd.f32 0.0, %v4905
        %v4907 = vpop.f32.mrb[0].mxu0
        %4908 = vmatprep.mubr.f32.mxu0 0.0
        %4909 = vmatmul.mubr.f32.gmra.mrb[0].mxu0 %v4759
        %v4910 = vpop.f32.mrb[0].mxu0
        %v4911 = vadd.f32 0.0, %v4910
        %v4912 = vpop.f32.mrb[0].mxu0
        %4913 = vmatprep.mubr.f32.mxu0 0.0
        %4914 = vmatmul.mubr.f32.gmra.mrb[0].mxu0 %v4760
        %v4915 = vpop.f32.mrb[0].mxu0
        %v4916 = vadd.f32 0.0, %v4915
        %v4917 = vpop.f32.mrb[0].mxu0
        %4918 = vmatprep.mubr.f32.mxu0 0.0
        %4919 = vmatmul.mubr.f32.gmra.mrb[0].mxu0 %v4761
        %v4920 = vpop.f32.mrb[0].mxu0
        %v4921 = vadd.f32 0.0, %v4920
        %v4922 = vpop.f32.mrb[0].mxu0
        %4923 = vmatprep.mubr.f32.mxu0 0.0
        %4924 = vmatmul.mubr.f32.gmra.mrb[0].mxu0 %v4762
        %v4925 = vpop.f32.mrb[0].mxu0
        %v4926 = vadd.f32 0.0, %v4925
        %v4927 = vpop.f32.mrb[0].mxu0
        %4928 = vmatprep.mubr.f32.mxu0 0.0
        %4929 = vmatmul.mubr.f32.gmra.mrb[0].mxu0 %v4763
        %v4930 = vpop.f32.mrb[0].mxu0
        %v4931 = vadd.f32 0.0, %v4930
        %v4932 = vpop.f32.mrb[0].mxu0
        %4933 = vmatprep.mubr.f32.mxu0 0.0
        %4934 = vmatmul.mubr.f32.gmra.mrb[0].mxu0 %v4764
        %v4935 = vpop.f32.mrb[0].mxu0
        %v4936 = vadd.f32 0.0, %v4935
        %v4937 = vpop.f32.mrb[0].mxu0
        %4938 = vmatprep.mubr.f32.mxu0 0.0
        %4939 = vmatmul.mubr.f32.gmra.mrb[0].mxu0 %v4765
        %v4940 = vpop.f32.mrb[0].mxu0
        %v4941 = vadd.f32 0.0, %v4940
        %v4942 = vpop.f32.mrb[0].mxu0
        %4943 = vmatprep.mubr.f32.mxu0 0.0
        %4944 = vmatmul.mubr.f32.gmra.mrb[0].mxu0 %v4766
        %v4945 = vpop.f32.mrb[0].mxu0
        %v4946 = vadd.f32 0.0, %v4945
        %v4947 = vpop.f32.mrb[0].mxu0
        %4948 = vmatprep.mubr.f32.mxu0 0.0
        %4949 = vmatmul.mubr.f32.gmra.mrb[0].mxu0 %v4767
        %v4950 = vpop.f32.mrb[0].mxu0
        %v4951 = vadd.f32 0.0, %v4950
        %v4952 = vpop.f32.mrb[0].mxu0
        %4953 = vmatprep.mubr.f32.mxu0 0.0
        %4954 = vmatmul.mubr.f32.gmra.mrb[0].mxu0 %v4768
        %v4955 = vpop.f32.mrb[0].mxu0
        %v4956 = vadd.f32 0.0, %v4955
        %v4957 = vpop.f32.mrb[0].mxu0
        %4958 = vmatprep.mubr.f32.mxu0 0.0
        %4959 = vmatmul.mubr.f32.gmra.mrb[0].mxu0 %v4769
        %v4960 = vpop.f32.mrb[0].mxu0
        %v4961 = vadd.f32 0.0, %v4960
        %v4962 = vpop.f32.mrb[0].mxu0
        %4963 = vmatprep.mubr.f32.mxu0 0.0
        %4964 = vmatmul.mubr.f32.gmra.mrb[0].mxu0 %v4770
        %v4965 = vpop.f32.mrb[0].mxu0
        %v4966 = vadd.f32 0.0, %v4965
        %v4967 = vpop.f32.mrb[0].mxu0
        %4968 = vmatprep.mubr.f32.mxu0 0.0
        %4969 = vmatmul.mubr.f32.gmra.mrb[0].mxu0 %v4771
        %v4970 = vpop.f32.mrb[0].mxu0
        %v4971 = vadd.f32 0.0, %v4970
        %v4972 = vpop.f32.mrb[0].mxu0
        %4973 = vmatprep.mubr.f32.mxu0 0.0
        %4974 = vmatmul.mubr.f32.gmra.mrb[0].mxu0 %v4772
        %v4975 = vpop.f32.mrb[0].mxu0
        %v4976 = vadd.f32 0.0, %v4975
        %v4977 = vpop.f32.mrb[0].mxu0
        %4978 = vmatprep.mubr.f32.mxu0 0.0
        %4979 = vmatmul.mubr.f32.gmra.mrb[0].mxu0 %v4773
        %v4980 = vpop.f32.mrb[0].mxu0
        %v4981 = vadd.f32 0.0, %v4980
        %v4982 = vpop.f32.mrb[0].mxu0
        %4983 = vmatprep.mubr.f32.mxu0 0.0
        %4984 = vmatmul.mubr.f32.gmra.mrb[0].mxu0 %v4774
        %v4985 = vpop.f32.mrb[0].mxu0
        %v4986 = vadd.f32 0.0, %v4985
        %v4987 = vpop.f32.mrb[0].mxu0
        %4988 = vmatprep.mubr.f32.mxu0 0.0
        %4989 = vmatmul.mubr.f32.gmra.mrb[0].mxu0 %v4775
        %v4990 = vpop.f32.mrb[0].mxu0
        %v4991 = vadd.f32 0.0, %v4990
        %v4992 = vpop.f32.mrb[0].mxu0
        %4993 = vmatprep.mubr.f32.mxu0 0.0
        %4994 = vmatmul.mubr.f32.gmra.mrb[0].mxu0 %v4776
        %v4995 = vpop.f32.mrb[0].mxu0
        %v4996 = vadd.f32 0.0, %v4995
        %v4997 = vpop.f32.mrb[0].mxu0
        %4998 = vmatprep.mubr.f32.mxu0 0.0
        %4999 = vmatmul.mubr.f32.gmra.mrb[0].mxu0 %v4777
        %v5000 = vpop.f32.mrb[0].mxu0
        %v5001 = vadd.f32 0.0, %v5000
        %v5002 = vpop.f32.mrb[0].mxu0
        %5003 = vmatprep.mubr.f32.mxu0 0.0
        %5004 = vmatmul.mubr.f32.gmra.mrb[0].mxu0 %v4778
        %v5005 = vpop.f32.mrb[0].mxu0
        %v5006 = vadd.f32 0.0, %v5005
        %v5007 = vpop.f32.mrb[0].mxu0
        %5008 = vmatprep.mubr.f32.mxu0 0.0
        %5009 = vmatmul.mubr.f32.gmra.mrb[0].mxu0 %v4779
        %v5010 = vpop.f32.mrb[0].mxu0
        %v5011 = vadd.f32 0.0, %v5010
        %v5012 = vpop.f32.mrb[0].mxu0
        %5013 = vmatprep.mubr.f32.mxu0 0.0
        %5014 = vmatmul.mubr.f32.gmra.mrb[0].mxu0 %v4780
        %v5015 = vpop.f32.mrb[0].mxu0
        %v5016 = vadd.f32 0.0, %v5015
        %v5017 = vpop.f32.mrb[0].mxu0
        %5018 = vmatprep.mubr.f32.mxu0 0.0
        %5019 = vmatmul.mubr.f32.gmra.mrb[0].mxu0 %v4781
        %v5020 = vpop.f32.mrb[0].mxu0
        %v5021 = vadd.f32 0.0, %v5020
        %v5022 = vpop.f32.mrb[0].mxu0
        %5023 = vmatprep.mubr.f32.mxu0 0.0
        %5024 = vmatmul.mubr.f32.gmra.mrb[0].mxu0 %v4782
        %v5025 = vpop.f32.mrb[0].mxu0
        %v5026 = vadd.f32 0.0, %v5025
        %v5027 = vpop.f32.mrb[0].mxu0
        %5028 = vmatprep.mubr.f32.mxu0 0.0
        %5029 = vmatmul.mubr.f32.gmra.mrb[0].mxu0 %v4783
        %v5030 = vpop.f32.mrb[0].mxu0
        %v5031 = vadd.f32 0.0, %v5030
        %v5032 = vpop.f32.mrb[0].mxu0
        %5033 = vmatprep.mubr.f32.mxu0 0.0
        %5034 = vmatmul.mubr.f32.gmra.mrb[0].mxu0 %v4784
        %v5035 = vpop.f32.mrb[0].mxu0
        %v5036 = vadd.f32 0.0, %v5035
        %v5037 = vpop.f32.mrb[0].mxu0
        %5038 = vmatprep.mubr.f32.mxu0 0.0
        %5039 = vmatmul.mubr.f32.gmra.mrb[0].mxu0 %v4785
        %v5040 = vpop.f32.mrb[0].mxu0
        %v5041 = vadd.f32 0.0, %v5040
        %v5042 = vpop.f32.mrb[0].mxu0
        %5043 = vmatprep.mubr.f32.mxu0 0.0
        %5044 = vmatmul.mubr.f32.gmra.mrb[0].mxu0 %v4786
        %v5045 = vpop.f32.mrb[0].mxu0
        %v5046 = vadd.f32 0.0, %v5045
        %v5047 = vpop.f32.mrb[0].mxu0
        %5048 = vmatprep.mubr.f32.mxu0 0.0
        %5049 = vmatmul.mubr.f32.gmra.mrb[0].mxu0 %v4787
        %v5050 = vpop.f32.mrb[0].mxu0
        %v5051 = vadd.f32 0.0, %v5050
        %v5052 = vpop.f32.mrb[0].mxu0
        %5053 = vmatprep.mubr.f32.mxu0 0.0
        %5054 = vmatmul.mubr.f32.gmra.mrb[0].mxu0 %v4788
        %v5055 = vpop.f32.mrb[0].mxu0
        %v5056 = vadd.f32 0.0, %v5055
        %v5057 = vpop.f32.mrb[0].mxu0
        %5058 = vmatprep.mubr.f32.mxu0 0.0
        %5059 = vmatmul.mubr.f32.gmra.mrb[0].mxu0 %v4789
        %v5060 = vpop.f32.mrb[0].mxu0
        %v5061 = vadd.f32 0.0, %v5060
        %v5062 = vpop.f32.mrb[0].mxu0
        %5063 = vmatprep.mubr.f32.mxu0 0.0
        %5064 = vmatmul.mubr.f32.gmra.mrb[0].mxu0 %v4790
        %v5065 = vpop.f32.mrb[0].mxu0
        %v5066 = vadd.f32 0.0, %v5065
        %v5067 = vpop.f32.mrb[0].mxu0
        %5068 = vmatprep.mubr.f32.mxu0 0.0
        %5069 = vmatmul.mubr.f32.gmra.mrb[0].mxu0 %v4791
        %v5070 = vpop.f32.mrb[0].mxu0
        %v5071 = vadd.f32 0.0, %v5070
        %v5072 = vpop.f32.mrb[0].mxu0
        %5073 = vmatprep.mubr.f32.mxu0 0.0
        %5074 = vmatmul.mubr.f32.gmra.mrb[0].mxu0 %v4792
        %v5075 = vpop.f32.mrb[0].mxu0
        %v5076 = vadd.f32 0.0, %v5075
        %v5077 = vpop.f32.mrb[0].mxu0
        %5078 = vmatprep.mubr.f32.mxu0 0.0
        %5079 = vmatmul.mubr.f32.gmra.mrb[0].mxu0 %v4793
        %v5080 = vpop.f32.mrb[0].mxu0
        %v5081 = vadd.f32 0.0, %v5080
        %v5082 = vpop.f32.mrb[0].mxu0
        %5083 = vmatprep.mubr.f32.mxu0 0.0
        %5084 = vmatmul.mubr.f32.gmra.mrb[0].mxu0 %v4794
        %v5085 = vpop.f32.mrb[0].mxu0
        %v5086 = vadd.f32 0.0, %v5085
        %v5087 = vpop.f32.mrb[0].mxu0
        %5088 = vmatprep.mubr.f32.mxu0 0.0
        %5089 = vmatmul.mubr.f32.gmra.mrb[0].mxu0 %v4795
        %v5090 = vpop.f32.mrb[0].mxu0
        %v5091 = vadd.f32 0.0, %v5090
        %v5092 = vpop.f32.mrb[0].mxu0
        %5093 = vmatprep.mubr.f32.mxu0 0.0
        %5094 = vmatmul.mubr.f32.gmra.mrb[0].mxu0 %v4796
        %v5095 = vpop.f32.mrb[0].mxu0
        %v5096 = vadd.f32 0.0, %v5095
        %v5097 = vpop.f32.mrb[0].mxu0
        %5098 = vmatprep.mubr.f32.mxu0 0.0
        %5099 = vmatmul.mubr.f32.gmra.mrb[0].mxu0 %v4797
        %v5100 = vpop.f32.mrb[0].mxu0
        %v5101 = vadd.f32 0.0, %v5100
        %v5102 = vpop.f32.mrb[0].mxu0
        %5103 = vmatprep.mubr.f32.mxu0 0.0
        %5104 = vmatmul.mubr.f32.gmra.mrb[0].mxu0 %v4798
        %v5105 = vpop.f32.mrb[0].mxu0
        %v5106 = vadd.f32 0.0, %v5105
        %v5107 = vpop.f32.mrb[0].mxu0
        %5108 = vmatprep.mubr.f32.mxu0 0.0
        %5109 = vmatmul.mubr.f32.gmra.mrb[0].mxu0 %v4799
        %v5110 = vpop.f32.mrb[0].mxu0
        %v5111 = vadd.f32 0.0, %v5110
        %v5112 = vpop.f32.mrb[0].mxu0
        %5113 = vmatprep.mubr.f32.mxu0 0.0
        %5114 = vmatmul.mubr.f32.gmra.mrb[0].mxu0 %v4800
        %v5115 = vpop.f32.mrb[0].mxu0
        %v5116 = vadd.f32 0.0, %v5115
        %v5117 = vpop.f32.mrb[0].mxu0
        %5118 = vmatprep.mubr.f32.mxu0 0.0
        %5119 = vmatmul.mubr.f32.gmra.mrb[0].mxu0 %v4801
        %v5120 = vpop.f32.mrb[0].mxu0
        %v5121 = vadd.f32 0.0, %v5120
        %v5122 = vpop.f32.mrb[0].mxu0
        %5123 = vmatprep.mubr.f32.mxu0 0.0
        %5124 = vmatmul.mubr.f32.gmra.mrb[0].mxu0 %v4802
        %v5125 = vpop.f32.mrb[0].mxu0
        %v5126 = vadd.f32 0.0, %v5125
        %v5127 = vpop.f32.mrb[0].mxu0
        %5128 = vmatprep.mubr.f32.mxu0 0.0
        %5129 = vmatmul.mubr.f32.gmra.mrb[0].mxu0 %v4803
        %v5130 = vpop.f32.mrb[0].mxu0
        %v5131 = vadd.f32 0.0, %v5130
        %v5132 = vpop.f32.mrb[0].mxu0
        %5133 = vmatprep.mubr.f32.mxu0 0.0
        %5134 = vmatmul.mubr.f32.gmra.mrb[0].mxu0 %v4804
        %v5135 = vpop.f32.mrb[0].mxu0
        %v5136 = vadd.f32 0.0, %v5135
        %v5137 = vpop.f32.mrb[0].mxu0
        %5138 = vmatprep.mubr.f32.mxu0 0.0
        %5139 = vmatmul.mubr.f32.gmra.mrb[0].mxu0 %v4805
        %v5140 = vpop.f32.mrb[0].mxu0
        %v5141 = vadd.f32 0.0, %v5140
        %v5142 = vpop.f32.mrb[0].mxu0
        %5143 = vmatprep.mubr.f32.mxu0 0.0
        %5144 = vmatmul.mubr.f32.gmra.mrb[0].mxu0 %v4806
        %v5145 = vpop.f32.mrb[0].mxu0
        %v5146 = vadd.f32 0.0, %v5145
        %v5147 = vpop.f32.mrb[0].mxu0
        %5148 = vmatprep.mubr.f32.mxu0 0.0
        %5149 = vmatmul.mubr.f32.gmra.mrb[0].mxu0 %v4807
        %v5150 = vpop.f32.mrb[0].mxu0
        %v5151 = vadd.f32 0.0, %v5150
        %v5152 = vpop.f32.mrb[0].mxu0
        %5153 = vmatprep.mubr.f32.mxu0 0.0
        %5154 = vmatmul.mubr.f32.gmra.mrb[0].mxu0 %v4808
        %v5155 = vpop.f32.mrb[0].mxu0
        %v5156 = vadd.f32 0.0, %v5155
        %v5157 = vpop.f32.mrb[0].mxu0
        %5158 = vmatprep.mubr.f32.mxu0 0.0
        %5159 = vmatmul.mubr.f32.gmra.mrb[0].mxu0 %v4809
        %v5160 = vpop.f32.mrb[0].mxu0
        %v5161 = vadd.f32 0.0, %v5160
        %v5162 = vpop.f32.mrb[0].mxu0
        %5163 = vmatprep.mubr.f32.mxu0 0.0
        %5164 = vmatmul.mubr.f32.gmra.mrb[0].mxu0 %v4810
        %v5165 = vpop.f32.mrb[0].mxu0
        %v5166 = vadd.f32 0.0, %v5165
        %v5167 = vpop.f32.mrb[0].mxu0
        %5168 = vmatprep.mubr.f32.mxu0 0.0
        %5169 = vmatmul.mubr.f32.gmra.mrb[0].mxu0 %v4811
        %v5170 = vpop.f32.mrb[0].mxu0
        %v5171 = vadd.f32 0.0, %v5170
        %v5172 = vpop.f32.mrb[0].mxu0
        %5173 = vmatprep.mubr.f32.mxu0 0.0
        %5174 = vmatmul.mubr.f32.gmra.mrb[0].mxu0 %v4812
        %v5175 = vpop.f32.mrb[0].mxu0
        %v5176 = vadd.f32 0.0, %v5175
        %v5177 = vpop.f32.mrb[0].mxu0
        %5178 = vmatprep.mubr.f32.mxu0 0.0
        %5179 = vmatmul.mubr.f32.gmra.mrb[0].mxu0 %v4813
        %v5180 = vpop.f32.mrb[0].mxu0
        %v5181 = vadd.f32 0.0, %v5180
        %v5182 = vpop.f32.mrb[0].mxu0
        %5183 = vmatprep.mubr.f32.mxu0 0.0
        %5184 = vmatmul.mubr.f32.gmra.mrb[0].mxu0 %v4814
        %v5185 = vpop.f32.mrb[0].mxu0
        %v5186 = vadd.f32 0.0, %v5185
        %v5187 = vpop.f32.mrb[0].mxu0
        %5188 = vmatprep.mubr.f32.mxu0 0.0
        %5189 = vmatmul.mubr.f32.gmra.mrb[0].mxu0 %v4815
        %v5190 = vpop.f32.mrb[0].mxu0
        %v5191 = vadd.f32 0.0, %v5190
        %v5192 = vpop.f32.mrb[0].mxu0
        %5193 = vmatprep.mubr.f32.mxu0 0.0
        %5194 = vmatmul.mubr.f32.gmra.mrb[0].mxu0 %v4816
        %v5195 = vpop.f32.mrb[0].mxu0
        %v5196 = vadd.f32 0.0, %v5195
        %v5197 = vpop.f32.mrb[0].mxu0
        %5198 = vmatprep.mubr.f32.mxu0 0.0
        %5199 = vmatmul.mubr.f32.gmra.mrb[0].mxu0 %v4817
        %v5200 = vpop.f32.mrb[0].mxu0
        %v5201 = vadd.f32 0.0, %v5200
        %v5202 = vpop.f32.mrb[0].mxu0
        %5203 = vmatprep.mubr.f32.mxu0 0.0
        %5204 = vmatmul.mubr.f32.gmra.mrb[0].mxu0 %v4818
        %v5205 = vpop.f32.mrb[0].mxu0
        %v5206 = vadd.f32 0.0, %v5205
        %v5207 = vpop.f32.mrb[0].mxu0
        %5208 = vmatprep.mubr.f32.mxu0 0.0
        %5209 = vmatmul.mubr.f32.gmra.mrb[0].mxu0 %v4819
        %v5210 = vpop.f32.mrb[0].mxu0
        %v5211 = vadd.f32 0.0, %v5210
        %v5212 = vpop.f32.mrb[0].mxu0
        %5213 = vmatprep.mubr.f32.mxu0 0.0
        %5214 = vmatmul.mubr.f32.gmra.mrb[0].mxu0 %v4820
        %v5215 = vpop.f32.mrb[0].mxu0
        %v5216 = vadd.f32 0.0, %v5215
        %v5217 = vpop.f32.mrb[0].mxu0
        %5218 = vmatprep.mubr.f32.mxu0 0.0
        %5219 = vmatmul.mubr.f32.gmra.mrb[0].mxu0 %v4821
        %v5220 = vpop.f32.mrb[0].mxu0
        %v5221 = vadd.f32 0.0, %v5220
        %v5222 = vpop.f32.mrb[0].mxu0
        %5223 = vdwg.mxu0
        %v5224 = vadd.f32 %v4694, %v4906
        %v5225 = vadd.f32 %v4695, %v4911
        %v5226 = vadd.f32 %v4696, %v4916
        %v5227 = vadd.f32 %v4697, %v4921
        %v5228 = vadd.f32 %v4698, %v4926
        %v5229 = vadd.f32 %v4699, %v4931
        %v5230 = vadd.f32 %v4700, %v4936
        %v5231 = vadd.f32 %v4701, %v4941
        %v5232 = vadd.f32 %v4702, %v4946
        %v5233 = vadd.f32 %v4703, %v4951
        %v5234 = vadd.f32 %v4704, %v4956
        %v5235 = vadd.f32 %v4705, %v4961
        %v5236 = vadd.f32 %v4706, %v4966
        %v5237 = vadd.f32 %v4707, %v4971
        %v5238 = vadd.f32 %v4708, %v4976
        %v5239 = vadd.f32 %v4709, %v4981
        %v5240 = vadd.f32 %v4710, %v4986
        %v5241 = vadd.f32 %v4711, %v4991
        %v5242 = vadd.f32 %v4712, %v4996
        %v5243 = vadd.f32 %v4713, %v5001
        %v5244 = vadd.f32 %v4714, %v5006
        %v5245 = vadd.f32 %v4715, %v5011
        %v5246 = vadd.f32 %v4716, %v5016
        %v5247 = vadd.f32 %v4717, %v5021
        %v5248 = vadd.f32 %v4718, %v5026
        %v5249 = vadd.f32 %v4719, %v5031
        %v5250 = vadd.f32 %v4720, %v5036
        %v5251 = vadd.f32 %v4721, %v5041
        %v5252 = vadd.f32 %v4722, %v5046
        %v5253 = vadd.f32 %v4723, %v5051
        %v5254 = vadd.f32 %v4724, %v5056
        %v5255 = vadd.f32 %v4725, %v5061
        %v5256 = vadd.f32 %v4726, %v5066
        %v5257 = vadd.f32 %v4727, %v5071
        %v5258 = vadd.f32 %v4728, %v5076
        %v5259 = vadd.f32 %v4729, %v5081
        %v5260 = vadd.f32 %v4730, %v5086
        %v5261 = vadd.f32 %v4731, %v5091
        %v5262 = vadd.f32 %v4732, %v5096
        %v5263 = vadd.f32 %v4733, %v5101
        %v5264 = vadd.f32 %v4734, %v5106
        %v5265 = vadd.f32 %v4735, %v5111
        %v5266 = vadd.f32 %v4736, %v5116
        %v5267 = vadd.f32 %v4737, %v5121
        %v5268 = vadd.f32 %v4738, %v5126
        %v5269 = vadd.f32 %v4739, %v5131
        %v5270 = vadd.f32 %v4740, %v5136
        %v5271 = vadd.f32 %v4741, %v5141
        %v5272 = vadd.f32 %v4742, %v5146
        %v5273 = vadd.f32 %v4743, %v5151
        %v5274 = vadd.f32 %v4744, %v5156
        %v5275 = vadd.f32 %v4745, %v5161
        %v5276 = vadd.f32 %v4746, %v5166
        %v5277 = vadd.f32 %v4747, %v5171
        %v5278 = vadd.f32 %v4748, %v5176
        %v5279 = vadd.f32 %v4749, %v5181
        %v5280 = vadd.f32 %v4750, %v5186
        %v5281 = vadd.f32 %v4751, %v5191
        %v5282 = vadd.f32 %v4752, %v5196
        %v5283 = vadd.f32 %v4753, %v5201
        %v5284 = vadd.f32 %v4754, %v5206
        %v5285 = vadd.f32 %v4755, %v5211
        %v5286 = vadd.f32 %v4756, %v5216
        %v5287 = vadd.f32 %v4757, %v5221
        %v5288 = vld [vmem:[%s4227 + $0x2] sm:$0xff]
        %v5289 = vld [vmem:[%s4227 + $0x12] sm:$0xff]
        %v5290 = vld [vmem:[%s4227 + $0x22] sm:$0xff]
        %v5291 = vld [vmem:[%s4227 + $0x32] sm:$0xff]
        %v5292 = vld [vmem:[%s4227 + $0x42] sm:$0xff]
        %v5293 = vld [vmem:[%s4227 + $0x52] sm:$0xff]
        %v5294 = vld [vmem:[%s4227 + $0x62] sm:$0xff]
        %v5295 = vld [vmem:[%s4227 + $0x72] sm:$0xff]
        %v5296 = vld [vmem:[%s4227 + $0xa2] sm:$0xff]
        %v5297 = vld [vmem:[%s4227 + $0xb2] sm:$0xff]
        %v5298 = vld [vmem:[%s4227 + $0xc2] sm:$0xff]
        %v5299 = vld [vmem:[%s4227 + $0xd2] sm:$0xff]
        %v5300 = vld [vmem:[%s4227 + $0xe2] sm:$0xff]
        %v5301 = vld [vmem:[%s4227 + $0xf2] sm:$0xff]
        %v5302 = vld [vmem:[%s4227 + $0x102] sm:$0xff]
        %v5303 = vld [vmem:[%s4227 + $0x112] sm:$0xff]
        %v5304 = vld [vmem:[%s4227 + $0x142] sm:$0xff]
        %v5305 = vld [vmem:[%s4227 + $0x152] sm:$0xff]
        %v5306 = vld [vmem:[%s4227 + $0x162] sm:$0xff]
        %v5307 = vld [vmem:[%s4227 + $0x172] sm:$0xff]
        %v5308 = vld [vmem:[%s4227 + $0x182] sm:$0xff]
        %v5309 = vld [vmem:[%s4227 + $0x192] sm:$0xff]
        %v5310 = vld [vmem:[%s4227 + $0x1a2] sm:$0xff]
        %v5311 = vld [vmem:[%s4227 + $0x1b2] sm:$0xff]
        %v5312 = vld [vmem:[%s4227 + $0x1e2] sm:$0xff]
        %v5313 = vld [vmem:[%s4227 + $0x1f2] sm:$0xff]
        %v5314 = vld [vmem:[%s4227 + $0x202] sm:$0xff]
        %v5315 = vld [vmem:[%s4227 + $0x212] sm:$0xff]
        %v5316 = vld [vmem:[%s4227 + $0x222] sm:$0xff]
        %v5317 = vld [vmem:[%s4227 + $0x232] sm:$0xff]
        %v5318 = vld [vmem:[%s4227 + $0x242] sm:$0xff]
        %v5319 = vld [vmem:[%s4227 + $0x252] sm:$0xff]
        %v5320 = vld [vmem:[%s4227 + $0x282] sm:$0xff]
        %v5321 = vld [vmem:[%s4227 + $0x292] sm:$0xff]
        %v5322 = vld [vmem:[%s4227 + $0x2a2] sm:$0xff]
        %v5323 = vld [vmem:[%s4227 + $0x2b2] sm:$0xff]
        %v5324 = vld [vmem:[%s4227 + $0x2c2] sm:$0xff]
        %v5325 = vld [vmem:[%s4227 + $0x2d2] sm:$0xff]
        %v5326 = vld [vmem:[%s4227 + $0x2e2] sm:$0xff]
        %v5327 = vld [vmem:[%s4227 + $0x2f2] sm:$0xff]
        %v5328 = vld [vmem:[%s4227 + $0x322] sm:$0xff]
        %v5329 = vld [vmem:[%s4227 + $0x332] sm:$0xff]
        %v5330 = vld [vmem:[%s4227 + $0x342] sm:$0xff]
        %v5331 = vld [vmem:[%s4227 + $0x352] sm:$0xff]
        %v5332 = vld [vmem:[%s4227 + $0x362] sm:$0xff]
        %v5333 = vld [vmem:[%s4227 + $0x372] sm:$0xff]
        %v5334 = vld [vmem:[%s4227 + $0x382] sm:$0xff]
        %v5335 = vld [vmem:[%s4227 + $0x392] sm:$0xff]
        %v5336 = vld [vmem:[%s4227 + $0x3c2] sm:$0xff]
        %v5337 = vld [vmem:[%s4227 + $0x3d2] sm:$0xff]
        %v5338 = vld [vmem:[%s4227 + $0x3e2] sm:$0xff]
        %v5339 = vld [vmem:[%s4227 + $0x3f2] sm:$0xff]
        %v5340 = vld [vmem:[%s4227 + $0x402] sm:$0xff]
        %v5341 = vld [vmem:[%s4227 + $0x412] sm:$0xff]
        %v5342 = vld [vmem:[%s4227 + $0x422] sm:$0xff]
        %v5343 = vld [vmem:[%s4227 + $0x432] sm:$0xff]
        %v5344 = vld [vmem:[%s4227 + $0x462] sm:$0xff]
        %v5345 = vld [vmem:[%s4227 + $0x472] sm:$0xff]
        %v5346 = vld [vmem:[%s4227 + $0x482] sm:$0xff]
        %v5347 = vld [vmem:[%s4227 + $0x492] sm:$0xff]
        %v5348 = vld [vmem:[%s4227 + $0x4a2] sm:$0xff]
        %v5349 = vld [vmem:[%s4227 + $0x4b2] sm:$0xff]
        %v5350 = vld [vmem:[%s4227 + $0x4c2] sm:$0xff]
        %v5351 = vld [vmem:[%s4227 + $0x4d2] sm:$0xff]
        %s5352 = scalar_lea.vmem %s3, 1024
        %v5353 = vld [vmem:[%s5352] sm:$0xff]
        %v5354 = vld [vmem:[%s5352 + $0x8] sm:$0xff]
        %v5355 = vld [vmem:[%s5352 + $0x10] sm:$0xff]
        %v5356 = vld [vmem:[%s5352 + $0x18] sm:$0xff]
        %v5357 = vld [vmem:[%s5352 + $0x20] sm:$0xff]
        %v5358 = vld [vmem:[%s5352 + $0x28] sm:$0xff]
        %v5359 = vld [vmem:[%s5352 + $0x30] sm:$0xff]
        %v5360 = vld [vmem:[%s5352 + $0x38] sm:$0xff]
        %v5361 = vld [vmem:[%s5352 + $0x40] sm:$0xff]
        %v5362 = vld [vmem:[%s5352 + $0x48] sm:$0xff]
        %v5363 = vld [vmem:[%s5352 + $0x50] sm:$0xff]
        %v5364 = vld [vmem:[%s5352 + $0x58] sm:$0xff]
        %v5365 = vld [vmem:[%s5352 + $0x60] sm:$0xff]
        %v5366 = vld [vmem:[%s5352 + $0x68] sm:$0xff]
        %v5367 = vld [vmem:[%s5352 + $0x70] sm:$0xff]
        %v5368 = vld [vmem:[%s5352 + $0x78] sm:$0xff]
        %5369 = vmatprep.subr.mxu0 0.0
        %5370 = vmatpush1.msra.mxu0 %v5353
        %5371 = vmatprep.subr.mxu0 0.0
        %5372 = vmatpush1.msra.mxu0 %v5354
        %5373 = vmatprep.subr.mxu0 0.0
        %5374 = vmatpush1.msra.mxu0 %v5355
        %5375 = vmatprep.subr.mxu0 0.0
        %5376 = vmatpush1.msra.mxu0 %v5356
        %5377 = vmatprep.subr.mxu0 0.0
        %5378 = vmatpush1.msra.mxu0 %v5357
        %5379 = vmatprep.subr.mxu0 0.0
        %5380 = vmatpush1.msra.mxu0 %v5358
        %5381 = vmatprep.subr.mxu0 0.0
        %5382 = vmatpush1.msra.mxu0 %v5359
        %5383 = vmatprep.subr.mxu0 0.0
        %5384 = vmatpush1.msra.mxu0 %v5360
        %5385 = vmatprep.subr.mxu0 0.0
        %5386 = vmatpush1.msra.mxu0 %v5361
        %5387 = vmatprep.subr.mxu0 0.0
        %5388 = vmatpush1.msra.mxu0 %v5362
        %5389 = vmatprep.subr.mxu0 0.0
        %5390 = vmatpush1.msra.mxu0 %v5363
        %5391 = vmatprep.subr.mxu0 0.0
        %5392 = vmatpush1.msra.mxu0 %v5364
        %5393 = vmatprep.subr.mxu0 0.0
        %5394 = vmatpush1.msra.mxu0 %v5365
        %5395 = vmatprep.subr.mxu0 0.0
        %5396 = vmatpush1.msra.mxu0 %v5366
        %5397 = vmatprep.subr.mxu0 0.0
        %5398 = vmatpush1.msra.mxu0 %v5367
        %5399 = vmatprep.subr.mxu0 0.0
        %5400 = vmatpush1.msra.mxu0 %v5368
        %5401 = vmatprep.subr.mxu0 0.0
        %5402 = vmatpush1.msra.mxu0 0.0
        %5403 = vmatprep.subr.mxu0 0.0
        %5404 = vmatpush1.msra.mxu0 0.0
        %5405 = vmatprep.subr.mxu0 0.0
        %5406 = vmatpush1.msra.mxu0 0.0
        %5407 = vmatprep.subr.mxu0 0.0
        %5408 = vmatpush1.msra.mxu0 0.0
        %5409 = vmatprep.subr.mxu0 0.0
        %5410 = vmatpush1.msra.mxu0 0.0
        %5411 = vmatprep.subr.mxu0 0.0
        %5412 = vmatpush1.msra.mxu0 0.0
        %5413 = vmatprep.subr.mxu0 0.0
        %5414 = vmatpush1.msra.mxu0 0.0
        %5415 = vmatprep.subr.mxu0 0.0
        %5416 = vmatpush1.msra.mxu0 0.0
        %5417 = vmatprep.subr.mxu0 0.0
        %5418 = vmatpush1.msra.mxu0 0.0
        %5419 = vmatprep.subr.mxu0 0.0
        %5420 = vmatpush1.msra.mxu0 0.0
        %5421 = vmatprep.subr.mxu0 0.0
        %5422 = vmatpush1.msra.mxu0 0.0
        %5423 = vmatprep.subr.mxu0 0.0
        %5424 = vmatpush1.msra.mxu0 0.0
        %5425 = vmatprep.subr.mxu0 0.0
        %5426 = vmatpush1.msra.mxu0 0.0
        %5427 = vmatprep.subr.mxu0 0.0
        %5428 = vmatpush1.msra.mxu0 0.0
        %5429 = vmatprep.subr.mxu0 0.0
        %5430 = vmatpush1.msra.mxu0 0.0
        %5431 = vmatprep.subr.mxu0 0.0
        %5432 = vmatpush1.msra.mxu0 0.0
        %5433 = vmatprep.mubr.f32.mxu0 0.0
        %5434 = vmatmul.mubr.f32.gmra.mrb[0].mxu0 %v5288
        %v5435 = vpop.f32.mrb[0].mxu0
        %v5436 = vadd.f32 0.0, %v5435
        %v5437 = vpop.f32.mrb[0].mxu0
        %5438 = vmatprep.mubr.f32.mxu0 0.0
        %5439 = vmatmul.mubr.f32.gmra.mrb[0].mxu0 %v5289
        %v5440 = vpop.f32.mrb[0].mxu0
        %v5441 = vadd.f32 0.0, %v5440
        %v5442 = vpop.f32.mrb[0].mxu0
        %5443 = vmatprep.mubr.f32.mxu0 0.0
        %5444 = vmatmul.mubr.f32.gmra.mrb[0].mxu0 %v5290
        %v5445 = vpop.f32.mrb[0].mxu0
        %v5446 = vadd.f32 0.0, %v5445
        %v5447 = vpop.f32.mrb[0].mxu0
        %5448 = vmatprep.mubr.f32.mxu0 0.0
        %5449 = vmatmul.mubr.f32.gmra.mrb[0].mxu0 %v5291
        %v5450 = vpop.f32.mrb[0].mxu0
        %v5451 = vadd.f32 0.0, %v5450
        %v5452 = vpop.f32.mrb[0].mxu0
        %5453 = vmatprep.mubr.f32.mxu0 0.0
        %5454 = vmatmul.mubr.f32.gmra.mrb[0].mxu0 %v5292
        %v5455 = vpop.f32.mrb[0].mxu0
        %v5456 = vadd.f32 0.0, %v5455
        %v5457 = vpop.f32.mrb[0].mxu0
        %5458 = vmatprep.mubr.f32.mxu0 0.0
        %5459 = vmatmul.mubr.f32.gmra.mrb[0].mxu0 %v5293
        %v5460 = vpop.f32.mrb[0].mxu0
        %v5461 = vadd.f32 0.0, %v5460
        %v5462 = vpop.f32.mrb[0].mxu0
        %5463 = vmatprep.mubr.f32.mxu0 0.0
        %5464 = vmatmul.mubr.f32.gmra.mrb[0].mxu0 %v5294
        %v5465 = vpop.f32.mrb[0].mxu0
        %v5466 = vadd.f32 0.0, %v5465
        %v5467 = vpop.f32.mrb[0].mxu0
        %5468 = vmatprep.mubr.f32.mxu0 0.0
        %5469 = vmatmul.mubr.f32.gmra.mrb[0].mxu0 %v5295
        %v5470 = vpop.f32.mrb[0].mxu0
        %v5471 = vadd.f32 0.0, %v5470
        %v5472 = vpop.f32.mrb[0].mxu0
        %5473 = vmatprep.mubr.f32.mxu0 0.0
        %5474 = vmatmul.mubr.f32.gmra.mrb[0].mxu0 %v5296
        %v5475 = vpop.f32.mrb[0].mxu0
        %v5476 = vadd.f32 0.0, %v5475
        %v5477 = vpop.f32.mrb[0].mxu0
        %5478 = vmatprep.mubr.f32.mxu0 0.0
        %5479 = vmatmul.mubr.f32.gmra.mrb[0].mxu0 %v5297
        %v5480 = vpop.f32.mrb[0].mxu0
        %v5481 = vadd.f32 0.0, %v5480
        %v5482 = vpop.f32.mrb[0].mxu0
        %5483 = vmatprep.mubr.f32.mxu0 0.0
        %5484 = vmatmul.mubr.f32.gmra.mrb[0].mxu0 %v5298
        %v5485 = vpop.f32.mrb[0].mxu0
        %v5486 = vadd.f32 0.0, %v5485
        %v5487 = vpop.f32.mrb[0].mxu0
        %5488 = vmatprep.mubr.f32.mxu0 0.0
        %5489 = vmatmul.mubr.f32.gmra.mrb[0].mxu0 %v5299
        %v5490 = vpop.f32.mrb[0].mxu0
        %v5491 = vadd.f32 0.0, %v5490
        %v5492 = vpop.f32.mrb[0].mxu0
        %5493 = vmatprep.mubr.f32.mxu0 0.0
        %5494 = vmatmul.mubr.f32.gmra.mrb[0].mxu0 %v5300
        %v5495 = vpop.f32.mrb[0].mxu0
        %v5496 = vadd.f32 0.0, %v5495
        %v5497 = vpop.f32.mrb[0].mxu0
        %5498 = vmatprep.mubr.f32.mxu0 0.0
        %5499 = vmatmul.mubr.f32.gmra.mrb[0].mxu0 %v5301
        %v5500 = vpop.f32.mrb[0].mxu0
        %v5501 = vadd.f32 0.0, %v5500
        %v5502 = vpop.f32.mrb[0].mxu0
        %5503 = vmatprep.mubr.f32.mxu0 0.0
        %5504 = vmatmul.mubr.f32.gmra.mrb[0].mxu0 %v5302
        %v5505 = vpop.f32.mrb[0].mxu0
        %v5506 = vadd.f32 0.0, %v5505
        %v5507 = vpop.f32.mrb[0].mxu0
        %5508 = vmatprep.mubr.f32.mxu0 0.0
        %5509 = vmatmul.mubr.f32.gmra.mrb[0].mxu0 %v5303
        %v5510 = vpop.f32.mrb[0].mxu0
        %v5511 = vadd.f32 0.0, %v5510
        %v5512 = vpop.f32.mrb[0].mxu0
        %5513 = vmatprep.mubr.f32.mxu0 0.0
        %5514 = vmatmul.mubr.f32.gmra.mrb[0].mxu0 %v5304
        %v5515 = vpop.f32.mrb[0].mxu0
        %v5516 = vadd.f32 0.0, %v5515
        %v5517 = vpop.f32.mrb[0].mxu0
        %5518 = vmatprep.mubr.f32.mxu0 0.0
        %5519 = vmatmul.mubr.f32.gmra.mrb[0].mxu0 %v5305
        %v5520 = vpop.f32.mrb[0].mxu0
        %v5521 = vadd.f32 0.0, %v5520
        %v5522 = vpop.f32.mrb[0].mxu0
        %5523 = vmatprep.mubr.f32.mxu0 0.0
        %5524 = vmatmul.mubr.f32.gmra.mrb[0].mxu0 %v5306
        %v5525 = vpop.f32.mrb[0].mxu0
        %v5526 = vadd.f32 0.0, %v5525
        %v5527 = vpop.f32.mrb[0].mxu0
        %5528 = vmatprep.mubr.f32.mxu0 0.0
        %5529 = vmatmul.mubr.f32.gmra.mrb[0].mxu0 %v5307
        %v5530 = vpop.f32.mrb[0].mxu0
        %v5531 = vadd.f32 0.0, %v5530
        %v5532 = vpop.f32.mrb[0].mxu0
        %5533 = vmatprep.mubr.f32.mxu0 0.0
        %5534 = vmatmul.mubr.f32.gmra.mrb[0].mxu0 %v5308
        %v5535 = vpop.f32.mrb[0].mxu0
        %v5536 = vadd.f32 0.0, %v5535
        %v5537 = vpop.f32.mrb[0].mxu0
        %5538 = vmatprep.mubr.f32.mxu0 0.0
        %5539 = vmatmul.mubr.f32.gmra.mrb[0].mxu0 %v5309
        %v5540 = vpop.f32.mrb[0].mxu0
        %v5541 = vadd.f32 0.0, %v5540
        %v5542 = vpop.f32.mrb[0].mxu0
        %5543 = vmatprep.mubr.f32.mxu0 0.0
        %5544 = vmatmul.mubr.f32.gmra.mrb[0].mxu0 %v5310
        %v5545 = vpop.f32.mrb[0].mxu0
        %v5546 = vadd.f32 0.0, %v5545
        %v5547 = vpop.f32.mrb[0].mxu0
        %5548 = vmatprep.mubr.f32.mxu0 0.0
        %5549 = vmatmul.mubr.f32.gmra.mrb[0].mxu0 %v5311
        %v5550 = vpop.f32.mrb[0].mxu0
        %v5551 = vadd.f32 0.0, %v5550
        %v5552 = vpop.f32.mrb[0].mxu0
        %5553 = vmatprep.mubr.f32.mxu0 0.0
        %5554 = vmatmul.mubr.f32.gmra.mrb[0].mxu0 %v5312
        %v5555 = vpop.f32.mrb[0].mxu0
        %v5556 = vadd.f32 0.0, %v5555
        %v5557 = vpop.f32.mrb[0].mxu0
        %5558 = vmatprep.mubr.f32.mxu0 0.0
        %5559 = vmatmul.mubr.f32.gmra.mrb[0].mxu0 %v5313
        %v5560 = vpop.f32.mrb[0].mxu0
        %v5561 = vadd.f32 0.0, %v5560
        %v5562 = vpop.f32.mrb[0].mxu0
        %5563 = vmatprep.mubr.f32.mxu0 0.0
        %5564 = vmatmul.mubr.f32.gmra.mrb[0].mxu0 %v5314
        %v5565 = vpop.f32.mrb[0].mxu0
        %v5566 = vadd.f32 0.0, %v5565
        %v5567 = vpop.f32.mrb[0].mxu0
        %5568 = vmatprep.mubr.f32.mxu0 0.0
        %5569 = vmatmul.mubr.f32.gmra.mrb[0].mxu0 %v5315
        %v5570 = vpop.f32.mrb[0].mxu0
        %v5571 = vadd.f32 0.0, %v5570
        %v5572 = vpop.f32.mrb[0].mxu0
        %5573 = vmatprep.mubr.f32.mxu0 0.0
        %5574 = vmatmul.mubr.f32.gmra.mrb[0].mxu0 %v5316
        %v5575 = vpop.f32.mrb[0].mxu0
        %v5576 = vadd.f32 0.0, %v5575
        %v5577 = vpop.f32.mrb[0].mxu0
        %5578 = vmatprep.mubr.f32.mxu0 0.0
        %5579 = vmatmul.mubr.f32.gmra.mrb[0].mxu0 %v5317
        %v5580 = vpop.f32.mrb[0].mxu0
        %v5581 = vadd.f32 0.0, %v5580
        %v5582 = vpop.f32.mrb[0].mxu0
        %5583 = vmatprep.mubr.f32.mxu0 0.0
        %5584 = vmatmul.mubr.f32.gmra.mrb[0].mxu0 %v5318
        %v5585 = vpop.f32.mrb[0].mxu0
        %v5586 = vadd.f32 0.0, %v5585
        %v5587 = vpop.f32.mrb[0].mxu0
        %5588 = vmatprep.mubr.f32.mxu0 0.0
        %5589 = vmatmul.mubr.f32.gmra.mrb[0].mxu0 %v5319
        %v5590 = vpop.f32.mrb[0].mxu0
        %v5591 = vadd.f32 0.0, %v5590
        %v5592 = vpop.f32.mrb[0].mxu0
        %5593 = vmatprep.mubr.f32.mxu0 0.0
        %5594 = vmatmul.mubr.f32.gmra.mrb[0].mxu0 %v5320
        %v5595 = vpop.f32.mrb[0].mxu0
        %v5596 = vadd.f32 0.0, %v5595
        %v5597 = vpop.f32.mrb[0].mxu0
        %5598 = vmatprep.mubr.f32.mxu0 0.0
        %5599 = vmatmul.mubr.f32.gmra.mrb[0].mxu0 %v5321
        %v5600 = vpop.f32.mrb[0].mxu0
        %v5601 = vadd.f32 0.0, %v5600
        %v5602 = vpop.f32.mrb[0].mxu0
        %5603 = vmatprep.mubr.f32.mxu0 0.0
        %5604 = vmatmul.mubr.f32.gmra.mrb[0].mxu0 %v5322
        %v5605 = vpop.f32.mrb[0].mxu0
        %v5606 = vadd.f32 0.0, %v5605
        %v5607 = vpop.f32.mrb[0].mxu0
        %5608 = vmatprep.mubr.f32.mxu0 0.0
        %5609 = vmatmul.mubr.f32.gmra.mrb[0].mxu0 %v5323
        %v5610 = vpop.f32.mrb[0].mxu0
        %v5611 = vadd.f32 0.0, %v5610
        %v5612 = vpop.f32.mrb[0].mxu0
        %5613 = vmatprep.mubr.f32.mxu0 0.0
        %5614 = vmatmul.mubr.f32.gmra.mrb[0].mxu0 %v5324
        %v5615 = vpop.f32.mrb[0].mxu0
        %v5616 = vadd.f32 0.0, %v5615
        %v5617 = vpop.f32.mrb[0].mxu0
        %5618 = vmatprep.mubr.f32.mxu0 0.0
        %5619 = vmatmul.mubr.f32.gmra.mrb[0].mxu0 %v5325
        %v5620 = vpop.f32.mrb[0].mxu0
        %v5621 = vadd.f32 0.0, %v5620
        %v5622 = vpop.f32.mrb[0].mxu0
        %5623 = vmatprep.mubr.f32.mxu0 0.0
        %5624 = vmatmul.mubr.f32.gmra.mrb[0].mxu0 %v5326
        %v5625 = vpop.f32.mrb[0].mxu0
        %v5626 = vadd.f32 0.0, %v5625
        %v5627 = vpop.f32.mrb[0].mxu0
        %5628 = vmatprep.mubr.f32.mxu0 0.0
        %5629 = vmatmul.mubr.f32.gmra.mrb[0].mxu0 %v5327
        %v5630 = vpop.f32.mrb[0].mxu0
        %v5631 = vadd.f32 0.0, %v5630
        %v5632 = vpop.f32.mrb[0].mxu0
        %5633 = vmatprep.mubr.f32.mxu0 0.0
        %5634 = vmatmul.mubr.f32.gmra.mrb[0].mxu0 %v5328
        %v5635 = vpop.f32.mrb[0].mxu0
        %v5636 = vadd.f32 0.0, %v5635
        %v5637 = vpop.f32.mrb[0].mxu0
        %5638 = vmatprep.mubr.f32.mxu0 0.0
        %5639 = vmatmul.mubr.f32.gmra.mrb[0].mxu0 %v5329
        %v5640 = vpop.f32.mrb[0].mxu0
        %v5641 = vadd.f32 0.0, %v5640
        %v5642 = vpop.f32.mrb[0].mxu0
        %5643 = vmatprep.mubr.f32.mxu0 0.0
        %5644 = vmatmul.mubr.f32.gmra.mrb[0].mxu0 %v5330
        %v5645 = vpop.f32.mrb[0].mxu0
        %v5646 = vadd.f32 0.0, %v5645
        %v5647 = vpop.f32.mrb[0].mxu0
        %5648 = vmatprep.mubr.f32.mxu0 0.0
        %5649 = vmatmul.mubr.f32.gmra.mrb[0].mxu0 %v5331
        %v5650 = vpop.f32.mrb[0].mxu0
        %v5651 = vadd.f32 0.0, %v5650
        %v5652 = vpop.f32.mrb[0].mxu0
        %5653 = vmatprep.mubr.f32.mxu0 0.0
        %5654 = vmatmul.mubr.f32.gmra.mrb[0].mxu0 %v5332
        %v5655 = vpop.f32.mrb[0].mxu0
        %v5656 = vadd.f32 0.0, %v5655
        %v5657 = vpop.f32.mrb[0].mxu0
        %5658 = vmatprep.mubr.f32.mxu0 0.0
        %5659 = vmatmul.mubr.f32.gmra.mrb[0].mxu0 %v5333
        %v5660 = vpop.f32.mrb[0].mxu0
        %v5661 = vadd.f32 0.0, %v5660
        %v5662 = vpop.f32.mrb[0].mxu0
        %5663 = vmatprep.mubr.f32.mxu0 0.0
        %5664 = vmatmul.mubr.f32.gmra.mrb[0].mxu0 %v5334
        %v5665 = vpop.f32.mrb[0].mxu0
        %v5666 = vadd.f32 0.0, %v5665
        %v5667 = vpop.f32.mrb[0].mxu0
        %5668 = vmatprep.mubr.f32.mxu0 0.0
        %5669 = vmatmul.mubr.f32.gmra.mrb[0].mxu0 %v5335
        %v5670 = vpop.f32.mrb[0].mxu0
        %v5671 = vadd.f32 0.0, %v5670
        %v5672 = vpop.f32.mrb[0].mxu0
        %5673 = vmatprep.mubr.f32.mxu0 0.0
        %5674 = vmatmul.mubr.f32.gmra.mrb[0].mxu0 %v5336
        %v5675 = vpop.f32.mrb[0].mxu0
        %v5676 = vadd.f32 0.0, %v5675
        %v5677 = vpop.f32.mrb[0].mxu0
        %5678 = vmatprep.mubr.f32.mxu0 0.0
        %5679 = vmatmul.mubr.f32.gmra.mrb[0].mxu0 %v5337
        %v5680 = vpop.f32.mrb[0].mxu0
        %v5681 = vadd.f32 0.0, %v5680
        %v5682 = vpop.f32.mrb[0].mxu0
        %5683 = vmatprep.mubr.f32.mxu0 0.0
        %5684 = vmatmul.mubr.f32.gmra.mrb[0].mxu0 %v5338
        %v5685 = vpop.f32.mrb[0].mxu0
        %v5686 = vadd.f32 0.0, %v5685
        %v5687 = vpop.f32.mrb[0].mxu0
        %5688 = vmatprep.mubr.f32.mxu0 0.0
        %5689 = vmatmul.mubr.f32.gmra.mrb[0].mxu0 %v5339
        %v5690 = vpop.f32.mrb[0].mxu0
        %v5691 = vadd.f32 0.0, %v5690
        %v5692 = vpop.f32.mrb[0].mxu0
        %5693 = vmatprep.mubr.f32.mxu0 0.0
        %5694 = vmatmul.mubr.f32.gmra.mrb[0].mxu0 %v5340
        %v5695 = vpop.f32.mrb[0].mxu0
        %v5696 = vadd.f32 0.0, %v5695
        %v5697 = vpop.f32.mrb[0].mxu0
        %5698 = vmatprep.mubr.f32.mxu0 0.0
        %5699 = vmatmul.mubr.f32.gmra.mrb[0].mxu0 %v5341
        %v5700 = vpop.f32.mrb[0].mxu0
        %v5701 = vadd.f32 0.0, %v5700
        %v5702 = vpop.f32.mrb[0].mxu0
        %5703 = vmatprep.mubr.f32.mxu0 0.0
        %5704 = vmatmul.mubr.f32.gmra.mrb[0].mxu0 %v5342
        %v5705 = vpop.f32.mrb[0].mxu0
        %v5706 = vadd.f32 0.0, %v5705
        %v5707 = vpop.f32.mrb[0].mxu0
        %5708 = vmatprep.mubr.f32.mxu0 0.0
        %5709 = vmatmul.mubr.f32.gmra.mrb[0].mxu0 %v5343
        %v5710 = vpop.f32.mrb[0].mxu0
        %v5711 = vadd.f32 0.0, %v5710
        %v5712 = vpop.f32.mrb[0].mxu0
        %5713 = vmatprep.mubr.f32.mxu0 0.0
        %5714 = vmatmul.mubr.f32.gmra.mrb[0].mxu0 %v5344
        %v5715 = vpop.f32.mrb[0].mxu0
        %v5716 = vadd.f32 0.0, %v5715
        %v5717 = vpop.f32.mrb[0].mxu0
        %5718 = vmatprep.mubr.f32.mxu0 0.0
        %5719 = vmatmul.mubr.f32.gmra.mrb[0].mxu0 %v5345
        %v5720 = vpop.f32.mrb[0].mxu0
        %v5721 = vadd.f32 0.0, %v5720
        %v5722 = vpop.f32.mrb[0].mxu0
        %5723 = vmatprep.mubr.f32.mxu0 0.0
        %5724 = vmatmul.mubr.f32.gmra.mrb[0].mxu0 %v5346
        %v5725 = vpop.f32.mrb[0].mxu0
        %v5726 = vadd.f32 0.0, %v5725
        %v5727 = vpop.f32.mrb[0].mxu0
        %5728 = vmatprep.mubr.f32.mxu0 0.0
        %5729 = vmatmul.mubr.f32.gmra.mrb[0].mxu0 %v5347
        %v5730 = vpop.f32.mrb[0].mxu0
        %v5731 = vadd.f32 0.0, %v5730
        %v5732 = vpop.f32.mrb[0].mxu0
        %5733 = vmatprep.mubr.f32.mxu0 0.0
        %5734 = vmatmul.mubr.f32.gmra.mrb[0].mxu0 %v5348
        %v5735 = vpop.f32.mrb[0].mxu0
        %v5736 = vadd.f32 0.0, %v5735
        %v5737 = vpop.f32.mrb[0].mxu0
        %5738 = vmatprep.mubr.f32.mxu0 0.0
        %5739 = vmatmul.mubr.f32.gmra.mrb[0].mxu0 %v5349
        %v5740 = vpop.f32.mrb[0].mxu0
        %v5741 = vadd.f32 0.0, %v5740
        %v5742 = vpop.f32.mrb[0].mxu0
        %5743 = vmatprep.mubr.f32.mxu0 0.0
        %5744 = vmatmul.mubr.f32.gmra.mrb[0].mxu0 %v5350
        %v5745 = vpop.f32.mrb[0].mxu0
        %v5746 = vadd.f32 0.0, %v5745
        %v5747 = vpop.f32.mrb[0].mxu0
        %5748 = vmatprep.mubr.f32.mxu0 0.0
        %5749 = vmatmul.mubr.f32.gmra.mrb[0].mxu0 %v5351
        %v5750 = vpop.f32.mrb[0].mxu0
        %v5751 = vadd.f32 0.0, %v5750
        %v5752 = vpop.f32.mrb[0].mxu0
        %5753 = vdwg.mxu0
        %v5754 = vadd.f32 %v5224, %v5436
        %v5755 = vadd.f32 %v5225, %v5441
        %v5756 = vadd.f32 %v5226, %v5446
        %v5757 = vadd.f32 %v5227, %v5451
        %v5758 = vadd.f32 %v5228, %v5456
        %v5759 = vadd.f32 %v5229, %v5461
        %v5760 = vadd.f32 %v5230, %v5466
        %v5761 = vadd.f32 %v5231, %v5471
        %v5762 = vadd.f32 %v5232, %v5476
        %v5763 = vadd.f32 %v5233, %v5481
        %v5764 = vadd.f32 %v5234, %v5486
        %v5765 = vadd.f32 %v5235, %v5491
        %v5766 = vadd.f32 %v5236, %v5496
        %v5767 = vadd.f32 %v5237, %v5501
        %v5768 = vadd.f32 %v5238, %v5506
        %v5769 = vadd.f32 %v5239, %v5511
        %v5770 = vadd.f32 %v5240, %v5516
        %v5771 = vadd.f32 %v5241, %v5521
        %v5772 = vadd.f32 %v5242, %v5526
        %v5773 = vadd.f32 %v5243, %v5531
        %v5774 = vadd.f32 %v5244, %v5536
        %v5775 = vadd.f32 %v5245, %v5541
        %v5776 = vadd.f32 %v5246, %v5546
        %v5777 = vadd.f32 %v5247, %v5551
        %v5778 = vadd.f32 %v5248, %v5556
        %v5779 = vadd.f32 %v5249, %v5561
        %v5780 = vadd.f32 %v5250, %v5566
        %v5781 = vadd.f32 %v5251, %v5571
        %v5782 = vadd.f32 %v5252, %v5576
        %v5783 = vadd.f32 %v5253, %v5581
        %v5784 = vadd.f32 %v5254, %v5586
        %v5785 = vadd.f32 %v5255, %v5591
        %v5786 = vadd.f32 %v5256, %v5596
        %v5787 = vadd.f32 %v5257, %v5601
        %v5788 = vadd.f32 %v5258, %v5606
        %v5789 = vadd.f32 %v5259, %v5611
        %v5790 = vadd.f32 %v5260, %v5616
        %v5791 = vadd.f32 %v5261, %v5621
        %v5792 = vadd.f32 %v5262, %v5626
        %v5793 = vadd.f32 %v5263, %v5631
        %v5794 = vadd.f32 %v5264, %v5636
        %v5795 = vadd.f32 %v5265, %v5641
        %v5796 = vadd.f32 %v5266, %v5646
        %v5797 = vadd.f32 %v5267, %v5651
        %v5798 = vadd.f32 %v5268, %v5656
        %v5799 = vadd.f32 %v5269, %v5661
        %v5800 = vadd.f32 %v5270, %v5666
        %v5801 = vadd.f32 %v5271, %v5671
        %v5802 = vadd.f32 %v5272, %v5676
        %v5803 = vadd.f32 %v5273, %v5681
        %v5804 = vadd.f32 %v5274, %v5686
        %v5805 = vadd.f32 %v5275, %v5691
        %v5806 = vadd.f32 %v5276, %v5696
        %v5807 = vadd.f32 %v5277, %v5701
        %v5808 = vadd.f32 %v5278, %v5706
        %v5809 = vadd.f32 %v5279, %v5711
        %v5810 = vadd.f32 %v5280, %v5716
        %v5811 = vadd.f32 %v5281, %v5721
        %v5812 = vadd.f32 %v5282, %v5726
        %v5813 = vadd.f32 %v5283, %v5731
        %v5814 = vadd.f32 %v5284, %v5736
        %v5815 = vadd.f32 %v5285, %v5741
        %v5816 = vadd.f32 %v5286, %v5746
        %v5817 = vadd.f32 %v5287, %v5751
        %v5818 = vld [vmem:[%s4] sm:$0x1]
        %v5820 = vlaneseq
        %v5821 = vshrl.u32 %v5820, 7
        %v5822 = vsub.s32 0, %v5821
        %v5823 = vrot.slane %v5818, %v5822
        %v5825 = vadd.f32 %v5754, %v5823
        %v5826 = vadd.f32 %v5755, %v5823
        %v5827 = vadd.f32 %v5756, %v5823
        %v5828 = vadd.f32 %v5757, %v5823
        %v5829 = vadd.f32 %v5758, %v5823
        %v5830 = vadd.f32 %v5759, %v5823
        %v5831 = vadd.f32 %v5760, %v5823
        %v5832 = vadd.f32 %v5761, %v5823
        %v5833 = vadd.f32 %v5762, %v5823
        %v5834 = vadd.f32 %v5763, %v5823
        %v5835 = vadd.f32 %v5764, %v5823
        %v5836 = vadd.f32 %v5765, %v5823
        %v5837 = vadd.f32 %v5766, %v5823
        %v5838 = vadd.f32 %v5767, %v5823
        %v5839 = vadd.f32 %v5768, %v5823
        %v5840 = vadd.f32 %v5769, %v5823
        %v5841 = vadd.f32 %v5770, %v5823
        %v5842 = vadd.f32 %v5771, %v5823
        %v5843 = vadd.f32 %v5772, %v5823
        %v5844 = vadd.f32 %v5773, %v5823
        %v5845 = vadd.f32 %v5774, %v5823
        %v5846 = vadd.f32 %v5775, %v5823
        %v5847 = vadd.f32 %v5776, %v5823
        %v5848 = vadd.f32 %v5777, %v5823
        %v5849 = vadd.f32 %v5778, %v5823
        %v5850 = vadd.f32 %v5779, %v5823
        %v5851 = vadd.f32 %v5780, %v5823
        %v5852 = vadd.f32 %v5781, %v5823
        %v5853 = vadd.f32 %v5782, %v5823
        %v5854 = vadd.f32 %v5783, %v5823
        %v5855 = vadd.f32 %v5784, %v5823
        %v5856 = vadd.f32 %v5785, %v5823
        %v5857 = vadd.f32 %v5786, %v5823
        %v5858 = vadd.f32 %v5787, %v5823
        %v5859 = vadd.f32 %v5788, %v5823
        %v5860 = vadd.f32 %v5789, %v5823
        %v5861 = vadd.f32 %v5790, %v5823
        %v5862 = vadd.f32 %v5791, %v5823
        %v5863 = vadd.f32 %v5792, %v5823
        %v5864 = vadd.f32 %v5793, %v5823
        %v5865 = vadd.f32 %v5794, %v5823
        %v5866 = vadd.f32 %v5795, %v5823
        %v5867 = vadd.f32 %v5796, %v5823
        %v5868 = vadd.f32 %v5797, %v5823
        %v5869 = vadd.f32 %v5798, %v5823
        %v5870 = vadd.f32 %v5799, %v5823
        %v5871 = vadd.f32 %v5800, %v5823
        %v5872 = vadd.f32 %v5801, %v5823
        %v5873 = vadd.f32 %v5802, %v5823
        %v5874 = vadd.f32 %v5803, %v5823
        %v5875 = vadd.f32 %v5804, %v5823
        %v5876 = vadd.f32 %v5805, %v5823
        %v5877 = vadd.f32 %v5806, %v5823
        %v5878 = vadd.f32 %v5807, %v5823
        %v5879 = vadd.f32 %v5808, %v5823
        %v5880 = vadd.f32 %v5809, %v5823
        %v5881 = vadd.f32 %v5810, %v5823
        %v5882 = vadd.f32 %v5811, %v5823
        %v5883 = vadd.f32 %v5812, %v5823
        %v5884 = vadd.f32 %v5813, %v5823
        %v5885 = vadd.f32 %v5814, %v5823
        %v5886 = vadd.f32 %v5815, %v5823
        %v5887 = vadd.f32 %v5816, %v5823
        %v5888 = vadd.f32 %v5817, %v5823
        %v5889 = vmax.f32 %v5825, 0.0
        %v5890 = vmax.f32 %v5826, 0.0
        %v5891 = vmax.f32 %v5827, 0.0
        %v5892 = vmax.f32 %v5828, 0.0
        %v5893 = vmax.f32 %v5829, 0.0
        %v5894 = vmax.f32 %v5830, 0.0
        %v5895 = vmax.f32 %v5831, 0.0
        %v5896 = vmax.f32 %v5832, 0.0
        %v5897 = vmax.f32 %v5833, 0.0
        %v5898 = vmax.f32 %v5834, 0.0
        %v5899 = vmax.f32 %v5835, 0.0
        %v5900 = vmax.f32 %v5836, 0.0
        %v5901 = vmax.f32 %v5837, 0.0
        %v5902 = vmax.f32 %v5838, 0.0
        %v5903 = vmax.f32 %v5839, 0.0
        %v5904 = vmax.f32 %v5840, 0.0
        %v5905 = vmax.f32 %v5841, 0.0
        %v5906 = vmax.f32 %v5842, 0.0
        %v5907 = vmax.f32 %v5843, 0.0
        %v5908 = vmax.f32 %v5844, 0.0
        %v5909 = vmax.f32 %v5845, 0.0
        %v5910 = vmax.f32 %v5846, 0.0
        %v5911 = vmax.f32 %v5847, 0.0
        %v5912 = vmax.f32 %v5848, 0.0
        %v5913 = vmax.f32 %v5849, 0.0
        %v5914 = vmax.f32 %v5850, 0.0
        %v5915 = vmax.f32 %v5851, 0.0
        %v5916 = vmax.f32 %v5852, 0.0
        %v5917 = vmax.f32 %v5853, 0.0
        %v5918 = vmax.f32 %v5854, 0.0
        %v5919 = vmax.f32 %v5855, 0.0
        %v5920 = vmax.f32 %v5856, 0.0
        %v5921 = vmax.f32 %v5857, 0.0
        %v5922 = vmax.f32 %v5858, 0.0
        %v5923 = vmax.f32 %v5859, 0.0
        %v5924 = vmax.f32 %v5860, 0.0
        %v5925 = vmax.f32 %v5861, 0.0
        %v5926 = vmax.f32 %v5862, 0.0
        %v5927 = vmax.f32 %v5863, 0.0
        %v5928 = vmax.f32 %v5864, 0.0
        %v5929 = vmax.f32 %v5865, 0.0
        %v5930 = vmax.f32 %v5866, 0.0
        %v5931 = vmax.f32 %v5867, 0.0
        %v5932 = vmax.f32 %v5868, 0.0
        %v5933 = vmax.f32 %v5869, 0.0
        %v5934 = vmax.f32 %v5870, 0.0
        %v5935 = vmax.f32 %v5871, 0.0
        %v5936 = vmax.f32 %v5872, 0.0
        %v5937 = vmax.f32 %v5873, 0.0
        %v5938 = vmax.f32 %v5874, 0.0
        %v5939 = vmax.f32 %v5875, 0.0
        %v5940 = vmax.f32 %v5876, 0.0
        %v5941 = vmax.f32 %v5877, 0.0
        %v5942 = vmax.f32 %v5878, 0.0
        %v5943 = vmax.f32 %v5879, 0.0
        %v5944 = vmax.f32 %v5880, 0.0
        %v5945 = vmax.f32 %v5881, 0.0
        %v5946 = vmax.f32 %v5882, 0.0
        %v5947 = vmax.f32 %v5883, 0.0
        %v5948 = vmax.f32 %v5884, 0.0
        %v5949 = vmax.f32 %v5885, 0.0
        %v5950 = vmax.f32 %v5886, 0.0
        %v5951 = vmax.f32 %v5887, 0.0
        %v5952 = vmax.f32 %v5888, 0.0
        %v5953 = vld [vmem:[%s276] sm:$0xff]
        %v5954 = vld [vmem:[%s276 + $0x8] sm:$0xff]
        %v5955 = vld [vmem:[%s276 + $0x10] sm:$0xff]
        %v5956 = vld [vmem:[%s276 + $0x18] sm:$0xff]
        %v5957 = vld [vmem:[%s276 + $0x20] sm:$0xff]
        %v5958 = vld [vmem:[%s276 + $0x28] sm:$0xff]
        %v5959 = vld [vmem:[%s276 + $0x30] sm:$0xff]
        %v5960 = vld [vmem:[%s276 + $0x38] sm:$0xff]
        %v5961 = vld [vmem:[%s276 + $0x40] sm:$0xff]
        %v5962 = vld [vmem:[%s276 + $0x48] sm:$0xff]
        %v5963 = vld [vmem:[%s276 + $0x50] sm:$0xff]
        %v5964 = vld [vmem:[%s276 + $0x58] sm:$0xff]
        %v5965 = vld [vmem:[%s276 + $0x60] sm:$0xff]
        %v5966 = vld [vmem:[%s276 + $0x68] sm:$0xff]
        %v5967 = vld [vmem:[%s276 + $0x70] sm:$0xff]
        %v5968 = vld [vmem:[%s276 + $0x78] sm:$0xff]
        %v5969 = vld [vmem:[%s276 + $0x80] sm:$0xff]
        %v5970 = vld [vmem:[%s276 + $0x88] sm:$0xff]
        %v5971 = vld [vmem:[%s276 + $0x90] sm:$0xff]
        %v5972 = vld [vmem:[%s276 + $0x98] sm:$0xff]
        %v5973 = vld [vmem:[%s276 + $0xa0] sm:$0xff]
        %v5974 = vld [vmem:[%s276 + $0xa8] sm:$0xff]
        %v5975 = vld [vmem:[%s276 + $0xb0] sm:$0xff]
        %v5976 = vld [vmem:[%s276 + $0xb8] sm:$0xff]
        %v5977 = vld [vmem:[%s276 + $0xc0] sm:$0xff]
        %v5978 = vld [vmem:[%s276 + $0xc8] sm:$0xff]
        %v5979 = vld [vmem:[%s276 + $0xd0] sm:$0xff]
        %v5980 = vld [vmem:[%s276 + $0xd8] sm:$0xff]
        %v5981 = vld [vmem:[%s276 + $0xe0] sm:$0xff]
        %v5982 = vld [vmem:[%s276 + $0xe8] sm:$0xff]
        %v5983 = vld [vmem:[%s276 + $0xf0] sm:$0xff]
        %v5984 = vld [vmem:[%s276 + $0xf8] sm:$0xff]
        %v5985 = vld [vmem:[%s276 + $0x100] sm:$0xff]
        %v5986 = vld [vmem:[%s276 + $0x108] sm:$0xff]
        %v5987 = vld [vmem:[%s276 + $0x110] sm:$0xff]
        %v5988 = vld [vmem:[%s276 + $0x118] sm:$0xff]
        %v5989 = vld [vmem:[%s276 + $0x120] sm:$0xff]
        %v5990 = vld [vmem:[%s276 + $0x128] sm:$0xff]
        %v5991 = vld [vmem:[%s276 + $0x130] sm:$0xff]
        %v5992 = vld [vmem:[%s276 + $0x138] sm:$0xff]
        %v5993 = vld [vmem:[%s276 + $0x140] sm:$0xff]
        %v5994 = vld [vmem:[%s276 + $0x148] sm:$0xff]
        %v5995 = vld [vmem:[%s276 + $0x150] sm:$0xff]
        %v5996 = vld [vmem:[%s276 + $0x158] sm:$0xff]
        %v5997 = vld [vmem:[%s276 + $0x160] sm:$0xff]
        %v5998 = vld [vmem:[%s276 + $0x168] sm:$0xff]
        %v5999 = vld [vmem:[%s276 + $0x170] sm:$0xff]
        %v6000 = vld [vmem:[%s276 + $0x178] sm:$0xff]
        %v6001 = vld [vmem:[%s276 + $0x180] sm:$0xff]
        %v6002 = vld [vmem:[%s276 + $0x188] sm:$0xff]
        %v6003 = vld [vmem:[%s276 + $0x190] sm:$0xff]
        %v6004 = vld [vmem:[%s276 + $0x198] sm:$0xff]
        %v6005 = vld [vmem:[%s276 + $0x1a0] sm:$0xff]
        %v6006 = vld [vmem:[%s276 + $0x1a8] sm:$0xff]
        %v6007 = vld [vmem:[%s276 + $0x1b0] sm:$0xff]
        %v6008 = vld [vmem:[%s276 + $0x1b8] sm:$0xff]
        %v6009 = vld [vmem:[%s276 + $0x1c0] sm:$0xff]
        %v6010 = vld [vmem:[%s276 + $0x1c8] sm:$0xff]
        %v6011 = vld [vmem:[%s276 + $0x1d0] sm:$0xff]
        %v6012 = vld [vmem:[%s276 + $0x1d8] sm:$0xff]
        %v6013 = vld [vmem:[%s276 + $0x1e0] sm:$0xff]
        %v6014 = vld [vmem:[%s276 + $0x1e8] sm:$0xff]
        %v6015 = vld [vmem:[%s276 + $0x1f0] sm:$0xff]
        %v6016 = vld [vmem:[%s276 + $0x1f8] sm:$0xff]
        %v6017 = vld [vmem:[%s5] sm:$0xff]
        %v6018 = vld [vmem:[%s5 + $0x8] sm:$0xff]
        %v6019 = vld [vmem:[%s5 + $0x10] sm:$0xff]
        %v6020 = vld [vmem:[%s5 + $0x18] sm:$0xff]
        %v6021 = vld [vmem:[%s6] sm:$0x1]
        %v6023 = vlaneseq
        %v6024 = vshrl.u32 %v6023, 7
        %v6025 = vsub.s32 0, %v6024
        %v6026 = vrot.slane %v6021, %v6025
        %vm6028 = vcmask 261120
        %v6030 = vsel %vm6028, %v5889, 0
        %v6033 = vsel %vm6028, %v5890, 0
        %v6036 = vsel %vm6028, %v5891, 0
        %v6039 = vsel %vm6028, %v5892, 0
        %v6042 = vsel %vm6028, %v5893, 0
        %v6045 = vsel %vm6028, %v5894, 0
        %v6048 = vsel %vm6028, %v5895, 0
        %v6051 = vsel %vm6028, %v5896, 0
        %v6054 = vsel %vm6028, %v5897, 0
        %v6057 = vsel %vm6028, %v5898, 0
        %v6060 = vsel %vm6028, %v5899, 0
        %v6063 = vsel %vm6028, %v5900, 0
        %v6066 = vsel %vm6028, %v5901, 0
        %v6069 = vsel %vm6028, %v5902, 0
        %v6072 = vsel %vm6028, %v5903, 0
        %v6075 = vsel %vm6028, %v5904, 0
        %v6078 = vsel %vm6028, %v5905, 0
        %v6081 = vsel %vm6028, %v5906, 0
        %v6084 = vsel %vm6028, %v5907, 0
        %v6087 = vsel %vm6028, %v5908, 0
        %v6090 = vsel %vm6028, %v5909, 0
        %v6093 = vsel %vm6028, %v5910, 0
        %v6096 = vsel %vm6028, %v5911, 0
        %v6099 = vsel %vm6028, %v5912, 0
        %v6102 = vsel %vm6028, %v5913, 0
        %v6105 = vsel %vm6028, %v5914, 0
        %v6108 = vsel %vm6028, %v5915, 0
        %v6111 = vsel %vm6028, %v5916, 0
        %v6114 = vsel %vm6028, %v5917, 0
        %v6117 = vsel %vm6028, %v5918, 0
        %v6120 = vsel %vm6028, %v5919, 0
        %v6123 = vsel %vm6028, %v5920, 0
        %v6126 = vsel %vm6028, %v5921, 0
        %v6129 = vsel %vm6028, %v5922, 0
        %v6132 = vsel %vm6028, %v5923, 0
        %v6135 = vsel %vm6028, %v5924, 0
        %v6138 = vsel %vm6028, %v5925, 0
        %v6141 = vsel %vm6028, %v5926, 0
        %v6144 = vsel %vm6028, %v5927, 0
        %v6147 = vsel %vm6028, %v5928, 0
        %v6150 = vsel %vm6028, %v5929, 0
        %v6153 = vsel %vm6028, %v5930, 0
        %v6156 = vsel %vm6028, %v5931, 0
        %v6159 = vsel %vm6028, %v5932, 0
        %v6162 = vsel %vm6028, %v5933, 0
        %v6165 = vsel %vm6028, %v5934, 0
        %v6168 = vsel %vm6028, %v5935, 0
        %v6171 = vsel %vm6028, %v5936, 0
        %v6174 = vsel %vm6028, %v5937, 0
        %v6177 = vsel %vm6028, %v5938, 0
        %v6180 = vsel %vm6028, %v5939, 0
        %v6183 = vsel %vm6028, %v5940, 0
        %v6186 = vsel %vm6028, %v5941, 0
        %v6189 = vsel %vm6028, %v5942, 0
        %v6192 = vsel %vm6028, %v5943, 0
        %v6195 = vsel %vm6028, %v5944, 0
        %v6198 = vsel %vm6028, %v5945, 0
        %v6201 = vsel %vm6028, %v5946, 0
        %v6204 = vsel %vm6028, %v5947, 0
        %v6207 = vsel %vm6028, %v5948, 0
        %v6210 = vsel %vm6028, %v5949, 0
        %v6213 = vsel %vm6028, %v5950, 0
        %v6216 = vsel %vm6028, %v5951, 0
        %v6219 = vsel %vm6028, %v5952, 0
        %6221 = vmatprep.subr.mxu0 0.0
        %6222 = vmatpush1.msra.mxu0 %v6017
        %6223 = vmatprep.subr.mxu0 0.0
        %6224 = vmatpush1.msra.mxu0 %v6018
        %6225 = vmatprep.subr.mxu0 0.0
        %6226 = vmatpush1.msra.mxu0 %v6019
        %6227 = vmatprep.subr.mxu0 0.0
        %6228 = vmatpush1.msra.mxu0 %v6020
        %6229 = vmatprep.subr.mxu0 0.0
        %6230 = vmatpush1.msra.mxu0 0.0
        %6231 = vmatprep.subr.mxu0 0.0
        %6232 = vmatpush1.msra.mxu0 0.0
        %6233 = vmatprep.subr.mxu0 0.0
        %6234 = vmatpush1.msra.mxu0 0.0
        %6235 = vmatprep.subr.mxu0 0.0
        %6236 = vmatpush1.msra.mxu0 0.0
        %6237 = vmatprep.subr.mxu0 0.0
        %6238 = vmatpush1.msra.mxu0 0.0
        %6239 = vmatprep.subr.mxu0 0.0
        %6240 = vmatpush1.msra.mxu0 0.0
        %6241 = vmatprep.subr.mxu0 0.0
        %6242 = vmatpush1.msra.mxu0 0.0
        %6243 = vmatprep.subr.mxu0 0.0
        %6244 = vmatpush1.msra.mxu0 0.0
        %6245 = vmatprep.subr.mxu0 0.0
        %6246 = vmatpush1.msra.mxu0 0.0
        %6247 = vmatprep.subr.mxu0 0.0
        %6248 = vmatpush1.msra.mxu0 0.0
        %6249 = vmatprep.subr.mxu0 0.0
        %6250 = vmatpush1.msra.mxu0 0.0
        %6251 = vmatprep.subr.mxu0 0.0
        %6252 = vmatpush1.msra.mxu0 0.0
        %6253 = vmatprep.subr.mxu0 0.0
        %6254 = vmatpush1.msra.mxu0 0.0
        %6255 = vmatprep.subr.mxu0 0.0
        %6256 = vmatpush1.msra.mxu0 0.0
        %6257 = vmatprep.subr.mxu0 0.0
        %6258 = vmatpush1.msra.mxu0 0.0
        %6259 = vmatprep.subr.mxu0 0.0
        %6260 = vmatpush1.msra.mxu0 0.0
        %6261 = vmatprep.subr.mxu0 0.0
        %6262 = vmatpush1.msra.mxu0 0.0
        %6263 = vmatprep.subr.mxu0 0.0
        %6264 = vmatpush1.msra.mxu0 0.0
        %6265 = vmatprep.subr.mxu0 0.0
        %6266 = vmatpush1.msra.mxu0 0.0
        %6267 = vmatprep.subr.mxu0 0.0
        %6268 = vmatpush1.msra.mxu0 0.0
        %6269 = vmatprep.subr.mxu0 0.0
        %6270 = vmatpush1.msra.mxu0 0.0
        %6271 = vmatprep.subr.mxu0 0.0
        %6272 = vmatpush1.msra.mxu0 0.0
        %6273 = vmatprep.subr.mxu0 0.0
        %6274 = vmatpush1.msra.mxu0 0.0
        %6275 = vmatprep.subr.mxu0 0.0
        %6276 = vmatpush1.msra.mxu0 0.0
        %6277 = vmatprep.subr.mxu0 0.0
        %6278 = vmatpush1.msra.mxu0 0.0
        %6279 = vmatprep.subr.mxu0 0.0
        %6280 = vmatpush1.msra.mxu0 0.0
        %6281 = vmatprep.subr.mxu0 0.0
        %6282 = vmatpush1.msra.mxu0 0.0
        %6283 = vmatprep.subr.mxu0 0.0
        %6284 = vmatpush1.msra.mxu0 0.0
        %6285 = vmatprep.mubr.f32.mxu0 0.0
        %6286 = vmatmul.mubr.f32.gmra.mrb[0].mxu0 %v6030
        %v6287 = vpop.f32.mrb[0].mxu0
        %v6288 = vadd.f32 %v6026, %v6287
        %v6289 = vpop.f32.mrb[0].mxu0
        %6290 = vmatprep.mubr.f32.mxu0 0.0
        %6291 = vmatmul.mubr.f32.gmra.mrb[0].mxu0 %v6033
        %v6292 = vpop.f32.mrb[0].mxu0
        %v6293 = vadd.f32 %v6026, %v6292
        %v6294 = vpop.f32.mrb[0].mxu0
        %6295 = vmatprep.mubr.f32.mxu0 0.0
        %6296 = vmatmul.mubr.f32.gmra.mrb[0].mxu0 %v6036
        %v6297 = vpop.f32.mrb[0].mxu0
        %v6298 = vadd.f32 %v6026, %v6297
        %v6299 = vpop.f32.mrb[0].mxu0
        %6300 = vmatprep.mubr.f32.mxu0 0.0
        %6301 = vmatmul.mubr.f32.gmra.mrb[0].mxu0 %v6039
        %v6302 = vpop.f32.mrb[0].mxu0
        %v6303 = vadd.f32 %v6026, %v6302
        %v6304 = vpop.f32.mrb[0].mxu0
        %6305 = vmatprep.mubr.f32.mxu0 0.0
        %6306 = vmatmul.mubr.f32.gmra.mrb[0].mxu0 %v6042
        %v6307 = vpop.f32.mrb[0].mxu0
        %v6308 = vadd.f32 %v6026, %v6307
        %v6309 = vpop.f32.mrb[0].mxu0
        %6310 = vmatprep.mubr.f32.mxu0 0.0
        %6311 = vmatmul.mubr.f32.gmra.mrb[0].mxu0 %v6045
        %v6312 = vpop.f32.mrb[0].mxu0
        %v6313 = vadd.f32 %v6026, %v6312
        %v6314 = vpop.f32.mrb[0].mxu0
        %6315 = vmatprep.mubr.f32.mxu0 0.0
        %6316 = vmatmul.mubr.f32.gmra.mrb[0].mxu0 %v6048
        %v6317 = vpop.f32.mrb[0].mxu0
        %v6318 = vadd.f32 %v6026, %v6317
        %v6319 = vpop.f32.mrb[0].mxu0
        %6320 = vmatprep.mubr.f32.mxu0 0.0
        %6321 = vmatmul.mubr.f32.gmra.mrb[0].mxu0 %v6051
        %v6322 = vpop.f32.mrb[0].mxu0
        %v6323 = vadd.f32 %v6026, %v6322
        %v6324 = vpop.f32.mrb[0].mxu0
        %6325 = vmatprep.mubr.f32.mxu0 0.0
        %6326 = vmatmul.mubr.f32.gmra.mrb[0].mxu0 %v6054
        %v6327 = vpop.f32.mrb[0].mxu0
        %v6328 = vadd.f32 %v6026, %v6327
        %v6329 = vpop.f32.mrb[0].mxu0
        %6330 = vmatprep.mubr.f32.mxu0 0.0
        %6331 = vmatmul.mubr.f32.gmra.mrb[0].mxu0 %v6057
        %v6332 = vpop.f32.mrb[0].mxu0
        %v6333 = vadd.f32 %v6026, %v6332
        %v6334 = vpop.f32.mrb[0].mxu0
        %6335 = vmatprep.mubr.f32.mxu0 0.0
        %6336 = vmatmul.mubr.f32.gmra.mrb[0].mxu0 %v6060
        %v6337 = vpop.f32.mrb[0].mxu0
        %v6338 = vadd.f32 %v6026, %v6337
        %v6339 = vpop.f32.mrb[0].mxu0
        %6340 = vmatprep.mubr.f32.mxu0 0.0
        %6341 = vmatmul.mubr.f32.gmra.mrb[0].mxu0 %v6063
        %v6342 = vpop.f32.mrb[0].mxu0
        %v6343 = vadd.f32 %v6026, %v6342
        %v6344 = vpop.f32.mrb[0].mxu0
        %6345 = vmatprep.mubr.f32.mxu0 0.0
        %6346 = vmatmul.mubr.f32.gmra.mrb[0].mxu0 %v6066
        %v6347 = vpop.f32.mrb[0].mxu0
        %v6348 = vadd.f32 %v6026, %v6347
        %v6349 = vpop.f32.mrb[0].mxu0
        %6350 = vmatprep.mubr.f32.mxu0 0.0
        %6351 = vmatmul.mubr.f32.gmra.mrb[0].mxu0 %v6069
        %v6352 = vpop.f32.mrb[0].mxu0
        %v6353 = vadd.f32 %v6026, %v6352
        %v6354 = vpop.f32.mrb[0].mxu0
        %6355 = vmatprep.mubr.f32.mxu0 0.0
        %6356 = vmatmul.mubr.f32.gmra.mrb[0].mxu0 %v6072
        %v6357 = vpop.f32.mrb[0].mxu0
        %v6358 = vadd.f32 %v6026, %v6357
        %v6359 = vpop.f32.mrb[0].mxu0
        %6360 = vmatprep.mubr.f32.mxu0 0.0
        %6361 = vmatmul.mubr.f32.gmra.mrb[0].mxu0 %v6075
        %v6362 = vpop.f32.mrb[0].mxu0
        %v6363 = vadd.f32 %v6026, %v6362
        %v6364 = vpop.f32.mrb[0].mxu0
        %6365 = vmatprep.mubr.f32.mxu0 0.0
        %6366 = vmatmul.mubr.f32.gmra.mrb[0].mxu0 %v6078
        %v6367 = vpop.f32.mrb[0].mxu0
        %v6368 = vadd.f32 %v6026, %v6367
        %v6369 = vpop.f32.mrb[0].mxu0
        %6370 = vmatprep.mubr.f32.mxu0 0.0
        %6371 = vmatmul.mubr.f32.gmra.mrb[0].mxu0 %v6081
        %v6372 = vpop.f32.mrb[0].mxu0
        %v6373 = vadd.f32 %v6026, %v6372
        %v6374 = vpop.f32.mrb[0].mxu0
        %6375 = vmatprep.mubr.f32.mxu0 0.0
        %6376 = vmatmul.mubr.f32.gmra.mrb[0].mxu0 %v6084
        %v6377 = vpop.f32.mrb[0].mxu0
        %v6378 = vadd.f32 %v6026, %v6377
        %v6379 = vpop.f32.mrb[0].mxu0
        %6380 = vmatprep.mubr.f32.mxu0 0.0
        %6381 = vmatmul.mubr.f32.gmra.mrb[0].mxu0 %v6087
        %v6382 = vpop.f32.mrb[0].mxu0
        %v6383 = vadd.f32 %v6026, %v6382
        %v6384 = vpop.f32.mrb[0].mxu0
        %6385 = vmatprep.mubr.f32.mxu0 0.0
        %6386 = vmatmul.mubr.f32.gmra.mrb[0].mxu0 %v6090
        %v6387 = vpop.f32.mrb[0].mxu0
        %v6388 = vadd.f32 %v6026, %v6387
        %v6389 = vpop.f32.mrb[0].mxu0
        %6390 = vmatprep.mubr.f32.mxu0 0.0
        %6391 = vmatmul.mubr.f32.gmra.mrb[0].mxu0 %v6093
        %v6392 = vpop.f32.mrb[0].mxu0
        %v6393 = vadd.f32 %v6026, %v6392
        %v6394 = vpop.f32.mrb[0].mxu0
        %6395 = vmatprep.mubr.f32.mxu0 0.0
        %6396 = vmatmul.mubr.f32.gmra.mrb[0].mxu0 %v6096
        %v6397 = vpop.f32.mrb[0].mxu0
        %v6398 = vadd.f32 %v6026, %v6397
        %v6399 = vpop.f32.mrb[0].mxu0
        %6400 = vmatprep.mubr.f32.mxu0 0.0
        %6401 = vmatmul.mubr.f32.gmra.mrb[0].mxu0 %v6099
        %v6402 = vpop.f32.mrb[0].mxu0
        %v6403 = vadd.f32 %v6026, %v6402
        %v6404 = vpop.f32.mrb[0].mxu0
        %6405 = vmatprep.mubr.f32.mxu0 0.0
        %6406 = vmatmul.mubr.f32.gmra.mrb[0].mxu0 %v6102
        %v6407 = vpop.f32.mrb[0].mxu0
        %v6408 = vadd.f32 %v6026, %v6407
        %v6409 = vpop.f32.mrb[0].mxu0
        %6410 = vmatprep.mubr.f32.mxu0 0.0
        %6411 = vmatmul.mubr.f32.gmra.mrb[0].mxu0 %v6105
        %v6412 = vpop.f32.mrb[0].mxu0
        %v6413 = vadd.f32 %v6026, %v6412
        %v6414 = vpop.f32.mrb[0].mxu0
        %6415 = vmatprep.mubr.f32.mxu0 0.0
        %6416 = vmatmul.mubr.f32.gmra.mrb[0].mxu0 %v6108
        %v6417 = vpop.f32.mrb[0].mxu0
        %v6418 = vadd.f32 %v6026, %v6417
        %v6419 = vpop.f32.mrb[0].mxu0
        %6420 = vmatprep.mubr.f32.mxu0 0.0
        %6421 = vmatmul.mubr.f32.gmra.mrb[0].mxu0 %v6111
        %v6422 = vpop.f32.mrb[0].mxu0
        %v6423 = vadd.f32 %v6026, %v6422
        %v6424 = vpop.f32.mrb[0].mxu0
        %6425 = vmatprep.mubr.f32.mxu0 0.0
        %6426 = vmatmul.mubr.f32.gmra.mrb[0].mxu0 %v6114
        %v6427 = vpop.f32.mrb[0].mxu0
        %v6428 = vadd.f32 %v6026, %v6427
        %v6429 = vpop.f32.mrb[0].mxu0
        %6430 = vmatprep.mubr.f32.mxu0 0.0
        %6431 = vmatmul.mubr.f32.gmra.mrb[0].mxu0 %v6117
        %v6432 = vpop.f32.mrb[0].mxu0
        %v6433 = vadd.f32 %v6026, %v6432
        %v6434 = vpop.f32.mrb[0].mxu0
        %6435 = vmatprep.mubr.f32.mxu0 0.0
        %6436 = vmatmul.mubr.f32.gmra.mrb[0].mxu0 %v6120
        %v6437 = vpop.f32.mrb[0].mxu0
        %v6438 = vadd.f32 %v6026, %v6437
        %v6439 = vpop.f32.mrb[0].mxu0
        %6440 = vmatprep.mubr.f32.mxu0 0.0
        %6441 = vmatmul.mubr.f32.gmra.mrb[0].mxu0 %v6123
        %v6442 = vpop.f32.mrb[0].mxu0
        %v6443 = vadd.f32 %v6026, %v6442
        %v6444 = vpop.f32.mrb[0].mxu0
        %6445 = vmatprep.mubr.f32.mxu0 0.0
        %6446 = vmatmul.mubr.f32.gmra.mrb[0].mxu0 %v6126
        %v6447 = vpop.f32.mrb[0].mxu0
        %v6448 = vadd.f32 %v6026, %v6447
        %v6449 = vpop.f32.mrb[0].mxu0
        %6450 = vmatprep.mubr.f32.mxu0 0.0
        %6451 = vmatmul.mubr.f32.gmra.mrb[0].mxu0 %v6129
        %v6452 = vpop.f32.mrb[0].mxu0
        %v6453 = vadd.f32 %v6026, %v6452
        %v6454 = vpop.f32.mrb[0].mxu0
        %6455 = vmatprep.mubr.f32.mxu0 0.0
        %6456 = vmatmul.mubr.f32.gmra.mrb[0].mxu0 %v6132
        %v6457 = vpop.f32.mrb[0].mxu0
        %v6458 = vadd.f32 %v6026, %v6457
        %v6459 = vpop.f32.mrb[0].mxu0
        %6460 = vmatprep.mubr.f32.mxu0 0.0
        %6461 = vmatmul.mubr.f32.gmra.mrb[0].mxu0 %v6135
        %v6462 = vpop.f32.mrb[0].mxu0
        %v6463 = vadd.f32 %v6026, %v6462
        %v6464 = vpop.f32.mrb[0].mxu0
        %6465 = vmatprep.mubr.f32.mxu0 0.0
        %6466 = vmatmul.mubr.f32.gmra.mrb[0].mxu0 %v6138
        %v6467 = vpop.f32.mrb[0].mxu0
        %v6468 = vadd.f32 %v6026, %v6467
        %v6469 = vpop.f32.mrb[0].mxu0
        %6470 = vmatprep.mubr.f32.mxu0 0.0
        %6471 = vmatmul.mubr.f32.gmra.mrb[0].mxu0 %v6141
        %v6472 = vpop.f32.mrb[0].mxu0
        %v6473 = vadd.f32 %v6026, %v6472
        %v6474 = vpop.f32.mrb[0].mxu0
        %6475 = vmatprep.mubr.f32.mxu0 0.0
        %6476 = vmatmul.mubr.f32.gmra.mrb[0].mxu0 %v6144
        %v6477 = vpop.f32.mrb[0].mxu0
        %v6478 = vadd.f32 %v6026, %v6477
        %v6479 = vpop.f32.mrb[0].mxu0
        %6480 = vmatprep.mubr.f32.mxu0 0.0
        %6481 = vmatmul.mubr.f32.gmra.mrb[0].mxu0 %v6147
        %v6482 = vpop.f32.mrb[0].mxu0
        %v6483 = vadd.f32 %v6026, %v6482
        %v6484 = vpop.f32.mrb[0].mxu0
        %6485 = vmatprep.mubr.f32.mxu0 0.0
        %6486 = vmatmul.mubr.f32.gmra.mrb[0].mxu0 %v6150
        %v6487 = vpop.f32.mrb[0].mxu0
        %v6488 = vadd.f32 %v6026, %v6487
        %v6489 = vpop.f32.mrb[0].mxu0
        %6490 = vmatprep.mubr.f32.mxu0 0.0
        %6491 = vmatmul.mubr.f32.gmra.mrb[0].mxu0 %v6153
        %v6492 = vpop.f32.mrb[0].mxu0
        %v6493 = vadd.f32 %v6026, %v6492
        %v6494 = vpop.f32.mrb[0].mxu0
        %6495 = vmatprep.mubr.f32.mxu0 0.0
        %6496 = vmatmul.mubr.f32.gmra.mrb[0].mxu0 %v6156
        %v6497 = vpop.f32.mrb[0].mxu0
        %v6498 = vadd.f32 %v6026, %v6497
        %v6499 = vpop.f32.mrb[0].mxu0
        %6500 = vmatprep.mubr.f32.mxu0 0.0
        %6501 = vmatmul.mubr.f32.gmra.mrb[0].mxu0 %v6159
        %v6502 = vpop.f32.mrb[0].mxu0
        %v6503 = vadd.f32 %v6026, %v6502
        %v6504 = vpop.f32.mrb[0].mxu0
        %6505 = vmatprep.mubr.f32.mxu0 0.0
        %6506 = vmatmul.mubr.f32.gmra.mrb[0].mxu0 %v6162
        %v6507 = vpop.f32.mrb[0].mxu0
        %v6508 = vadd.f32 %v6026, %v6507
        %v6509 = vpop.f32.mrb[0].mxu0
        %6510 = vmatprep.mubr.f32.mxu0 0.0
        %6511 = vmatmul.mubr.f32.gmra.mrb[0].mxu0 %v6165
        %v6512 = vpop.f32.mrb[0].mxu0
        %v6513 = vadd.f32 %v6026, %v6512
        %v6514 = vpop.f32.mrb[0].mxu0
        %6515 = vmatprep.mubr.f32.mxu0 0.0
        %6516 = vmatmul.mubr.f32.gmra.mrb[0].mxu0 %v6168
        %v6517 = vpop.f32.mrb[0].mxu0
        %v6518 = vadd.f32 %v6026, %v6517
        %v6519 = vpop.f32.mrb[0].mxu0
        %6520 = vmatprep.mubr.f32.mxu0 0.0
        %6521 = vmatmul.mubr.f32.gmra.mrb[0].mxu0 %v6171
        %v6522 = vpop.f32.mrb[0].mxu0
        %v6523 = vadd.f32 %v6026, %v6522
        %v6524 = vpop.f32.mrb[0].mxu0
        %6525 = vmatprep.mubr.f32.mxu0 0.0
        %6526 = vmatmul.mubr.f32.gmra.mrb[0].mxu0 %v6174
        %v6527 = vpop.f32.mrb[0].mxu0
        %v6528 = vadd.f32 %v6026, %v6527
        %v6529 = vpop.f32.mrb[0].mxu0
        %6530 = vmatprep.mubr.f32.mxu0 0.0
        %6531 = vmatmul.mubr.f32.gmra.mrb[0].mxu0 %v6177
        %v6532 = vpop.f32.mrb[0].mxu0
        %v6533 = vadd.f32 %v6026, %v6532
        %v6534 = vpop.f32.mrb[0].mxu0
        %6535 = vmatprep.mubr.f32.mxu0 0.0
        %6536 = vmatmul.mubr.f32.gmra.mrb[0].mxu0 %v6180
        %v6537 = vpop.f32.mrb[0].mxu0
        %v6538 = vadd.f32 %v6026, %v6537
        %v6539 = vpop.f32.mrb[0].mxu0
        %6540 = vmatprep.mubr.f32.mxu0 0.0
        %6541 = vmatmul.mubr.f32.gmra.mrb[0].mxu0 %v6183
        %v6542 = vpop.f32.mrb[0].mxu0
        %v6543 = vadd.f32 %v6026, %v6542
        %v6544 = vpop.f32.mrb[0].mxu0
        %6545 = vmatprep.mubr.f32.mxu0 0.0
        %6546 = vmatmul.mubr.f32.gmra.mrb[0].mxu0 %v6186
        %v6547 = vpop.f32.mrb[0].mxu0
        %v6548 = vadd.f32 %v6026, %v6547
        %v6549 = vpop.f32.mrb[0].mxu0
        %6550 = vmatprep.mubr.f32.mxu0 0.0
        %6551 = vmatmul.mubr.f32.gmra.mrb[0].mxu0 %v6189
        %v6552 = vpop.f32.mrb[0].mxu0
        %v6553 = vadd.f32 %v6026, %v6552
        %v6554 = vpop.f32.mrb[0].mxu0
        %6555 = vmatprep.mubr.f32.mxu0 0.0
        %6556 = vmatmul.mubr.f32.gmra.mrb[0].mxu0 %v6192
        %v6557 = vpop.f32.mrb[0].mxu0
        %v6558 = vadd.f32 %v6026, %v6557
        %v6559 = vpop.f32.mrb[0].mxu0
        %6560 = vmatprep.mubr.f32.mxu0 0.0
        %6561 = vmatmul.mubr.f32.gmra.mrb[0].mxu0 %v6195
        %v6562 = vpop.f32.mrb[0].mxu0
        %v6563 = vadd.f32 %v6026, %v6562
        %v6564 = vpop.f32.mrb[0].mxu0
        %6565 = vmatprep.mubr.f32.mxu0 0.0
        %6566 = vmatmul.mubr.f32.gmra.mrb[0].mxu0 %v6198
        %v6567 = vpop.f32.mrb[0].mxu0
        %v6568 = vadd.f32 %v6026, %v6567
        %v6569 = vpop.f32.mrb[0].mxu0
        %6570 = vmatprep.mubr.f32.mxu0 0.0
        %6571 = vmatmul.mubr.f32.gmra.mrb[0].mxu0 %v6201
        %v6572 = vpop.f32.mrb[0].mxu0
        %v6573 = vadd.f32 %v6026, %v6572
        %v6574 = vpop.f32.mrb[0].mxu0
        %6575 = vmatprep.mubr.f32.mxu0 0.0
        %6576 = vmatmul.mubr.f32.gmra.mrb[0].mxu0 %v6204
        %v6577 = vpop.f32.mrb[0].mxu0
        %v6578 = vadd.f32 %v6026, %v6577
        %v6579 = vpop.f32.mrb[0].mxu0
        %6580 = vmatprep.mubr.f32.mxu0 0.0
        %6581 = vmatmul.mubr.f32.gmra.mrb[0].mxu0 %v6207
        %v6582 = vpop.f32.mrb[0].mxu0
        %v6583 = vadd.f32 %v6026, %v6582
        %v6584 = vpop.f32.mrb[0].mxu0
        %6585 = vmatprep.mubr.f32.mxu0 0.0
        %6586 = vmatmul.mubr.f32.gmra.mrb[0].mxu0 %v6210
        %v6587 = vpop.f32.mrb[0].mxu0
        %v6588 = vadd.f32 %v6026, %v6587
        %v6589 = vpop.f32.mrb[0].mxu0
        %6590 = vmatprep.mubr.f32.mxu0 0.0
        %6591 = vmatmul.mubr.f32.gmra.mrb[0].mxu0 %v6213
        %v6592 = vpop.f32.mrb[0].mxu0
        %v6593 = vadd.f32 %v6026, %v6592
        %v6594 = vpop.f32.mrb[0].mxu0
        %6595 = vmatprep.mubr.f32.mxu0 0.0
        %6596 = vmatmul.mubr.f32.gmra.mrb[0].mxu0 %v6216
        %v6597 = vpop.f32.mrb[0].mxu0
        %v6598 = vadd.f32 %v6026, %v6597
        %v6599 = vpop.f32.mrb[0].mxu0
        %6600 = vmatprep.mubr.f32.mxu0 0.0
        %6601 = vmatmul.mubr.f32.gmra.mrb[0].mxu0 %v6219
        %v6602 = vpop.f32.mrb[0].mxu0
        %v6603 = vadd.f32 %v6026, %v6602
        %v6604 = vpop.f32.mrb[0].mxu0
        %6605 = vdwg.mxu0
        %v6606 = vadd.f32 %v6288, %v5953
        %v6607 = vadd.f32 %v6293, %v5954
        %v6608 = vadd.f32 %v6298, %v5955
        %v6609 = vadd.f32 %v6303, %v5956
        %v6610 = vadd.f32 %v6308, %v5957
        %v6611 = vadd.f32 %v6313, %v5958
        %v6612 = vadd.f32 %v6318, %v5959
        %v6613 = vadd.f32 %v6323, %v5960
        %v6614 = vadd.f32 %v6328, %v5961
        %v6615 = vadd.f32 %v6333, %v5962
        %v6616 = vadd.f32 %v6338, %v5963
        %v6617 = vadd.f32 %v6343, %v5964
        %v6618 = vadd.f32 %v6348, %v5965
        %v6619 = vadd.f32 %v6353, %v5966
        %v6620 = vadd.f32 %v6358, %v5967
        %v6621 = vadd.f32 %v6363, %v5968
        %v6622 = vadd.f32 %v6368, %v5969
        %v6623 = vadd.f32 %v6373, %v5970
        %v6624 = vadd.f32 %v6378, %v5971
        %v6625 = vadd.f32 %v6383, %v5972
        %v6626 = vadd.f32 %v6388, %v5973
        %v6627 = vadd.f32 %v6393, %v5974
        %v6628 = vadd.f32 %v6398, %v5975
        %v6629 = vadd.f32 %v6403, %v5976
        %v6630 = vadd.f32 %v6408, %v5977
        %v6631 = vadd.f32 %v6413, %v5978
        %v6632 = vadd.f32 %v6418, %v5979
        %v6633 = vadd.f32 %v6423, %v5980
        %v6634 = vadd.f32 %v6428, %v5981
        %v6635 = vadd.f32 %v6433, %v5982
        %v6636 = vadd.f32 %v6438, %v5983
        %v6637 = vadd.f32 %v6443, %v5984
        %v6638 = vadd.f32 %v6448, %v5985
        %v6639 = vadd.f32 %v6453, %v5986
        %v6640 = vadd.f32 %v6458, %v5987
        %v6641 = vadd.f32 %v6463, %v5988
        %v6642 = vadd.f32 %v6468, %v5989
        %v6643 = vadd.f32 %v6473, %v5990
        %v6644 = vadd.f32 %v6478, %v5991
        %v6645 = vadd.f32 %v6483, %v5992
        %v6646 = vadd.f32 %v6488, %v5993
        %v6647 = vadd.f32 %v6493, %v5994
        %v6648 = vadd.f32 %v6498, %v5995
        %v6649 = vadd.f32 %v6503, %v5996
        %v6650 = vadd.f32 %v6508, %v5997
        %v6651 = vadd.f32 %v6513, %v5998
        %v6652 = vadd.f32 %v6518, %v5999
        %v6653 = vadd.f32 %v6523, %v6000
        %v6654 = vadd.f32 %v6528, %v6001
        %v6655 = vadd.f32 %v6533, %v6002
        %v6656 = vadd.f32 %v6538, %v6003
        %v6657 = vadd.f32 %v6543, %v6004
        %v6658 = vadd.f32 %v6548, %v6005
        %v6659 = vadd.f32 %v6553, %v6006
        %v6660 = vadd.f32 %v6558, %v6007
        %v6661 = vadd.f32 %v6563, %v6008
        %v6662 = vadd.f32 %v6568, %v6009
        %v6663 = vadd.f32 %v6573, %v6010
        %v6664 = vadd.f32 %v6578, %v6011
        %v6665 = vadd.f32 %v6583, %v6012
        %v6666 = vadd.f32 %v6588, %v6013
        %v6667 = vadd.f32 %v6593, %v6014
        %v6668 = vadd.f32 %v6598, %v6015
        %v6669 = vadd.f32 %v6603, %v6016
        %v6670 = vmax.f32 %v6606, 0.0
        %v6671 = vmax.f32 %v6607, 0.0
        %v6672 = vmax.f32 %v6608, 0.0
        %v6673 = vmax.f32 %v6609, 0.0
        %v6674 = vmax.f32 %v6610, 0.0
        %v6675 = vmax.f32 %v6611, 0.0
        %v6676 = vmax.f32 %v6612, 0.0
        %v6677 = vmax.f32 %v6613, 0.0
        %v6678 = vmax.f32 %v6614, 0.0
        %v6679 = vmax.f32 %v6615, 0.0
        %v6680 = vmax.f32 %v6616, 0.0
        %v6681 = vmax.f32 %v6617, 0.0
        %v6682 = vmax.f32 %v6618, 0.0
        %v6683 = vmax.f32 %v6619, 0.0
        %v6684 = vmax.f32 %v6620, 0.0
        %v6685 = vmax.f32 %v6621, 0.0
        %v6686 = vmax.f32 %v6622, 0.0
        %v6687 = vmax.f32 %v6623, 0.0
        %v6688 = vmax.f32 %v6624, 0.0
        %v6689 = vmax.f32 %v6625, 0.0
        %v6690 = vmax.f32 %v6626, 0.0
        %v6691 = vmax.f32 %v6627, 0.0
        %v6692 = vmax.f32 %v6628, 0.0
        %v6693 = vmax.f32 %v6629, 0.0
        %v6694 = vmax.f32 %v6630, 0.0
        %v6695 = vmax.f32 %v6631, 0.0
        %v6696 = vmax.f32 %v6632, 0.0
        %v6697 = vmax.f32 %v6633, 0.0
        %v6698 = vmax.f32 %v6634, 0.0
        %v6699 = vmax.f32 %v6635, 0.0
        %v6700 = vmax.f32 %v6636, 0.0
        %v6701 = vmax.f32 %v6637, 0.0
        %v6702 = vmax.f32 %v6638, 0.0
        %v6703 = vmax.f32 %v6639, 0.0
        %v6704 = vmax.f32 %v6640, 0.0
        %v6705 = vmax.f32 %v6641, 0.0
        %v6706 = vmax.f32 %v6642, 0.0
        %v6707 = vmax.f32 %v6643, 0.0
        %v6708 = vmax.f32 %v6644, 0.0
        %v6709 = vmax.f32 %v6645, 0.0
        %v6710 = vmax.f32 %v6646, 0.0
        %v6711 = vmax.f32 %v6647, 0.0
        %v6712 = vmax.f32 %v6648, 0.0
        %v6713 = vmax.f32 %v6649, 0.0
        %v6714 = vmax.f32 %v6650, 0.0
        %v6715 = vmax.f32 %v6651, 0.0
        %v6716 = vmax.f32 %v6652, 0.0
        %v6717 = vmax.f32 %v6653, 0.0
        %v6718 = vmax.f32 %v6654, 0.0
        %v6719 = vmax.f32 %v6655, 0.0
        %v6720 = vmax.f32 %v6656, 0.0
        %v6721 = vmax.f32 %v6657, 0.0
        %v6722 = vmax.f32 %v6658, 0.0
        %v6723 = vmax.f32 %v6659, 0.0
        %v6724 = vmax.f32 %v6660, 0.0
        %v6725 = vmax.f32 %v6661, 0.0
        %v6726 = vmax.f32 %v6662, 0.0
        %v6727 = vmax.f32 %v6663, 0.0
        %v6728 = vmax.f32 %v6664, 0.0
        %v6729 = vmax.f32 %v6665, 0.0
        %v6730 = vmax.f32 %v6666, 0.0
        %v6731 = vmax.f32 %v6667, 0.0
        %v6732 = vmax.f32 %v6668, 0.0
        %v6733 = vmax.f32 %v6669, 0.0
        %6734 = vst [vmem:[%s271] sm:$0xff] %v6670
        %6735 = vst [vmem:[%s271 + $0x8] sm:$0xff] %v6671
        %6736 = vst [vmem:[%s271 + $0x10] sm:$0xff] %v6672
        %6737 = vst [vmem:[%s271 + $0x18] sm:$0xff] %v6673
        %6738 = vst [vmem:[%s271 + $0x20] sm:$0xff] %v6674
        %6739 = vst [vmem:[%s271 + $0x28] sm:$0xff] %v6675
        %6740 = vst [vmem:[%s271 + $0x30] sm:$0xff] %v6676
        %6741 = vst [vmem:[%s271 + $0x38] sm:$0xff] %v6677
        %6742 = vst [vmem:[%s271 + $0x40] sm:$0xff] %v6678
        %6743 = vst [vmem:[%s271 + $0x48] sm:$0xff] %v6679
        %6744 = vst [vmem:[%s271 + $0x50] sm:$0xff] %v6680
        %6745 = vst [vmem:[%s271 + $0x58] sm:$0xff] %v6681
        %6746 = vst [vmem:[%s271 + $0x60] sm:$0xff] %v6682
        %6747 = vst [vmem:[%s271 + $0x68] sm:$0xff] %v6683
        %6748 = vst [vmem:[%s271 + $0x70] sm:$0xff] %v6684
        %6749 = vst [vmem:[%s271 + $0x78] sm:$0xff] %v6685
        %6750 = vst [vmem:[%s271 + $0x80] sm:$0xff] %v6686
        %6751 = vst [vmem:[%s271 + $0x88] sm:$0xff] %v6687
        %6752 = vst [vmem:[%s271 + $0x90] sm:$0xff] %v6688
        %6753 = vst [vmem:[%s271 + $0x98] sm:$0xff] %v6689
        %6754 = vst [vmem:[%s271 + $0xa0] sm:$0xff] %v6690
        %6755 = vst [vmem:[%s271 + $0xa8] sm:$0xff] %v6691
        %6756 = vst [vmem:[%s271 + $0xb0] sm:$0xff] %v6692
        %6757 = vst [vmem:[%s271 + $0xb8] sm:$0xff] %v6693
        %6758 = vst [vmem:[%s271 + $0xc0] sm:$0xff] %v6694
        %6759 = vst [vmem:[%s271 + $0xc8] sm:$0xff] %v6695
        %6760 = vst [vmem:[%s271 + $0xd0] sm:$0xff] %v6696
        %6761 = vst [vmem:[%s271 + $0xd8] sm:$0xff] %v6697
        %6762 = vst [vmem:[%s271 + $0xe0] sm:$0xff] %v6698
        %6763 = vst [vmem:[%s271 + $0xe8] sm:$0xff] %v6699
        %6764 = vst [vmem:[%s271 + $0xf0] sm:$0xff] %v6700
        %6765 = vst [vmem:[%s271 + $0xf8] sm:$0xff] %v6701
        %6766 = vst [vmem:[%s271 + $0x100] sm:$0xff] %v6702
        %6767 = vst [vmem:[%s271 + $0x108] sm:$0xff] %v6703
        %6768 = vst [vmem:[%s271 + $0x110] sm:$0xff] %v6704
        %6769 = vst [vmem:[%s271 + $0x118] sm:$0xff] %v6705
        %6770 = vst [vmem:[%s271 + $0x120] sm:$0xff] %v6706
        %6771 = vst [vmem:[%s271 + $0x128] sm:$0xff] %v6707
        %6772 = vst [vmem:[%s271 + $0x130] sm:$0xff] %v6708
        %6773 = vst [vmem:[%s271 + $0x138] sm:$0xff] %v6709
        %6774 = vst [vmem:[%s271 + $0x140] sm:$0xff] %v6710
        %6775 = vst [vmem:[%s271 + $0x148] sm:$0xff] %v6711
        %6776 = vst [vmem:[%s271 + $0x150] sm:$0xff] %v6712
        %6777 = vst [vmem:[%s271 + $0x158] sm:$0xff] %v6713
        %6778 = vst [vmem:[%s271 + $0x160] sm:$0xff] %v6714
        %6779 = vst [vmem:[%s271 + $0x168] sm:$0xff] %v6715
        %6780 = vst [vmem:[%s271 + $0x170] sm:$0xff] %v6716
        %6781 = vst [vmem:[%s271 + $0x178] sm:$0xff] %v6717
        %6782 = vst [vmem:[%s271 + $0x180] sm:$0xff] %v6718
        %6783 = vst [vmem:[%s271 + $0x188] sm:$0xff] %v6719
        %6784 = vst [vmem:[%s271 + $0x190] sm:$0xff] %v6720
        %6785 = vst [vmem:[%s271 + $0x198] sm:$0xff] %v6721
        %6786 = vst [vmem:[%s271 + $0x1a0] sm:$0xff] %v6722
        %6787 = vst [vmem:[%s271 + $0x1a8] sm:$0xff] %v6723
        %6788 = vst [vmem:[%s271 + $0x1b0] sm:$0xff] %v6724
        %6789 = vst [vmem:[%s271 + $0x1b8] sm:$0xff] %v6725
        %6790 = vst [vmem:[%s271 + $0x1c0] sm:$0xff] %v6726
        %6791 = vst [vmem:[%s271 + $0x1c8] sm:$0xff] %v6727
        %6792 = vst [vmem:[%s271 + $0x1d0] sm:$0xff] %v6728
        %6793 = vst [vmem:[%s271 + $0x1d8] sm:$0xff] %v6729
        %6794 = vst [vmem:[%s271 + $0x1e0] sm:$0xff] %v6730
        %6795 = vst [vmem:[%s271 + $0x1e8] sm:$0xff] %v6731
        %6796 = vst [vmem:[%s271 + $0x1f0] sm:$0xff] %v6732
        %6797 = vst [vmem:[%s271 + $0x1f8] sm:$0xff] %v6733
        %s6798 = sand.u32 %s181, 1
        %s6799 = scalar_lea.sflag [#allocation4], %s6798
        %s6800 = sand.u32 %s181, 1
        %s6801 = smul.addr %s6800, 512
        %s6802 = scalar_lea.vmem [#allocation3], %s6801
        // Predicated region
        $region49: #{bottleneck_forward.1} parent=47 // pred_check
          %p6803 = pneg %p191
        $region50: #{bottleneck_forward.1} parent=47 // pred_check_branch
          %6805 = sbr.rel (%p6803) target = $region52
        $region51: #{bottleneck_forward.1} parent=47 // pred_region
          %s6807 = ssub.s32 8192, 8192
          %6808 = vsyncadd %s6799, %s6807
          %s6809 = smul.addr %s21, 64
          %s6810 = smul.addr %s6809, 128
          %s6811 = scalar_lea.hbm %s7, %s6810
          %s6812 = sshll.u32 %s6802, 4
          %s6813 = int_to_ptr.vmem [resolvable:$true] %s6812
          %6818 = dma.vmem_to_hbm [thread:$0]  %s6813, 8192, %s6811, %s6799, 128, 128, 8
        $region52: #{bottleneck_forward.1} parent=47 // pred_fallthru
          _
      $region48: #{bottleneck_forward.1} parent=5 // pred_fallthru
        _
      %p6819 = scmp.le.s32.totalorder 2, %s16
      // Predicated region
      $region53: #{bottleneck_forward.1} parent=5 // pred_check
        %p6820 = pneg %p6819
      $region54: #{bottleneck_forward.1} parent=5 // pred_check_branch
        %6822 = sbr.rel (%p6820) target = $region56
      $region55: #{bottleneck_forward.1} parent=5 // pred_region
        %s6823 = ssub.s32 %s16, 2
        // Predicated region
        $region57: #{bottleneck_forward.1} parent=55 // pred_check
          %p6824 = pneg %p197
        $region58: #{bottleneck_forward.1} parent=55 // pred_check_branch
          %6826 = sbr.rel (%p6824) target = $region60
        $region59: #{bottleneck_forward.1} parent=55 // pred_region
          %s6827 = sand.u32 %s182, 1
          %s6828 = scalar_lea.sflag [#allocation4], %s6827
          %s6829 = sand.u32 %s182, 1
          %s6830 = smul.addr %s6829, 512
          %s6831 = scalar_lea.vmem [#allocation3], %s6830
          %6832 = dma.done %s6828, 8192
        $region60: #{bottleneck_forward.1} parent=55 // pred_fallthru
          _
      $region56: #{bottleneck_forward.1} parent=5 // pred_fallthru
        _
    $region6: #{bottleneck_forward.1} parent=1 // loop_footer
      %s20 = sadd.s32 1, %s16
    $region7: #{bottleneck_forward.1} parent=1 // loop_footer_branch
      %15 = sbr.rel target = $region3
    $region8: #{bottleneck_forward.1} parent=1 // loop_exit
      _
    %6833 = vsyncpa [#allocation4], 1
    %s6834 = scalar_lea.sflag [#allocation4], 1
    %6835 = vsyncpa %s6834, 1

</llo_original>
